<compile_context>
chip_gen: v6e
topology: v6e:2x2x1
jax: 0.10.0
libtpu: 0.0.40
codegen_flags: <defaults>
</compile_context>

<pallas_src>
import jax
import jax.numpy as jnp
from jax.experimental import pallas as pl
from jax.experimental.pallas import tpu as pltpu

EPS = 1e-5          # PyTorch BatchNorm2d default eps
NEG = -3.0e38       # large finite negative for max-pool borders (f32/bf16 safe)


# --------------------------------------------------------------------------- #
# Fused Pallas kernel (one grid step = b_tile images, M = b_tile*H rows).
# --------------------------------------------------------------------------- #
def _make_kernel(H, Cin, WCin, WCout, r3w, r5w, has_proj):
    f32 = jnp.float32
    bf16 = jnp.bfloat16
    o1 = 0
    ores = WCout
    o3 = WCout * (2 if has_proj else 1)
    o5 = o3 + r3w

    def kernel(y_ref, lane_ref, x_ref, wf_ref, bf_ref, t3_ref, b3_ref,
               t5_ref, b5_ref, wp_ref, bp_ref, o_ref):
        xs = x_ref[...]                     # (M, W*Cin) bf16 activation slab
        M = xs.shape[0]
        y = y_ref[...]                      # (M, 1)  int32: row index within image
        lane = lane_ref[...]                # (1, W*Cin) int32: lane index

        # -- one fused MXU matmul against x:
        #    [conv1(BN folded) | residual-proj | 3x3-reduce | 5x5-reduce] ------
        big = jnp.dot(xs, wf_ref[...], preferred_element_type=f32) + bf_ref[...]

        acc = jnp.maximum(big[:, o1:o1 + WCout], 0.0)        # conv1 branch
        if has_proj:
            acc = acc + big[:, ores:ores + WCout]            # 1x1 residual proj
        else:
            acc = acc + xs.astype(f32)                       # identity residual

        # -- k x k conv = k row-rolled matmuls against block-Toeplitz weights --
        def kxk_branch(r, t_ref, b_ref, k):
            p = (k - 1) // 2
            c = None
            for dy in range(k):
                if dy == p:
                    shifted = r                              # no shift, no mask
                else:
                    shifted = pltpu.roll(r, (p - dy) % M, axis=0)
                    valid = (y >= p - dy) & (y < H + p - dy)
                    shifted = jnp.where(valid, shifted, 0.0)  # zero padding rows
                term = jnp.dot(shifted.astype(bf16), t_ref[dy],
                               preferred_element_type=f32)
                c = term if c is None else c + term
            return jnp.maximum(c + b_ref[...], 0.0)

        acc = acc + kxk_branch(big[:, o3:o3 + r3w], t3_ref, b3_ref, 3)
        acc = acc + kxk_branch(big[:, o5:o5 + r5w], t5_ref, b5_ref, 5)

        # -- pool branch: separable 3x3 max-pool via XLU rolls + NEG borders ---
        xf = xs.astype(f32)
        left = jnp.where(lane >= Cin, pltpu.roll(xf, Cin, axis=1), NEG)
        right = jnp.where(lane < WCin - Cin,
                          pltpu.roll(xf, WCin - Cin, axis=1), NEG)
        rmax = jnp.maximum(jnp.maximum(left, right), xf)
        up = jnp.where(y >= 1, pltpu.roll(rmax, 1, axis=0), NEG)
        down = jnp.where(y < H - 1, pltpu.roll(rmax, M - 1, axis=0), NEG)
        pooled = jnp.maximum(jnp.maximum(up, down), rmax)
        acc = acc + jnp.maximum(
            jnp.dot(pooled.astype(bf16), wp_ref[...],
                    preferred_element_type=f32) + bp_ref[...], 0.0)

        o_ref[...] = acc.astype(o_ref.dtype)

    return kernel


# --------------------------------------------------------------------------- #
# One-time operand construction (block-diagonal / block-Toeplitz, BN folded).
# --------------------------------------------------------------------------- #
def _rup(n, m):
    return ((n + m - 1) // m) * m


def _fold_bn(bn):
    s = bn["gamma"] / jnp.sqrt(bn["var"] + EPS)
    return s, bn["beta"] - bn["mean"] * s


def build_operands(p, Cin, W):
    f32 = jnp.float32
    bf16 = jnp.bfloat16
    C1 = p["w1"].shape[1]
    Cr3, C3 = p["w3r"].shape[1], p["b3"].shape[0]
    Cr5, C5 = p["w5r"].shape[1], p["b5"].shape[0]
    Cout = C1 + C3 + C5 + Cin               # change_depth_pool=False
    off1, off3, off5, offp = 0, C1, C1 + C3, C1 + C3 + C5
    WCout = W * Cout
    has_proj = "wr" in p
    r3w = _rup(W * Cr3, 128)
    r5w = _rup(W * Cr5, 128)
    eyeW = jnp.eye(W, dtype=f32)

    def place_cols(mat, off):
        return jnp.zeros((mat.shape[0], Cout), f32).at[:, off:off + mat.shape[1]].set(mat)

    def place_bias(vec, off):
        b = jnp.zeros((Cout,), f32).at[off:off + vec.shape[0]].set(vec)
        return jnp.tile(b, W)[None, :]                       # (1, W*Cout)

    # fused xs-matmul: [conv1 (BN folded) | residual proj | 3x3 reduce | 5x5 reduce]
    s1, sh1 = _fold_bn(p["bn1"])
    cols = [jnp.kron(eyeW, place_cols(p["w1"] * s1[None, :], off1))]
    biases = [place_bias(p["b1"] * s1 + sh1, off1)]
    if has_proj:
        cols.append(jnp.kron(eyeW, p["wr"].astype(f32)))
        biases.append(jnp.tile(p["br"].astype(f32), W)[None, :])

    def reduce_block(w_red, b_red, width):
        pad_lanes = width - W * w_red.shape[1]
        rd = jnp.pad(jnp.kron(eyeW, w_red.astype(f32)), ((0, 0), (0, pad_lanes)))
        brd = jnp.pad(jnp.tile(b_red.astype(f32), W), (0, pad_lanes))[None, :]
        return rd, brd

    rd3, brd3 = reduce_block(p["w3r"], p["b3r"], r3w)
    rd5, brd5 = reduce_block(p["w5r"], p["b5r"], r5w)
    cols += [rd3, rd5]
    biases += [brd3, brd5]
    WF = jnp.concatenate(cols, axis=1)
    BF = jnp.concatenate(biases, axis=1)

    # per-dy block-Toeplitz weights (dx shift + width borders + BN folded)
    def toeplitz(wk, bk, bn, k, Cr, off, width):
        pad = (k - 1) // 2
        s, sh = _fold_bn(bn)
        w4 = wk.reshape(k, k, Cr, -1).astype(f32) * s[None, None, None, :]
        mats = []
        for dy in range(k):
            t = jnp.zeros((W * Cr, WCout), f32)
            for dx in range(k):
                t = t + jnp.kron(jnp.eye(W, k=pad - dx, dtype=f32),
                                 place_cols(w4[dy, dx], off))
            mats.append(jnp.pad(t, ((0, width - W * Cr), (0, 0))))
        return jnp.stack(mats), place_bias(bk * s + sh, off)

    T3, B3 = toeplitz(p["w3"], p["b3"], p["bn3"], 3, Cr3, off3, r3w)
    T5, B5 = toeplitz(p["w5"], p["b5"], p["bn5"], 5, Cr5, off5, r5w)

    # pool branch: BN scale as a placed diagonal, BN shift as a placed bias
    sp, shp = _fold_bn(p["bnp"])
    WP = jnp.kron(eyeW, place_cols(jnp.diag(sp), offp))
    BP = place_bias(shp, offp)

    ops = dict(WF=WF.astype(bf16), BF=BF, T3=T3.astype(bf16), B3=B3,
               T5=T5.astype(bf16), B5=B5, WP=WP.astype(bf16), BP=BP)
    meta = dict(Cout=Cout, has_proj=has_proj, r3w=r3w, r5w=r5w)
    return ops, meta


# --------------------------------------------------------------------------- #
# Wrapper: builds operands once, returns a jitted forward(x_nchw) closure.
# --------------------------------------------------------------------------- #
def _const_spec(a):
    return pl.BlockSpec(a.shape, lambda b, _n=a.ndim: (0,) * _n)


def _pick_b_tile(n, h, max_rows=256):
    divs = [d for d in range(1, n + 1) if n % d == 0 and d * h <= max_rows]
    best = max(divs) if divs else 1
    two_step = [d for d in divs if n // d >= 2]      # prefer >= 2 grid steps
    if two_step:
        best = max(two_step)
    return best


def make_forward(params, Cin, H, W, b_tile=None):
    assert H >= 2 and W >= 2, "3x3 max-pool NEG-border trick needs H, W >= 2"
    ops, meta = build_operands(params, Cin, W)       # built once, reused per call
    Cout = meta["Cout"]
    WCin, WCout = W * Cin, W * Cout
    kernel = _make_kernel(H, Cin, WCin, WCout, meta["r3w"], meta["r5w"],
                          meta["has_proj"])

    @jax.jit
    def forward(x_nchw):
        N = x_nchw.shape[0]
        bt = b_tile if b_tile is not None else _pick_b_tile(N, H)
        assert N % bt == 0, "batch must be divisible by the batch tile"
        M = bt * H
        assert M % 8 == 0 or bt == N, "batch-tile rows must be sublane aligned"

        ycoord = jnp.tile(jnp.arange(H, dtype=jnp.int32), bt)[:, None]  # (M, 1)
        lane = jnp.arange(WCin, dtype=jnp.int32)[None, :]               # (1, WCin)

        # lane-dense activation slab: (N*H, W*Cin), channel-minor, bf16
        x_slab = jnp.transpose(x_nchw, (0, 2, 3, 1)).reshape(N * H, WCin)
        x_slab = x_slab.astype(jnp.bfloat16)

        out = pl.pallas_call(
            kernel,
            out_shape=jax.ShapeDtypeStruct((N * H, WCout), jnp.float32),
            grid=(N // bt,),
            in_specs=[
                pl.BlockSpec((M, 1), lambda b: (0, 0)),       # ycoord
                pl.BlockSpec((1, WCin), lambda b: (0, 0)),    # lane index
                pl.BlockSpec((M, WCin), lambda b: (b, 0)),    # activations
                _const_spec(ops["WF"]), _const_spec(ops["BF"]),
                _const_spec(ops["T3"]), _const_spec(ops["B3"]),
                _const_spec(ops["T5"]), _const_spec(ops["B5"]),
                _const_spec(ops["WP"]), _const_spec(ops["BP"]),
            ],
            out_specs=pl.BlockSpec((M, WCout), lambda b: (b, 0)),
            compiler_params=pltpu.CompilerParams(
                dimension_semantics=("parallel",)),
        )(ycoord, lane, x_slab, ops["WF"], ops["BF"], ops["T3"], ops["B3"],
          ops["T5"], ops["B5"], ops["WP"], ops["BP"])

        return jnp.transpose(out.reshape(N, H, W, Cout), (0, 3, 1, 2))   # NCHW

    return forward


# --------------------------------------------------------------------------- #
# Parameters (same layout as the PyTorch module; conv weights flattened
# (dy, dx, cin) x cout so they are plain matrices).
# --------------------------------------------------------------------------- #
def init_params(key, cin, cout, conv_size_in, conv_size_out):
    keys = jax.random.split(key, 32)
    it = iter(keys)

    def nrm(shape, scale=0.1):
        return scale * jax.random.normal(next(it), shape, jnp.float32)

    def bn(c):
        return dict(
            gamma=1.0 + nrm((c,)),
            beta=nrm((c,)),
            mean=nrm((c,)),
            var=0.5 + jax.random.uniform(next(it), (c,), jnp.float32),
        )

    p = {}
    p["w1"] = nrm((1 * 1 * cin, conv_size_out[0]))
    p["b1"] = nrm((conv_size_out[0],))
    p["bn1"] = bn(conv_size_out[0])

    p["w3r"] = nrm((cin, conv_size_in[0]))
    p["b3r"] = nrm((conv_size_in[0],))
    p["w3"] = nrm((3 * 3 * conv_size_in[0], conv_size_out[1]))
    p["b3"] = nrm((conv_size_out[1],))
    p["bn3"] = bn(conv_size_out[1])

    p["w5r"] = nrm((cin, conv_size_in[1]))
    p["b5r"] = nrm((conv_size_in[1],))
    p["w5"] = nrm((5 * 5 * conv_size_in[1], conv_size_out[2]))
    p["b5"] = nrm((conv_size_out[2],))
    p["bn5"] = bn(conv_size_out[2])

    p["bnp"] = bn(cin)   # pool branch BN over in_channels (change_depth_pool=False)

    if cin != cout:
        p["wr"] = nrm((cin, cout))
        p["br"] = nrm((cout,))
    return p


# --------------------------------------------------------------------------- #
# Pure-JAX reference (verification only)
# --------------------------------------------------------------------------- #
def reference_forward(x_nchw, p):
    x = jnp.transpose(x_nchw, (0, 2, 3, 1))

    def conv(z, wmat, b, k, pad):
        C = z.shape[-1]
        w = wmat.reshape(k, k, C, -1)
        y = jax.lax.conv_general_dilated(
            z, w, window_strides=(1, 1), padding=[(pad, pad), (pad, pad)],
            dimension_numbers=("NHWC", "HWIO", "NHWC"))
        return y + b

    def bn_relu(y, bn):
        s = bn["gamma"] / jnp.sqrt(bn["var"] + EPS)
        return jnp.maximum((y - bn["mean"]) * s + bn["beta"], 0.0)

    y1 = bn_relu(conv(x, p["w1"], p["b1"], 1, 0), p["bn1"])
    y3 = bn_relu(conv(conv(x, p["w3r"], p["b3r"], 1, 0), p["w3"], p["b3"], 3, 1), p["bn3"])
    y5 = bn_relu(conv(conv(x, p["w5r"], p["b5r"], 1, 0), p["w5"], p["b5"], 5, 2), p["bn5"])
    pooled = jax.lax.reduce_window(
        x, -jnp.inf, jax.lax.max, (1, 3, 3, 1), (1, 1, 1, 1),
        [(0, 0), (1, 1), (1, 1), (0, 0)])
    yp = bn_relu(pooled, p["bnp"])
    res = conv(x, p["wr"], p["br"], 1, 0) if "wr" in p else x
    out = jnp.concatenate([y1, y3, y5, yp], axis=-1) + res
    return jnp.transpose(out, (0, 3, 1, 2))


# --------------------------------------------------------------------------- #
if __name__ == "__main__":
    key = jax.random.PRNGKey(0)
    N, Cin, H, W = 16, 8, 16, 16
    conv_size_in = [4, 4]
    conv_size_out = [4, 6, 6]
    Cout = sum(conv_size_out) + Cin   # change_depth_pool=False -> pool keeps Cin

    params = init_params(key, Cin, Cout, conv_size_in, conv_size_out)
    x = jax.random.normal(jax.random.fold_in(key, 123), (N, Cin, H, W), jnp.float32)

    forward = make_forward(params, Cin, H, W)
    out = jax.block_until_ready(forward(x))
    ref = reference_forward(x, params)

    assert out.shape == (N, Cout, H, W), out.shape
    err = float(jnp.max(jnp.abs(out - ref)))
    assert err < 1e-1, f"max abs err {err} (bf16 weights/activations)"

    print("KERNEL_OK")
</pallas_src>

<mosaic_0001>
module attributes {stable_mosaic.version = 11 : i64} {
  func.func @kernel(%arg0: i32, %arg1: memref<128x1xi32, #tpu.memory_space<vmem>>, %arg2: memref<1x128xi32, #tpu.memory_space<vmem>>, %arg3: memref<128x128xbf16, #tpu.memory_space<vmem>>, %arg4: memref<128x1024xbf16, #tpu.memory_space<vmem>>, %arg5: memref<1x1024xf32, #tpu.memory_space<vmem>>, %arg6: memref<3x128x384xbf16, #tpu.memory_space<vmem>>, %arg7: memref<1x384xf32, #tpu.memory_space<vmem>>, %arg8: memref<5x128x384xbf16, #tpu.memory_space<vmem>>, %arg9: memref<1x384xf32, #tpu.memory_space<vmem>>, %arg10: memref<128x384xbf16, #tpu.memory_space<vmem>>, %arg11: memref<1x384xf32, #tpu.memory_space<vmem>>, %arg12: memref<128x384xf32, #tpu.memory_space<vmem>>) attributes {dimension_semantics = [#tpu.dimension_semantics<parallel>], iteration_bounds = array<i64: 2>, scalar_prefetch = 0 : i64, scratch_operands = 0 : i64, tpu.core_type = #tpu.core_type<tc>, window_params = [{pipeline_mode = #tpu.pipeline_mode<synchronous>, transform_indices = @transform_0, window_bounds = array<i64: 128, 1>}, {pipeline_mode = #tpu.pipeline_mode<synchronous>, transform_indices = @transform_1, window_bounds = array<i64: 1, 128>}, {transform_indices = @transform_2, window_bounds = array<i64: 128, 128>}, {pipeline_mode = #tpu.pipeline_mode<synchronous>, transform_indices = @transform_3, window_bounds = array<i64: 128, 1024>}, {pipeline_mode = #tpu.pipeline_mode<synchronous>, transform_indices = @transform_4, window_bounds = array<i64: 1, 1024>}, {pipeline_mode = #tpu.pipeline_mode<synchronous>, transform_indices = @transform_5, window_bounds = array<i64: 3, 128, 384>}, {pipeline_mode = #tpu.pipeline_mode<synchronous>, transform_indices = @transform_6, window_bounds = array<i64: 1, 384>}, {pipeline_mode = #tpu.pipeline_mode<synchronous>, transform_indices = @transform_7, window_bounds = array<i64: 5, 128, 384>}, {pipeline_mode = #tpu.pipeline_mode<synchronous>, transform_indices = @transform_8, window_bounds = array<i64: 1, 384>}, {pipeline_mode = #tpu.pipeline_mode<synchronous>, transform_indices = @transform_9, window_bounds = array<i64: 128, 384>}, {pipeline_mode = #tpu.pipeline_mode<synchronous>, transform_indices = @transform_10, window_bounds = array<i64: 1, 384>}, {transform_indices = @transform_11, window_bounds = array<i64: 128, 384>}]} {
    %c0 = arith.constant 0 : index
    %c0_0 = arith.constant 0 : index
    %0 = vector.load %arg3[%c0, %c0_0] : memref<128x128xbf16, #tpu.memory_space<vmem>>, vector<128x128xbf16>
    %c0_1 = arith.constant 0 : index
    %c0_2 = arith.constant 0 : index
    %1 = vector.load %arg1[%c0_1, %c0_2] : memref<128x1xi32, #tpu.memory_space<vmem>>, vector<128x1xi32>
    %c0_3 = arith.constant 0 : index
    %c0_4 = arith.constant 0 : index
    %2 = vector.load %arg2[%c0_3, %c0_4] : memref<1x128xi32, #tpu.memory_space<vmem>>, vector<1x128xi32>
    %c0_5 = arith.constant 0 : index
    %c0_6 = arith.constant 0 : index
    %3 = vector.load %arg4[%c0_5, %c0_6] : memref<128x1024xbf16, #tpu.memory_space<vmem>>, vector<128x1024xbf16>
    %cst = arith.constant dense<0.000000e+00> : vector<128x1024xf32>
    %4 = tpu.matmul %0, %3, %cst {dimension_numbers = #tpu.dot_dimension_numbers<[1], [0], [0], [1], [0, 0, 1, 1], [], []>} : vector<128x128xbf16>, vector<128x1024xbf16>, vector<128x1024xf32> -> vector<128x1024xf32>
    %c0_7 = arith.constant 0 : index
    %c0_8 = arith.constant 0 : index
    %5 = vector.load %arg5[%c0_7, %c0_8] : memref<1x1024xf32, #tpu.memory_space<vmem>>, vector<1x1024xf32>
    %6 = vector.broadcast %5 : vector<1x1024xf32> to vector<128x1024xf32>
    %7 = arith.addf %4, %6 : vector<128x1024xf32>
    %8 = vector.extract_strided_slice %7 {offsets = [0, 0], sizes = [128, 384], strides = [1, 1]} : vector<128x1024xf32> to vector<128x384xf32>
    %cst_9 = arith.constant 0.000000e+00 : f32
    %9 = vector.broadcast %cst_9 : f32 to vector<128x384xf32>
    %10 = arith.maximumf %8, %9 : vector<128x384xf32>
    %11 = vector.extract_strided_slice %7 {offsets = [0, 384], sizes = [128, 384], strides = [1, 1]} : vector<128x1024xf32> to vector<128x384xf32>
    %12 = arith.addf %10, %11 : vector<128x384xf32>
    %13 = vector.extract_strided_slice %7 {offsets = [0, 768], sizes = [128, 128], strides = [1, 1]} : vector<128x1024xf32> to vector<128x128xf32>
    %c1_i32 = arith.constant 1 : i32
    %14 = tpu.dynamic_rotate %13 by %c1_i32 dim 0 : vector<128x128xf32>, i32 -> vector<128x128xf32>
    %c1_i32_10 = arith.constant 1 : i32
    %15 = vector.broadcast %c1_i32_10 : i32 to vector<128x1xi32>
    %16 = arith.cmpi sge, %1, %15 : vector<128x1xi32>
    %c17_i32 = arith.constant 17 : i32
    %17 = vector.broadcast %c17_i32 : i32 to vector<128x1xi32>
    %18 = arith.cmpi slt, %1, %17 : vector<128x1xi32>
    %19 = arith.andi %16, %18 : vector<128x1xi1>
    %cst_11 = arith.constant 0.000000e+00 : f32
    %20 = vector.shape_cast %19 : vector<128x1xi1> to vector<128x1xi1>
    %21 = vector.broadcast %20 : vector<128x1xi1> to vector<128x128xi1>
    %22 = vector.broadcast %cst_11 : f32 to vector<128x128xf32>
    %23 = arith.select %21, %14, %22 : vector<128x128xi1>, vector<128x128xf32>
    %24 = arith.truncf %23 : vector<128x128xf32> to vector<128x128xbf16>
    %c0_12 = arith.constant 0 : index
    %c0_13 = arith.constant 0 : index
    %c0_14 = arith.constant 0 : index
    %25 = vector.load %arg6[%c0_12, %c0_13, %c0_14] : memref<3x128x384xbf16, #tpu.memory_space<vmem>>, vector<1x128x384xbf16>
    %26 = vector.shape_cast %25 : vector<1x128x384xbf16> to vector<128x384xbf16>
    %cst_15 = arith.constant dense<0.000000e+00> : vector<128x384xf32>
    %27 = tpu.matmul %24, %26, %cst_15 {dimension_numbers = #tpu.dot_dimension_numbers<[1], [0], [0], [1], [0, 0, 1, 1], [], []>} : vector<128x128xbf16>, vector<128x384xbf16>, vector<128x384xf32> -> vector<128x384xf32>
    %28 = arith.truncf %13 : vector<128x128xf32> to vector<128x128xbf16>
    %c1 = arith.constant 1 : index
    %c0_16 = arith.constant 0 : index
    %c0_17 = arith.constant 0 : index
    %29 = vector.load %arg6[%c1, %c0_16, %c0_17] : memref<3x128x384xbf16, #tpu.memory_space<vmem>>, vector<1x128x384xbf16>
    %30 = vector.shape_cast %29 : vector<1x128x384xbf16> to vector<128x384xbf16>
    %cst_18 = arith.constant dense<0.000000e+00> : vector<128x384xf32>
    %31 = tpu.matmul %28, %30, %cst_18 {dimension_numbers = #tpu.dot_dimension_numbers<[1], [0], [0], [1], [0, 0, 1, 1], [], []>} : vector<128x128xbf16>, vector<128x384xbf16>, vector<128x384xf32> -> vector<128x384xf32>
    %32 = arith.addf %27, %31 : vector<128x384xf32>
    %c127_i32 = arith.constant 127 : i32
    %33 = tpu.dynamic_rotate %13 by %c127_i32 dim 0 : vector<128x128xf32>, i32 -> vector<128x128xf32>
    %c-1_i32 = arith.constant -1 : i32
    %34 = vector.broadcast %c-1_i32 : i32 to vector<128x1xi32>
    %35 = arith.cmpi sge, %1, %34 : vector<128x1xi32>
    %c15_i32 = arith.constant 15 : i32
    %36 = vector.broadcast %c15_i32 : i32 to vector<128x1xi32>
    %37 = arith.cmpi slt, %1, %36 : vector<128x1xi32>
    %38 = arith.andi %35, %37 : vector<128x1xi1>
    %cst_19 = arith.constant 0.000000e+00 : f32
    %39 = vector.shape_cast %38 : vector<128x1xi1> to vector<128x1xi1>
    %40 = vector.broadcast %39 : vector<128x1xi1> to vector<128x128xi1>
    %41 = vector.broadcast %cst_19 : f32 to vector<128x128xf32>
    %42 = arith.select %40, %33, %41 : vector<128x128xi1>, vector<128x128xf32>
    %43 = arith.truncf %42 : vector<128x128xf32> to vector<128x128xbf16>
    %c2 = arith.constant 2 : index
    %c0_20 = arith.constant 0 : index
    %c0_21 = arith.constant 0 : index
    %44 = vector.load %arg6[%c2, %c0_20, %c0_21] : memref<3x128x384xbf16, #tpu.memory_space<vmem>>, vector<1x128x384xbf16>
    %45 = vector.shape_cast %44 : vector<1x128x384xbf16> to vector<128x384xbf16>
    %cst_22 = arith.constant dense<0.000000e+00> : vector<128x384xf32>
    %46 = tpu.matmul %43, %45, %cst_22 {dimension_numbers = #tpu.dot_dimension_numbers<[1], [0], [0], [1], [0, 0, 1, 1], [], []>} : vector<128x128xbf16>, vector<128x384xbf16>, vector<128x384xf32> -> vector<128x384xf32>
    %47 = arith.addf %32, %46 : vector<128x384xf32>
    %c0_23 = arith.constant 0 : index
    %c0_24 = arith.constant 0 : index
    %48 = vector.load %arg7[%c0_23, %c0_24] : memref<1x384xf32, #tpu.memory_space<vmem>>, vector<1x384xf32>
    %49 = vector.broadcast %48 : vector<1x384xf32> to vector<128x384xf32>
    %50 = arith.addf %47, %49 : vector<128x384xf32>
    %cst_25 = arith.constant 0.000000e+00 : f32
    %51 = vector.broadcast %cst_25 : f32 to vector<128x384xf32>
    %52 = arith.maximumf %50, %51 : vector<128x384xf32>
    %53 = arith.addf %12, %52 : vector<128x384xf32>
    %54 = vector.extract_strided_slice %7 {offsets = [0, 896], sizes = [128, 128], strides = [1, 1]} : vector<128x1024xf32> to vector<128x128xf32>
    %c2_i32 = arith.constant 2 : i32
    %55 = tpu.dynamic_rotate %54 by %c2_i32 dim 0 : vector<128x128xf32>, i32 -> vector<128x128xf32>
    %c2_i32_26 = arith.constant 2 : i32
    %56 = vector.broadcast %c2_i32_26 : i32 to vector<128x1xi32>
    %57 = arith.cmpi sge, %1, %56 : vector<128x1xi32>
    %c18_i32 = arith.constant 18 : i32
    %58 = vector.broadcast %c18_i32 : i32 to vector<128x1xi32>
    %59 = arith.cmpi slt, %1, %58 : vector<128x1xi32>
    %60 = arith.andi %57, %59 : vector<128x1xi1>
    %cst_27 = arith.constant 0.000000e+00 : f32
    %61 = vector.shape_cast %60 : vector<128x1xi1> to vector<128x1xi1>
    %62 = vector.broadcast %61 : vector<128x1xi1> to vector<128x128xi1>
    %63 = vector.broadcast %cst_27 : f32 to vector<128x128xf32>
    %64 = arith.select %62, %55, %63 : vector<128x128xi1>, vector<128x128xf32>
    %65 = arith.truncf %64 : vector<128x128xf32> to vector<128x128xbf16>
    %c0_28 = arith.constant 0 : index
    %c0_29 = arith.constant 0 : index
    %c0_30 = arith.constant 0 : index
    %66 = vector.load %arg8[%c0_28, %c0_29, %c0_30] : memref<5x128x384xbf16, #tpu.memory_space<vmem>>, vector<1x128x384xbf16>
    %67 = vector.shape_cast %66 : vector<1x128x384xbf16> to vector<128x384xbf16>
    %cst_31 = arith.constant dense<0.000000e+00> : vector<128x384xf32>
    %68 = tpu.matmul %65, %67, %cst_31 {dimension_numbers = #tpu.dot_dimension_numbers<[1], [0], [0], [1], [0, 0, 1, 1], [], []>} : vector<128x128xbf16>, vector<128x384xbf16>, vector<128x384xf32> -> vector<128x384xf32>
    %c1_i32_32 = arith.constant 1 : i32
    %69 = tpu.dynamic_rotate %54 by %c1_i32_32 dim 0 : vector<128x128xf32>, i32 -> vector<128x128xf32>
    %c1_i32_33 = arith.constant 1 : i32
    %70 = vector.broadcast %c1_i32_33 : i32 to vector<128x1xi32>
    %71 = arith.cmpi sge, %1, %70 : vector<128x1xi32>
    %c17_i32_34 = arith.constant 17 : i32
    %72 = vector.broadcast %c17_i32_34 : i32 to vector<128x1xi32>
    %73 = arith.cmpi slt, %1, %72 : vector<128x1xi32>
    %74 = arith.andi %71, %73 : vector<128x1xi1>
    %cst_35 = arith.constant 0.000000e+00 : f32
    %75 = vector.shape_cast %74 : vector<128x1xi1> to vector<128x1xi1>
    %76 = vector.broadcast %75 : vector<128x1xi1> to vector<128x128xi1>
    %77 = vector.broadcast %cst_35 : f32 to vector<128x128xf32>
    %78 = arith.select %76, %69, %77 : vector<128x128xi1>, vector<128x128xf32>
    %79 = arith.truncf %78 : vector<128x128xf32> to vector<128x128xbf16>
    %c1_36 = arith.constant 1 : index
    %c0_37 = arith.constant 0 : index
    %c0_38 = arith.constant 0 : index
    %80 = vector.load %arg8[%c1_36, %c0_37, %c0_38] : memref<5x128x384xbf16, #tpu.memory_space<vmem>>, vector<1x128x384xbf16>
    %81 = vector.shape_cast %80 : vector<1x128x384xbf16> to vector<128x384xbf16>
    %cst_39 = arith.constant dense<0.000000e+00> : vector<128x384xf32>
    %82 = tpu.matmul %79, %81, %cst_39 {dimension_numbers = #tpu.dot_dimension_numbers<[1], [0], [0], [1], [0, 0, 1, 1], [], []>} : vector<128x128xbf16>, vector<128x384xbf16>, vector<128x384xf32> -> vector<128x384xf32>
    %83 = arith.addf %68, %82 : vector<128x384xf32>
    %84 = arith.truncf %54 : vector<128x128xf32> to vector<128x128xbf16>
    %c2_40 = arith.constant 2 : index
    %c0_41 = arith.constant 0 : index
    %c0_42 = arith.constant 0 : index
    %85 = vector.load %arg8[%c2_40, %c0_41, %c0_42] : memref<5x128x384xbf16, #tpu.memory_space<vmem>>, vector<1x128x384xbf16>
    %86 = vector.shape_cast %85 : vector<1x128x384xbf16> to vector<128x384xbf16>
    %cst_43 = arith.constant dense<0.000000e+00> : vector<128x384xf32>
    %87 = tpu.matmul %84, %86, %cst_43 {dimension_numbers = #tpu.dot_dimension_numbers<[1], [0], [0], [1], [0, 0, 1, 1], [], []>} : vector<128x128xbf16>, vector<128x384xbf16>, vector<128x384xf32> -> vector<128x384xf32>
    %88 = arith.addf %83, %87 : vector<128x384xf32>
    %c127_i32_44 = arith.constant 127 : i32
    %89 = tpu.dynamic_rotate %54 by %c127_i32_44 dim 0 : vector<128x128xf32>, i32 -> vector<128x128xf32>
    %c-1_i32_45 = arith.constant -1 : i32
    %90 = vector.broadcast %c-1_i32_45 : i32 to vector<128x1xi32>
    %91 = arith.cmpi sge, %1, %90 : vector<128x1xi32>
    %c15_i32_46 = arith.constant 15 : i32
    %92 = vector.broadcast %c15_i32_46 : i32 to vector<128x1xi32>
    %93 = arith.cmpi slt, %1, %92 : vector<128x1xi32>
    %94 = arith.andi %91, %93 : vector<128x1xi1>
    %cst_47 = arith.constant 0.000000e+00 : f32
    %95 = vector.shape_cast %94 : vector<128x1xi1> to vector<128x1xi1>
    %96 = vector.broadcast %95 : vector<128x1xi1> to vector<128x128xi1>
    %97 = vector.broadcast %cst_47 : f32 to vector<128x128xf32>
    %98 = arith.select %96, %89, %97 : vector<128x128xi1>, vector<128x128xf32>
    %99 = arith.truncf %98 : vector<128x128xf32> to vector<128x128xbf16>
    %c3 = arith.constant 3 : index
    %c0_48 = arith.constant 0 : index
    %c0_49 = arith.constant 0 : index
    %100 = vector.load %arg8[%c3, %c0_48, %c0_49] : memref<5x128x384xbf16, #tpu.memory_space<vmem>>, vector<1x128x384xbf16>
    %101 = vector.shape_cast %100 : vector<1x128x384xbf16> to vector<128x384xbf16>
    %cst_50 = arith.constant dense<0.000000e+00> : vector<128x384xf32>
    %102 = tpu.matmul %99, %101, %cst_50 {dimension_numbers = #tpu.dot_dimension_numbers<[1], [0], [0], [1], [0, 0, 1, 1], [], []>} : vector<128x128xbf16>, vector<128x384xbf16>, vector<128x384xf32> -> vector<128x384xf32>
    %103 = arith.addf %88, %102 : vector<128x384xf32>
    %c126_i32 = arith.constant 126 : i32
    %104 = tpu.dynamic_rotate %54 by %c126_i32 dim 0 : vector<128x128xf32>, i32 -> vector<128x128xf32>
    %c-2_i32 = arith.constant -2 : i32
    %105 = vector.broadcast %c-2_i32 : i32 to vector<128x1xi32>
    %106 = arith.cmpi sge, %1, %105 : vector<128x1xi32>
    %c14_i32 = arith.constant 14 : i32
    %107 = vector.broadcast %c14_i32 : i32 to vector<128x1xi32>
    %108 = arith.cmpi slt, %1, %107 : vector<128x1xi32>
    %109 = arith.andi %106, %108 : vector<128x1xi1>
    %cst_51 = arith.constant 0.000000e+00 : f32
    %110 = vector.shape_cast %109 : vector<128x1xi1> to vector<128x1xi1>
    %111 = vector.broadcast %110 : vector<128x1xi1> to vector<128x128xi1>
    %112 = vector.broadcast %cst_51 : f32 to vector<128x128xf32>
    %113 = arith.select %111, %104, %112 : vector<128x128xi1>, vector<128x128xf32>
    %114 = arith.truncf %113 : vector<128x128xf32> to vector<128x128xbf16>
    %c4 = arith.constant 4 : index
    %c0_52 = arith.constant 0 : index
    %c0_53 = arith.constant 0 : index
    %115 = vector.load %arg8[%c4, %c0_52, %c0_53] : memref<5x128x384xbf16, #tpu.memory_space<vmem>>, vector<1x128x384xbf16>
    %116 = vector.shape_cast %115 : vector<1x128x384xbf16> to vector<128x384xbf16>
    %cst_54 = arith.constant dense<0.000000e+00> : vector<128x384xf32>
    %117 = tpu.matmul %114, %116, %cst_54 {dimension_numbers = #tpu.dot_dimension_numbers<[1], [0], [0], [1], [0, 0, 1, 1], [], []>} : vector<128x128xbf16>, vector<128x384xbf16>, vector<128x384xf32> -> vector<128x384xf32>
    %118 = arith.addf %103, %117 : vector<128x384xf32>
    %c0_55 = arith.constant 0 : index
    %c0_56 = arith.constant 0 : index
    %119 = vector.load %arg9[%c0_55, %c0_56] : memref<1x384xf32, #tpu.memory_space<vmem>>, vector<1x384xf32>
    %120 = vector.broadcast %119 : vector<1x384xf32> to vector<128x384xf32>
    %121 = arith.addf %118, %120 : vector<128x384xf32>
    %cst_57 = arith.constant 0.000000e+00 : f32
    %122 = vector.broadcast %cst_57 : f32 to vector<128x384xf32>
    %123 = arith.maximumf %121, %122 : vector<128x384xf32>
    %124 = arith.addf %53, %123 : vector<128x384xf32>
    %125 = arith.extf %0 : vector<128x128xbf16> to vector<128x128xf32>
    %c8_i32 = arith.constant 8 : i32
    %126 = vector.broadcast %c8_i32 : i32 to vector<1x128xi32>
    %127 = arith.cmpi sge, %2, %126 : vector<1x128xi32>
    %c8_i32_58 = arith.constant 8 : i32
    %128 = tpu.dynamic_rotate %125 by %c8_i32_58 dim 1 : vector<128x128xf32>, i32 -> vector<128x128xf32>
    %cst_59 = arith.constant -3.000000e+38 : f32
    %129 = vector.shape_cast %127 : vector<1x128xi1> to vector<1x128xi1>
    %130 = vector.broadcast %129 : vector<1x128xi1> to vector<128x128xi1>
    %131 = vector.broadcast %cst_59 : f32 to vector<128x128xf32>
    %132 = arith.select %130, %128, %131 : vector<128x128xi1>, vector<128x128xf32>
    %c120_i32 = arith.constant 120 : i32
    %133 = vector.broadcast %c120_i32 : i32 to vector<1x128xi32>
    %134 = arith.cmpi slt, %2, %133 : vector<1x128xi32>
    %c120_i32_60 = arith.constant 120 : i32
    %135 = tpu.dynamic_rotate %125 by %c120_i32_60 dim 1 : vector<128x128xf32>, i32 -> vector<128x128xf32>
    %cst_61 = arith.constant -3.000000e+38 : f32
    %136 = vector.shape_cast %134 : vector<1x128xi1> to vector<1x128xi1>
    %137 = vector.broadcast %136 : vector<1x128xi1> to vector<128x128xi1>
    %138 = vector.broadcast %cst_61 : f32 to vector<128x128xf32>
    %139 = arith.select %137, %135, %138 : vector<128x128xi1>, vector<128x128xf32>
    %140 = arith.maximumf %132, %139 : vector<128x128xf32>
    %141 = arith.maximumf %140, %125 : vector<128x128xf32>
    %c1_i32_62 = arith.constant 1 : i32
    %142 = vector.broadcast %c1_i32_62 : i32 to vector<128x1xi32>
    %143 = arith.cmpi sge, %1, %142 : vector<128x1xi32>
    %c1_i32_63 = arith.constant 1 : i32
    %144 = tpu.dynamic_rotate %141 by %c1_i32_63 dim 0 : vector<128x128xf32>, i32 -> vector<128x128xf32>
    %cst_64 = arith.constant -3.000000e+38 : f32
    %145 = vector.shape_cast %143 : vector<128x1xi1> to vector<128x1xi1>
    %146 = vector.broadcast %145 : vector<128x1xi1> to vector<128x128xi1>
    %147 = vector.broadcast %cst_64 : f32 to vector<128x128xf32>
    %148 = arith.select %146, %144, %147 : vector<128x128xi1>, vector<128x128xf32>
    %c15_i32_65 = arith.constant 15 : i32
    %149 = vector.broadcast %c15_i32_65 : i32 to vector<128x1xi32>
    %150 = arith.cmpi slt, %1, %149 : vector<128x1xi32>
    %c127_i32_66 = arith.constant 127 : i32
    %151 = tpu.dynamic_rotate %141 by %c127_i32_66 dim 0 : vector<128x128xf32>, i32 -> vector<128x128xf32>
    %cst_67 = arith.constant -3.000000e+38 : f32
    %152 = vector.shape_cast %150 : vector<128x1xi1> to vector<128x1xi1>
    %153 = vector.broadcast %152 : vector<128x1xi1> to vector<128x128xi1>
    %154 = vector.broadcast %cst_67 : f32 to vector<128x128xf32>
    %155 = arith.select %153, %151, %154 : vector<128x128xi1>, vector<128x128xf32>
    %156 = arith.maximumf %148, %155 : vector<128x128xf32>
    %157 = arith.maximumf %156, %141 : vector<128x128xf32>
    %158 = arith.truncf %157 : vector<128x128xf32> to vector<128x128xbf16>
    %c0_68 = arith.constant 0 : index
    %c0_69 = arith.constant 0 : index
    %159 = vector.load %arg10[%c0_68, %c0_69] : memref<128x384xbf16, #tpu.memory_space<vmem>>, vector<128x384xbf16>
    %cst_70 = arith.constant dense<0.000000e+00> : vector<128x384xf32>
    %160 = tpu.matmul %158, %159, %cst_70 {dimension_numbers = #tpu.dot_dimension_numbers<[1], [0], [0], [1], [0, 0, 1, 1], [], []>} : vector<128x128xbf16>, vector<128x384xbf16>, vector<128x384xf32> -> vector<128x384xf32>
    %c0_71 = arith.constant 0 : index
    %c0_72 = arith.constant 0 : index
    %161 = vector.load %arg11[%c0_71, %c0_72] : memref<1x384xf32, #tpu.memory_space<vmem>>, vector<1x384xf32>
    %162 = vector.broadcast %161 : vector<1x384xf32> to vector<128x384xf32>
    %163 = arith.addf %160, %162 : vector<128x384xf32>
    %cst_73 = arith.constant 0.000000e+00 : f32
    %164 = vector.broadcast %cst_73 : f32 to vector<128x384xf32>
    %165 = arith.maximumf %163, %164 : vector<128x384xf32>
    %166 = arith.addf %124, %165 : vector<128x384xf32>
    %c0_74 = arith.constant 0 : index
    %c0_75 = arith.constant 0 : index
    %167 = vector.load %arg12[%c0_74, %c0_75] : memref<128x384xf32, #tpu.memory_space<vmem>>, vector<128x384xf32>
    tpu.vector_store %arg12[%c0_74, %c0_75], %166 {strides = array<i32>} : memref<128x384xf32, #tpu.memory_space<vmem>>, vector<128x384xf32>,
    return
  }
  func.func @transform_0(%arg0: i32) -> (i32, i32) {
    %c0_i32 = arith.constant 0 : i32
    %c0_i32_0 = arith.constant 0 : i32
    %c0_i32_1 = arith.constant 0 : i32
    return %c0_i32, %c0_i32_0 : i32, i32
  }
  func.func @transform_1(%arg0: i32) -> (i32, i32) {
    %c0_i32 = arith.constant 0 : i32
    %c0_i32_0 = arith.constant 0 : i32
    %c0_i32_1 = arith.constant 0 : i32
    return %c0_i32, %c0_i32_0 : i32, i32
  }
  func.func @transform_2(%arg0: i32) -> (i32, i32) {
    %c0_i32 = arith.constant 0 : i32
    %c0_i32_0 = arith.constant 0 : i32
    return %arg0, %c0_i32 : i32, i32
  }
  func.func @transform_3(%arg0: i32) -> (i32, i32) {
    %c0_i32 = arith.constant 0 : i32
    %c0_i32_0 = arith.constant 0 : i32
    %c0_i32_1 = arith.constant 0 : i32
    return %c0_i32, %c0_i32_0 : i32, i32
  }
  func.func @transform_4(%arg0: i32) -> (i32, i32) {
    %c0_i32 = arith.constant 0 : i32
    %c0_i32_0 = arith.constant 0 : i32
    %c0_i32_1 = arith.constant 0 : i32
    return %c0_i32, %c0_i32_0 : i32, i32
  }
  func.func @transform_5(%arg0: i32) -> (i32, i32, i32) {
    %c0_i32 = arith.constant 0 : i32
    %c0_i32_0 = arith.constant 0 : i32
    %c0_i32_1 = arith.constant 0 : i32
    %c0_i32_2 = arith.constant 0 : i32
    return %c0_i32, %c0_i32_0, %c0_i32_1 : i32, i32, i32
  }
  func.func @transform_6(%arg0: i32) -> (i32, i32) {
    %c0_i32 = arith.constant 0 : i32
    %c0_i32_0 = arith.constant 0 : i32
    %c0_i32_1 = arith.constant 0 : i32
    return %c0_i32, %c0_i32_0 : i32, i32
  }
  func.func @transform_7(%arg0: i32) -> (i32, i32, i32) {
    %c0_i32 = arith.constant 0 : i32
    %c0_i32_0 = arith.constant 0 : i32
    %c0_i32_1 = arith.constant 0 : i32
    %c0_i32_2 = arith.constant 0 : i32
    return %c0_i32, %c0_i32_0, %c0_i32_1 : i32, i32, i32
  }
  func.func @transform_8(%arg0: i32) -> (i32, i32) {
    %c0_i32 = arith.constant 0 : i32
    %c0_i32_0 = arith.constant 0 : i32
    %c0_i32_1 = arith.constant 0 : i32
    return %c0_i32, %c0_i32_0 : i32, i32
  }
  func.func @transform_9(%arg0: i32) -> (i32, i32) {
    %c0_i32 = arith.constant 0 : i32
    %c0_i32_0 = arith.constant 0 : i32
    %c0_i32_1 = arith.constant 0 : i32
    return %c0_i32, %c0_i32_0 : i32, i32
  }
  func.func @transform_10(%arg0: i32) -> (i32, i32) {
    %c0_i32 = arith.constant 0 : i32
    %c0_i32_0 = arith.constant 0 : i32
    %c0_i32_1 = arith.constant 0 : i32
    return %c0_i32, %c0_i32_0 : i32, i32
  }
  func.func @transform_11(%arg0: i32) -> (i32, i32) {
    %c0_i32 = arith.constant 0 : i32
    %c0_i32_0 = arith.constant 0 : i32
    return %arg0, %c0_i32 : i32, i32
  }
}

</mosaic_0001>

<llo_original>
// kernel: tile.0
$region0: #{tile.0}
  %s0 = inlined_call_operand.vmem [shape: s32[8,16], index: 0, kind: input, shape index: {}]
  %s1 = inlined_call_operand.vmem [shape: s32[128,1], index: 1, kind: output, shape index: {}]
  %v2 = vld [vmem:[%s0] sm:$0xff]
  %vm3 = vcmask 7168
  %4 = vst.msk [vmem:[%s1] ss:$16 sm:$0x3] %vm3, %v2
  %5 = vst.msk [vmem:[%s1] ss:$16 sm:$0xc] %vm3, %v2
  %6 = vst.msk [vmem:[%s1] ss:$16 sm:$0x30] %vm3, %v2
  %7 = vst.msk [vmem:[%s1] ss:$16 sm:$0xc0] %vm3, %v2
  %v8 = vld [vmem:[%s0] sm:$0xff]
  %9 = vrot.lane.b32.xlu0 %v8, 127
  %v10 = vpop.permute.xlu0 %9
  %vm11 = vcmask 7168
  %s12 = scalar_lea.vmem %s1, 1
  %13 = vst.msk [vmem:[%s12] ss:$16 sm:$0x3] %vm11, %v10
  %s14 = scalar_lea.vmem %s1, 1
  %15 = vst.msk [vmem:[%s14] ss:$16 sm:$0xc] %vm11, %v10
  %s16 = scalar_lea.vmem %s1, 1
  %17 = vst.msk [vmem:[%s16] ss:$16 sm:$0x30] %vm11, %v10
  %s18 = scalar_lea.vmem %s1, 1
  %19 = vst.msk [vmem:[%s18] ss:$16 sm:$0xc0] %vm11, %v10
  %v20 = vld [vmem:[%s0] sm:$0xff]
  %21 = vrot.lane.b32.xlu0 %v20, 126
  %v22 = vpop.permute.xlu0 %21
  %vm23 = vcmask 7168
  %s24 = scalar_lea.vmem %s1, 2
  %25 = vst.msk [vmem:[%s24] ss:$16 sm:$0x3] %vm23, %v22
  %s26 = scalar_lea.vmem %s1, 2
  %27 = vst.msk [vmem:[%s26] ss:$16 sm:$0xc] %vm23, %v22
  %s28 = scalar_lea.vmem %s1, 2
  %29 = vst.msk [vmem:[%s28] ss:$16 sm:$0x30] %vm23, %v22
  %s30 = scalar_lea.vmem %s1, 2
  %31 = vst.msk [vmem:[%s30] ss:$16 sm:$0xc0] %vm23, %v22
  %v32 = vld [vmem:[%s0] sm:$0xff]
  %33 = vrot.lane.b32.xlu0 %v32, 125
  %v34 = vpop.permute.xlu0 %33
  %vm35 = vcmask 7168
  %s36 = scalar_lea.vmem %s1, 3
  %37 = vst.msk [vmem:[%s36] ss:$16 sm:$0x3] %vm35, %v34
  %s38 = scalar_lea.vmem %s1, 3
  %39 = vst.msk [vmem:[%s38] ss:$16 sm:$0xc] %vm35, %v34
  %s40 = scalar_lea.vmem %s1, 3
  %41 = vst.msk [vmem:[%s40] ss:$16 sm:$0x30] %vm35, %v34
  %s42 = scalar_lea.vmem %s1, 3
  %43 = vst.msk [vmem:[%s42] ss:$16 sm:$0xc0] %vm35, %v34
  %v44 = vld [vmem:[%s0] sm:$0xff]
  %45 = vrot.lane.b32.xlu0 %v44, 124
  %v46 = vpop.permute.xlu0 %45
  %vm47 = vcmask 7168
  %s48 = scalar_lea.vmem %s1, 4
  %49 = vst.msk [vmem:[%s48] ss:$16 sm:$0x3] %vm47, %v46
  %s50 = scalar_lea.vmem %s1, 4
  %51 = vst.msk [vmem:[%s50] ss:$16 sm:$0xc] %vm47, %v46
  %s52 = scalar_lea.vmem %s1, 4
  %53 = vst.msk [vmem:[%s52] ss:$16 sm:$0x30] %vm47, %v46
  %s54 = scalar_lea.vmem %s1, 4
  %55 = vst.msk [vmem:[%s54] ss:$16 sm:$0xc0] %vm47, %v46
  %v56 = vld [vmem:[%s0] sm:$0xff]
  %57 = vrot.lane.b32.xlu0 %v56, 123
  %v58 = vpop.permute.xlu0 %57
  %vm59 = vcmask 7168
  %s60 = scalar_lea.vmem %s1, 5
  %61 = vst.msk [vmem:[%s60] ss:$16 sm:$0x3] %vm59, %v58
  %s62 = scalar_lea.vmem %s1, 5
  %63 = vst.msk [vmem:[%s62] ss:$16 sm:$0xc] %vm59, %v58
  %s64 = scalar_lea.vmem %s1, 5
  %65 = vst.msk [vmem:[%s64] ss:$16 sm:$0x30] %vm59, %v58
  %s66 = scalar_lea.vmem %s1, 5
  %67 = vst.msk [vmem:[%s66] ss:$16 sm:$0xc0] %vm59, %v58
  %v68 = vld [vmem:[%s0] sm:$0xff]
  %69 = vrot.lane.b32.xlu0 %v68, 122
  %v70 = vpop.permute.xlu0 %69
  %vm71 = vcmask 7168
  %s72 = scalar_lea.vmem %s1, 6
  %73 = vst.msk [vmem:[%s72] ss:$16 sm:$0x3] %vm71, %v70
  %s74 = scalar_lea.vmem %s1, 6
  %75 = vst.msk [vmem:[%s74] ss:$16 sm:$0xc] %vm71, %v70
  %s76 = scalar_lea.vmem %s1, 6
  %77 = vst.msk [vmem:[%s76] ss:$16 sm:$0x30] %vm71, %v70
  %s78 = scalar_lea.vmem %s1, 6
  %79 = vst.msk [vmem:[%s78] ss:$16 sm:$0xc0] %vm71, %v70
  %v80 = vld [vmem:[%s0] sm:$0xff]
  %81 = vrot.lane.b32.xlu0 %v80, 121
  %v82 = vpop.permute.xlu0 %81
  %vm83 = vcmask 7168
  %s84 = scalar_lea.vmem %s1, 7
  %85 = vst.msk [vmem:[%s84] ss:$16 sm:$0x3] %vm83, %v82
  %s86 = scalar_lea.vmem %s1, 7
  %87 = vst.msk [vmem:[%s86] ss:$16 sm:$0xc] %vm83, %v82
  %s88 = scalar_lea.vmem %s1, 7
  %89 = vst.msk [vmem:[%s88] ss:$16 sm:$0x30] %vm83, %v82
  %s90 = scalar_lea.vmem %s1, 7
  %91 = vst.msk [vmem:[%s90] ss:$16 sm:$0xc0] %vm83, %v82
  %v92 = vld [vmem:[%s0] sm:$0xff]
  %93 = vrot.lane.b32.xlu0 %v92, 120
  %v94 = vpop.permute.xlu0 %93
  %vm95 = vcmask 7168
  %s96 = scalar_lea.vmem %s1, 8
  %97 = vst.msk [vmem:[%s96] ss:$16 sm:$0x3] %vm95, %v94
  %s98 = scalar_lea.vmem %s1, 8
  %99 = vst.msk [vmem:[%s98] ss:$16 sm:$0xc] %vm95, %v94
  %s100 = scalar_lea.vmem %s1, 8
  %101 = vst.msk [vmem:[%s100] ss:$16 sm:$0x30] %vm95, %v94
  %s102 = scalar_lea.vmem %s1, 8
  %103 = vst.msk [vmem:[%s102] ss:$16 sm:$0xc0] %vm95, %v94
  %v104 = vld [vmem:[%s0] sm:$0xff]
  %105 = vrot.lane.b32.xlu0 %v104, 119
  %v106 = vpop.permute.xlu0 %105
  %vm107 = vcmask 7168
  %s108 = scalar_lea.vmem %s1, 9
  %109 = vst.msk [vmem:[%s108] ss:$16 sm:$0x3] %vm107, %v106
  %s110 = scalar_lea.vmem %s1, 9
  %111 = vst.msk [vmem:[%s110] ss:$16 sm:$0xc] %vm107, %v106
  %s112 = scalar_lea.vmem %s1, 9
  %113 = vst.msk [vmem:[%s112] ss:$16 sm:$0x30] %vm107, %v106
  %s114 = scalar_lea.vmem %s1, 9
  %115 = vst.msk [vmem:[%s114] ss:$16 sm:$0xc0] %vm107, %v106
  %v116 = vld [vmem:[%s0] sm:$0xff]
  %117 = vrot.lane.b32.xlu0 %v116, 118
  %v118 = vpop.permute.xlu0 %117
  %vm119 = vcmask 7168
  %s120 = scalar_lea.vmem %s1, 10
  %121 = vst.msk [vmem:[%s120] ss:$16 sm:$0x3] %vm119, %v118
  %s122 = scalar_lea.vmem %s1, 10
  %123 = vst.msk [vmem:[%s122] ss:$16 sm:$0xc] %vm119, %v118
  %s124 = scalar_lea.vmem %s1, 10
  %125 = vst.msk [vmem:[%s124] ss:$16 sm:$0x30] %vm119, %v118
  %s126 = scalar_lea.vmem %s1, 10
  %127 = vst.msk [vmem:[%s126] ss:$16 sm:$0xc0] %vm119, %v118
  %v128 = vld [vmem:[%s0] sm:$0xff]
  %129 = vrot.lane.b32.xlu0 %v128, 117
  %v130 = vpop.permute.xlu0 %129
  %vm131 = vcmask 7168
  %s132 = scalar_lea.vmem %s1, 11
  %133 = vst.msk [vmem:[%s132] ss:$16 sm:$0x3] %vm131, %v130
  %s134 = scalar_lea.vmem %s1, 11
  %135 = vst.msk [vmem:[%s134] ss:$16 sm:$0xc] %vm131, %v130
  %s136 = scalar_lea.vmem %s1, 11
  %137 = vst.msk [vmem:[%s136] ss:$16 sm:$0x30] %vm131, %v130
  %s138 = scalar_lea.vmem %s1, 11
  %139 = vst.msk [vmem:[%s138] ss:$16 sm:$0xc0] %vm131, %v130
  %v140 = vld [vmem:[%s0] sm:$0xff]
  %141 = vrot.lane.b32.xlu0 %v140, 116
  %v142 = vpop.permute.xlu0 %141
  %vm143 = vcmask 7168
  %s144 = scalar_lea.vmem %s1, 12
  %145 = vst.msk [vmem:[%s144] ss:$16 sm:$0x3] %vm143, %v142
  %s146 = scalar_lea.vmem %s1, 12
  %147 = vst.msk [vmem:[%s146] ss:$16 sm:$0xc] %vm143, %v142
  %s148 = scalar_lea.vmem %s1, 12
  %149 = vst.msk [vmem:[%s148] ss:$16 sm:$0x30] %vm143, %v142
  %s150 = scalar_lea.vmem %s1, 12
  %151 = vst.msk [vmem:[%s150] ss:$16 sm:$0xc0] %vm143, %v142
  %v152 = vld [vmem:[%s0] sm:$0xff]
  %153 = vrot.lane.b32.xlu0 %v152, 115
  %v154 = vpop.permute.xlu0 %153
  %vm155 = vcmask 7168
  %s156 = scalar_lea.vmem %s1, 13
  %157 = vst.msk [vmem:[%s156] ss:$16 sm:$0x3] %vm155, %v154
  %s158 = scalar_lea.vmem %s1, 13
  %159 = vst.msk [vmem:[%s158] ss:$16 sm:$0xc] %vm155, %v154
  %s160 = scalar_lea.vmem %s1, 13
  %161 = vst.msk [vmem:[%s160] ss:$16 sm:$0x30] %vm155, %v154
  %s162 = scalar_lea.vmem %s1, 13
  %163 = vst.msk [vmem:[%s162] ss:$16 sm:$0xc0] %vm155, %v154
  %v164 = vld [vmem:[%s0] sm:$0xff]
  %165 = vrot.lane.b32.xlu0 %v164, 114
  %v166 = vpop.permute.xlu0 %165
  %vm167 = vcmask 7168
  %s168 = scalar_lea.vmem %s1, 14
  %169 = vst.msk [vmem:[%s168] ss:$16 sm:$0x3] %vm167, %v166
  %s170 = scalar_lea.vmem %s1, 14
  %171 = vst.msk [vmem:[%s170] ss:$16 sm:$0xc] %vm167, %v166
  %s172 = scalar_lea.vmem %s1, 14
  %173 = vst.msk [vmem:[%s172] ss:$16 sm:$0x30] %vm167, %v166
  %s174 = scalar_lea.vmem %s1, 14
  %175 = vst.msk [vmem:[%s174] ss:$16 sm:$0xc0] %vm167, %v166
  %v176 = vld [vmem:[%s0] sm:$0xff]
  %177 = vrot.lane.b32.xlu0 %v176, 113
  %v178 = vpop.permute.xlu0 %177
  %vm179 = vcmask 7168
  %s180 = scalar_lea.vmem %s1, 15
  %181 = vst.msk [vmem:[%s180] ss:$16 sm:$0x3] %vm179, %v178
  %s182 = scalar_lea.vmem %s1, 15
  %183 = vst.msk [vmem:[%s182] ss:$16 sm:$0xc] %vm179, %v178
  %s184 = scalar_lea.vmem %s1, 15
  %185 = vst.msk [vmem:[%s184] ss:$16 sm:$0x30] %vm179, %v178
  %s186 = scalar_lea.vmem %s1, 15
  %187 = vst.msk [vmem:[%s186] ss:$16 sm:$0xc0] %vm179, %v178

// kernel: forward.1
$region0: #{forward.1}
  #allocation0 [shape = 'u32[]', space=smem, size = 0x4, offset = 0x4, fixed_abs, tag = 'smem constant byte address 0x4 - core index']
  #allocation1 [shape = 'u32[144,128]{1,0:T(1,128)}', space=vmem, size = 0x12000, scoped, tag = 'internal scratch']
  %s0 = inlined_call_operand.vmem [shape: s32[128,1], index: 0, kind: input, shape index: {}]
  %s1 = inlined_call_operand.vmem [shape: s32[1,128], index: 1, kind: input, shape index: {}]
  %s2 = inlined_call_operand.vmem [shape: bf16[256,128], index: 2, kind: input, shape index: {}]
  %s3 = inlined_call_operand.vmem [shape: bf16[128,1024], index: 3, kind: input, shape index: {}]
  %s4 = inlined_call_operand.vmem [shape: f32[1,1024], index: 4, kind: input, shape index: {}]
  %s5 = inlined_call_operand.vmem [shape: bf16[3,128,384], index: 5, kind: input, shape index: {}]
  %s6 = inlined_call_operand.vmem [shape: f32[1,384], index: 6, kind: input, shape index: {}]
  %s7 = inlined_call_operand.vmem [shape: bf16[5,128,384], index: 7, kind: input, shape index: {}]
  %s8 = inlined_call_operand.vmem [shape: f32[1,384], index: 8, kind: input, shape index: {}]
  %s9 = inlined_call_operand.vmem [shape: bf16[128,384], index: 9, kind: input, shape index: {}]
  %s10 = inlined_call_operand.vmem [shape: f32[1,384], index: 10, kind: input, shape index: {}]
  %s11 = inlined_call_operand.vmem [shape: f32[256,384], index: 11, kind: output, shape index: {}]
  %s12 = sld [smem:[#allocation0]]
  $region77: #{forward.1} parent=0
    _
  %s14 = ssub.s32 1, %s12
  %s15 = scalar_select 0, %s14, %s12
  loop: start=0, step=1, limit=4
  $region2: #{forward.1} parent=0 // loop_pre_header
    _
  $region3: #{forward.1} parent=0 // loop_header
    %s17 = sphi 0, %s21
    %p18 = scmp.ge.s32.totalorder %s17, 4
    %s25 = sphi 0, %s25
    %s27 = sphi 0, %s25
    %s28 = sphi 0, %s27
    %s42 = sphi 0, %s28
    %s46 = sphi 0, %s46
    %s48 = sphi 0, %s46
    %s49 = sphi 0, %s48
    %s63 = sphi 0, %s49
    %s69 = sphi 0, %s71
    %s72 = sphi 0, %s69
    %s73 = sphi 0, %s72
    %s89 = sphi 0, %s73
    %s93 = sphi 0, %s93
    %s95 = sphi 0, %s93
    %s96 = sphi 0, %s95
    %s110 = sphi 0, %s96
    %s114 = sphi 0, %s114
    %s116 = sphi 0, %s114
    %s117 = sphi 0, %s116
    %s131 = sphi 0, %s117
    %s135 = sphi 0, %s135
    %s137 = sphi 0, %s135
    %s138 = sphi 0, %s137
    %s152 = sphi 0, %s138
    %s156 = sphi 0, %s156
    %s158 = sphi 0, %s156
    %s159 = sphi 0, %s158
    %s173 = sphi 0, %s159
    %s177 = sphi 0, %s177
    %s179 = sphi 0, %s177
    %s180 = sphi 0, %s179
    %s194 = sphi 0, %s180
    %s198 = sphi 0, %s198
    %s200 = sphi 0, %s198
    %s201 = sphi 0, %s200
    %s215 = sphi 0, %s201
    %s219 = sphi 0, %s219
    %s221 = sphi 0, %s219
    %s222 = sphi 0, %s221
    %s236 = sphi 0, %s222
    %s240 = sphi 0, %s240
    %s242 = sphi 0, %s240
    %s243 = sphi 0, %s242
    %s257 = sphi 0, %s243
    %s263 = sphi 0, %s265
    %s266 = sphi 0, %s263
    %s267 = sphi 0, %s266
    %s283 = sphi 0, %s267
  $region4: #{forward.1} parent=0 // loop_header_branch
    %20 = sbr.rel (%p18) target = $region8
  $region5: #{forward.1} parent=0 // loop_body
    %s22 = ssub.s32 %s17, 1
    %s23 = ssub.s32 %s17, 2
    %s24 = sadd.s32 %s17, 1
    %s26 = sadd.s32 %s25, 1
    %p29 = scmp.eq.s32.totalorder %s17, 1
    %p30 = scmp.ne.s32.totalorder %s25, %s27
    %p31 = scmp.eq.s32.totalorder %s17, 0
    %p32 = por %p30, %p31
    %p33 = scmp.ne.s32.totalorder %s25, %s27
    %p34 = scmp.eq.s32.totalorder %s22, 1
    %p35 = por %p33, %p34
    %p36 = scmp.ne.s32.totalorder %s27, %s28
    %p37 = scmp.eq.s32.totalorder %s22, 0
    %p38 = por %p36, %p37
    %p39 = scmp.ne.s32.totalorder %s27, %s28
    %p40 = scmp.eq.s32.totalorder %s23, 1
    %p41 = por %p39, %p40
    %p43 = scmp.ne.s32.totalorder %s28, %s42
    %p44 = scmp.eq.s32.totalorder %s23, 0
    %p45 = por %p43, %p44
    %s47 = sadd.s32 %s46, 1
    %p50 = scmp.eq.s32.totalorder %s17, 1
    %p51 = scmp.ne.s32.totalorder %s46, %s48
    %p52 = scmp.eq.s32.totalorder %s17, 0
    %p53 = por %p51, %p52
    %p54 = scmp.ne.s32.totalorder %s46, %s48
    %p55 = scmp.eq.s32.totalorder %s22, 1
    %p56 = por %p54, %p55
    %p57 = scmp.ne.s32.totalorder %s48, %s49
    %p58 = scmp.eq.s32.totalorder %s22, 0
    %p59 = por %p57, %p58
    %p60 = scmp.ne.s32.totalorder %s48, %s49
    %p61 = scmp.eq.s32.totalorder %s23, 1
    %p62 = por %p60, %p61
    %p64 = scmp.ne.s32.totalorder %s49, %s63
    %p65 = scmp.eq.s32.totalorder %s23, 0
    %p66 = por %p64, %p65
    %s67 = ssub.s32 %s17, %s24
    %p68 = scmp.eq.s32.totalorder %s67, 0
    %s70 = sadd.s32 %s69, 1
    %s71 = scalar_select %p68, %s69, %s70
    %p74 = pneg %p68
    %p75 = scmp.eq.s32.totalorder %s17, 1
    %p76 = por %p74, %p75
    %p77 = scmp.ne.s32.totalorder %s69, %s72
    %p78 = scmp.eq.s32.totalorder %s17, 0
    %p79 = por %p77, %p78
    %p80 = scmp.ne.s32.totalorder %s69, %s72
    %p81 = scmp.eq.s32.totalorder %s22, 1
    %p82 = por %p80, %p81
    %p83 = scmp.ne.s32.totalorder %s72, %s73
    %p84 = scmp.eq.s32.totalorder %s22, 0
    %p85 = por %p83, %p84
    %p86 = scmp.ne.s32.totalorder %s72, %s73
    %p87 = scmp.eq.s32.totalorder %s23, 1
    %p88 = por %p86, %p87
    %p90 = scmp.ne.s32.totalorder %s73, %s89
    %p91 = scmp.eq.s32.totalorder %s23, 0
    %p92 = por %p90, %p91
    %s94 = sadd.s32 %s93, 1
    %p97 = scmp.eq.s32.totalorder %s17, 1
    %p98 = scmp.ne.s32.totalorder %s93, %s95
    %p99 = scmp.eq.s32.totalorder %s17, 0
    %p100 = por %p98, %p99
    %p101 = scmp.ne.s32.totalorder %s93, %s95
    %p102 = scmp.eq.s32.totalorder %s22, 1
    %p103 = por %p101, %p102
    %p104 = scmp.ne.s32.totalorder %s95, %s96
    %p105 = scmp.eq.s32.totalorder %s22, 0
    %p106 = por %p104, %p105
    %p107 = scmp.ne.s32.totalorder %s95, %s96
    %p108 = scmp.eq.s32.totalorder %s23, 1
    %p109 = por %p107, %p108
    %p111 = scmp.ne.s32.totalorder %s96, %s110
    %p112 = scmp.eq.s32.totalorder %s23, 0
    %p113 = por %p111, %p112
    %s115 = sadd.s32 %s114, 1
    %p118 = scmp.eq.s32.totalorder %s17, 1
    %p119 = scmp.ne.s32.totalorder %s114, %s116
    %p120 = scmp.eq.s32.totalorder %s17, 0
    %p121 = por %p119, %p120
    %p122 = scmp.ne.s32.totalorder %s114, %s116
    %p123 = scmp.eq.s32.totalorder %s22, 1
    %p124 = por %p122, %p123
    %p125 = scmp.ne.s32.totalorder %s116, %s117
    %p126 = scmp.eq.s32.totalorder %s22, 0
    %p127 = por %p125, %p126
    %p128 = scmp.ne.s32.totalorder %s116, %s117
    %p129 = scmp.eq.s32.totalorder %s23, 1
    %p130 = por %p128, %p129
    %p132 = scmp.ne.s32.totalorder %s117, %s131
    %p133 = scmp.eq.s32.totalorder %s23, 0
    %p134 = por %p132, %p133
    %s136 = sadd.s32 %s135, 1
    %p139 = scmp.eq.s32.totalorder %s17, 1
    %p140 = scmp.ne.s32.totalorder %s135, %s137
    %p141 = scmp.eq.s32.totalorder %s17, 0
    %p142 = por %p140, %p141
    %p143 = scmp.ne.s32.totalorder %s135, %s137
    %p144 = scmp.eq.s32.totalorder %s22, 1
    %p145 = por %p143, %p144
    %p146 = scmp.ne.s32.totalorder %s137, %s138
    %p147 = scmp.eq.s32.totalorder %s22, 0
    %p148 = por %p146, %p147
    %p149 = scmp.ne.s32.totalorder %s137, %s138
    %p150 = scmp.eq.s32.totalorder %s23, 1
    %p151 = por %p149, %p150
    %p153 = scmp.ne.s32.totalorder %s138, %s152
    %p154 = scmp.eq.s32.totalorder %s23, 0
    %p155 = por %p153, %p154
    %s157 = sadd.s32 %s156, 1
    %p160 = scmp.eq.s32.totalorder %s17, 1
    %p161 = scmp.ne.s32.totalorder %s156, %s158
    %p162 = scmp.eq.s32.totalorder %s17, 0
    %p163 = por %p161, %p162
    %p164 = scmp.ne.s32.totalorder %s156, %s158
    %p165 = scmp.eq.s32.totalorder %s22, 1
    %p166 = por %p164, %p165
    %p167 = scmp.ne.s32.totalorder %s158, %s159
    %p168 = scmp.eq.s32.totalorder %s22, 0
    %p169 = por %p167, %p168
    %p170 = scmp.ne.s32.totalorder %s158, %s159
    %p171 = scmp.eq.s32.totalorder %s23, 1
    %p172 = por %p170, %p171
    %p174 = scmp.ne.s32.totalorder %s159, %s173
    %p175 = scmp.eq.s32.totalorder %s23, 0
    %p176 = por %p174, %p175
    %s178 = sadd.s32 %s177, 1
    %p181 = scmp.eq.s32.totalorder %s17, 1
    %p182 = scmp.ne.s32.totalorder %s177, %s179
    %p183 = scmp.eq.s32.totalorder %s17, 0
    %p184 = por %p182, %p183
    %p185 = scmp.ne.s32.totalorder %s177, %s179
    %p186 = scmp.eq.s32.totalorder %s22, 1
    %p187 = por %p185, %p186
    %p188 = scmp.ne.s32.totalorder %s179, %s180
    %p189 = scmp.eq.s32.totalorder %s22, 0
    %p190 = por %p188, %p189
    %p191 = scmp.ne.s32.totalorder %s179, %s180
    %p192 = scmp.eq.s32.totalorder %s23, 1
    %p193 = por %p191, %p192
    %p195 = scmp.ne.s32.totalorder %s180, %s194
    %p196 = scmp.eq.s32.totalorder %s23, 0
    %p197 = por %p195, %p196
    %s199 = sadd.s32 %s198, 1
    %p202 = scmp.eq.s32.totalorder %s17, 1
    %p203 = scmp.ne.s32.totalorder %s198, %s200
    %p204 = scmp.eq.s32.totalorder %s17, 0
    %p205 = por %p203, %p204
    %p206 = scmp.ne.s32.totalorder %s198, %s200
    %p207 = scmp.eq.s32.totalorder %s22, 1
    %p208 = por %p206, %p207
    %p209 = scmp.ne.s32.totalorder %s200, %s201
    %p210 = scmp.eq.s32.totalorder %s22, 0
    %p211 = por %p209, %p210
    %p212 = scmp.ne.s32.totalorder %s200, %s201
    %p213 = scmp.eq.s32.totalorder %s23, 1
    %p214 = por %p212, %p213
    %p216 = scmp.ne.s32.totalorder %s201, %s215
    %p217 = scmp.eq.s32.totalorder %s23, 0
    %p218 = por %p216, %p217
    %s220 = sadd.s32 %s219, 1
    %p223 = scmp.eq.s32.totalorder %s17, 1
    %p224 = scmp.ne.s32.totalorder %s219, %s221
    %p225 = scmp.eq.s32.totalorder %s17, 0
    %p226 = por %p224, %p225
    %p227 = scmp.ne.s32.totalorder %s219, %s221
    %p228 = scmp.eq.s32.totalorder %s22, 1
    %p229 = por %p227, %p228
    %p230 = scmp.ne.s32.totalorder %s221, %s222
    %p231 = scmp.eq.s32.totalorder %s22, 0
    %p232 = por %p230, %p231
    %p233 = scmp.ne.s32.totalorder %s221, %s222
    %p234 = scmp.eq.s32.totalorder %s23, 1
    %p235 = por %p233, %p234
    %p237 = scmp.ne.s32.totalorder %s222, %s236
    %p238 = scmp.eq.s32.totalorder %s23, 0
    %p239 = por %p237, %p238
    %s241 = sadd.s32 %s240, 1
    %p244 = scmp.eq.s32.totalorder %s17, 1
    %p245 = scmp.ne.s32.totalorder %s240, %s242
    %p246 = scmp.eq.s32.totalorder %s17, 0
    %p247 = por %p245, %p246
    %p248 = scmp.ne.s32.totalorder %s240, %s242
    %p249 = scmp.eq.s32.totalorder %s22, 1
    %p250 = por %p248, %p249
    %p251 = scmp.ne.s32.totalorder %s242, %s243
    %p252 = scmp.eq.s32.totalorder %s22, 0
    %p253 = por %p251, %p252
    %p254 = scmp.ne.s32.totalorder %s242, %s243
    %p255 = scmp.eq.s32.totalorder %s23, 1
    %p256 = por %p254, %p255
    %p258 = scmp.ne.s32.totalorder %s243, %s257
    %p259 = scmp.eq.s32.totalorder %s23, 0
    %p260 = por %p258, %p259
    %s261 = ssub.s32 %s17, %s24
    %p262 = scmp.eq.s32.totalorder %s261, 0
    %s264 = sadd.s32 %s263, 1
    %s265 = scalar_select %p262, %s263, %s264
    %p268 = pneg %p262
    %p269 = scmp.eq.s32.totalorder %s17, 1
    %p270 = por %p268, %p269
    %p271 = scmp.ne.s32.totalorder %s263, %s266
    %p272 = scmp.eq.s32.totalorder %s17, 0
    %p273 = por %p271, %p272
    %p274 = scmp.ne.s32.totalorder %s263, %s266
    %p275 = scmp.eq.s32.totalorder %s22, 1
    %p276 = por %p274, %p275
    %p277 = scmp.ne.s32.totalorder %s266, %s267
    %p278 = scmp.eq.s32.totalorder %s22, 0
    %p279 = por %p277, %p278
    %p280 = scmp.ne.s32.totalorder %s266, %s267
    %p281 = scmp.eq.s32.totalorder %s23, 1
    %p282 = por %p280, %p281
    %p284 = scmp.ne.s32.totalorder %s267, %s283
    %p285 = scmp.eq.s32.totalorder %s23, 0
    %p286 = por %p284, %p285
    %p287 = scmp.le.s32.totalorder 1, %s17
    %p288 = scmp.lt.s32.totalorder %s17, 3
    %p289 = pnand %p287, %p288
    %p290 = pneg %p289
    // Predicated region
    $region9: #{forward.1} parent=5 // pred_check
      _
    $region10: #{forward.1} parent=5 // pred_check_branch
      %292 = sbr.rel (%p289) target = $region12
    $region11: #{forward.1} parent=5 // pred_region
      %s293 = ssub.s32 %s17, 1
      // Predicated region
      $region13: #{forward.1} parent=11 // pred_check
        %p294 = pneg %p38
      $region14: #{forward.1} parent=11 // pred_check_branch
        %296 = sbr.rel (%p294) target = $region16
      $region15: #{forward.1} parent=11 // pred_region
        _
      $region16: #{forward.1} parent=11 // pred_fallthru
        _
      // Predicated region
      $region17: #{forward.1} parent=11 // pred_check
        %p297 = pneg %p59
      $region18: #{forward.1} parent=11 // pred_check_branch
        %299 = sbr.rel (%p297) target = $region20
      $region19: #{forward.1} parent=11 // pred_region
        _
      $region20: #{forward.1} parent=11 // pred_fallthru
        _
      // Predicated region
      $region21: #{forward.1} parent=11 // pred_check
        %p300 = pneg %p106
      $region22: #{forward.1} parent=11 // pred_check_branch
        %302 = sbr.rel (%p300) target = $region24
      $region23: #{forward.1} parent=11 // pred_region
        _
      $region24: #{forward.1} parent=11 // pred_fallthru
        _
      // Predicated region
      $region25: #{forward.1} parent=11 // pred_check
        %p303 = pneg %p127
      $region26: #{forward.1} parent=11 // pred_check_branch
        %305 = sbr.rel (%p303) target = $region28
      $region27: #{forward.1} parent=11 // pred_region
        _
      $region28: #{forward.1} parent=11 // pred_fallthru
        _
      // Predicated region
      $region29: #{forward.1} parent=11 // pred_check
        %p306 = pneg %p148
      $region30: #{forward.1} parent=11 // pred_check_branch
        %308 = sbr.rel (%p306) target = $region32
      $region31: #{forward.1} parent=11 // pred_region
        _
      $region32: #{forward.1} parent=11 // pred_fallthru
        _
      // Predicated region
      $region33: #{forward.1} parent=11 // pred_check
        %p309 = pneg %p169
      $region34: #{forward.1} parent=11 // pred_check_branch
        %311 = sbr.rel (%p309) target = $region36
      $region35: #{forward.1} parent=11 // pred_region
        _
      $region36: #{forward.1} parent=11 // pred_fallthru
        _
      // Predicated region
      $region37: #{forward.1} parent=11 // pred_check
        %p312 = pneg %p190
      $region38: #{forward.1} parent=11 // pred_check_branch
        %314 = sbr.rel (%p312) target = $region40
      $region39: #{forward.1} parent=11 // pred_region
        _
      $region40: #{forward.1} parent=11 // pred_fallthru
        _
      // Predicated region
      $region41: #{forward.1} parent=11 // pred_check
        %p315 = pneg %p211
      $region42: #{forward.1} parent=11 // pred_check_branch
        %317 = sbr.rel (%p315) target = $region44
      $region43: #{forward.1} parent=11 // pred_region
        _
      $region44: #{forward.1} parent=11 // pred_fallthru
        _
      // Predicated region
      $region45: #{forward.1} parent=11 // pred_check
        %p318 = pneg %p232
      $region46: #{forward.1} parent=11 // pred_check_branch
        %320 = sbr.rel (%p318) target = $region48
      $region47: #{forward.1} parent=11 // pred_region
        _
      $region48: #{forward.1} parent=11 // pred_fallthru
        _
      // Predicated region
      $region49: #{forward.1} parent=11 // pred_check
        %p321 = pneg %p253
      $region50: #{forward.1} parent=11 // pred_check_branch
        %323 = sbr.rel (%p321) target = $region52
      $region51: #{forward.1} parent=11 // pred_region
        _
      $region52: #{forward.1} parent=11 // pred_fallthru
        _
    $region12: #{forward.1} parent=5 // pred_fallthru
      _
    %p324 = scmp.lt.s32.totalorder %s17, 2
    // Predicated region
    $region53: #{forward.1} parent=5 // pred_check
      %p325 = pneg %p324
    $region54: #{forward.1} parent=5 // pred_check_branch
      %327 = sbr.rel (%p325) target = $region56
    $region55: #{forward.1} parent=5 // pred_region
      // Predicated region
      $region57: #{forward.1} parent=55 // pred_check
        %p328 = pneg %p79
      $region58: #{forward.1} parent=55 // pred_check_branch
        %330 = sbr.rel (%p328) target = $region60
      $region59: #{forward.1} parent=55 // pred_region
        %s331 = smul.u32 16, %s17
        %p332 = scmp.lt.s32.totalorder %s331, 31
        %s333 = scalar_select %p332, %s331, 31
        %s334 = smul.addr %s333, 4
        %s335 = scalar_lea.vmem %s2, %s334
        %s336 = smul.u32 16, %s17
      $region60: #{forward.1} parent=55 // pred_fallthru
        _
    $region56: #{forward.1} parent=5 // pred_fallthru
      _
    %p337 = scmp.le.s32.totalorder 1, %s17
    %p338 = scmp.lt.s32.totalorder %s17, 3
    %p339 = pnand %p337, %p338
    %p340 = pneg %p339
    // Predicated region
    $region61: #{forward.1} parent=5 // pred_check
      _
    $region62: #{forward.1} parent=5 // pred_check_branch
      %342 = sbr.rel (%p339) target = $region64
    $region63: #{forward.1} parent=5 // pred_region
      %s343 = ssub.s32 %s17, 1
      %p344 = pneg %p38
      %p345 = pneg %p35
      %p346 = pneg %p59
      %p347 = pneg %p56
      %s348 = smul.u32 16, %s22
      %p349 = scmp.lt.s32.totalorder %s348, 31
      %s350 = scalar_select %p349, %s348, 31
      %s351 = smul.addr %s350, 4
      %s352 = scalar_lea.vmem %s2, %s351
      %p353 = pneg %p85
      %p354 = pneg %p82
      %p355 = pneg %p106
      %p356 = pneg %p103
      %p357 = pneg %p127
      %p358 = pneg %p124
      %p359 = pneg %p148
      %p360 = pneg %p145
      %p361 = pneg %p169
      %p362 = pneg %p166
      %p363 = pneg %p190
      %p364 = pneg %p187
      %p365 = pneg %p211
      %p366 = pneg %p208
      %p367 = pneg %p232
      %p368 = pneg %p229
      %p369 = pneg %p253
      %p370 = pneg %p250
      %p371 = pneg %p279
      %p372 = pneg %p276
      %s373 = smul.u32 16, %s22
      %p374 = scmp.lt.s32.totalorder %s373, 31
      %s375 = scalar_select %p374, %s373, 31
      %s376 = smul.addr %s375, 3
      %s377 = smul.addr %s376, 8
      %s378 = scalar_lea.vmem %s11, %s377
      %s379 = smul.u32 16, %s22
      %p380 = scmp.lt.s32.totalorder %s379, 31
      %s381 = scalar_select %p380, %s379, 31
      %s382 = smul.addr %s381, 4
      %s383 = scalar_lea.vmem %s2, %s382
      %s384 = smul.u32 16, %s22
      %s385 = smul.u32 16, %s22
      %p386 = scmp.lt.s32.totalorder %s385, 31
      %s387 = scalar_select %p386, %s385, 31
      %s388 = smul.addr %s387, 3
      %s389 = smul.addr %s388, 8
      %s390 = scalar_lea.vmem %s11, %s389
      %s391 = smul.u32 16, %s22
      %v393 = vld [vmem:[%s383] sm:$0xf]
      %v394 = vld [vmem:[%s383 + $0x4] sm:$0xf]
      %v395 = vld [vmem:[%s383 + $0x8] sm:$0xf]
      %v396 = vld [vmem:[%s383 + $0xc] sm:$0xf]
      %v397 = vld [vmem:[%s383 + $0x10] sm:$0xf]
      %v398 = vld [vmem:[%s383 + $0x14] sm:$0xf]
      %v399 = vld [vmem:[%s383 + $0x18] sm:$0xf]
      %v400 = vld [vmem:[%s383 + $0x1c] sm:$0xf]
      %v401 = vld [vmem:[%s383 + $0x20] sm:$0xf]
      %v402 = vld [vmem:[%s383 + $0x24] sm:$0xf]
      %v403 = vld [vmem:[%s383 + $0x28] sm:$0xf]
      %v404 = vld [vmem:[%s383 + $0x2c] sm:$0xf]
      %v405 = vld [vmem:[%s383 + $0x30] sm:$0xf]
      %v406 = vld [vmem:[%s383 + $0x34] sm:$0xf]
      %v407 = vld [vmem:[%s383 + $0x38] sm:$0xf]
      %v408 = vld [vmem:[%s383 + $0x3c] sm:$0xf]
      %v409 = vld [vmem:[%s0] sm:$0xff]
      %v410 = vld [vmem:[%s0 + $0x8] sm:$0xff]
      %v411 = vld [vmem:[%s0 + $0x10] sm:$0xff]
      %v412 = vld [vmem:[%s0 + $0x18] sm:$0xff]
      %v413 = vld [vmem:[%s0 + $0x20] sm:$0xff]
      %v414 = vld [vmem:[%s0 + $0x28] sm:$0xff]
      %v415 = vld [vmem:[%s0 + $0x30] sm:$0xff]
      %v416 = vld [vmem:[%s0 + $0x38] sm:$0xff]
      %v417 = vld [vmem:[%s0 + $0x40] sm:$0xff]
      %v418 = vld [vmem:[%s0 + $0x48] sm:$0xff]
      %v419 = vld [vmem:[%s0 + $0x50] sm:$0xff]
      %v420 = vld [vmem:[%s0 + $0x58] sm:$0xff]
      %v421 = vld [vmem:[%s0 + $0x60] sm:$0xff]
      %v422 = vld [vmem:[%s0 + $0x68] sm:$0xff]
      %v423 = vld [vmem:[%s0 + $0x70] sm:$0xff]
      %v424 = vld [vmem:[%s0 + $0x78] sm:$0xff]
      %v425 = vld [vmem:[%s1] sm:$0x1]
      %v426 = vld [vmem:[%s3] sm:$0xff]
      %v427 = vld [vmem:[%s3 + $0x8] sm:$0xff]
      %v428 = vld [vmem:[%s3 + $0x10] sm:$0xff]
      %v429 = vld [vmem:[%s3 + $0x18] sm:$0xff]
      %v430 = vld [vmem:[%s3 + $0x20] sm:$0xff]
      %v431 = vld [vmem:[%s3 + $0x28] sm:$0xff]
      %v432 = vld [vmem:[%s3 + $0x30] sm:$0xff]
      %v433 = vld [vmem:[%s3 + $0x38] sm:$0xff]
      %v434 = vld [vmem:[%s3 + $0x40] sm:$0xff]
      %v435 = vld [vmem:[%s3 + $0x48] sm:$0xff]
      %v436 = vld [vmem:[%s3 + $0x50] sm:$0xff]
      %v437 = vld [vmem:[%s3 + $0x58] sm:$0xff]
      %v438 = vld [vmem:[%s3 + $0x60] sm:$0xff]
      %v439 = vld [vmem:[%s3 + $0x68] sm:$0xff]
      %v440 = vld [vmem:[%s3 + $0x70] sm:$0xff]
      %v441 = vld [vmem:[%s3 + $0x78] sm:$0xff]
      %v442 = vld [vmem:[%s3 + $0x80] sm:$0xff]
      %v443 = vld [vmem:[%s3 + $0x88] sm:$0xff]
      %v444 = vld [vmem:[%s3 + $0x90] sm:$0xff]
      %v445 = vld [vmem:[%s3 + $0x98] sm:$0xff]
      %v446 = vld [vmem:[%s3 + $0xa0] sm:$0xff]
      %v447 = vld [vmem:[%s3 + $0xa8] sm:$0xff]
      %v448 = vld [vmem:[%s3 + $0xb0] sm:$0xff]
      %v449 = vld [vmem:[%s3 + $0xb8] sm:$0xff]
      %v450 = vld [vmem:[%s3 + $0xc0] sm:$0xff]
      %v451 = vld [vmem:[%s3 + $0xc8] sm:$0xff]
      %v452 = vld [vmem:[%s3 + $0xd0] sm:$0xff]
      %v453 = vld [vmem:[%s3 + $0xd8] sm:$0xff]
      %v454 = vld [vmem:[%s3 + $0xe0] sm:$0xff]
      %v455 = vld [vmem:[%s3 + $0xe8] sm:$0xff]
      %v456 = vld [vmem:[%s3 + $0xf0] sm:$0xff]
      %v457 = vld [vmem:[%s3 + $0xf8] sm:$0xff]
      %v458 = vld [vmem:[%s3 + $0x100] sm:$0xff]
      %v459 = vld [vmem:[%s3 + $0x108] sm:$0xff]
      %v460 = vld [vmem:[%s3 + $0x110] sm:$0xff]
      %v461 = vld [vmem:[%s3 + $0x118] sm:$0xff]
      %v462 = vld [vmem:[%s3 + $0x120] sm:$0xff]
      %v463 = vld [vmem:[%s3 + $0x128] sm:$0xff]
      %v464 = vld [vmem:[%s3 + $0x130] sm:$0xff]
      %v465 = vld [vmem:[%s3 + $0x138] sm:$0xff]
      %v466 = vld [vmem:[%s3 + $0x140] sm:$0xff]
      %v467 = vld [vmem:[%s3 + $0x148] sm:$0xff]
      %v468 = vld [vmem:[%s3 + $0x150] sm:$0xff]
      %v469 = vld [vmem:[%s3 + $0x158] sm:$0xff]
      %v470 = vld [vmem:[%s3 + $0x160] sm:$0xff]
      %v471 = vld [vmem:[%s3 + $0x168] sm:$0xff]
      %v472 = vld [vmem:[%s3 + $0x170] sm:$0xff]
      %v473 = vld [vmem:[%s3 + $0x178] sm:$0xff]
      %v474 = vld [vmem:[%s3 + $0x180] sm:$0xff]
      %v475 = vld [vmem:[%s3 + $0x188] sm:$0xff]
      %v476 = vld [vmem:[%s3 + $0x190] sm:$0xff]
      %v477 = vld [vmem:[%s3 + $0x198] sm:$0xff]
      %v478 = vld [vmem:[%s3 + $0x1a0] sm:$0xff]
      %v479 = vld [vmem:[%s3 + $0x1a8] sm:$0xff]
      %v480 = vld [vmem:[%s3 + $0x1b0] sm:$0xff]
      %v481 = vld [vmem:[%s3 + $0x1b8] sm:$0xff]
      %v482 = vld [vmem:[%s3 + $0x1c0] sm:$0xff]
      %v483 = vld [vmem:[%s3 + $0x1c8] sm:$0xff]
      %v484 = vld [vmem:[%s3 + $0x1d0] sm:$0xff]
      %v485 = vld [vmem:[%s3 + $0x1d8] sm:$0xff]
      %v486 = vld [vmem:[%s3 + $0x1e0] sm:$0xff]
      %v487 = vld [vmem:[%s3 + $0x1e8] sm:$0xff]
      %v488 = vld [vmem:[%s3 + $0x1f0] sm:$0xff]
      %v489 = vld [vmem:[%s3 + $0x1f8] sm:$0xff]
      %v490 = vld [vmem:[%s4] sm:$0xff]
      %v492 = vlaneseq
      %v493 = vshrl.u32 %v492, 7
      %v494 = vsub.s32 0, %v493
      %v495 = vrot.slane %v490, %v494
      %v496 = vlaneseq
      %v497 = vshrl.u32 %v496, 7
      %v498 = vsub.s32 1, %v497
      %v499 = vrot.slane %v490, %v498
      %v500 = vlaneseq
      %v501 = vshrl.u32 %v500, 7
      %v502 = vsub.s32 2, %v501
      %v503 = vrot.slane %v490, %v502
      %v504 = vlaneseq
      %v505 = vshrl.u32 %v504, 7
      %v506 = vsub.s32 3, %v505
      %v507 = vrot.slane %v490, %v506
      %v508 = vlaneseq
      %v509 = vshrl.u32 %v508, 7
      %v510 = vsub.s32 4, %v509
      %v511 = vrot.slane %v490, %v510
      %v512 = vlaneseq
      %v513 = vshrl.u32 %v512, 7
      %v514 = vsub.s32 5, %v513
      %v515 = vrot.slane %v490, %v514
      %v516 = vlaneseq
      %v517 = vshrl.u32 %v516, 7
      %v518 = vsub.s32 6, %v517
      %v519 = vrot.slane %v490, %v518
      %v520 = vlaneseq
      %v521 = vshrl.u32 %v520, 7
      %v522 = vsub.s32 7, %v521
      %v523 = vrot.slane %v490, %v522
      %v548 = vunpack.c.l.b16 %v393
      %v549 = vunpack.c.l.b16 %v394
      %v550 = vunpack.c.l.b16 %v395
      %v551 = vunpack.c.l.b16 %v396
      %v552 = vunpack.c.l.b16 %v397
      %v553 = vunpack.c.l.b16 %v398
      %v554 = vunpack.c.l.b16 %v399
      %v555 = vunpack.c.l.b16 %v400
      %v556 = vunpack.c.l.b16 %v401
      %v557 = vunpack.c.l.b16 %v402
      %v558 = vunpack.c.l.b16 %v403
      %v559 = vunpack.c.l.b16 %v404
      %v560 = vunpack.c.l.b16 %v405
      %v561 = vunpack.c.l.b16 %v406
      %v562 = vunpack.c.l.b16 %v407
      %v563 = vunpack.c.l.b16 %v408
      %v564 = vpack.c.b16 %v549, %v548
      %v565 = vpack.c.b16 %v551, %v550
      %v566 = vpack.c.b16 %v553, %v552
      %v567 = vpack.c.b16 %v555, %v554
      %v568 = vpack.c.b16 %v557, %v556
      %v569 = vpack.c.b16 %v559, %v558
      %v570 = vpack.c.b16 %v561, %v560
      %v571 = vpack.c.b16 %v563, %v562
      %v644 = vunpack.c.l.b16 %v426
      %v645 = vunpack.c.h.b16 %v426
      %v646 = vunpack.c.l.b16 %v427
      %v647 = vunpack.c.h.b16 %v427
      %v648 = vunpack.c.l.b16 %v428
      %v649 = vunpack.c.h.b16 %v428
      %v650 = vunpack.c.l.b16 %v429
      %v651 = vunpack.c.h.b16 %v429
      %v652 = vunpack.c.l.b16 %v430
      %v653 = vunpack.c.h.b16 %v430
      %v654 = vunpack.c.l.b16 %v431
      %v655 = vunpack.c.h.b16 %v431
      %v656 = vunpack.c.l.b16 %v432
      %v657 = vunpack.c.h.b16 %v432
      %v658 = vunpack.c.l.b16 %v433
      %v659 = vunpack.c.h.b16 %v433
      %v660 = vunpack.c.l.b16 %v434
      %v661 = vunpack.c.h.b16 %v434
      %v662 = vunpack.c.l.b16 %v435
      %v663 = vunpack.c.h.b16 %v435
      %v664 = vunpack.c.l.b16 %v436
      %v665 = vunpack.c.h.b16 %v436
      %v666 = vunpack.c.l.b16 %v437
      %v667 = vunpack.c.h.b16 %v437
      %v668 = vunpack.c.l.b16 %v438
      %v669 = vunpack.c.h.b16 %v438
      %v670 = vunpack.c.l.b16 %v439
      %v671 = vunpack.c.h.b16 %v439
      %v672 = vunpack.c.l.b16 %v440
      %v673 = vunpack.c.h.b16 %v440
      %v674 = vunpack.c.l.b16 %v441
      %v675 = vunpack.c.h.b16 %v441
      %v676 = vunpack.c.l.b16 %v442
      %v677 = vunpack.c.h.b16 %v442
      %v678 = vunpack.c.l.b16 %v443
      %v679 = vunpack.c.h.b16 %v443
      %v680 = vunpack.c.l.b16 %v444
      %v681 = vunpack.c.h.b16 %v444
      %v682 = vunpack.c.l.b16 %v445
      %v683 = vunpack.c.h.b16 %v445
      %v684 = vunpack.c.l.b16 %v446
      %v685 = vunpack.c.h.b16 %v446
      %v686 = vunpack.c.l.b16 %v447
      %v687 = vunpack.c.h.b16 %v447
      %v688 = vunpack.c.l.b16 %v448
      %v689 = vunpack.c.h.b16 %v448
      %v690 = vunpack.c.l.b16 %v449
      %v691 = vunpack.c.h.b16 %v449
      %v692 = vunpack.c.l.b16 %v450
      %v693 = vunpack.c.h.b16 %v450
      %v694 = vunpack.c.l.b16 %v451
      %v695 = vunpack.c.h.b16 %v451
      %v696 = vunpack.c.l.b16 %v452
      %v697 = vunpack.c.h.b16 %v452
      %v698 = vunpack.c.l.b16 %v453
      %v699 = vunpack.c.h.b16 %v453
      %v700 = vunpack.c.l.b16 %v454
      %v701 = vunpack.c.h.b16 %v454
      %v702 = vunpack.c.l.b16 %v455
      %v703 = vunpack.c.h.b16 %v455
      %v704 = vunpack.c.l.b16 %v456
      %v705 = vunpack.c.h.b16 %v456
      %v706 = vunpack.c.l.b16 %v457
      %v707 = vunpack.c.h.b16 %v457
      %v708 = vunpack.c.l.b16 %v458
      %v709 = vunpack.c.h.b16 %v458
      %v710 = vunpack.c.l.b16 %v459
      %v711 = vunpack.c.h.b16 %v459
      %v712 = vunpack.c.l.b16 %v460
      %v713 = vunpack.c.h.b16 %v460
      %v714 = vunpack.c.l.b16 %v461
      %v715 = vunpack.c.h.b16 %v461
      %v716 = vunpack.c.l.b16 %v462
      %v717 = vunpack.c.h.b16 %v462
      %v718 = vunpack.c.l.b16 %v463
      %v719 = vunpack.c.h.b16 %v463
      %v720 = vunpack.c.l.b16 %v464
      %v721 = vunpack.c.h.b16 %v464
      %v722 = vunpack.c.l.b16 %v465
      %v723 = vunpack.c.h.b16 %v465
      %v724 = vunpack.c.l.b16 %v466
      %v725 = vunpack.c.h.b16 %v466
      %v726 = vunpack.c.l.b16 %v467
      %v727 = vunpack.c.h.b16 %v467
      %v728 = vunpack.c.l.b16 %v468
      %v729 = vunpack.c.h.b16 %v468
      %v730 = vunpack.c.l.b16 %v469
      %v731 = vunpack.c.h.b16 %v469
      %v732 = vunpack.c.l.b16 %v470
      %v733 = vunpack.c.h.b16 %v470
      %v734 = vunpack.c.l.b16 %v471
      %v735 = vunpack.c.h.b16 %v471
      %v736 = vunpack.c.l.b16 %v472
      %v737 = vunpack.c.h.b16 %v472
      %v738 = vunpack.c.l.b16 %v473
      %v739 = vunpack.c.h.b16 %v473
      %v740 = vunpack.c.l.b16 %v474
      %v741 = vunpack.c.h.b16 %v474
      %v742 = vunpack.c.l.b16 %v475
      %v743 = vunpack.c.h.b16 %v475
      %v744 = vunpack.c.l.b16 %v476
      %v745 = vunpack.c.h.b16 %v476
      %v746 = vunpack.c.l.b16 %v477
      %v747 = vunpack.c.h.b16 %v477
      %v748 = vunpack.c.l.b16 %v478
      %v749 = vunpack.c.h.b16 %v478
      %v750 = vunpack.c.l.b16 %v479
      %v751 = vunpack.c.h.b16 %v479
      %v752 = vunpack.c.l.b16 %v480
      %v753 = vunpack.c.h.b16 %v480
      %v754 = vunpack.c.l.b16 %v481
      %v755 = vunpack.c.h.b16 %v481
      %v756 = vunpack.c.l.b16 %v482
      %v757 = vunpack.c.h.b16 %v482
      %v758 = vunpack.c.l.b16 %v483
      %v759 = vunpack.c.h.b16 %v483
      %v760 = vunpack.c.l.b16 %v484
      %v761 = vunpack.c.h.b16 %v484
      %v762 = vunpack.c.l.b16 %v485
      %v763 = vunpack.c.h.b16 %v485
      %v764 = vunpack.c.l.b16 %v486
      %v765 = vunpack.c.h.b16 %v486
      %v766 = vunpack.c.l.b16 %v487
      %v767 = vunpack.c.h.b16 %v487
      %v768 = vunpack.c.l.b16 %v488
      %v769 = vunpack.c.h.b16 %v488
      %v770 = vunpack.c.l.b16 %v489
      %v771 = vunpack.c.h.b16 %v489
      %v772 = vpack.c.b16 %v652, %v644
      %v773 = vpack.c.b16 %v653, %v645
      %v774 = vpack.c.b16 %v654, %v646
      %v775 = vpack.c.b16 %v655, %v647
      %v776 = vpack.c.b16 %v656, %v648
      %v777 = vpack.c.b16 %v657, %v649
      %v778 = vpack.c.b16 %v658, %v650
      %v779 = vpack.c.b16 %v659, %v651
      %v780 = vpack.c.b16 %v668, %v660
      %v781 = vpack.c.b16 %v669, %v661
      %v782 = vpack.c.b16 %v670, %v662
      %v783 = vpack.c.b16 %v671, %v663
      %v784 = vpack.c.b16 %v672, %v664
      %v785 = vpack.c.b16 %v673, %v665
      %v786 = vpack.c.b16 %v674, %v666
      %v787 = vpack.c.b16 %v675, %v667
      %v788 = vpack.c.b16 %v684, %v676
      %v789 = vpack.c.b16 %v685, %v677
      %v790 = vpack.c.b16 %v686, %v678
      %v791 = vpack.c.b16 %v687, %v679
      %v792 = vpack.c.b16 %v688, %v680
      %v793 = vpack.c.b16 %v689, %v681
      %v794 = vpack.c.b16 %v690, %v682
      %v795 = vpack.c.b16 %v691, %v683
      %v796 = vpack.c.b16 %v700, %v692
      %v797 = vpack.c.b16 %v701, %v693
      %v798 = vpack.c.b16 %v702, %v694
      %v799 = vpack.c.b16 %v703, %v695
      %v800 = vpack.c.b16 %v704, %v696
      %v801 = vpack.c.b16 %v705, %v697
      %v802 = vpack.c.b16 %v706, %v698
      %v803 = vpack.c.b16 %v707, %v699
      %v804 = vpack.c.b16 %v716, %v708
      %v805 = vpack.c.b16 %v717, %v709
      %v806 = vpack.c.b16 %v718, %v710
      %v807 = vpack.c.b16 %v719, %v711
      %v808 = vpack.c.b16 %v720, %v712
      %v809 = vpack.c.b16 %v721, %v713
      %v810 = vpack.c.b16 %v722, %v714
      %v811 = vpack.c.b16 %v723, %v715
      %v812 = vpack.c.b16 %v732, %v724
      %v813 = vpack.c.b16 %v733, %v725
      %v814 = vpack.c.b16 %v734, %v726
      %v815 = vpack.c.b16 %v735, %v727
      %v816 = vpack.c.b16 %v736, %v728
      %v817 = vpack.c.b16 %v737, %v729
      %v818 = vpack.c.b16 %v738, %v730
      %v819 = vpack.c.b16 %v739, %v731
      %v820 = vpack.c.b16 %v748, %v740
      %v821 = vpack.c.b16 %v749, %v741
      %v822 = vpack.c.b16 %v750, %v742
      %v823 = vpack.c.b16 %v751, %v743
      %v824 = vpack.c.b16 %v752, %v744
      %v825 = vpack.c.b16 %v753, %v745
      %v826 = vpack.c.b16 %v754, %v746
      %v827 = vpack.c.b16 %v755, %v747
      %v828 = vpack.c.b16 %v764, %v756
      %v829 = vpack.c.b16 %v765, %v757
      %v830 = vpack.c.b16 %v766, %v758
      %v831 = vpack.c.b16 %v767, %v759
      %v832 = vpack.c.b16 %v768, %v760
      %v833 = vpack.c.b16 %v769, %v761
      %v834 = vpack.c.b16 %v770, %v762
      %v835 = vpack.c.b16 %v771, %v763
      %900 = vmatprep.subr.bf16.mxu0 %v829
      %901 = vmatpush1.bf16.msra.mxu0 %v828
      %902 = vmatprep.subr.bf16.mxu0 %v821
      %903 = vmatpush1.bf16.msra.mxu0 %v820
      %904 = vmatprep.subr.bf16.mxu0 %v813
      %905 = vmatpush1.bf16.msra.mxu0 %v812
      %906 = vmatprep.subr.bf16.mxu0 %v805
      %907 = vmatpush1.bf16.msra.mxu0 %v804
      %908 = vmatprep.subr.bf16.mxu0 %v797
      %909 = vmatpush1.bf16.msra.mxu0 %v796
      %910 = vmatprep.subr.bf16.mxu0 %v789
      %911 = vmatpush1.bf16.msra.mxu0 %v788
      %912 = vmatprep.subr.bf16.mxu0 %v781
      %913 = vmatpush1.bf16.msra.mxu0 %v780
      %914 = vmatprep.subr.bf16.mxu0 %v773
      %915 = vmatpush1.bf16.msra.mxu0 %v772
      %916 = vmatprep.subr.bf16.mxu0 0
      %917 = vmatpush2.bf16.msra.mxu0 0
      %918 = vmatprep.subr.bf16.mxu0 0
      %919 = vmatpush2.bf16.msra.mxu0 0
      %920 = vmatprep.subr.bf16.mxu0 0
      %921 = vmatpush2.bf16.msra.mxu0 0
      %922 = vmatprep.subr.bf16.mxu0 0
      %923 = vmatpush2.bf16.msra.mxu0 0
      %924 = vmatprep.subr.bf16.mxu0 0
      %925 = vmatpush2.bf16.msra.mxu0 0
      %926 = vmatprep.subr.bf16.mxu0 0
      %927 = vmatpush2.bf16.msra.mxu0 0
      %928 = vmatprep.subr.bf16.mxu0 0
      %929 = vmatpush2.bf16.msra.mxu0 0
      %930 = vmatprep.subr.bf16.mxu0 0
      %931 = vmatpush2.bf16.msra.mxu0 0
      %932 = vmatprep.mubr.bf16.mxu0 0
      %933 = vmatmul.mubr.bf16.gmra.mxu0 %v564
      %v934 = vpop.f32.mrf.mxu0
      %v935 = vadd.f32 %v495, %v934
      %v936 = vpop.f32.mrf.mxu0
      %v937 = vadd.f32 %v499, %v936
      %v938 = vpop.f32.mrf.mxu0
      %v939 = vadd.f32 %v495, %v938
      %v940 = vpop.f32.mrf.mxu0
      %v941 = vadd.f32 %v499, %v940
      %942 = vmatprep.mubr.bf16.mxu0 0
      %943 = vmatmul.mubr.bf16.gmra.mxu0 %v565
      %v944 = vpop.f32.mrf.mxu0
      %v945 = vadd.f32 %v495, %v944
      %v946 = vpop.f32.mrf.mxu0
      %v947 = vadd.f32 %v499, %v946
      %v948 = vpop.f32.mrf.mxu0
      %v949 = vadd.f32 %v495, %v948
      %v950 = vpop.f32.mrf.mxu0
      %v951 = vadd.f32 %v499, %v950
      %952 = vmatprep.mubr.bf16.mxu0 0
      %953 = vmatmul.mubr.bf16.gmra.mxu0 %v566
      %v954 = vpop.f32.mrf.mxu0
      %v955 = vadd.f32 %v495, %v954
      %v956 = vpop.f32.mrf.mxu0
      %v957 = vadd.f32 %v499, %v956
      %v958 = vpop.f32.mrf.mxu0
      %v959 = vadd.f32 %v495, %v958
      %v960 = vpop.f32.mrf.mxu0
      %v961 = vadd.f32 %v499, %v960
      %962 = vmatprep.mubr.bf16.mxu0 0
      %963 = vmatmul.mubr.bf16.gmra.mxu0 %v567
      %v964 = vpop.f32.mrf.mxu0
      %v965 = vadd.f32 %v495, %v964
      %v966 = vpop.f32.mrf.mxu0
      %v967 = vadd.f32 %v499, %v966
      %v968 = vpop.f32.mrf.mxu0
      %v969 = vadd.f32 %v495, %v968
      %v970 = vpop.f32.mrf.mxu0
      %v971 = vadd.f32 %v499, %v970
      %972 = vmatprep.mubr.bf16.mxu0 0
      %973 = vmatmul.mubr.bf16.gmra.mxu0 %v568
      %v974 = vpop.f32.mrf.mxu0
      %v975 = vadd.f32 %v495, %v974
      %v976 = vpop.f32.mrf.mxu0
      %v977 = vadd.f32 %v499, %v976
      %v978 = vpop.f32.mrf.mxu0
      %v979 = vadd.f32 %v495, %v978
      %v980 = vpop.f32.mrf.mxu0
      %v981 = vadd.f32 %v499, %v980
      %982 = vmatprep.mubr.bf16.mxu0 0
      %983 = vmatmul.mubr.bf16.gmra.mxu0 %v569
      %v984 = vpop.f32.mrf.mxu0
      %v985 = vadd.f32 %v495, %v984
      %v986 = vpop.f32.mrf.mxu0
      %v987 = vadd.f32 %v499, %v986
      %v988 = vpop.f32.mrf.mxu0
      %v989 = vadd.f32 %v495, %v988
      %v990 = vpop.f32.mrf.mxu0
      %v991 = vadd.f32 %v499, %v990
      %992 = vmatprep.mubr.bf16.mxu0 0
      %993 = vmatmul.mubr.bf16.gmra.mxu0 %v570
      %v994 = vpop.f32.mrf.mxu0
      %v995 = vadd.f32 %v495, %v994
      %v996 = vpop.f32.mrf.mxu0
      %v997 = vadd.f32 %v499, %v996
      %v998 = vpop.f32.mrf.mxu0
      %v999 = vadd.f32 %v495, %v998
      %v1000 = vpop.f32.mrf.mxu0
      %v1001 = vadd.f32 %v499, %v1000
      %1002 = vmatprep.mubr.bf16.mxu0 0
      %1003 = vmatmul.mubr.bf16.gmra.mxu0 %v571
      %v1004 = vpop.f32.mrf.mxu0
      %v1005 = vadd.f32 %v495, %v1004
      %v1006 = vpop.f32.mrf.mxu0
      %v1007 = vadd.f32 %v499, %v1006
      %v1008 = vpop.f32.mrf.mxu0
      %v1009 = vadd.f32 %v495, %v1008
      %v1010 = vpop.f32.mrf.mxu0
      %v1011 = vadd.f32 %v499, %v1010
      %1012 = vdwg.mxu0
      %1013 = vmatprep.subr.bf16.mxu0 %v831
      %1014 = vmatpush1.bf16.msra.mxu0 %v830
      %1015 = vmatprep.subr.bf16.mxu0 %v823
      %1016 = vmatpush1.bf16.msra.mxu0 %v822
      %1017 = vmatprep.subr.bf16.mxu0 %v815
      %1018 = vmatpush1.bf16.msra.mxu0 %v814
      %1019 = vmatprep.subr.bf16.mxu0 %v807
      %1020 = vmatpush1.bf16.msra.mxu0 %v806
      %1021 = vmatprep.subr.bf16.mxu0 %v799
      %1022 = vmatpush1.bf16.msra.mxu0 %v798
      %1023 = vmatprep.subr.bf16.mxu0 %v791
      %1024 = vmatpush1.bf16.msra.mxu0 %v790
      %1025 = vmatprep.subr.bf16.mxu0 %v783
      %1026 = vmatpush1.bf16.msra.mxu0 %v782
      %1027 = vmatprep.subr.bf16.mxu0 %v775
      %1028 = vmatpush1.bf16.msra.mxu0 %v774
      %1029 = vmatprep.subr.bf16.mxu0 0
      %1030 = vmatpush2.bf16.msra.mxu0 0
      %1031 = vmatprep.subr.bf16.mxu0 0
      %1032 = vmatpush2.bf16.msra.mxu0 0
      %1033 = vmatprep.subr.bf16.mxu0 0
      %1034 = vmatpush2.bf16.msra.mxu0 0
      %1035 = vmatprep.subr.bf16.mxu0 0
      %1036 = vmatpush2.bf16.msra.mxu0 0
      %1037 = vmatprep.subr.bf16.mxu0 0
      %1038 = vmatpush2.bf16.msra.mxu0 0
      %1039 = vmatprep.subr.bf16.mxu0 0
      %1040 = vmatpush2.bf16.msra.mxu0 0
      %1041 = vmatprep.subr.bf16.mxu0 0
      %1042 = vmatpush2.bf16.msra.mxu0 0
      %1043 = vmatprep.subr.bf16.mxu0 0
      %1044 = vmatpush2.bf16.msra.mxu0 0
      %1045 = vmatprep.mubr.bf16.mxu0 0
      %1046 = vmatmul.mubr.bf16.gmra.mxu0 %v564
      %v1047 = vpop.f32.mrf.mxu0
      %v1048 = vadd.f32 %v503, %v1047
      %v1049 = vpop.f32.mrf.mxu0
      %v1050 = vadd.f32 %v507, %v1049
      %v1051 = vpop.f32.mrf.mxu0
      %v1052 = vadd.f32 %v503, %v1051
      %v1053 = vpop.f32.mrf.mxu0
      %v1054 = vadd.f32 %v507, %v1053
      %1055 = vmatprep.mubr.bf16.mxu0 0
      %1056 = vmatmul.mubr.bf16.gmra.mxu0 %v565
      %v1057 = vpop.f32.mrf.mxu0
      %v1058 = vadd.f32 %v503, %v1057
      %v1059 = vpop.f32.mrf.mxu0
      %v1060 = vadd.f32 %v507, %v1059
      %v1061 = vpop.f32.mrf.mxu0
      %v1062 = vadd.f32 %v503, %v1061
      %v1063 = vpop.f32.mrf.mxu0
      %v1064 = vadd.f32 %v507, %v1063
      %1065 = vmatprep.mubr.bf16.mxu0 0
      %1066 = vmatmul.mubr.bf16.gmra.mxu0 %v566
      %v1067 = vpop.f32.mrf.mxu0
      %v1068 = vadd.f32 %v503, %v1067
      %v1069 = vpop.f32.mrf.mxu0
      %v1070 = vadd.f32 %v507, %v1069
      %v1071 = vpop.f32.mrf.mxu0
      %v1072 = vadd.f32 %v503, %v1071
      %v1073 = vpop.f32.mrf.mxu0
      %v1074 = vadd.f32 %v507, %v1073
      %1075 = vmatprep.mubr.bf16.mxu0 0
      %1076 = vmatmul.mubr.bf16.gmra.mxu0 %v567
      %v1077 = vpop.f32.mrf.mxu0
      %v1078 = vadd.f32 %v503, %v1077
      %v1079 = vpop.f32.mrf.mxu0
      %v1080 = vadd.f32 %v507, %v1079
      %v1081 = vpop.f32.mrf.mxu0
      %v1082 = vadd.f32 %v503, %v1081
      %v1083 = vpop.f32.mrf.mxu0
      %v1084 = vadd.f32 %v507, %v1083
      %1085 = vmatprep.mubr.bf16.mxu0 0
      %1086 = vmatmul.mubr.bf16.gmra.mxu0 %v568
      %v1087 = vpop.f32.mrf.mxu0
      %v1088 = vadd.f32 %v503, %v1087
      %v1089 = vpop.f32.mrf.mxu0
      %v1090 = vadd.f32 %v507, %v1089
      %v1091 = vpop.f32.mrf.mxu0
      %v1092 = vadd.f32 %v503, %v1091
      %v1093 = vpop.f32.mrf.mxu0
      %v1094 = vadd.f32 %v507, %v1093
      %1095 = vmatprep.mubr.bf16.mxu0 0
      %1096 = vmatmul.mubr.bf16.gmra.mxu0 %v569
      %v1097 = vpop.f32.mrf.mxu0
      %v1098 = vadd.f32 %v503, %v1097
      %v1099 = vpop.f32.mrf.mxu0
      %v1100 = vadd.f32 %v507, %v1099
      %v1101 = vpop.f32.mrf.mxu0
      %v1102 = vadd.f32 %v503, %v1101
      %v1103 = vpop.f32.mrf.mxu0
      %v1104 = vadd.f32 %v507, %v1103
      %1105 = vmatprep.mubr.bf16.mxu0 0
      %1106 = vmatmul.mubr.bf16.gmra.mxu0 %v570
      %v1107 = vpop.f32.mrf.mxu0
      %v1108 = vadd.f32 %v503, %v1107
      %v1109 = vpop.f32.mrf.mxu0
      %v1110 = vadd.f32 %v507, %v1109
      %v1111 = vpop.f32.mrf.mxu0
      %v1112 = vadd.f32 %v503, %v1111
      %v1113 = vpop.f32.mrf.mxu0
      %v1114 = vadd.f32 %v507, %v1113
      %1115 = vmatprep.mubr.bf16.mxu0 0
      %1116 = vmatmul.mubr.bf16.gmra.mxu0 %v571
      %v1117 = vpop.f32.mrf.mxu0
      %v1118 = vadd.f32 %v503, %v1117
      %v1119 = vpop.f32.mrf.mxu0
      %v1120 = vadd.f32 %v507, %v1119
      %v1121 = vpop.f32.mrf.mxu0
      %v1122 = vadd.f32 %v503, %v1121
      %v1123 = vpop.f32.mrf.mxu0
      %v1124 = vadd.f32 %v507, %v1123
      %1125 = vdwg.mxu0
      %1126 = vmatprep.subr.bf16.mxu0 %v833
      %1127 = vmatpush1.bf16.msra.mxu0 %v832
      %1128 = vmatprep.subr.bf16.mxu0 %v825
      %1129 = vmatpush1.bf16.msra.mxu0 %v824
      %1130 = vmatprep.subr.bf16.mxu0 %v817
      %1131 = vmatpush1.bf16.msra.mxu0 %v816
      %1132 = vmatprep.subr.bf16.mxu0 %v809
      %1133 = vmatpush1.bf16.msra.mxu0 %v808
      %1134 = vmatprep.subr.bf16.mxu0 %v801
      %1135 = vmatpush1.bf16.msra.mxu0 %v800
      %1136 = vmatprep.subr.bf16.mxu0 %v793
      %1137 = vmatpush1.bf16.msra.mxu0 %v792
      %1138 = vmatprep.subr.bf16.mxu0 %v785
      %1139 = vmatpush1.bf16.msra.mxu0 %v784
      %1140 = vmatprep.subr.bf16.mxu0 %v777
      %1141 = vmatpush1.bf16.msra.mxu0 %v776
      %1142 = vmatprep.subr.bf16.mxu0 0
      %1143 = vmatpush2.bf16.msra.mxu0 0
      %1144 = vmatprep.subr.bf16.mxu0 0
      %1145 = vmatpush2.bf16.msra.mxu0 0
      %1146 = vmatprep.subr.bf16.mxu0 0
      %1147 = vmatpush2.bf16.msra.mxu0 0
      %1148 = vmatprep.subr.bf16.mxu0 0
      %1149 = vmatpush2.bf16.msra.mxu0 0
      %1150 = vmatprep.subr.bf16.mxu0 0
      %1151 = vmatpush2.bf16.msra.mxu0 0
      %1152 = vmatprep.subr.bf16.mxu0 0
      %1153 = vmatpush2.bf16.msra.mxu0 0
      %1154 = vmatprep.subr.bf16.mxu0 0
      %1155 = vmatpush2.bf16.msra.mxu0 0
      %1156 = vmatprep.subr.bf16.mxu0 0
      %1157 = vmatpush2.bf16.msra.mxu0 0
      %1158 = vmatprep.mubr.bf16.mxu0 0
      %1159 = vmatmul.mubr.bf16.gmra.mxu0 %v564
      %v1160 = vpop.f32.mrf.mxu0
      %v1161 = vadd.f32 %v511, %v1160
      %v1162 = vpop.f32.mrf.mxu0
      %v1163 = vadd.f32 %v515, %v1162
      %v1164 = vpop.f32.mrf.mxu0
      %v1165 = vadd.f32 %v511, %v1164
      %v1166 = vpop.f32.mrf.mxu0
      %v1167 = vadd.f32 %v515, %v1166
      %1168 = vmatprep.mubr.bf16.mxu0 0
      %1169 = vmatmul.mubr.bf16.gmra.mxu0 %v565
      %v1170 = vpop.f32.mrf.mxu0
      %v1171 = vadd.f32 %v511, %v1170
      %v1172 = vpop.f32.mrf.mxu0
      %v1173 = vadd.f32 %v515, %v1172
      %v1174 = vpop.f32.mrf.mxu0
      %v1175 = vadd.f32 %v511, %v1174
      %v1176 = vpop.f32.mrf.mxu0
      %v1177 = vadd.f32 %v515, %v1176
      %1178 = vmatprep.mubr.bf16.mxu0 0
      %1179 = vmatmul.mubr.bf16.gmra.mxu0 %v566
      %v1180 = vpop.f32.mrf.mxu0
      %v1181 = vadd.f32 %v511, %v1180
      %v1182 = vpop.f32.mrf.mxu0
      %v1183 = vadd.f32 %v515, %v1182
      %v1184 = vpop.f32.mrf.mxu0
      %v1185 = vadd.f32 %v511, %v1184
      %v1186 = vpop.f32.mrf.mxu0
      %v1187 = vadd.f32 %v515, %v1186
      %1188 = vmatprep.mubr.bf16.mxu0 0
      %1189 = vmatmul.mubr.bf16.gmra.mxu0 %v567
      %v1190 = vpop.f32.mrf.mxu0
      %v1191 = vadd.f32 %v511, %v1190
      %v1192 = vpop.f32.mrf.mxu0
      %v1193 = vadd.f32 %v515, %v1192
      %v1194 = vpop.f32.mrf.mxu0
      %v1195 = vadd.f32 %v511, %v1194
      %v1196 = vpop.f32.mrf.mxu0
      %v1197 = vadd.f32 %v515, %v1196
      %1198 = vmatprep.mubr.bf16.mxu0 0
      %1199 = vmatmul.mubr.bf16.gmra.mxu0 %v568
      %v1200 = vpop.f32.mrf.mxu0
      %v1201 = vadd.f32 %v511, %v1200
      %v1202 = vpop.f32.mrf.mxu0
      %v1203 = vadd.f32 %v515, %v1202
      %v1204 = vpop.f32.mrf.mxu0
      %v1205 = vadd.f32 %v511, %v1204
      %v1206 = vpop.f32.mrf.mxu0
      %v1207 = vadd.f32 %v515, %v1206
      %1208 = vmatprep.mubr.bf16.mxu0 0
      %1209 = vmatmul.mubr.bf16.gmra.mxu0 %v569
      %v1210 = vpop.f32.mrf.mxu0
      %v1211 = vadd.f32 %v511, %v1210
      %v1212 = vpop.f32.mrf.mxu0
      %v1213 = vadd.f32 %v515, %v1212
      %v1214 = vpop.f32.mrf.mxu0
      %v1215 = vadd.f32 %v511, %v1214
      %v1216 = vpop.f32.mrf.mxu0
      %v1217 = vadd.f32 %v515, %v1216
      %1218 = vmatprep.mubr.bf16.mxu0 0
      %1219 = vmatmul.mubr.bf16.gmra.mxu0 %v570
      %v1220 = vpop.f32.mrf.mxu0
      %v1221 = vadd.f32 %v511, %v1220
      %v1222 = vpop.f32.mrf.mxu0
      %v1223 = vadd.f32 %v515, %v1222
      %v1224 = vpop.f32.mrf.mxu0
      %v1225 = vadd.f32 %v511, %v1224
      %v1226 = vpop.f32.mrf.mxu0
      %v1227 = vadd.f32 %v515, %v1226
      %1228 = vmatprep.mubr.bf16.mxu0 0
      %1229 = vmatmul.mubr.bf16.gmra.mxu0 %v571
      %v1230 = vpop.f32.mrf.mxu0
      %v1231 = vadd.f32 %v511, %v1230
      %v1232 = vpop.f32.mrf.mxu0
      %v1233 = vadd.f32 %v515, %v1232
      %v1234 = vpop.f32.mrf.mxu0
      %v1235 = vadd.f32 %v511, %v1234
      %v1236 = vpop.f32.mrf.mxu0
      %v1237 = vadd.f32 %v515, %v1236
      %1238 = vdwg.mxu0
      %1239 = vmatprep.subr.bf16.mxu0 %v835
      %1240 = vmatpush1.bf16.msra.mxu0 %v834
      %1241 = vmatprep.subr.bf16.mxu0 %v827
      %1242 = vmatpush1.bf16.msra.mxu0 %v826
      %1243 = vmatprep.subr.bf16.mxu0 %v819
      %1244 = vmatpush1.bf16.msra.mxu0 %v818
      %1245 = vmatprep.subr.bf16.mxu0 %v811
      %1246 = vmatpush1.bf16.msra.mxu0 %v810
      %1247 = vmatprep.subr.bf16.mxu0 %v803
      %1248 = vmatpush1.bf16.msra.mxu0 %v802
      %1249 = vmatprep.subr.bf16.mxu0 %v795
      %1250 = vmatpush1.bf16.msra.mxu0 %v794
      %1251 = vmatprep.subr.bf16.mxu0 %v787
      %1252 = vmatpush1.bf16.msra.mxu0 %v786
      %1253 = vmatprep.subr.bf16.mxu0 %v779
      %1254 = vmatpush1.bf16.msra.mxu0 %v778
      %1255 = vmatprep.subr.bf16.mxu0 0
      %1256 = vmatpush2.bf16.msra.mxu0 0
      %1257 = vmatprep.subr.bf16.mxu0 0
      %1258 = vmatpush2.bf16.msra.mxu0 0
      %1259 = vmatprep.subr.bf16.mxu0 0
      %1260 = vmatpush2.bf16.msra.mxu0 0
      %1261 = vmatprep.subr.bf16.mxu0 0
      %1262 = vmatpush2.bf16.msra.mxu0 0
      %1263 = vmatprep.subr.bf16.mxu0 0
      %1264 = vmatpush2.bf16.msra.mxu0 0
      %1265 = vmatprep.subr.bf16.mxu0 0
      %1266 = vmatpush2.bf16.msra.mxu0 0
      %1267 = vmatprep.subr.bf16.mxu0 0
      %1268 = vmatpush2.bf16.msra.mxu0 0
      %1269 = vmatprep.subr.bf16.mxu0 0
      %1270 = vmatpush2.bf16.msra.mxu0 0
      %1271 = vmatprep.mubr.bf16.mxu0 0
      %1272 = vmatmul.mubr.bf16.gmra.mxu0 %v564
      %v1273 = vpop.f32.mrf.mxu0
      %v1274 = vadd.f32 %v519, %v1273
      %v1275 = vpop.f32.mrf.mxu0
      %v1276 = vadd.f32 %v523, %v1275
      %v1277 = vpop.f32.mrf.mxu0
      %v1278 = vadd.f32 %v519, %v1277
      %v1279 = vpop.f32.mrf.mxu0
      %v1280 = vadd.f32 %v523, %v1279
      %1281 = vmatprep.mubr.bf16.mxu0 0
      %1282 = vmatmul.mubr.bf16.gmra.mxu0 %v565
      %v1283 = vpop.f32.mrf.mxu0
      %v1284 = vadd.f32 %v519, %v1283
      %v1285 = vpop.f32.mrf.mxu0
      %v1286 = vadd.f32 %v523, %v1285
      %v1287 = vpop.f32.mrf.mxu0
      %v1288 = vadd.f32 %v519, %v1287
      %v1289 = vpop.f32.mrf.mxu0
      %v1290 = vadd.f32 %v523, %v1289
      %1291 = vmatprep.mubr.bf16.mxu0 0
      %1292 = vmatmul.mubr.bf16.gmra.mxu0 %v566
      %v1293 = vpop.f32.mrf.mxu0
      %v1294 = vadd.f32 %v519, %v1293
      %v1295 = vpop.f32.mrf.mxu0
      %v1296 = vadd.f32 %v523, %v1295
      %v1297 = vpop.f32.mrf.mxu0
      %v1298 = vadd.f32 %v519, %v1297
      %v1299 = vpop.f32.mrf.mxu0
      %v1300 = vadd.f32 %v523, %v1299
      %1301 = vmatprep.mubr.bf16.mxu0 0
      %1302 = vmatmul.mubr.bf16.gmra.mxu0 %v567
      %v1303 = vpop.f32.mrf.mxu0
      %v1304 = vadd.f32 %v519, %v1303
      %v1305 = vpop.f32.mrf.mxu0
      %v1306 = vadd.f32 %v523, %v1305
      %v1307 = vpop.f32.mrf.mxu0
      %v1308 = vadd.f32 %v519, %v1307
      %v1309 = vpop.f32.mrf.mxu0
      %v1310 = vadd.f32 %v523, %v1309
      %1311 = vmatprep.mubr.bf16.mxu0 0
      %1312 = vmatmul.mubr.bf16.gmra.mxu0 %v568
      %v1313 = vpop.f32.mrf.mxu0
      %v1314 = vadd.f32 %v519, %v1313
      %v1315 = vpop.f32.mrf.mxu0
      %v1316 = vadd.f32 %v523, %v1315
      %v1317 = vpop.f32.mrf.mxu0
      %v1318 = vadd.f32 %v519, %v1317
      %v1319 = vpop.f32.mrf.mxu0
      %v1320 = vadd.f32 %v523, %v1319
      %1321 = vmatprep.mubr.bf16.mxu0 0
      %1322 = vmatmul.mubr.bf16.gmra.mxu0 %v569
      %v1323 = vpop.f32.mrf.mxu0
      %v1324 = vadd.f32 %v519, %v1323
      %v1325 = vpop.f32.mrf.mxu0
      %v1326 = vadd.f32 %v523, %v1325
      %v1327 = vpop.f32.mrf.mxu0
      %v1328 = vadd.f32 %v519, %v1327
      %v1329 = vpop.f32.mrf.mxu0
      %v1330 = vadd.f32 %v523, %v1329
      %1331 = vmatprep.mubr.bf16.mxu0 0
      %1332 = vmatmul.mubr.bf16.gmra.mxu0 %v570
      %v1333 = vpop.f32.mrf.mxu0
      %v1334 = vadd.f32 %v519, %v1333
      %v1335 = vpop.f32.mrf.mxu0
      %v1336 = vadd.f32 %v523, %v1335
      %v1337 = vpop.f32.mrf.mxu0
      %v1338 = vadd.f32 %v519, %v1337
      %v1339 = vpop.f32.mrf.mxu0
      %v1340 = vadd.f32 %v523, %v1339
      %1341 = vmatprep.mubr.bf16.mxu0 0
      %1342 = vmatmul.mubr.bf16.gmra.mxu0 %v571
      %v1343 = vpop.f32.mrf.mxu0
      %v1344 = vadd.f32 %v519, %v1343
      %v1345 = vpop.f32.mrf.mxu0
      %v1346 = vadd.f32 %v523, %v1345
      %v1347 = vpop.f32.mrf.mxu0
      %v1348 = vadd.f32 %v519, %v1347
      %v1349 = vpop.f32.mrf.mxu0
      %v1350 = vadd.f32 %v523, %v1349
      %1351 = vdwg.mxu0
      %v1352 = vmax.f32 %v935, 0.0
      %v1353 = vmax.f32 %v937, 0.0
      %v1354 = vmax.f32 %v1048, 0.0
      %v1355 = vmax.f32 %v939, 0.0
      %v1356 = vmax.f32 %v941, 0.0
      %v1357 = vmax.f32 %v1052, 0.0
      %v1358 = vmax.f32 %v945, 0.0
      %v1359 = vmax.f32 %v947, 0.0
      %v1360 = vmax.f32 %v1058, 0.0
      %v1361 = vmax.f32 %v949, 0.0
      %v1362 = vmax.f32 %v951, 0.0
      %v1363 = vmax.f32 %v1062, 0.0
      %v1364 = vmax.f32 %v955, 0.0
      %v1365 = vmax.f32 %v957, 0.0
      %v1366 = vmax.f32 %v1068, 0.0
      %v1367 = vmax.f32 %v959, 0.0
      %v1368 = vmax.f32 %v961, 0.0
      %v1369 = vmax.f32 %v1072, 0.0
      %v1370 = vmax.f32 %v965, 0.0
      %v1371 = vmax.f32 %v967, 0.0
      %v1372 = vmax.f32 %v1078, 0.0
      %v1373 = vmax.f32 %v969, 0.0
      %v1374 = vmax.f32 %v971, 0.0
      %v1375 = vmax.f32 %v1082, 0.0
      %v1376 = vmax.f32 %v975, 0.0
      %v1377 = vmax.f32 %v977, 0.0
      %v1378 = vmax.f32 %v1088, 0.0
      %v1379 = vmax.f32 %v979, 0.0
      %v1380 = vmax.f32 %v981, 0.0
      %v1381 = vmax.f32 %v1092, 0.0
      %v1382 = vmax.f32 %v985, 0.0
      %v1383 = vmax.f32 %v987, 0.0
      %v1384 = vmax.f32 %v1098, 0.0
      %v1385 = vmax.f32 %v989, 0.0
      %v1386 = vmax.f32 %v991, 0.0
      %v1387 = vmax.f32 %v1102, 0.0
      %v1388 = vmax.f32 %v995, 0.0
      %v1389 = vmax.f32 %v997, 0.0
      %v1390 = vmax.f32 %v1108, 0.0
      %v1391 = vmax.f32 %v999, 0.0
      %v1392 = vmax.f32 %v1001, 0.0
      %v1393 = vmax.f32 %v1112, 0.0
      %v1394 = vmax.f32 %v1005, 0.0
      %v1395 = vmax.f32 %v1007, 0.0
      %v1396 = vmax.f32 %v1118, 0.0
      %v1397 = vmax.f32 %v1009, 0.0
      %v1398 = vmax.f32 %v1011, 0.0
      %v1399 = vmax.f32 %v1122, 0.0
      %v1400 = vadd.f32 %v1352, %v1050
      %v1401 = vadd.f32 %v1353, %v1161
      %v1402 = vadd.f32 %v1354, %v1163
      %v1403 = vadd.f32 %v1355, %v1054
      %v1404 = vadd.f32 %v1356, %v1165
      %v1405 = vadd.f32 %v1357, %v1167
      %v1406 = vadd.f32 %v1358, %v1060
      %v1407 = vadd.f32 %v1359, %v1171
      %v1408 = vadd.f32 %v1360, %v1173
      %v1409 = vadd.f32 %v1361, %v1064
      %v1410 = vadd.f32 %v1362, %v1175
      %v1411 = vadd.f32 %v1363, %v1177
      %v1412 = vadd.f32 %v1364, %v1070
      %v1413 = vadd.f32 %v1365, %v1181
      %v1414 = vadd.f32 %v1366, %v1183
      %v1415 = vadd.f32 %v1367, %v1074
      %v1416 = vadd.f32 %v1368, %v1185
      %v1417 = vadd.f32 %v1369, %v1187
      %v1418 = vadd.f32 %v1370, %v1080
      %v1419 = vadd.f32 %v1371, %v1191
      %v1420 = vadd.f32 %v1372, %v1193
      %v1421 = vadd.f32 %v1373, %v1084
      %v1422 = vadd.f32 %v1374, %v1195
      %v1423 = vadd.f32 %v1375, %v1197
      %v1424 = vadd.f32 %v1376, %v1090
      %v1425 = vadd.f32 %v1377, %v1201
      %v1426 = vadd.f32 %v1378, %v1203
      %v1427 = vadd.f32 %v1379, %v1094
      %v1428 = vadd.f32 %v1380, %v1205
      %v1429 = vadd.f32 %v1381, %v1207
      %v1430 = vadd.f32 %v1382, %v1100
      %v1431 = vadd.f32 %v1383, %v1211
      %v1432 = vadd.f32 %v1384, %v1213
      %v1433 = vadd.f32 %v1385, %v1104
      %v1434 = vadd.f32 %v1386, %v1215
      %v1435 = vadd.f32 %v1387, %v1217
      %v1436 = vadd.f32 %v1388, %v1110
      %v1437 = vadd.f32 %v1389, %v1221
      %v1438 = vadd.f32 %v1390, %v1223
      %v1439 = vadd.f32 %v1391, %v1114
      %v1440 = vadd.f32 %v1392, %v1225
      %v1441 = vadd.f32 %v1393, %v1227
      %v1442 = vadd.f32 %v1394, %v1120
      %v1443 = vadd.f32 %v1395, %v1231
      %v1444 = vadd.f32 %v1396, %v1233
      %v1445 = vadd.f32 %v1397, %v1124
      %v1446 = vadd.f32 %v1398, %v1235
      %v1447 = vadd.f32 %v1399, %v1237
      %v1448 = vrot.slane %v1274, 7
      %v1449 = vrot.slane %v1278, 7
      %v1450 = vrot.slane %v1284, 7
      %v1451 = vrot.slane %v1288, 7
      %v1452 = vrot.slane %v1294, 7
      %v1453 = vrot.slane %v1298, 7
      %v1454 = vrot.slane %v1304, 7
      %v1455 = vrot.slane %v1308, 7
      %v1456 = vrot.slane %v1314, 7
      %v1457 = vrot.slane %v1318, 7
      %v1458 = vrot.slane %v1324, 7
      %v1459 = vrot.slane %v1328, 7
      %v1460 = vrot.slane %v1334, 7
      %v1461 = vrot.slane %v1338, 7
      %v1462 = vrot.slane %v1344, 7
      %v1463 = vrot.slane %v1348, 7
      %v1464 = vlaneseq
      %v1465 = vshrl.u32 %v1464, 7
      %vm1466 = vcmp.lt.s32.totalorder %v1465, 1
      %v1467 = vsel %vm1466, %v1462, %v1463
      %v1468 = vsel %vm1466, %v1461, %v1462
      %v1469 = vsel %vm1466, %v1460, %v1461
      %v1470 = vsel %vm1466, %v1459, %v1460
      %v1471 = vsel %vm1466, %v1458, %v1459
      %v1472 = vsel %vm1466, %v1457, %v1458
      %v1473 = vsel %vm1466, %v1456, %v1457
      %v1474 = vsel %vm1466, %v1455, %v1456
      %v1475 = vsel %vm1466, %v1454, %v1455
      %v1476 = vsel %vm1466, %v1453, %v1454
      %v1477 = vsel %vm1466, %v1452, %v1453
      %v1478 = vsel %vm1466, %v1451, %v1452
      %v1479 = vsel %vm1466, %v1450, %v1451
      %v1480 = vsel %vm1466, %v1449, %v1450
      %v1481 = vsel %vm1466, %v1448, %v1449
      %v1482 = vsel %vm1466, %v1463, %v1448
      %vm1483 = vcmp.ge.s32.totalorder %v409, 1
      %vm1484 = vcmp.ge.s32.totalorder %v410, 1
      %vm1485 = vcmp.ge.s32.totalorder %v411, 1
      %vm1486 = vcmp.ge.s32.totalorder %v412, 1
      %vm1487 = vcmp.ge.s32.totalorder %v413, 1
      %vm1488 = vcmp.ge.s32.totalorder %v414, 1
      %vm1489 = vcmp.ge.s32.totalorder %v415, 1
      %vm1490 = vcmp.ge.s32.totalorder %v416, 1
      %vm1491 = vcmp.ge.s32.totalorder %v417, 1
      %vm1492 = vcmp.ge.s32.totalorder %v418, 1
      %vm1493 = vcmp.ge.s32.totalorder %v419, 1
      %vm1494 = vcmp.ge.s32.totalorder %v420, 1
      %vm1495 = vcmp.ge.s32.totalorder %v421, 1
      %vm1496 = vcmp.ge.s32.totalorder %v422, 1
      %vm1497 = vcmp.ge.s32.totalorder %v423, 1
      %vm1498 = vcmp.ge.s32.totalorder %v424, 1
      %vm1499 = vcmp.lt.s32.totalorder %v409, 17
      %vm1500 = vcmp.lt.s32.totalorder %v410, 17
      %vm1501 = vcmp.lt.s32.totalorder %v411, 17
      %vm1502 = vcmp.lt.s32.totalorder %v412, 17
      %vm1503 = vcmp.lt.s32.totalorder %v413, 17
      %vm1504 = vcmp.lt.s32.totalorder %v414, 17
      %vm1505 = vcmp.lt.s32.totalorder %v415, 17
      %vm1506 = vcmp.lt.s32.totalorder %v416, 17
      %vm1507 = vcmp.lt.s32.totalorder %v417, 17
      %vm1508 = vcmp.lt.s32.totalorder %v418, 17
      %vm1509 = vcmp.lt.s32.totalorder %v419, 17
      %vm1510 = vcmp.lt.s32.totalorder %v420, 17
      %vm1511 = vcmp.lt.s32.totalorder %v421, 17
      %vm1512 = vcmp.lt.s32.totalorder %v422, 17
      %vm1513 = vcmp.lt.s32.totalorder %v423, 17
      %vm1514 = vcmp.lt.s32.totalorder %v424, 17
      %vm1515 = vmand %vm1483, %vm1499
      %vm1516 = vmand %vm1484, %vm1500
      %vm1517 = vmand %vm1485, %vm1501
      %vm1518 = vmand %vm1486, %vm1502
      %vm1519 = vmand %vm1487, %vm1503
      %vm1520 = vmand %vm1488, %vm1504
      %vm1521 = vmand %vm1489, %vm1505
      %vm1522 = vmand %vm1490, %vm1506
      %vm1523 = vmand %vm1491, %vm1507
      %vm1524 = vmand %vm1492, %vm1508
      %vm1525 = vmand %vm1493, %vm1509
      %vm1526 = vmand %vm1494, %vm1510
      %vm1527 = vmand %vm1495, %vm1511
      %vm1528 = vmand %vm1496, %vm1512
      %vm1529 = vmand %vm1497, %vm1513
      %vm1530 = vmand %vm1498, %vm1514
      %v1531 = vsel %vm1515, 1, 0
      %v1532 = vsel %vm1516, 1, 0
      %v1533 = vsel %vm1517, 1, 0
      %v1534 = vsel %vm1518, 1, 0
      %v1535 = vsel %vm1519, 1, 0
      %v1536 = vsel %vm1520, 1, 0
      %v1537 = vsel %vm1521, 1, 0
      %v1538 = vsel %vm1522, 1, 0
      %v1539 = vsel %vm1523, 1, 0
      %v1540 = vsel %vm1524, 1, 0
      %v1541 = vsel %vm1525, 1, 0
      %v1542 = vsel %vm1526, 1, 0
      %v1543 = vsel %vm1527, 1, 0
      %v1544 = vsel %vm1528, 1, 0
      %v1545 = vsel %vm1529, 1, 0
      %v1546 = vsel %vm1530, 1, 0
      %1547 = vset.pattern.permute.xlu0 0
      %1548 = vperm.xlu0 %1547, %v1531
      %v1549 = vpop.permute.xlu0 %1548
      %1550 = vset.pattern.permute.xlu0 0
      %1551 = vperm.xlu0 %1550, %v1532
      %v1552 = vpop.permute.xlu0 %1551
      %1553 = vset.pattern.permute.xlu0 0
      %1554 = vperm.xlu0 %1553, %v1533
      %v1555 = vpop.permute.xlu0 %1554
      %1556 = vset.pattern.permute.xlu0 0
      %1557 = vperm.xlu0 %1556, %v1534
      %v1558 = vpop.permute.xlu0 %1557
      %1559 = vset.pattern.permute.xlu0 0
      %1560 = vperm.xlu0 %1559, %v1535
      %v1561 = vpop.permute.xlu0 %1560
      %1562 = vset.pattern.permute.xlu0 0
      %1563 = vperm.xlu0 %1562, %v1536
      %v1564 = vpop.permute.xlu0 %1563
      %1565 = vset.pattern.permute.xlu0 0
      %1566 = vperm.xlu0 %1565, %v1537
      %v1567 = vpop.permute.xlu0 %1566
      %1568 = vset.pattern.permute.xlu0 0
      %1569 = vperm.xlu0 %1568, %v1538
      %v1570 = vpop.permute.xlu0 %1569
      %1571 = vset.pattern.permute.xlu0 0
      %1572 = vperm.xlu0 %1571, %v1539
      %v1573 = vpop.permute.xlu0 %1572
      %1574 = vset.pattern.permute.xlu0 0
      %1575 = vperm.xlu0 %1574, %v1540
      %v1576 = vpop.permute.xlu0 %1575
      %1577 = vset.pattern.permute.xlu0 0
      %1578 = vperm.xlu0 %1577, %v1541
      %v1579 = vpop.permute.xlu0 %1578
      %1580 = vset.pattern.permute.xlu0 0
      %1581 = vperm.xlu0 %1580, %v1542
      %v1582 = vpop.permute.xlu0 %1581
      %1583 = vset.pattern.permute.xlu0 0
      %1584 = vperm.xlu0 %1583, %v1543
      %v1585 = vpop.permute.xlu0 %1584
      %1586 = vset.pattern.permute.xlu0 0
      %1587 = vperm.xlu0 %1586, %v1544
      %v1588 = vpop.permute.xlu0 %1587
      %1589 = vset.pattern.permute.xlu0 0
      %1590 = vperm.xlu0 %1589, %v1545
      %v1591 = vpop.permute.xlu0 %1590
      %1592 = vset.pattern.permute.xlu0 0
      %1593 = vperm.xlu0 %1592, %v1546
      %v1594 = vpop.permute.xlu0 %1593
      %vm1595 = vcmp.eq.s32.totalorder %v1549, 1
      %vm1596 = vcmp.eq.s32.totalorder %v1552, 1
      %vm1597 = vcmp.eq.s32.totalorder %v1555, 1
      %vm1598 = vcmp.eq.s32.totalorder %v1558, 1
      %vm1599 = vcmp.eq.s32.totalorder %v1561, 1
      %vm1600 = vcmp.eq.s32.totalorder %v1564, 1
      %vm1601 = vcmp.eq.s32.totalorder %v1567, 1
      %vm1602 = vcmp.eq.s32.totalorder %v1570, 1
      %vm1603 = vcmp.eq.s32.totalorder %v1573, 1
      %vm1604 = vcmp.eq.s32.totalorder %v1576, 1
      %vm1605 = vcmp.eq.s32.totalorder %v1579, 1
      %vm1606 = vcmp.eq.s32.totalorder %v1582, 1
      %vm1607 = vcmp.eq.s32.totalorder %v1585, 1
      %vm1608 = vcmp.eq.s32.totalorder %v1588, 1
      %vm1609 = vcmp.eq.s32.totalorder %v1591, 1
      %vm1610 = vcmp.eq.s32.totalorder %v1594, 1
      %v1611 = vsel %vm1595, %v1482, 0.0
      %v1612 = vsel %vm1596, %v1481, 0.0
      %v1613 = vsel %vm1597, %v1480, 0.0
      %v1614 = vsel %vm1598, %v1479, 0.0
      %v1615 = vsel %vm1599, %v1478, 0.0
      %v1616 = vsel %vm1600, %v1477, 0.0
      %v1617 = vsel %vm1601, %v1476, 0.0
      %v1618 = vsel %vm1602, %v1475, 0.0
      %v1619 = vsel %vm1603, %v1474, 0.0
      %v1620 = vsel %vm1604, %v1473, 0.0
      %v1621 = vsel %vm1605, %v1472, 0.0
      %v1622 = vsel %vm1606, %v1471, 0.0
      %v1623 = vsel %vm1607, %v1470, 0.0
      %v1624 = vsel %vm1608, %v1469, 0.0
      %v1625 = vsel %vm1609, %v1468, 0.0
      %v1626 = vsel %vm1610, %v1467, 0.0
      %v1627 = vpack.c.bf16 %v1612, %v1611
      %v1628 = vpack.c.bf16 %v1614, %v1613
      %v1629 = vpack.c.bf16 %v1616, %v1615
      %v1630 = vpack.c.bf16 %v1618, %v1617
      %v1631 = vpack.c.bf16 %v1620, %v1619
      %v1632 = vpack.c.bf16 %v1622, %v1621
      %v1633 = vpack.c.bf16 %v1624, %v1623
      %v1634 = vpack.c.bf16 %v1626, %v1625
      %v1635 = vld [vmem:[%s5] sm:$0xff]
      %v1636 = vld [vmem:[%s5 + $0x8] sm:$0xf]
      %v1637 = vld [vmem:[%s5 + $0xc] sm:$0xff]
      %v1638 = vld [vmem:[%s5 + $0x14] sm:$0xf]
      %v1639 = vld [vmem:[%s5 + $0x18] sm:$0xff]
      %v1640 = vld [vmem:[%s5 + $0x20] sm:$0xf]
      %v1641 = vld [vmem:[%s5 + $0x24] sm:$0xff]
      %v1642 = vld [vmem:[%s5 + $0x2c] sm:$0xf]
      %v1643 = vld [vmem:[%s5 + $0x30] sm:$0xff]
      %v1644 = vld [vmem:[%s5 + $0x38] sm:$0xf]
      %v1645 = vld [vmem:[%s5 + $0x3c] sm:$0xff]
      %v1646 = vld [vmem:[%s5 + $0x44] sm:$0xf]
      %v1647 = vld [vmem:[%s5 + $0x48] sm:$0xff]
      %v1648 = vld [vmem:[%s5 + $0x50] sm:$0xf]
      %v1649 = vld [vmem:[%s5 + $0x54] sm:$0xff]
      %v1650 = vld [vmem:[%s5 + $0x5c] sm:$0xf]
      %v1651 = vld [vmem:[%s5 + $0x60] sm:$0xff]
      %v1652 = vld [vmem:[%s5 + $0x68] sm:$0xf]
      %v1653 = vld [vmem:[%s5 + $0x6c] sm:$0xff]
      %v1654 = vld [vmem:[%s5 + $0x74] sm:$0xf]
      %v1655 = vld [vmem:[%s5 + $0x78] sm:$0xff]
      %v1656 = vld [vmem:[%s5 + $0x80] sm:$0xf]
      %v1657 = vld [vmem:[%s5 + $0x84] sm:$0xff]
      %v1658 = vld [vmem:[%s5 + $0x8c] sm:$0xf]
      %v1659 = vld [vmem:[%s5 + $0x90] sm:$0xff]
      %v1660 = vld [vmem:[%s5 + $0x98] sm:$0xf]
      %v1661 = vld [vmem:[%s5 + $0x9c] sm:$0xff]
      %v1662 = vld [vmem:[%s5 + $0xa4] sm:$0xf]
      %v1663 = vld [vmem:[%s5 + $0xa8] sm:$0xff]
      %v1664 = vld [vmem:[%s5 + $0xb0] sm:$0xf]
      %v1665 = vld [vmem:[%s5 + $0xb4] sm:$0xff]
      %v1666 = vld [vmem:[%s5 + $0xbc] sm:$0xf]
      %v1667 = vpack.c.bf16 %v1278, %v1274
      %v1668 = vpack.c.bf16 %v1288, %v1284
      %v1669 = vpack.c.bf16 %v1298, %v1294
      %v1670 = vpack.c.bf16 %v1308, %v1304
      %v1671 = vpack.c.bf16 %v1318, %v1314
      %v1672 = vpack.c.bf16 %v1328, %v1324
      %v1673 = vpack.c.bf16 %v1338, %v1334
      %v1674 = vpack.c.bf16 %v1348, %v1344
      %s1675 = scalar_lea.vmem %s5, 192
      %v1676 = vld [vmem:[%s1675] sm:$0xff]
      %v1677 = vld [vmem:[%s1675 + $0x8] sm:$0xf]
      %v1678 = vld [vmem:[%s1675 + $0xc] sm:$0xff]
      %v1679 = vld [vmem:[%s1675 + $0x14] sm:$0xf]
      %v1680 = vld [vmem:[%s1675 + $0x18] sm:$0xff]
      %v1681 = vld [vmem:[%s1675 + $0x20] sm:$0xf]
      %v1682 = vld [vmem:[%s1675 + $0x24] sm:$0xff]
      %v1683 = vld [vmem:[%s1675 + $0x2c] sm:$0xf]
      %v1684 = vld [vmem:[%s1675 + $0x30] sm:$0xff]
      %v1685 = vld [vmem:[%s1675 + $0x38] sm:$0xf]
      %v1686 = vld [vmem:[%s1675 + $0x3c] sm:$0xff]
      %v1687 = vld [vmem:[%s1675 + $0x44] sm:$0xf]
      %v1688 = vld [vmem:[%s1675 + $0x48] sm:$0xff]
      %v1689 = vld [vmem:[%s1675 + $0x50] sm:$0xf]
      %v1690 = vld [vmem:[%s1675 + $0x54] sm:$0xff]
      %v1691 = vld [vmem:[%s1675 + $0x5c] sm:$0xf]
      %v1692 = vld [vmem:[%s1675 + $0x60] sm:$0xff]
      %v1693 = vld [vmem:[%s1675 + $0x68] sm:$0xf]
      %v1694 = vld [vmem:[%s1675 + $0x6c] sm:$0xff]
      %v1695 = vld [vmem:[%s1675 + $0x74] sm:$0xf]
      %v1696 = vld [vmem:[%s1675 + $0x78] sm:$0xff]
      %v1697 = vld [vmem:[%s1675 + $0x80] sm:$0xf]
      %v1698 = vld [vmem:[%s1675 + $0x84] sm:$0xff]
      %v1699 = vld [vmem:[%s1675 + $0x8c] sm:$0xf]
      %v1700 = vld [vmem:[%s1675 + $0x90] sm:$0xff]
      %v1701 = vld [vmem:[%s1675 + $0x98] sm:$0xf]
      %v1702 = vld [vmem:[%s1675 + $0x9c] sm:$0xff]
      %v1703 = vld [vmem:[%s1675 + $0xa4] sm:$0xf]
      %v1704 = vld [vmem:[%s1675 + $0xa8] sm:$0xff]
      %v1705 = vld [vmem:[%s1675 + $0xb0] sm:$0xf]
      %v1706 = vld [vmem:[%s1675 + $0xb4] sm:$0xff]
      %v1707 = vld [vmem:[%s1675 + $0xbc] sm:$0xf]
      %v1740 = vunpack.c.l.b16 %v1676
      %v1741 = vunpack.c.h.b16 %v1676
      %v1742 = vunpack.c.l.b16 %v1677
      %v1743 = vunpack.c.l.b16 %v1678
      %v1744 = vunpack.c.h.b16 %v1678
      %v1745 = vunpack.c.l.b16 %v1679
      %v1746 = vunpack.c.l.b16 %v1680
      %v1747 = vunpack.c.h.b16 %v1680
      %v1748 = vunpack.c.l.b16 %v1681
      %v1749 = vunpack.c.l.b16 %v1682
      %v1750 = vunpack.c.h.b16 %v1682
      %v1751 = vunpack.c.l.b16 %v1683
      %v1752 = vunpack.c.l.b16 %v1684
      %v1753 = vunpack.c.h.b16 %v1684
      %v1754 = vunpack.c.l.b16 %v1685
      %v1755 = vunpack.c.l.b16 %v1686
      %v1756 = vunpack.c.h.b16 %v1686
      %v1757 = vunpack.c.l.b16 %v1687
      %v1758 = vunpack.c.l.b16 %v1688
      %v1759 = vunpack.c.h.b16 %v1688
      %v1760 = vunpack.c.l.b16 %v1689
      %v1761 = vunpack.c.l.b16 %v1690
      %v1762 = vunpack.c.h.b16 %v1690
      %v1763 = vunpack.c.l.b16 %v1691
      %v1764 = vunpack.c.l.b16 %v1692
      %v1765 = vunpack.c.h.b16 %v1692
      %v1766 = vunpack.c.l.b16 %v1693
      %v1767 = vunpack.c.l.b16 %v1694
      %v1768 = vunpack.c.h.b16 %v1694
      %v1769 = vunpack.c.l.b16 %v1695
      %v1770 = vunpack.c.l.b16 %v1696
      %v1771 = vunpack.c.h.b16 %v1696
      %v1772 = vunpack.c.l.b16 %v1697
      %v1773 = vunpack.c.l.b16 %v1698
      %v1774 = vunpack.c.h.b16 %v1698
      %v1775 = vunpack.c.l.b16 %v1699
      %v1776 = vunpack.c.l.b16 %v1700
      %v1777 = vunpack.c.h.b16 %v1700
      %v1778 = vunpack.c.l.b16 %v1701
      %v1779 = vunpack.c.l.b16 %v1702
      %v1780 = vunpack.c.h.b16 %v1702
      %v1781 = vunpack.c.l.b16 %v1703
      %v1782 = vunpack.c.l.b16 %v1704
      %v1783 = vunpack.c.h.b16 %v1704
      %v1784 = vunpack.c.l.b16 %v1705
      %v1785 = vunpack.c.l.b16 %v1706
      %v1786 = vunpack.c.h.b16 %v1706
      %v1787 = vunpack.c.l.b16 %v1707
      %v1788 = vpack.c.b16 %v1743, %v1740
      %v1789 = vpack.c.b16 %v1744, %v1741
      %v1790 = vpack.c.b16 %v1745, %v1742
      %v1791 = vpack.c.b16 %v1749, %v1746
      %v1792 = vpack.c.b16 %v1750, %v1747
      %v1793 = vpack.c.b16 %v1751, %v1748
      %v1794 = vpack.c.b16 %v1755, %v1752
      %v1795 = vpack.c.b16 %v1756, %v1753
      %v1796 = vpack.c.b16 %v1757, %v1754
      %v1797 = vpack.c.b16 %v1761, %v1758
      %v1798 = vpack.c.b16 %v1762, %v1759
      %v1799 = vpack.c.b16 %v1763, %v1760
      %v1800 = vpack.c.b16 %v1767, %v1764
      %v1801 = vpack.c.b16 %v1768, %v1765
      %v1802 = vpack.c.b16 %v1769, %v1766
      %v1803 = vpack.c.b16 %v1773, %v1770
      %v1804 = vpack.c.b16 %v1774, %v1771
      %v1805 = vpack.c.b16 %v1775, %v1772
      %v1806 = vpack.c.b16 %v1779, %v1776
      %v1807 = vpack.c.b16 %v1780, %v1777
      %v1808 = vpack.c.b16 %v1781, %v1778
      %v1809 = vpack.c.b16 %v1785, %v1782
      %v1810 = vpack.c.b16 %v1786, %v1783
      %v1811 = vpack.c.b16 %v1787, %v1784
      %1836 = vmatprep.subr.bf16.mxu0 %v1810
      %1837 = vmatpush1.bf16.msra.mxu0 %v1809
      %1838 = vmatprep.subr.bf16.mxu0 %v1807
      %1839 = vmatpush1.bf16.msra.mxu0 %v1806
      %1840 = vmatprep.subr.bf16.mxu0 %v1804
      %1841 = vmatpush1.bf16.msra.mxu0 %v1803
      %1842 = vmatprep.subr.bf16.mxu0 %v1801
      %1843 = vmatpush1.bf16.msra.mxu0 %v1800
      %1844 = vmatprep.subr.bf16.mxu0 %v1798
      %1845 = vmatpush1.bf16.msra.mxu0 %v1797
      %1846 = vmatprep.subr.bf16.mxu0 %v1795
      %1847 = vmatpush1.bf16.msra.mxu0 %v1794
      %1848 = vmatprep.subr.bf16.mxu0 %v1792
      %1849 = vmatpush1.bf16.msra.mxu0 %v1791
      %1850 = vmatprep.subr.bf16.mxu0 %v1789
      %1851 = vmatpush1.bf16.msra.mxu0 %v1788
      %1852 = vmatprep.subr.bf16.mxu0 0
      %1853 = vmatpush2.bf16.msra.mxu0 0
      %1854 = vmatprep.subr.bf16.mxu0 0
      %1855 = vmatpush2.bf16.msra.mxu0 0
      %1856 = vmatprep.subr.bf16.mxu0 0
      %1857 = vmatpush2.bf16.msra.mxu0 0
      %1858 = vmatprep.subr.bf16.mxu0 0
      %1859 = vmatpush2.bf16.msra.mxu0 0
      %1860 = vmatprep.subr.bf16.mxu0 0
      %1861 = vmatpush2.bf16.msra.mxu0 0
      %1862 = vmatprep.subr.bf16.mxu0 0
      %1863 = vmatpush2.bf16.msra.mxu0 0
      %1864 = vmatprep.subr.bf16.mxu0 0
      %1865 = vmatpush2.bf16.msra.mxu0 0
      %1866 = vmatprep.subr.bf16.mxu0 0
      %1867 = vmatpush2.bf16.msra.mxu0 0
      %1868 = vmatprep.mubr.bf16.mxu0 0
      %1869 = vmatmul.mubr.bf16.gmra.mxu0 %v1667
      %v1870 = vpop.f32.mrf.mxu0
      %v1871 = vadd.f32 0.0, %v1870
      %v1872 = vpop.f32.mrf.mxu0
      %v1873 = vadd.f32 0.0, %v1872
      %v1874 = vpop.f32.mrf.mxu0
      %v1875 = vadd.f32 0.0, %v1874
      %v1876 = vpop.f32.mrf.mxu0
      %v1877 = vadd.f32 0.0, %v1876
      %1878 = vmatprep.mubr.bf16.mxu0 0
      %1879 = vmatmul.mubr.bf16.gmra.mxu0 %v1668
      %v1880 = vpop.f32.mrf.mxu0
      %v1881 = vadd.f32 0.0, %v1880
      %v1882 = vpop.f32.mrf.mxu0
      %v1883 = vadd.f32 0.0, %v1882
      %v1884 = vpop.f32.mrf.mxu0
      %v1885 = vadd.f32 0.0, %v1884
      %v1886 = vpop.f32.mrf.mxu0
      %v1887 = vadd.f32 0.0, %v1886
      %1888 = vmatprep.mubr.bf16.mxu0 0
      %1889 = vmatmul.mubr.bf16.gmra.mxu0 %v1669
      %v1890 = vpop.f32.mrf.mxu0
      %v1891 = vadd.f32 0.0, %v1890
      %v1892 = vpop.f32.mrf.mxu0
      %v1893 = vadd.f32 0.0, %v1892
      %v1894 = vpop.f32.mrf.mxu0
      %v1895 = vadd.f32 0.0, %v1894
      %v1896 = vpop.f32.mrf.mxu0
      %v1897 = vadd.f32 0.0, %v1896
      %1898 = vmatprep.mubr.bf16.mxu0 0
      %1899 = vmatmul.mubr.bf16.gmra.mxu0 %v1670
      %v1900 = vpop.f32.mrf.mxu0
      %v1901 = vadd.f32 0.0, %v1900
      %v1902 = vpop.f32.mrf.mxu0
      %v1903 = vadd.f32 0.0, %v1902
      %v1904 = vpop.f32.mrf.mxu0
      %v1905 = vadd.f32 0.0, %v1904
      %v1906 = vpop.f32.mrf.mxu0
      %v1907 = vadd.f32 0.0, %v1906
      %1908 = vmatprep.mubr.bf16.mxu0 0
      %1909 = vmatmul.mubr.bf16.gmra.mxu0 %v1671
      %v1910 = vpop.f32.mrf.mxu0
      %v1911 = vadd.f32 0.0, %v1910
      %v1912 = vpop.f32.mrf.mxu0
      %v1913 = vadd.f32 0.0, %v1912
      %v1914 = vpop.f32.mrf.mxu0
      %v1915 = vadd.f32 0.0, %v1914
      %v1916 = vpop.f32.mrf.mxu0
      %v1917 = vadd.f32 0.0, %v1916
      %1918 = vmatprep.mubr.bf16.mxu0 0
      %1919 = vmatmul.mubr.bf16.gmra.mxu0 %v1672
      %v1920 = vpop.f32.mrf.mxu0
      %v1921 = vadd.f32 0.0, %v1920
      %v1922 = vpop.f32.mrf.mxu0
      %v1923 = vadd.f32 0.0, %v1922
      %v1924 = vpop.f32.mrf.mxu0
      %v1925 = vadd.f32 0.0, %v1924
      %v1926 = vpop.f32.mrf.mxu0
      %v1927 = vadd.f32 0.0, %v1926
      %1928 = vmatprep.mubr.bf16.mxu0 0
      %1929 = vmatmul.mubr.bf16.gmra.mxu0 %v1673
      %v1930 = vpop.f32.mrf.mxu0
      %v1931 = vadd.f32 0.0, %v1930
      %v1932 = vpop.f32.mrf.mxu0
      %v1933 = vadd.f32 0.0, %v1932
      %v1934 = vpop.f32.mrf.mxu0
      %v1935 = vadd.f32 0.0, %v1934
      %v1936 = vpop.f32.mrf.mxu0
      %v1937 = vadd.f32 0.0, %v1936
      %1938 = vmatprep.mubr.bf16.mxu0 0
      %1939 = vmatmul.mubr.bf16.gmra.mxu0 %v1674
      %v1940 = vpop.f32.mrf.mxu0
      %v1941 = vadd.f32 0.0, %v1940
      %v1942 = vpop.f32.mrf.mxu0
      %v1943 = vadd.f32 0.0, %v1942
      %v1944 = vpop.f32.mrf.mxu0
      %v1945 = vadd.f32 0.0, %v1944
      %v1946 = vpop.f32.mrf.mxu0
      %v1947 = vadd.f32 0.0, %v1946
      %1948 = vdwg.mxu0
      %1949 = vmatprep.subr.bf16.mxu0 0
      %1950 = vmatpush1.bf16.msra.mxu0 %v1811
      %1951 = vmatprep.subr.bf16.mxu0 0
      %1952 = vmatpush1.bf16.msra.mxu0 %v1808
      %1953 = vmatprep.subr.bf16.mxu0 0
      %1954 = vmatpush1.bf16.msra.mxu0 %v1805
      %1955 = vmatprep.subr.bf16.mxu0 0
      %1956 = vmatpush1.bf16.msra.mxu0 %v1802
      %1957 = vmatprep.subr.bf16.mxu0 0
      %1958 = vmatpush1.bf16.msra.mxu0 %v1799
      %1959 = vmatprep.subr.bf16.mxu0 0
      %1960 = vmatpush1.bf16.msra.mxu0 %v1796
      %1961 = vmatprep.subr.bf16.mxu0 0
      %1962 = vmatpush1.bf16.msra.mxu0 %v1793
      %1963 = vmatprep.subr.bf16.mxu0 0
      %1964 = vmatpush1.bf16.msra.mxu0 %v1790
      %1965 = vmatprep.subr.bf16.mxu0 0
      %1966 = vmatpush2.bf16.msra.mxu0 0
      %1967 = vmatprep.subr.bf16.mxu0 0
      %1968 = vmatpush2.bf16.msra.mxu0 0
      %1969 = vmatprep.subr.bf16.mxu0 0
      %1970 = vmatpush2.bf16.msra.mxu0 0
      %1971 = vmatprep.subr.bf16.mxu0 0
      %1972 = vmatpush2.bf16.msra.mxu0 0
      %1973 = vmatprep.subr.bf16.mxu0 0
      %1974 = vmatpush2.bf16.msra.mxu0 0
      %1975 = vmatprep.subr.bf16.mxu0 0
      %1976 = vmatpush2.bf16.msra.mxu0 0
      %1977 = vmatprep.subr.bf16.mxu0 0
      %1978 = vmatpush2.bf16.msra.mxu0 0
      %1979 = vmatprep.subr.bf16.mxu0 0
      %1980 = vmatpush2.bf16.msra.mxu0 0
      %1981 = vmatprep.mubr.bf16.mxu0 0
      %1982 = vmatmul.mubr.bf16.gmra.mxu0 %v1667
      %v1983 = vpop.f32.mrf.mxu0
      %v1984 = vadd.f32 0.0, %v1983
      %v1985 = vpop.f32.mrf.mxu0
      %v1986 = vpop.f32.mrf.mxu0
      %v1987 = vadd.f32 0.0, %v1986
      %v1988 = vpop.f32.mrf.mxu0
      %1989 = vmatprep.mubr.bf16.mxu0 0
      %1990 = vmatmul.mubr.bf16.gmra.mxu0 %v1668
      %v1991 = vpop.f32.mrf.mxu0
      %v1992 = vadd.f32 0.0, %v1991
      %v1993 = vpop.f32.mrf.mxu0
      %v1994 = vpop.f32.mrf.mxu0
      %v1995 = vadd.f32 0.0, %v1994
      %v1996 = vpop.f32.mrf.mxu0
      %1997 = vmatprep.mubr.bf16.mxu0 0
      %1998 = vmatmul.mubr.bf16.gmra.mxu0 %v1669
      %v1999 = vpop.f32.mrf.mxu0
      %v2000 = vadd.f32 0.0, %v1999
      %v2001 = vpop.f32.mrf.mxu0
      %v2002 = vpop.f32.mrf.mxu0
      %v2003 = vadd.f32 0.0, %v2002
      %v2004 = vpop.f32.mrf.mxu0
      %2005 = vmatprep.mubr.bf16.mxu0 0
      %2006 = vmatmul.mubr.bf16.gmra.mxu0 %v1670
      %v2007 = vpop.f32.mrf.mxu0
      %v2008 = vadd.f32 0.0, %v2007
      %v2009 = vpop.f32.mrf.mxu0
      %v2010 = vpop.f32.mrf.mxu0
      %v2011 = vadd.f32 0.0, %v2010
      %v2012 = vpop.f32.mrf.mxu0
      %2013 = vmatprep.mubr.bf16.mxu0 0
      %2014 = vmatmul.mubr.bf16.gmra.mxu0 %v1671
      %v2015 = vpop.f32.mrf.mxu0
      %v2016 = vadd.f32 0.0, %v2015
      %v2017 = vpop.f32.mrf.mxu0
      %v2018 = vpop.f32.mrf.mxu0
      %v2019 = vadd.f32 0.0, %v2018
      %v2020 = vpop.f32.mrf.mxu0
      %2021 = vmatprep.mubr.bf16.mxu0 0
      %2022 = vmatmul.mubr.bf16.gmra.mxu0 %v1672
      %v2023 = vpop.f32.mrf.mxu0
      %v2024 = vadd.f32 0.0, %v2023
      %v2025 = vpop.f32.mrf.mxu0
      %v2026 = vpop.f32.mrf.mxu0
      %v2027 = vadd.f32 0.0, %v2026
      %v2028 = vpop.f32.mrf.mxu0
      %2029 = vmatprep.mubr.bf16.mxu0 0
      %2030 = vmatmul.mubr.bf16.gmra.mxu0 %v1673
      %v2031 = vpop.f32.mrf.mxu0
      %v2032 = vadd.f32 0.0, %v2031
      %v2033 = vpop.f32.mrf.mxu0
      %v2034 = vpop.f32.mrf.mxu0
      %v2035 = vadd.f32 0.0, %v2034
      %v2036 = vpop.f32.mrf.mxu0
      %2037 = vmatprep.mubr.bf16.mxu0 0
      %2038 = vmatmul.mubr.bf16.gmra.mxu0 %v1674
      %v2039 = vpop.f32.mrf.mxu0
      %v2040 = vadd.f32 0.0, %v2039
      %v2041 = vpop.f32.mrf.mxu0
      %v2042 = vpop.f32.mrf.mxu0
      %v2043 = vadd.f32 0.0, %v2042
      %v2044 = vpop.f32.mrf.mxu0
      %2045 = vdwg.mxu0
      %v2078 = vunpack.c.l.b16 %v1635
      %v2079 = vunpack.c.h.b16 %v1635
      %v2080 = vunpack.c.l.b16 %v1636
      %v2081 = vunpack.c.l.b16 %v1637
      %v2082 = vunpack.c.h.b16 %v1637
      %v2083 = vunpack.c.l.b16 %v1638
      %v2084 = vunpack.c.l.b16 %v1639
      %v2085 = vunpack.c.h.b16 %v1639
      %v2086 = vunpack.c.l.b16 %v1640
      %v2087 = vunpack.c.l.b16 %v1641
      %v2088 = vunpack.c.h.b16 %v1641
      %v2089 = vunpack.c.l.b16 %v1642
      %v2090 = vunpack.c.l.b16 %v1643
      %v2091 = vunpack.c.h.b16 %v1643
      %v2092 = vunpack.c.l.b16 %v1644
      %v2093 = vunpack.c.l.b16 %v1645
      %v2094 = vunpack.c.h.b16 %v1645
      %v2095 = vunpack.c.l.b16 %v1646
      %v2096 = vunpack.c.l.b16 %v1647
      %v2097 = vunpack.c.h.b16 %v1647
      %v2098 = vunpack.c.l.b16 %v1648
      %v2099 = vunpack.c.l.b16 %v1649
      %v2100 = vunpack.c.h.b16 %v1649
      %v2101 = vunpack.c.l.b16 %v1650
      %v2102 = vunpack.c.l.b16 %v1651
      %v2103 = vunpack.c.h.b16 %v1651
      %v2104 = vunpack.c.l.b16 %v1652
      %v2105 = vunpack.c.l.b16 %v1653
      %v2106 = vunpack.c.h.b16 %v1653
      %v2107 = vunpack.c.l.b16 %v1654
      %v2108 = vunpack.c.l.b16 %v1655
      %v2109 = vunpack.c.h.b16 %v1655
      %v2110 = vunpack.c.l.b16 %v1656
      %v2111 = vunpack.c.l.b16 %v1657
      %v2112 = vunpack.c.h.b16 %v1657
      %v2113 = vunpack.c.l.b16 %v1658
      %v2114 = vunpack.c.l.b16 %v1659
      %v2115 = vunpack.c.h.b16 %v1659
      %v2116 = vunpack.c.l.b16 %v1660
      %v2117 = vunpack.c.l.b16 %v1661
      %v2118 = vunpack.c.h.b16 %v1661
      %v2119 = vunpack.c.l.b16 %v1662
      %v2120 = vunpack.c.l.b16 %v1663
      %v2121 = vunpack.c.h.b16 %v1663
      %v2122 = vunpack.c.l.b16 %v1664
      %v2123 = vunpack.c.l.b16 %v1665
      %v2124 = vunpack.c.h.b16 %v1665
      %v2125 = vunpack.c.l.b16 %v1666
      %v2126 = vpack.c.b16 %v2081, %v2078
      %v2127 = vpack.c.b16 %v2082, %v2079
      %v2128 = vpack.c.b16 %v2083, %v2080
      %v2129 = vpack.c.b16 %v2087, %v2084
      %v2130 = vpack.c.b16 %v2088, %v2085
      %v2131 = vpack.c.b16 %v2089, %v2086
      %v2132 = vpack.c.b16 %v2093, %v2090
      %v2133 = vpack.c.b16 %v2094, %v2091
      %v2134 = vpack.c.b16 %v2095, %v2092
      %v2135 = vpack.c.b16 %v2099, %v2096
      %v2136 = vpack.c.b16 %v2100, %v2097
      %v2137 = vpack.c.b16 %v2101, %v2098
      %v2138 = vpack.c.b16 %v2105, %v2102
      %v2139 = vpack.c.b16 %v2106, %v2103
      %v2140 = vpack.c.b16 %v2107, %v2104
      %v2141 = vpack.c.b16 %v2111, %v2108
      %v2142 = vpack.c.b16 %v2112, %v2109
      %v2143 = vpack.c.b16 %v2113, %v2110
      %v2144 = vpack.c.b16 %v2117, %v2114
      %v2145 = vpack.c.b16 %v2118, %v2115
      %v2146 = vpack.c.b16 %v2119, %v2116
      %v2147 = vpack.c.b16 %v2123, %v2120
      %v2148 = vpack.c.b16 %v2124, %v2121
      %v2149 = vpack.c.b16 %v2125, %v2122
      %2174 = vmatprep.subr.bf16.mxu0 %v2148
      %2175 = vmatpush1.bf16.msra.mxu0 %v2147
      %2176 = vmatprep.subr.bf16.mxu0 %v2145
      %2177 = vmatpush1.bf16.msra.mxu0 %v2144
      %2178 = vmatprep.subr.bf16.mxu0 %v2142
      %2179 = vmatpush1.bf16.msra.mxu0 %v2141
      %2180 = vmatprep.subr.bf16.mxu0 %v2139
      %2181 = vmatpush1.bf16.msra.mxu0 %v2138
      %2182 = vmatprep.subr.bf16.mxu0 %v2136
      %2183 = vmatpush1.bf16.msra.mxu0 %v2135
      %2184 = vmatprep.subr.bf16.mxu0 %v2133
      %2185 = vmatpush1.bf16.msra.mxu0 %v2132
      %2186 = vmatprep.subr.bf16.mxu0 %v2130
      %2187 = vmatpush1.bf16.msra.mxu0 %v2129
      %2188 = vmatprep.subr.bf16.mxu0 %v2127
      %2189 = vmatpush1.bf16.msra.mxu0 %v2126
      %2190 = vmatprep.subr.bf16.mxu0 0
      %2191 = vmatpush2.bf16.msra.mxu0 0
      %2192 = vmatprep.subr.bf16.mxu0 0
      %2193 = vmatpush2.bf16.msra.mxu0 0
      %2194 = vmatprep.subr.bf16.mxu0 0
      %2195 = vmatpush2.bf16.msra.mxu0 0
      %2196 = vmatprep.subr.bf16.mxu0 0
      %2197 = vmatpush2.bf16.msra.mxu0 0
      %2198 = vmatprep.subr.bf16.mxu0 0
      %2199 = vmatpush2.bf16.msra.mxu0 0
      %2200 = vmatprep.subr.bf16.mxu0 0
      %2201 = vmatpush2.bf16.msra.mxu0 0
      %2202 = vmatprep.subr.bf16.mxu0 0
      %2203 = vmatpush2.bf16.msra.mxu0 0
      %2204 = vmatprep.subr.bf16.mxu0 0
      %2205 = vmatpush2.bf16.msra.mxu0 0
      %2206 = vmatprep.mubr.bf16.mxu0 0
      %2207 = vmatmul.mubr.bf16.gmra.mxu0 %v1627
      %v2208 = vpop.f32.mrf.mxu0
      %v2209 = vadd.f32 %v1871, %v2208
      %v2210 = vpop.f32.mrf.mxu0
      %v2211 = vadd.f32 %v1873, %v2210
      %v2212 = vpop.f32.mrf.mxu0
      %v2213 = vadd.f32 %v1875, %v2212
      %v2214 = vpop.f32.mrf.mxu0
      %v2215 = vadd.f32 %v1877, %v2214
      %2216 = vmatprep.mubr.bf16.mxu0 0
      %2217 = vmatmul.mubr.bf16.gmra.mxu0 %v1628
      %v2218 = vpop.f32.mrf.mxu0
      %v2219 = vadd.f32 %v1881, %v2218
      %v2220 = vpop.f32.mrf.mxu0
      %v2221 = vadd.f32 %v1883, %v2220
      %v2222 = vpop.f32.mrf.mxu0
      %v2223 = vadd.f32 %v1885, %v2222
      %v2224 = vpop.f32.mrf.mxu0
      %v2225 = vadd.f32 %v1887, %v2224
      %2226 = vmatprep.mubr.bf16.mxu0 0
      %2227 = vmatmul.mubr.bf16.gmra.mxu0 %v1629
      %v2228 = vpop.f32.mrf.mxu0
      %v2229 = vadd.f32 %v1891, %v2228
      %v2230 = vpop.f32.mrf.mxu0
      %v2231 = vadd.f32 %v1893, %v2230
      %v2232 = vpop.f32.mrf.mxu0
      %v2233 = vadd.f32 %v1895, %v2232
      %v2234 = vpop.f32.mrf.mxu0
      %v2235 = vadd.f32 %v1897, %v2234
      %2236 = vmatprep.mubr.bf16.mxu0 0
      %2237 = vmatmul.mubr.bf16.gmra.mxu0 %v1630
      %v2238 = vpop.f32.mrf.mxu0
      %v2239 = vadd.f32 %v1901, %v2238
      %v2240 = vpop.f32.mrf.mxu0
      %v2241 = vadd.f32 %v1903, %v2240
      %v2242 = vpop.f32.mrf.mxu0
      %v2243 = vadd.f32 %v1905, %v2242
      %v2244 = vpop.f32.mrf.mxu0
      %v2245 = vadd.f32 %v1907, %v2244
      %2246 = vmatprep.mubr.bf16.mxu0 0
      %2247 = vmatmul.mubr.bf16.gmra.mxu0 %v1631
      %v2248 = vpop.f32.mrf.mxu0
      %v2249 = vadd.f32 %v1911, %v2248
      %v2250 = vpop.f32.mrf.mxu0
      %v2251 = vadd.f32 %v1913, %v2250
      %v2252 = vpop.f32.mrf.mxu0
      %v2253 = vadd.f32 %v1915, %v2252
      %v2254 = vpop.f32.mrf.mxu0
      %v2255 = vadd.f32 %v1917, %v2254
      %2256 = vmatprep.mubr.bf16.mxu0 0
      %2257 = vmatmul.mubr.bf16.gmra.mxu0 %v1632
      %v2258 = vpop.f32.mrf.mxu0
      %v2259 = vadd.f32 %v1921, %v2258
      %v2260 = vpop.f32.mrf.mxu0
      %v2261 = vadd.f32 %v1923, %v2260
      %v2262 = vpop.f32.mrf.mxu0
      %v2263 = vadd.f32 %v1925, %v2262
      %v2264 = vpop.f32.mrf.mxu0
      %v2265 = vadd.f32 %v1927, %v2264
      %2266 = vmatprep.mubr.bf16.mxu0 0
      %2267 = vmatmul.mubr.bf16.gmra.mxu0 %v1633
      %v2268 = vpop.f32.mrf.mxu0
      %v2269 = vadd.f32 %v1931, %v2268
      %v2270 = vpop.f32.mrf.mxu0
      %v2271 = vadd.f32 %v1933, %v2270
      %v2272 = vpop.f32.mrf.mxu0
      %v2273 = vadd.f32 %v1935, %v2272
      %v2274 = vpop.f32.mrf.mxu0
      %v2275 = vadd.f32 %v1937, %v2274
      %2276 = vmatprep.mubr.bf16.mxu0 0
      %2277 = vmatmul.mubr.bf16.gmra.mxu0 %v1634
      %v2278 = vpop.f32.mrf.mxu0
      %v2279 = vadd.f32 %v1941, %v2278
      %v2280 = vpop.f32.mrf.mxu0
      %v2281 = vadd.f32 %v1943, %v2280
      %v2282 = vpop.f32.mrf.mxu0
      %v2283 = vadd.f32 %v1945, %v2282
      %v2284 = vpop.f32.mrf.mxu0
      %v2285 = vadd.f32 %v1947, %v2284
      %2286 = vdwg.mxu0
      %2287 = vmatprep.subr.bf16.mxu0 0
      %2288 = vmatpush1.bf16.msra.mxu0 %v2149
      %2289 = vmatprep.subr.bf16.mxu0 0
      %2290 = vmatpush1.bf16.msra.mxu0 %v2146
      %2291 = vmatprep.subr.bf16.mxu0 0
      %2292 = vmatpush1.bf16.msra.mxu0 %v2143
      %2293 = vmatprep.subr.bf16.mxu0 0
      %2294 = vmatpush1.bf16.msra.mxu0 %v2140
      %2295 = vmatprep.subr.bf16.mxu0 0
      %2296 = vmatpush1.bf16.msra.mxu0 %v2137
      %2297 = vmatprep.subr.bf16.mxu0 0
      %2298 = vmatpush1.bf16.msra.mxu0 %v2134
      %2299 = vmatprep.subr.bf16.mxu0 0
      %2300 = vmatpush1.bf16.msra.mxu0 %v2131
      %2301 = vmatprep.subr.bf16.mxu0 0
      %2302 = vmatpush1.bf16.msra.mxu0 %v2128
      %2303 = vmatprep.subr.bf16.mxu0 0
      %2304 = vmatpush2.bf16.msra.mxu0 0
      %2305 = vmatprep.subr.bf16.mxu0 0
      %2306 = vmatpush2.bf16.msra.mxu0 0
      %2307 = vmatprep.subr.bf16.mxu0 0
      %2308 = vmatpush2.bf16.msra.mxu0 0
      %2309 = vmatprep.subr.bf16.mxu0 0
      %2310 = vmatpush2.bf16.msra.mxu0 0
      %2311 = vmatprep.subr.bf16.mxu0 0
      %2312 = vmatpush2.bf16.msra.mxu0 0
      %2313 = vmatprep.subr.bf16.mxu0 0
      %2314 = vmatpush2.bf16.msra.mxu0 0
      %2315 = vmatprep.subr.bf16.mxu0 0
      %2316 = vmatpush2.bf16.msra.mxu0 0
      %2317 = vmatprep.subr.bf16.mxu0 0
      %2318 = vmatpush2.bf16.msra.mxu0 0
      %2319 = vmatprep.mubr.bf16.mxu0 0
      %2320 = vmatmul.mubr.bf16.gmra.mxu0 %v1627
      %v2321 = vpop.f32.mrf.mxu0
      %v2322 = vadd.f32 %v1984, %v2321
      %v2323 = vpop.f32.mrf.mxu0
      %v2324 = vpop.f32.mrf.mxu0
      %v2325 = vadd.f32 %v1987, %v2324
      %v2326 = vpop.f32.mrf.mxu0
      %2327 = vmatprep.mubr.bf16.mxu0 0
      %2328 = vmatmul.mubr.bf16.gmra.mxu0 %v1628
      %v2329 = vpop.f32.mrf.mxu0
      %v2330 = vadd.f32 %v1992, %v2329
      %v2331 = vpop.f32.mrf.mxu0
      %v2332 = vpop.f32.mrf.mxu0
      %v2333 = vadd.f32 %v1995, %v2332
      %v2334 = vpop.f32.mrf.mxu0
      %2335 = vmatprep.mubr.bf16.mxu0 0
      %2336 = vmatmul.mubr.bf16.gmra.mxu0 %v1629
      %v2337 = vpop.f32.mrf.mxu0
      %v2338 = vadd.f32 %v2000, %v2337
      %v2339 = vpop.f32.mrf.mxu0
      %v2340 = vpop.f32.mrf.mxu0
      %v2341 = vadd.f32 %v2003, %v2340
      %v2342 = vpop.f32.mrf.mxu0
      %2343 = vmatprep.mubr.bf16.mxu0 0
      %2344 = vmatmul.mubr.bf16.gmra.mxu0 %v1630
      %v2345 = vpop.f32.mrf.mxu0
      %v2346 = vadd.f32 %v2008, %v2345
      %v2347 = vpop.f32.mrf.mxu0
      %v2348 = vpop.f32.mrf.mxu0
      %v2349 = vadd.f32 %v2011, %v2348
      %v2350 = vpop.f32.mrf.mxu0
      %2351 = vmatprep.mubr.bf16.mxu0 0
      %2352 = vmatmul.mubr.bf16.gmra.mxu0 %v1631
      %v2353 = vpop.f32.mrf.mxu0
      %v2354 = vadd.f32 %v2016, %v2353
      %v2355 = vpop.f32.mrf.mxu0
      %v2356 = vpop.f32.mrf.mxu0
      %v2357 = vadd.f32 %v2019, %v2356
      %v2358 = vpop.f32.mrf.mxu0
      %2359 = vmatprep.mubr.bf16.mxu0 0
      %2360 = vmatmul.mubr.bf16.gmra.mxu0 %v1632
      %v2361 = vpop.f32.mrf.mxu0
      %v2362 = vadd.f32 %v2024, %v2361
      %v2363 = vpop.f32.mrf.mxu0
      %v2364 = vpop.f32.mrf.mxu0
      %v2365 = vadd.f32 %v2027, %v2364
      %v2366 = vpop.f32.mrf.mxu0
      %2367 = vmatprep.mubr.bf16.mxu0 0
      %2368 = vmatmul.mubr.bf16.gmra.mxu0 %v1633
      %v2369 = vpop.f32.mrf.mxu0
      %v2370 = vadd.f32 %v2032, %v2369
      %v2371 = vpop.f32.mrf.mxu0
      %v2372 = vpop.f32.mrf.mxu0
      %v2373 = vadd.f32 %v2035, %v2372
      %v2374 = vpop.f32.mrf.mxu0
      %2375 = vmatprep.mubr.bf16.mxu0 0
      %2376 = vmatmul.mubr.bf16.gmra.mxu0 %v1634
      %v2377 = vpop.f32.mrf.mxu0
      %v2378 = vadd.f32 %v2040, %v2377
      %v2379 = vpop.f32.mrf.mxu0
      %v2380 = vpop.f32.mrf.mxu0
      %v2381 = vadd.f32 %v2043, %v2380
      %v2382 = vpop.f32.mrf.mxu0
      %2383 = vdwg.mxu0
      %v2384 = vrot.slane %v1274, 1
      %v2385 = vrot.slane %v1278, 1
      %v2386 = vrot.slane %v1284, 1
      %v2387 = vrot.slane %v1288, 1
      %v2388 = vrot.slane %v1294, 1
      %v2389 = vrot.slane %v1298, 1
      %v2390 = vrot.slane %v1304, 1
      %v2391 = vrot.slane %v1308, 1
      %v2392 = vrot.slane %v1314, 1
      %v2393 = vrot.slane %v1318, 1
      %v2394 = vrot.slane %v1324, 1
      %v2395 = vrot.slane %v1328, 1
      %v2396 = vrot.slane %v1334, 1
      %v2397 = vrot.slane %v1338, 1
      %v2398 = vrot.slane %v1344, 1
      %v2399 = vrot.slane %v1348, 1
      %vm2400 = vcmp.lt.s32.totalorder %v1465, 7
      %v2401 = vsel %vm2400, %v2398, %v2399
      %v2402 = vsel %vm2400, %v2397, %v2398
      %v2403 = vsel %vm2400, %v2396, %v2397
      %v2404 = vsel %vm2400, %v2395, %v2396
      %v2405 = vsel %vm2400, %v2394, %v2395
      %v2406 = vsel %vm2400, %v2393, %v2394
      %v2407 = vsel %vm2400, %v2392, %v2393
      %v2408 = vsel %vm2400, %v2391, %v2392
      %v2409 = vsel %vm2400, %v2390, %v2391
      %v2410 = vsel %vm2400, %v2389, %v2390
      %v2411 = vsel %vm2400, %v2388, %v2389
      %v2412 = vsel %vm2400, %v2387, %v2388
      %v2413 = vsel %vm2400, %v2386, %v2387
      %v2414 = vsel %vm2400, %v2385, %v2386
      %v2415 = vsel %vm2400, %v2384, %v2385
      %v2416 = vsel %vm2400, %v2399, %v2384
      %vm2417 = vcmp.ge.s32.totalorder %v409, 4294967295
      %vm2418 = vcmp.ge.s32.totalorder %v410, 4294967295
      %vm2419 = vcmp.ge.s32.totalorder %v411, 4294967295
      %vm2420 = vcmp.ge.s32.totalorder %v412, 4294967295
      %vm2421 = vcmp.ge.s32.totalorder %v413, 4294967295
      %vm2422 = vcmp.ge.s32.totalorder %v414, 4294967295
      %vm2423 = vcmp.ge.s32.totalorder %v415, 4294967295
      %vm2424 = vcmp.ge.s32.totalorder %v416, 4294967295
      %vm2425 = vcmp.ge.s32.totalorder %v417, 4294967295
      %vm2426 = vcmp.ge.s32.totalorder %v418, 4294967295
      %vm2427 = vcmp.ge.s32.totalorder %v419, 4294967295
      %vm2428 = vcmp.ge.s32.totalorder %v420, 4294967295
      %vm2429 = vcmp.ge.s32.totalorder %v421, 4294967295
      %vm2430 = vcmp.ge.s32.totalorder %v422, 4294967295
      %vm2431 = vcmp.ge.s32.totalorder %v423, 4294967295
      %vm2432 = vcmp.ge.s32.totalorder %v424, 4294967295
      %vm2433 = vcmp.lt.s32.totalorder %v409, 15
      %vm2434 = vcmp.lt.s32.totalorder %v410, 15
      %vm2435 = vcmp.lt.s32.totalorder %v411, 15
      %vm2436 = vcmp.lt.s32.totalorder %v412, 15
      %vm2437 = vcmp.lt.s32.totalorder %v413, 15
      %vm2438 = vcmp.lt.s32.totalorder %v414, 15
      %vm2439 = vcmp.lt.s32.totalorder %v415, 15
      %vm2440 = vcmp.lt.s32.totalorder %v416, 15
      %vm2441 = vcmp.lt.s32.totalorder %v417, 15
      %vm2442 = vcmp.lt.s32.totalorder %v418, 15
      %vm2443 = vcmp.lt.s32.totalorder %v419, 15
      %vm2444 = vcmp.lt.s32.totalorder %v420, 15
      %vm2445 = vcmp.lt.s32.totalorder %v421, 15
      %vm2446 = vcmp.lt.s32.totalorder %v422, 15
      %vm2447 = vcmp.lt.s32.totalorder %v423, 15
      %vm2448 = vcmp.lt.s32.totalorder %v424, 15
      %vm2449 = vmand %vm2417, %vm2433
      %vm2450 = vmand %vm2418, %vm2434
      %vm2451 = vmand %vm2419, %vm2435
      %vm2452 = vmand %vm2420, %vm2436
      %vm2453 = vmand %vm2421, %vm2437
      %vm2454 = vmand %vm2422, %vm2438
      %vm2455 = vmand %vm2423, %vm2439
      %vm2456 = vmand %vm2424, %vm2440
      %vm2457 = vmand %vm2425, %vm2441
      %vm2458 = vmand %vm2426, %vm2442
      %vm2459 = vmand %vm2427, %vm2443
      %vm2460 = vmand %vm2428, %vm2444
      %vm2461 = vmand %vm2429, %vm2445
      %vm2462 = vmand %vm2430, %vm2446
      %vm2463 = vmand %vm2431, %vm2447
      %vm2464 = vmand %vm2432, %vm2448
      %v2465 = vsel %vm2449, 1, 0
      %v2466 = vsel %vm2450, 1, 0
      %v2467 = vsel %vm2451, 1, 0
      %v2468 = vsel %vm2452, 1, 0
      %v2469 = vsel %vm2453, 1, 0
      %v2470 = vsel %vm2454, 1, 0
      %v2471 = vsel %vm2455, 1, 0
      %v2472 = vsel %vm2456, 1, 0
      %v2473 = vsel %vm2457, 1, 0
      %v2474 = vsel %vm2458, 1, 0
      %v2475 = vsel %vm2459, 1, 0
      %v2476 = vsel %vm2460, 1, 0
      %v2477 = vsel %vm2461, 1, 0
      %v2478 = vsel %vm2462, 1, 0
      %v2479 = vsel %vm2463, 1, 0
      %v2480 = vsel %vm2464, 1, 0
      %2481 = vset.pattern.permute.xlu0 0
      %2482 = vperm.xlu0 %2481, %v2465
      %v2483 = vpop.permute.xlu0 %2482
      %2484 = vset.pattern.permute.xlu0 0
      %2485 = vperm.xlu0 %2484, %v2466
      %v2486 = vpop.permute.xlu0 %2485
      %2487 = vset.pattern.permute.xlu0 0
      %2488 = vperm.xlu0 %2487, %v2467
      %v2489 = vpop.permute.xlu0 %2488
      %2490 = vset.pattern.permute.xlu0 0
      %2491 = vperm.xlu0 %2490, %v2468
      %v2492 = vpop.permute.xlu0 %2491
      %2493 = vset.pattern.permute.xlu0 0
      %2494 = vperm.xlu0 %2493, %v2469
      %v2495 = vpop.permute.xlu0 %2494
      %2496 = vset.pattern.permute.xlu0 0
      %2497 = vperm.xlu0 %2496, %v2470
      %v2498 = vpop.permute.xlu0 %2497
      %2499 = vset.pattern.permute.xlu0 0
      %2500 = vperm.xlu0 %2499, %v2471
      %v2501 = vpop.permute.xlu0 %2500
      %2502 = vset.pattern.permute.xlu0 0
      %2503 = vperm.xlu0 %2502, %v2472
      %v2504 = vpop.permute.xlu0 %2503
      %2505 = vset.pattern.permute.xlu0 0
      %2506 = vperm.xlu0 %2505, %v2473
      %v2507 = vpop.permute.xlu0 %2506
      %2508 = vset.pattern.permute.xlu0 0
      %2509 = vperm.xlu0 %2508, %v2474
      %v2510 = vpop.permute.xlu0 %2509
      %2511 = vset.pattern.permute.xlu0 0
      %2512 = vperm.xlu0 %2511, %v2475
      %v2513 = vpop.permute.xlu0 %2512
      %2514 = vset.pattern.permute.xlu0 0
      %2515 = vperm.xlu0 %2514, %v2476
      %v2516 = vpop.permute.xlu0 %2515
      %2517 = vset.pattern.permute.xlu0 0
      %2518 = vperm.xlu0 %2517, %v2477
      %v2519 = vpop.permute.xlu0 %2518
      %2520 = vset.pattern.permute.xlu0 0
      %2521 = vperm.xlu0 %2520, %v2478
      %v2522 = vpop.permute.xlu0 %2521
      %2523 = vset.pattern.permute.xlu0 0
      %2524 = vperm.xlu0 %2523, %v2479
      %v2525 = vpop.permute.xlu0 %2524
      %2526 = vset.pattern.permute.xlu0 0
      %2527 = vperm.xlu0 %2526, %v2480
      %v2528 = vpop.permute.xlu0 %2527
      %vm2529 = vcmp.eq.s32.totalorder %v2483, 1
      %vm2530 = vcmp.eq.s32.totalorder %v2486, 1
      %vm2531 = vcmp.eq.s32.totalorder %v2489, 1
      %vm2532 = vcmp.eq.s32.totalorder %v2492, 1
      %vm2533 = vcmp.eq.s32.totalorder %v2495, 1
      %vm2534 = vcmp.eq.s32.totalorder %v2498, 1
      %vm2535 = vcmp.eq.s32.totalorder %v2501, 1
      %vm2536 = vcmp.eq.s32.totalorder %v2504, 1
      %vm2537 = vcmp.eq.s32.totalorder %v2507, 1
      %vm2538 = vcmp.eq.s32.totalorder %v2510, 1
      %vm2539 = vcmp.eq.s32.totalorder %v2513, 1
      %vm2540 = vcmp.eq.s32.totalorder %v2516, 1
      %vm2541 = vcmp.eq.s32.totalorder %v2519, 1
      %vm2542 = vcmp.eq.s32.totalorder %v2522, 1
      %vm2543 = vcmp.eq.s32.totalorder %v2525, 1
      %vm2544 = vcmp.eq.s32.totalorder %v2528, 1
      %v2545 = vsel %vm2529, %v2415, 0.0
      %v2546 = vsel %vm2530, %v2414, 0.0
      %v2547 = vsel %vm2531, %v2413, 0.0
      %v2548 = vsel %vm2532, %v2412, 0.0
      %v2549 = vsel %vm2533, %v2411, 0.0
      %v2550 = vsel %vm2534, %v2410, 0.0
      %v2551 = vsel %vm2535, %v2409, 0.0
      %v2552 = vsel %vm2536, %v2408, 0.0
      %v2553 = vsel %vm2537, %v2407, 0.0
      %v2554 = vsel %vm2538, %v2406, 0.0
      %v2555 = vsel %vm2539, %v2405, 0.0
      %v2556 = vsel %vm2540, %v2404, 0.0
      %v2557 = vsel %vm2541, %v2403, 0.0
      %v2558 = vsel %vm2542, %v2402, 0.0
      %v2559 = vsel %vm2543, %v2401, 0.0
      %v2560 = vsel %vm2544, %v2416, 0.0
      %v2561 = vpack.c.bf16 %v2546, %v2545
      %v2562 = vpack.c.bf16 %v2548, %v2547
      %v2563 = vpack.c.bf16 %v2550, %v2549
      %v2564 = vpack.c.bf16 %v2552, %v2551
      %v2565 = vpack.c.bf16 %v2554, %v2553
      %v2566 = vpack.c.bf16 %v2556, %v2555
      %v2567 = vpack.c.bf16 %v2558, %v2557
      %v2568 = vpack.c.bf16 %v2560, %v2559
      %s2569 = scalar_lea.vmem %s5, 384
      %v2570 = vld [vmem:[%s2569] sm:$0xff]
      %v2571 = vld [vmem:[%s2569 + $0x8] sm:$0xf]
      %v2572 = vld [vmem:[%s2569 + $0xc] sm:$0xff]
      %v2573 = vld [vmem:[%s2569 + $0x14] sm:$0xf]
      %v2574 = vld [vmem:[%s2569 + $0x18] sm:$0xff]
      %v2575 = vld [vmem:[%s2569 + $0x20] sm:$0xf]
      %v2576 = vld [vmem:[%s2569 + $0x24] sm:$0xff]
      %v2577 = vld [vmem:[%s2569 + $0x2c] sm:$0xf]
      %v2578 = vld [vmem:[%s2569 + $0x30] sm:$0xff]
      %v2579 = vld [vmem:[%s2569 + $0x38] sm:$0xf]
      %v2580 = vld [vmem:[%s2569 + $0x3c] sm:$0xff]
      %v2581 = vld [vmem:[%s2569 + $0x44] sm:$0xf]
      %v2582 = vld [vmem:[%s2569 + $0x48] sm:$0xff]
      %v2583 = vld [vmem:[%s2569 + $0x50] sm:$0xf]
      %v2584 = vld [vmem:[%s2569 + $0x54] sm:$0xff]
      %v2585 = vld [vmem:[%s2569 + $0x5c] sm:$0xf]
      %v2586 = vld [vmem:[%s2569 + $0x60] sm:$0xff]
      %v2587 = vld [vmem:[%s2569 + $0x68] sm:$0xf]
      %v2588 = vld [vmem:[%s2569 + $0x6c] sm:$0xff]
      %v2589 = vld [vmem:[%s2569 + $0x74] sm:$0xf]
      %v2590 = vld [vmem:[%s2569 + $0x78] sm:$0xff]
      %v2591 = vld [vmem:[%s2569 + $0x80] sm:$0xf]
      %v2592 = vld [vmem:[%s2569 + $0x84] sm:$0xff]
      %v2593 = vld [vmem:[%s2569 + $0x8c] sm:$0xf]
      %v2594 = vld [vmem:[%s2569 + $0x90] sm:$0xff]
      %v2595 = vld [vmem:[%s2569 + $0x98] sm:$0xf]
      %v2596 = vld [vmem:[%s2569 + $0x9c] sm:$0xff]
      %v2597 = vld [vmem:[%s2569 + $0xa4] sm:$0xf]
      %v2598 = vld [vmem:[%s2569 + $0xa8] sm:$0xff]
      %v2599 = vld [vmem:[%s2569 + $0xb0] sm:$0xf]
      %v2600 = vld [vmem:[%s2569 + $0xb4] sm:$0xff]
      %v2601 = vld [vmem:[%s2569 + $0xbc] sm:$0xf]
      %v2634 = vunpack.c.l.b16 %v2570
      %v2635 = vunpack.c.h.b16 %v2570
      %v2636 = vunpack.c.l.b16 %v2571
      %v2637 = vunpack.c.l.b16 %v2572
      %v2638 = vunpack.c.h.b16 %v2572
      %v2639 = vunpack.c.l.b16 %v2573
      %v2640 = vunpack.c.l.b16 %v2574
      %v2641 = vunpack.c.h.b16 %v2574
      %v2642 = vunpack.c.l.b16 %v2575
      %v2643 = vunpack.c.l.b16 %v2576
      %v2644 = vunpack.c.h.b16 %v2576
      %v2645 = vunpack.c.l.b16 %v2577
      %v2646 = vunpack.c.l.b16 %v2578
      %v2647 = vunpack.c.h.b16 %v2578
      %v2648 = vunpack.c.l.b16 %v2579
      %v2649 = vunpack.c.l.b16 %v2580
      %v2650 = vunpack.c.h.b16 %v2580
      %v2651 = vunpack.c.l.b16 %v2581
      %v2652 = vunpack.c.l.b16 %v2582
      %v2653 = vunpack.c.h.b16 %v2582
      %v2654 = vunpack.c.l.b16 %v2583
      %v2655 = vunpack.c.l.b16 %v2584
      %v2656 = vunpack.c.h.b16 %v2584
      %v2657 = vunpack.c.l.b16 %v2585
      %v2658 = vunpack.c.l.b16 %v2586
      %v2659 = vunpack.c.h.b16 %v2586
      %v2660 = vunpack.c.l.b16 %v2587
      %v2661 = vunpack.c.l.b16 %v2588
      %v2662 = vunpack.c.h.b16 %v2588
      %v2663 = vunpack.c.l.b16 %v2589
      %v2664 = vunpack.c.l.b16 %v2590
      %v2665 = vunpack.c.h.b16 %v2590
      %v2666 = vunpack.c.l.b16 %v2591
      %v2667 = vunpack.c.l.b16 %v2592
      %v2668 = vunpack.c.h.b16 %v2592
      %v2669 = vunpack.c.l.b16 %v2593
      %v2670 = vunpack.c.l.b16 %v2594
      %v2671 = vunpack.c.h.b16 %v2594
      %v2672 = vunpack.c.l.b16 %v2595
      %v2673 = vunpack.c.l.b16 %v2596
      %v2674 = vunpack.c.h.b16 %v2596
      %v2675 = vunpack.c.l.b16 %v2597
      %v2676 = vunpack.c.l.b16 %v2598
      %v2677 = vunpack.c.h.b16 %v2598
      %v2678 = vunpack.c.l.b16 %v2599
      %v2679 = vunpack.c.l.b16 %v2600
      %v2680 = vunpack.c.h.b16 %v2600
      %v2681 = vunpack.c.l.b16 %v2601
      %v2682 = vpack.c.b16 %v2637, %v2634
      %v2683 = vpack.c.b16 %v2638, %v2635
      %v2684 = vpack.c.b16 %v2639, %v2636
      %v2685 = vpack.c.b16 %v2643, %v2640
      %v2686 = vpack.c.b16 %v2644, %v2641
      %v2687 = vpack.c.b16 %v2645, %v2642
      %v2688 = vpack.c.b16 %v2649, %v2646
      %v2689 = vpack.c.b16 %v2650, %v2647
      %v2690 = vpack.c.b16 %v2651, %v2648
      %v2691 = vpack.c.b16 %v2655, %v2652
      %v2692 = vpack.c.b16 %v2656, %v2653
      %v2693 = vpack.c.b16 %v2657, %v2654
      %v2694 = vpack.c.b16 %v2661, %v2658
      %v2695 = vpack.c.b16 %v2662, %v2659
      %v2696 = vpack.c.b16 %v2663, %v2660
      %v2697 = vpack.c.b16 %v2667, %v2664
      %v2698 = vpack.c.b16 %v2668, %v2665
      %v2699 = vpack.c.b16 %v2669, %v2666
      %v2700 = vpack.c.b16 %v2673, %v2670
      %v2701 = vpack.c.b16 %v2674, %v2671
      %v2702 = vpack.c.b16 %v2675, %v2672
      %v2703 = vpack.c.b16 %v2679, %v2676
      %v2704 = vpack.c.b16 %v2680, %v2677
      %v2705 = vpack.c.b16 %v2681, %v2678
      %2730 = vmatprep.subr.bf16.mxu0 %v2704
      %2731 = vmatpush1.bf16.msra.mxu0 %v2703
      %2732 = vmatprep.subr.bf16.mxu0 %v2701
      %2733 = vmatpush1.bf16.msra.mxu0 %v2700
      %2734 = vmatprep.subr.bf16.mxu0 %v2698
      %2735 = vmatpush1.bf16.msra.mxu0 %v2697
      %2736 = vmatprep.subr.bf16.mxu0 %v2695
      %2737 = vmatpush1.bf16.msra.mxu0 %v2694
      %2738 = vmatprep.subr.bf16.mxu0 %v2692
      %2739 = vmatpush1.bf16.msra.mxu0 %v2691
      %2740 = vmatprep.subr.bf16.mxu0 %v2689
      %2741 = vmatpush1.bf16.msra.mxu0 %v2688
      %2742 = vmatprep.subr.bf16.mxu0 %v2686
      %2743 = vmatpush1.bf16.msra.mxu0 %v2685
      %2744 = vmatprep.subr.bf16.mxu0 %v2683
      %2745 = vmatpush1.bf16.msra.mxu0 %v2682
      %2746 = vmatprep.subr.bf16.mxu0 0
      %2747 = vmatpush2.bf16.msra.mxu0 0
      %2748 = vmatprep.subr.bf16.mxu0 0
      %2749 = vmatpush2.bf16.msra.mxu0 0
      %2750 = vmatprep.subr.bf16.mxu0 0
      %2751 = vmatpush2.bf16.msra.mxu0 0
      %2752 = vmatprep.subr.bf16.mxu0 0
      %2753 = vmatpush2.bf16.msra.mxu0 0
      %2754 = vmatprep.subr.bf16.mxu0 0
      %2755 = vmatpush2.bf16.msra.mxu0 0
      %2756 = vmatprep.subr.bf16.mxu0 0
      %2757 = vmatpush2.bf16.msra.mxu0 0
      %2758 = vmatprep.subr.bf16.mxu0 0
      %2759 = vmatpush2.bf16.msra.mxu0 0
      %2760 = vmatprep.subr.bf16.mxu0 0
      %2761 = vmatpush2.bf16.msra.mxu0 0
      %2762 = vmatprep.mubr.bf16.mxu0 0
      %2763 = vmatmul.mubr.bf16.gmra.mxu0 %v2561
      %v2764 = vpop.f32.mrf.mxu0
      %v2765 = vadd.f32 0.0, %v2764
      %v2766 = vpop.f32.mrf.mxu0
      %v2767 = vadd.f32 0.0, %v2766
      %v2768 = vpop.f32.mrf.mxu0
      %v2769 = vadd.f32 0.0, %v2768
      %v2770 = vpop.f32.mrf.mxu0
      %v2771 = vadd.f32 0.0, %v2770
      %2772 = vmatprep.mubr.bf16.mxu0 0
      %2773 = vmatmul.mubr.bf16.gmra.mxu0 %v2562
      %v2774 = vpop.f32.mrf.mxu0
      %v2775 = vadd.f32 0.0, %v2774
      %v2776 = vpop.f32.mrf.mxu0
      %v2777 = vadd.f32 0.0, %v2776
      %v2778 = vpop.f32.mrf.mxu0
      %v2779 = vadd.f32 0.0, %v2778
      %v2780 = vpop.f32.mrf.mxu0
      %v2781 = vadd.f32 0.0, %v2780
      %2782 = vmatprep.mubr.bf16.mxu0 0
      %2783 = vmatmul.mubr.bf16.gmra.mxu0 %v2563
      %v2784 = vpop.f32.mrf.mxu0
      %v2785 = vadd.f32 0.0, %v2784
      %v2786 = vpop.f32.mrf.mxu0
      %v2787 = vadd.f32 0.0, %v2786
      %v2788 = vpop.f32.mrf.mxu0
      %v2789 = vadd.f32 0.0, %v2788
      %v2790 = vpop.f32.mrf.mxu0
      %v2791 = vadd.f32 0.0, %v2790
      %2792 = vmatprep.mubr.bf16.mxu0 0
      %2793 = vmatmul.mubr.bf16.gmra.mxu0 %v2564
      %v2794 = vpop.f32.mrf.mxu0
      %v2795 = vadd.f32 0.0, %v2794
      %v2796 = vpop.f32.mrf.mxu0
      %v2797 = vadd.f32 0.0, %v2796
      %v2798 = vpop.f32.mrf.mxu0
      %v2799 = vadd.f32 0.0, %v2798
      %v2800 = vpop.f32.mrf.mxu0
      %v2801 = vadd.f32 0.0, %v2800
      %2802 = vmatprep.mubr.bf16.mxu0 0
      %2803 = vmatmul.mubr.bf16.gmra.mxu0 %v2565
      %v2804 = vpop.f32.mrf.mxu0
      %v2805 = vadd.f32 0.0, %v2804
      %v2806 = vpop.f32.mrf.mxu0
      %v2807 = vadd.f32 0.0, %v2806
      %v2808 = vpop.f32.mrf.mxu0
      %v2809 = vadd.f32 0.0, %v2808
      %v2810 = vpop.f32.mrf.mxu0
      %v2811 = vadd.f32 0.0, %v2810
      %2812 = vmatprep.mubr.bf16.mxu0 0
      %2813 = vmatmul.mubr.bf16.gmra.mxu0 %v2566
      %v2814 = vpop.f32.mrf.mxu0
      %v2815 = vadd.f32 0.0, %v2814
      %v2816 = vpop.f32.mrf.mxu0
      %v2817 = vadd.f32 0.0, %v2816
      %v2818 = vpop.f32.mrf.mxu0
      %v2819 = vadd.f32 0.0, %v2818
      %v2820 = vpop.f32.mrf.mxu0
      %v2821 = vadd.f32 0.0, %v2820
      %2822 = vmatprep.mubr.bf16.mxu0 0
      %2823 = vmatmul.mubr.bf16.gmra.mxu0 %v2567
      %v2824 = vpop.f32.mrf.mxu0
      %v2825 = vadd.f32 0.0, %v2824
      %v2826 = vpop.f32.mrf.mxu0
      %v2827 = vadd.f32 0.0, %v2826
      %v2828 = vpop.f32.mrf.mxu0
      %v2829 = vadd.f32 0.0, %v2828
      %v2830 = vpop.f32.mrf.mxu0
      %v2831 = vadd.f32 0.0, %v2830
      %2832 = vmatprep.mubr.bf16.mxu0 0
      %2833 = vmatmul.mubr.bf16.gmra.mxu0 %v2568
      %v2834 = vpop.f32.mrf.mxu0
      %v2835 = vadd.f32 0.0, %v2834
      %v2836 = vpop.f32.mrf.mxu0
      %v2837 = vadd.f32 0.0, %v2836
      %v2838 = vpop.f32.mrf.mxu0
      %v2839 = vadd.f32 0.0, %v2838
      %v2840 = vpop.f32.mrf.mxu0
      %v2841 = vadd.f32 0.0, %v2840
      %2842 = vdwg.mxu0
      %2843 = vmatprep.subr.bf16.mxu0 0
      %2844 = vmatpush1.bf16.msra.mxu0 %v2705
      %2845 = vmatprep.subr.bf16.mxu0 0
      %2846 = vmatpush1.bf16.msra.mxu0 %v2702
      %2847 = vmatprep.subr.bf16.mxu0 0
      %2848 = vmatpush1.bf16.msra.mxu0 %v2699
      %2849 = vmatprep.subr.bf16.mxu0 0
      %2850 = vmatpush1.bf16.msra.mxu0 %v2696
      %2851 = vmatprep.subr.bf16.mxu0 0
      %2852 = vmatpush1.bf16.msra.mxu0 %v2693
      %2853 = vmatprep.subr.bf16.mxu0 0
      %2854 = vmatpush1.bf16.msra.mxu0 %v2690
      %2855 = vmatprep.subr.bf16.mxu0 0
      %2856 = vmatpush1.bf16.msra.mxu0 %v2687
      %2857 = vmatprep.subr.bf16.mxu0 0
      %2858 = vmatpush1.bf16.msra.mxu0 %v2684
      %2859 = vmatprep.subr.bf16.mxu0 0
      %2860 = vmatpush2.bf16.msra.mxu0 0
      %2861 = vmatprep.subr.bf16.mxu0 0
      %2862 = vmatpush2.bf16.msra.mxu0 0
      %2863 = vmatprep.subr.bf16.mxu0 0
      %2864 = vmatpush2.bf16.msra.mxu0 0
      %2865 = vmatprep.subr.bf16.mxu0 0
      %2866 = vmatpush2.bf16.msra.mxu0 0
      %2867 = vmatprep.subr.bf16.mxu0 0
      %2868 = vmatpush2.bf16.msra.mxu0 0
      %2869 = vmatprep.subr.bf16.mxu0 0
      %2870 = vmatpush2.bf16.msra.mxu0 0
      %2871 = vmatprep.subr.bf16.mxu0 0
      %2872 = vmatpush2.bf16.msra.mxu0 0
      %2873 = vmatprep.subr.bf16.mxu0 0
      %2874 = vmatpush2.bf16.msra.mxu0 0
      %2875 = vmatprep.mubr.bf16.mxu0 0
      %2876 = vmatmul.mubr.bf16.gmra.mxu0 %v2561
      %v2877 = vpop.f32.mrf.mxu0
      %v2878 = vadd.f32 0.0, %v2877
      %v2879 = vpop.f32.mrf.mxu0
      %v2880 = vpop.f32.mrf.mxu0
      %v2881 = vadd.f32 0.0, %v2880
      %v2882 = vpop.f32.mrf.mxu0
      %2883 = vmatprep.mubr.bf16.mxu0 0
      %2884 = vmatmul.mubr.bf16.gmra.mxu0 %v2562
      %v2885 = vpop.f32.mrf.mxu0
      %v2886 = vadd.f32 0.0, %v2885
      %v2887 = vpop.f32.mrf.mxu0
      %v2888 = vpop.f32.mrf.mxu0
      %v2889 = vadd.f32 0.0, %v2888
      %v2890 = vpop.f32.mrf.mxu0
      %2891 = vmatprep.mubr.bf16.mxu0 0
      %2892 = vmatmul.mubr.bf16.gmra.mxu0 %v2563
      %v2893 = vpop.f32.mrf.mxu0
      %v2894 = vadd.f32 0.0, %v2893
      %v2895 = vpop.f32.mrf.mxu0
      %v2896 = vpop.f32.mrf.mxu0
      %v2897 = vadd.f32 0.0, %v2896
      %v2898 = vpop.f32.mrf.mxu0
      %2899 = vmatprep.mubr.bf16.mxu0 0
      %2900 = vmatmul.mubr.bf16.gmra.mxu0 %v2564
      %v2901 = vpop.f32.mrf.mxu0
      %v2902 = vadd.f32 0.0, %v2901
      %v2903 = vpop.f32.mrf.mxu0
      %v2904 = vpop.f32.mrf.mxu0
      %v2905 = vadd.f32 0.0, %v2904
      %v2906 = vpop.f32.mrf.mxu0
      %2907 = vmatprep.mubr.bf16.mxu0 0
      %2908 = vmatmul.mubr.bf16.gmra.mxu0 %v2565
      %v2909 = vpop.f32.mrf.mxu0
      %v2910 = vadd.f32 0.0, %v2909
      %v2911 = vpop.f32.mrf.mxu0
      %v2912 = vpop.f32.mrf.mxu0
      %v2913 = vadd.f32 0.0, %v2912
      %v2914 = vpop.f32.mrf.mxu0
      %2915 = vmatprep.mubr.bf16.mxu0 0
      %2916 = vmatmul.mubr.bf16.gmra.mxu0 %v2566
      %v2917 = vpop.f32.mrf.mxu0
      %v2918 = vadd.f32 0.0, %v2917
      %v2919 = vpop.f32.mrf.mxu0
      %v2920 = vpop.f32.mrf.mxu0
      %v2921 = vadd.f32 0.0, %v2920
      %v2922 = vpop.f32.mrf.mxu0
      %2923 = vmatprep.mubr.bf16.mxu0 0
      %2924 = vmatmul.mubr.bf16.gmra.mxu0 %v2567
      %v2925 = vpop.f32.mrf.mxu0
      %v2926 = vadd.f32 0.0, %v2925
      %v2927 = vpop.f32.mrf.mxu0
      %v2928 = vpop.f32.mrf.mxu0
      %v2929 = vadd.f32 0.0, %v2928
      %v2930 = vpop.f32.mrf.mxu0
      %2931 = vmatprep.mubr.bf16.mxu0 0
      %2932 = vmatmul.mubr.bf16.gmra.mxu0 %v2568
      %v2933 = vpop.f32.mrf.mxu0
      %v2934 = vadd.f32 0.0, %v2933
      %v2935 = vpop.f32.mrf.mxu0
      %v2936 = vpop.f32.mrf.mxu0
      %v2937 = vadd.f32 0.0, %v2936
      %v2938 = vpop.f32.mrf.mxu0
      %2939 = vdwg.mxu0
      %v2940 = vadd.f32 %v2209, %v2765
      %v2941 = vadd.f32 %v2211, %v2767
      %v2942 = vadd.f32 %v2322, %v2878
      %v2943 = vadd.f32 %v2213, %v2769
      %v2944 = vadd.f32 %v2215, %v2771
      %v2945 = vadd.f32 %v2325, %v2881
      %v2946 = vadd.f32 %v2219, %v2775
      %v2947 = vadd.f32 %v2221, %v2777
      %v2948 = vadd.f32 %v2330, %v2886
      %v2949 = vadd.f32 %v2223, %v2779
      %v2950 = vadd.f32 %v2225, %v2781
      %v2951 = vadd.f32 %v2333, %v2889
      %v2952 = vadd.f32 %v2229, %v2785
      %v2953 = vadd.f32 %v2231, %v2787
      %v2954 = vadd.f32 %v2338, %v2894
      %v2955 = vadd.f32 %v2233, %v2789
      %v2956 = vadd.f32 %v2235, %v2791
      %v2957 = vadd.f32 %v2341, %v2897
      %v2958 = vadd.f32 %v2239, %v2795
      %v2959 = vadd.f32 %v2241, %v2797
      %v2960 = vadd.f32 %v2346, %v2902
      %v2961 = vadd.f32 %v2243, %v2799
      %v2962 = vadd.f32 %v2245, %v2801
      %v2963 = vadd.f32 %v2349, %v2905
      %v2964 = vadd.f32 %v2249, %v2805
      %v2965 = vadd.f32 %v2251, %v2807
      %v2966 = vadd.f32 %v2354, %v2910
      %v2967 = vadd.f32 %v2253, %v2809
      %v2968 = vadd.f32 %v2255, %v2811
      %v2969 = vadd.f32 %v2357, %v2913
      %v2970 = vadd.f32 %v2259, %v2815
      %v2971 = vadd.f32 %v2261, %v2817
      %v2972 = vadd.f32 %v2362, %v2918
      %v2973 = vadd.f32 %v2263, %v2819
      %v2974 = vadd.f32 %v2265, %v2821
      %v2975 = vadd.f32 %v2365, %v2921
      %v2976 = vadd.f32 %v2269, %v2825
      %v2977 = vadd.f32 %v2271, %v2827
      %v2978 = vadd.f32 %v2370, %v2926
      %v2979 = vadd.f32 %v2273, %v2829
      %v2980 = vadd.f32 %v2275, %v2831
      %v2981 = vadd.f32 %v2373, %v2929
      %v2982 = vadd.f32 %v2279, %v2835
      %v2983 = vadd.f32 %v2281, %v2837
      %v2984 = vadd.f32 %v2378, %v2934
      %v2985 = vadd.f32 %v2283, %v2839
      %v2986 = vadd.f32 %v2285, %v2841
      %v2987 = vadd.f32 %v2381, %v2937
      %v2988 = vld [vmem:[%s6] sm:$0x7]
      %v2990 = vlaneseq
      %v2991 = vshrl.u32 %v2990, 7
      %v2992 = vsub.s32 0, %v2991
      %v2993 = vrot.slane %v2988, %v2992
      %v2994 = vlaneseq
      %v2995 = vshrl.u32 %v2994, 7
      %v2996 = vsub.s32 1, %v2995
      %v2997 = vrot.slane %v2988, %v2996
      %v2998 = vlaneseq
      %v2999 = vshrl.u32 %v2998, 7
      %v3000 = vsub.s32 2, %v2999
      %v3001 = vrot.slane %v2988, %v3000
      %v3005 = vadd.f32 %v2940, %v2993
      %v3006 = vadd.f32 %v2941, %v2997
      %v3007 = vadd.f32 %v2942, %v3001
      %v3008 = vadd.f32 %v2943, %v2993
      %v3009 = vadd.f32 %v2944, %v2997
      %v3010 = vadd.f32 %v2945, %v3001
      %v3011 = vadd.f32 %v2946, %v2993
      %v3012 = vadd.f32 %v2947, %v2997
      %v3013 = vadd.f32 %v2948, %v3001
      %v3014 = vadd.f32 %v2949, %v2993
      %v3015 = vadd.f32 %v2950, %v2997
      %v3016 = vadd.f32 %v2951, %v3001
      %v3017 = vadd.f32 %v2952, %v2993
      %v3018 = vadd.f32 %v2953, %v2997
      %v3019 = vadd.f32 %v2954, %v3001
      %v3020 = vadd.f32 %v2955, %v2993
      %v3021 = vadd.f32 %v2956, %v2997
      %v3022 = vadd.f32 %v2957, %v3001
      %v3023 = vadd.f32 %v2958, %v2993
      %v3024 = vadd.f32 %v2959, %v2997
      %v3025 = vadd.f32 %v2960, %v3001
      %v3026 = vadd.f32 %v2961, %v2993
      %v3027 = vadd.f32 %v2962, %v2997
      %v3028 = vadd.f32 %v2963, %v3001
      %v3029 = vadd.f32 %v2964, %v2993
      %v3030 = vadd.f32 %v2965, %v2997
      %v3031 = vadd.f32 %v2966, %v3001
      %v3032 = vadd.f32 %v2967, %v2993
      %v3033 = vadd.f32 %v2968, %v2997
      %v3034 = vadd.f32 %v2969, %v3001
      %v3035 = vadd.f32 %v2970, %v2993
      %v3036 = vadd.f32 %v2971, %v2997
      %v3037 = vadd.f32 %v2972, %v3001
      %v3038 = vadd.f32 %v2973, %v2993
      %v3039 = vadd.f32 %v2974, %v2997
      %v3040 = vadd.f32 %v2975, %v3001
      %v3041 = vadd.f32 %v2976, %v2993
      %v3042 = vadd.f32 %v2977, %v2997
      %v3043 = vadd.f32 %v2978, %v3001
      %v3044 = vadd.f32 %v2979, %v2993
      %v3045 = vadd.f32 %v2980, %v2997
      %v3046 = vadd.f32 %v2981, %v3001
      %v3047 = vadd.f32 %v2982, %v2993
      %v3048 = vadd.f32 %v2983, %v2997
      %v3049 = vadd.f32 %v2984, %v3001
      %v3050 = vadd.f32 %v2985, %v2993
      %v3051 = vadd.f32 %v2986, %v2997
      %v3052 = vadd.f32 %v2987, %v3001
      %v3053 = vmax.f32 %v3005, 0.0
      %v3054 = vmax.f32 %v3006, 0.0
      %v3055 = vmax.f32 %v3007, 0.0
      %v3056 = vmax.f32 %v3008, 0.0
      %v3057 = vmax.f32 %v3009, 0.0
      %v3058 = vmax.f32 %v3010, 0.0
      %v3059 = vmax.f32 %v3011, 0.0
      %v3060 = vmax.f32 %v3012, 0.0
      %v3061 = vmax.f32 %v3013, 0.0
      %v3062 = vmax.f32 %v3014, 0.0
      %v3063 = vmax.f32 %v3015, 0.0
      %v3064 = vmax.f32 %v3016, 0.0
      %v3065 = vmax.f32 %v3017, 0.0
      %v3066 = vmax.f32 %v3018, 0.0
      %v3067 = vmax.f32 %v3019, 0.0
      %v3068 = vmax.f32 %v3020, 0.0
      %v3069 = vmax.f32 %v3021, 0.0
      %v3070 = vmax.f32 %v3022, 0.0
      %v3071 = vmax.f32 %v3023, 0.0
      %v3072 = vmax.f32 %v3024, 0.0
      %v3073 = vmax.f32 %v3025, 0.0
      %v3074 = vmax.f32 %v3026, 0.0
      %v3075 = vmax.f32 %v3027, 0.0
      %v3076 = vmax.f32 %v3028, 0.0
      %v3077 = vmax.f32 %v3029, 0.0
      %v3078 = vmax.f32 %v3030, 0.0
      %v3079 = vmax.f32 %v3031, 0.0
      %v3080 = vmax.f32 %v3032, 0.0
      %v3081 = vmax.f32 %v3033, 0.0
      %v3082 = vmax.f32 %v3034, 0.0
      %v3083 = vmax.f32 %v3035, 0.0
      %v3084 = vmax.f32 %v3036, 0.0
      %v3085 = vmax.f32 %v3037, 0.0
      %v3086 = vmax.f32 %v3038, 0.0
      %v3087 = vmax.f32 %v3039, 0.0
      %v3088 = vmax.f32 %v3040, 0.0
      %v3089 = vmax.f32 %v3041, 0.0
      %v3090 = vmax.f32 %v3042, 0.0
      %v3091 = vmax.f32 %v3043, 0.0
      %v3092 = vmax.f32 %v3044, 0.0
      %v3093 = vmax.f32 %v3045, 0.0
      %v3094 = vmax.f32 %v3046, 0.0
      %v3095 = vmax.f32 %v3047, 0.0
      %v3096 = vmax.f32 %v3048, 0.0
      %v3097 = vmax.f32 %v3049, 0.0
      %v3098 = vmax.f32 %v3050, 0.0
      %v3099 = vmax.f32 %v3051, 0.0
      %v3100 = vmax.f32 %v3052, 0.0
      %v3101 = vadd.f32 %v1400, %v3053
      %v3102 = vadd.f32 %v1401, %v3054
      %v3103 = vadd.f32 %v1402, %v3055
      %v3104 = vadd.f32 %v1403, %v3056
      %v3105 = vadd.f32 %v1404, %v3057
      %v3106 = vadd.f32 %v1405, %v3058
      %v3107 = vadd.f32 %v1406, %v3059
      %v3108 = vadd.f32 %v1407, %v3060
      %v3109 = vadd.f32 %v1408, %v3061
      %v3110 = vadd.f32 %v1409, %v3062
      %v3111 = vadd.f32 %v1410, %v3063
      %v3112 = vadd.f32 %v1411, %v3064
      %v3113 = vadd.f32 %v1412, %v3065
      %v3114 = vadd.f32 %v1413, %v3066
      %v3115 = vadd.f32 %v1414, %v3067
      %v3116 = vadd.f32 %v1415, %v3068
      %v3117 = vadd.f32 %v1416, %v3069
      %v3118 = vadd.f32 %v1417, %v3070
      %v3119 = vadd.f32 %v1418, %v3071
      %v3120 = vadd.f32 %v1419, %v3072
      %v3121 = vadd.f32 %v1420, %v3073
      %v3122 = vadd.f32 %v1421, %v3074
      %v3123 = vadd.f32 %v1422, %v3075
      %v3124 = vadd.f32 %v1423, %v3076
      %v3125 = vadd.f32 %v1424, %v3077
      %v3126 = vadd.f32 %v1425, %v3078
      %v3127 = vadd.f32 %v1426, %v3079
      %v3128 = vadd.f32 %v1427, %v3080
      %v3129 = vadd.f32 %v1428, %v3081
      %v3130 = vadd.f32 %v1429, %v3082
      %v3131 = vadd.f32 %v1430, %v3083
      %v3132 = vadd.f32 %v1431, %v3084
      %v3133 = vadd.f32 %v1432, %v3085
      %v3134 = vadd.f32 %v1433, %v3086
      %v3135 = vadd.f32 %v1434, %v3087
      %v3136 = vadd.f32 %v1435, %v3088
      %v3137 = vadd.f32 %v1436, %v3089
      %v3138 = vadd.f32 %v1437, %v3090
      %v3139 = vadd.f32 %v1438, %v3091
      %v3140 = vadd.f32 %v1439, %v3092
      %v3141 = vadd.f32 %v1440, %v3093
      %v3142 = vadd.f32 %v1441, %v3094
      %v3143 = vadd.f32 %v1442, %v3095
      %v3144 = vadd.f32 %v1443, %v3096
      %v3145 = vadd.f32 %v1444, %v3097
      %v3146 = vadd.f32 %v1445, %v3098
      %v3147 = vadd.f32 %v1446, %v3099
      %v3148 = vadd.f32 %v1447, %v3100
      %v3149 = vrot.slane %v1276, 6
      %v3150 = vrot.slane %v1280, 6
      %v3151 = vrot.slane %v1286, 6
      %v3152 = vrot.slane %v1290, 6
      %v3153 = vrot.slane %v1296, 6
      %v3154 = vrot.slane %v1300, 6
      %v3155 = vrot.slane %v1306, 6
      %v3156 = vrot.slane %v1310, 6
      %v3157 = vrot.slane %v1316, 6
      %v3158 = vrot.slane %v1320, 6
      %v3159 = vrot.slane %v1326, 6
      %v3160 = vrot.slane %v1330, 6
      %v3161 = vrot.slane %v1336, 6
      %v3162 = vrot.slane %v1340, 6
      %v3163 = vrot.slane %v1346, 6
      %v3164 = vrot.slane %v1350, 6
      %vm3165 = vcmp.lt.s32.totalorder %v1465, 2
      %v3166 = vsel %vm3165, %v3163, %v3164
      %v3167 = vsel %vm3165, %v3162, %v3163
      %v3168 = vsel %vm3165, %v3161, %v3162
      %v3169 = vsel %vm3165, %v3160, %v3161
      %v3170 = vsel %vm3165, %v3159, %v3160
      %v3171 = vsel %vm3165, %v3158, %v3159
      %v3172 = vsel %vm3165, %v3157, %v3158
      %v3173 = vsel %vm3165, %v3156, %v3157
      %v3174 = vsel %vm3165, %v3155, %v3156
      %v3175 = vsel %vm3165, %v3154, %v3155
      %v3176 = vsel %vm3165, %v3153, %v3154
      %v3177 = vsel %vm3165, %v3152, %v3153
      %v3178 = vsel %vm3165, %v3151, %v3152
      %v3179 = vsel %vm3165, %v3150, %v3151
      %v3180 = vsel %vm3165, %v3149, %v3150
      %v3181 = vsel %vm3165, %v3164, %v3149
      %vm3182 = vcmp.ge.s32.totalorder %v409, 2
      %vm3183 = vcmp.ge.s32.totalorder %v410, 2
      %vm3184 = vcmp.ge.s32.totalorder %v411, 2
      %vm3185 = vcmp.ge.s32.totalorder %v412, 2
      %vm3186 = vcmp.ge.s32.totalorder %v413, 2
      %vm3187 = vcmp.ge.s32.totalorder %v414, 2
      %vm3188 = vcmp.ge.s32.totalorder %v415, 2
      %vm3189 = vcmp.ge.s32.totalorder %v416, 2
      %vm3190 = vcmp.ge.s32.totalorder %v417, 2
      %vm3191 = vcmp.ge.s32.totalorder %v418, 2
      %vm3192 = vcmp.ge.s32.totalorder %v419, 2
      %vm3193 = vcmp.ge.s32.totalorder %v420, 2
      %vm3194 = vcmp.ge.s32.totalorder %v421, 2
      %vm3195 = vcmp.ge.s32.totalorder %v422, 2
      %vm3196 = vcmp.ge.s32.totalorder %v423, 2
      %vm3197 = vcmp.ge.s32.totalorder %v424, 2
      %vm3198 = vcmp.lt.s32.totalorder %v409, 18
      %vm3199 = vcmp.lt.s32.totalorder %v410, 18
      %vm3200 = vcmp.lt.s32.totalorder %v411, 18
      %vm3201 = vcmp.lt.s32.totalorder %v412, 18
      %vm3202 = vcmp.lt.s32.totalorder %v413, 18
      %vm3203 = vcmp.lt.s32.totalorder %v414, 18
      %vm3204 = vcmp.lt.s32.totalorder %v415, 18
      %vm3205 = vcmp.lt.s32.totalorder %v416, 18
      %vm3206 = vcmp.lt.s32.totalorder %v417, 18
      %vm3207 = vcmp.lt.s32.totalorder %v418, 18
      %vm3208 = vcmp.lt.s32.totalorder %v419, 18
      %vm3209 = vcmp.lt.s32.totalorder %v420, 18
      %vm3210 = vcmp.lt.s32.totalorder %v421, 18
      %vm3211 = vcmp.lt.s32.totalorder %v422, 18
      %vm3212 = vcmp.lt.s32.totalorder %v423, 18
      %vm3213 = vcmp.lt.s32.totalorder %v424, 18
      %vm3214 = vmand %vm3182, %vm3198
      %vm3215 = vmand %vm3183, %vm3199
      %vm3216 = vmand %vm3184, %vm3200
      %vm3217 = vmand %vm3185, %vm3201
      %vm3218 = vmand %vm3186, %vm3202
      %vm3219 = vmand %vm3187, %vm3203
      %vm3220 = vmand %vm3188, %vm3204
      %vm3221 = vmand %vm3189, %vm3205
      %vm3222 = vmand %vm3190, %vm3206
      %vm3223 = vmand %vm3191, %vm3207
      %vm3224 = vmand %vm3192, %vm3208
      %vm3225 = vmand %vm3193, %vm3209
      %vm3226 = vmand %vm3194, %vm3210
      %vm3227 = vmand %vm3195, %vm3211
      %vm3228 = vmand %vm3196, %vm3212
      %vm3229 = vmand %vm3197, %vm3213
      %v3230 = vsel %vm3214, 1, 0
      %v3231 = vsel %vm3215, 1, 0
      %v3232 = vsel %vm3216, 1, 0
      %v3233 = vsel %vm3217, 1, 0
      %v3234 = vsel %vm3218, 1, 0
      %v3235 = vsel %vm3219, 1, 0
      %v3236 = vsel %vm3220, 1, 0
      %v3237 = vsel %vm3221, 1, 0
      %v3238 = vsel %vm3222, 1, 0
      %v3239 = vsel %vm3223, 1, 0
      %v3240 = vsel %vm3224, 1, 0
      %v3241 = vsel %vm3225, 1, 0
      %v3242 = vsel %vm3226, 1, 0
      %v3243 = vsel %vm3227, 1, 0
      %v3244 = vsel %vm3228, 1, 0
      %v3245 = vsel %vm3229, 1, 0
      %3246 = vset.pattern.permute.xlu0 0
      %3247 = vperm.xlu0 %3246, %v3230
      %v3248 = vpop.permute.xlu0 %3247
      %3249 = vset.pattern.permute.xlu0 0
      %3250 = vperm.xlu0 %3249, %v3231
      %v3251 = vpop.permute.xlu0 %3250
      %3252 = vset.pattern.permute.xlu0 0
      %3253 = vperm.xlu0 %3252, %v3232
      %v3254 = vpop.permute.xlu0 %3253
      %3255 = vset.pattern.permute.xlu0 0
      %3256 = vperm.xlu0 %3255, %v3233
      %v3257 = vpop.permute.xlu0 %3256
      %3258 = vset.pattern.permute.xlu0 0
      %3259 = vperm.xlu0 %3258, %v3234
      %v3260 = vpop.permute.xlu0 %3259
      %3261 = vset.pattern.permute.xlu0 0
      %3262 = vperm.xlu0 %3261, %v3235
      %v3263 = vpop.permute.xlu0 %3262
      %3264 = vset.pattern.permute.xlu0 0
      %3265 = vperm.xlu0 %3264, %v3236
      %v3266 = vpop.permute.xlu0 %3265
      %3267 = vset.pattern.permute.xlu0 0
      %3268 = vperm.xlu0 %3267, %v3237
      %v3269 = vpop.permute.xlu0 %3268
      %3270 = vset.pattern.permute.xlu0 0
      %3271 = vperm.xlu0 %3270, %v3238
      %v3272 = vpop.permute.xlu0 %3271
      %3273 = vset.pattern.permute.xlu0 0
      %3274 = vperm.xlu0 %3273, %v3239
      %v3275 = vpop.permute.xlu0 %3274
      %3276 = vset.pattern.permute.xlu0 0
      %3277 = vperm.xlu0 %3276, %v3240
      %v3278 = vpop.permute.xlu0 %3277
      %3279 = vset.pattern.permute.xlu0 0
      %3280 = vperm.xlu0 %3279, %v3241
      %v3281 = vpop.permute.xlu0 %3280
      %3282 = vset.pattern.permute.xlu0 0
      %3283 = vperm.xlu0 %3282, %v3242
      %v3284 = vpop.permute.xlu0 %3283
      %3285 = vset.pattern.permute.xlu0 0
      %3286 = vperm.xlu0 %3285, %v3243
      %v3287 = vpop.permute.xlu0 %3286
      %3288 = vset.pattern.permute.xlu0 0
      %3289 = vperm.xlu0 %3288, %v3244
      %v3290 = vpop.permute.xlu0 %3289
      %3291 = vset.pattern.permute.xlu0 0
      %3292 = vperm.xlu0 %3291, %v3245
      %v3293 = vpop.permute.xlu0 %3292
      %vm3294 = vcmp.eq.s32.totalorder %v3248, 1
      %vm3295 = vcmp.eq.s32.totalorder %v3251, 1
      %vm3296 = vcmp.eq.s32.totalorder %v3254, 1
      %vm3297 = vcmp.eq.s32.totalorder %v3257, 1
      %vm3298 = vcmp.eq.s32.totalorder %v3260, 1
      %vm3299 = vcmp.eq.s32.totalorder %v3263, 1
      %vm3300 = vcmp.eq.s32.totalorder %v3266, 1
      %vm3301 = vcmp.eq.s32.totalorder %v3269, 1
      %vm3302 = vcmp.eq.s32.totalorder %v3272, 1
      %vm3303 = vcmp.eq.s32.totalorder %v3275, 1
      %vm3304 = vcmp.eq.s32.totalorder %v3278, 1
      %vm3305 = vcmp.eq.s32.totalorder %v3281, 1
      %vm3306 = vcmp.eq.s32.totalorder %v3284, 1
      %vm3307 = vcmp.eq.s32.totalorder %v3287, 1
      %vm3308 = vcmp.eq.s32.totalorder %v3290, 1
      %vm3309 = vcmp.eq.s32.totalorder %v3293, 1
      %v3310 = vsel %vm3294, %v3181, 0.0
      %v3311 = vsel %vm3295, %v3180, 0.0
      %v3312 = vsel %vm3296, %v3179, 0.0
      %v3313 = vsel %vm3297, %v3178, 0.0
      %v3314 = vsel %vm3298, %v3177, 0.0
      %v3315 = vsel %vm3299, %v3176, 0.0
      %v3316 = vsel %vm3300, %v3175, 0.0
      %v3317 = vsel %vm3301, %v3174, 0.0
      %v3318 = vsel %vm3302, %v3173, 0.0
      %v3319 = vsel %vm3303, %v3172, 0.0
      %v3320 = vsel %vm3304, %v3171, 0.0
      %v3321 = vsel %vm3305, %v3170, 0.0
      %v3322 = vsel %vm3306, %v3169, 0.0
      %v3323 = vsel %vm3307, %v3168, 0.0
      %v3324 = vsel %vm3308, %v3167, 0.0
      %v3325 = vsel %vm3309, %v3166, 0.0
      %v3326 = vpack.c.bf16 %v3311, %v3310
      %v3327 = vpack.c.bf16 %v3313, %v3312
      %v3328 = vpack.c.bf16 %v3315, %v3314
      %v3329 = vpack.c.bf16 %v3317, %v3316
      %v3330 = vpack.c.bf16 %v3319, %v3318
      %v3331 = vpack.c.bf16 %v3321, %v3320
      %v3332 = vpack.c.bf16 %v3323, %v3322
      %v3333 = vpack.c.bf16 %v3325, %v3324
      %v3334 = vld [vmem:[%s7] sm:$0xff]
      %v3335 = vld [vmem:[%s7 + $0x8] sm:$0xf]
      %v3336 = vld [vmem:[%s7 + $0xc] sm:$0xff]
      %v3337 = vld [vmem:[%s7 + $0x14] sm:$0xf]
      %v3338 = vld [vmem:[%s7 + $0x18] sm:$0xff]
      %v3339 = vld [vmem:[%s7 + $0x20] sm:$0xf]
      %v3340 = vld [vmem:[%s7 + $0x24] sm:$0xff]
      %v3341 = vld [vmem:[%s7 + $0x2c] sm:$0xf]
      %v3342 = vld [vmem:[%s7 + $0x30] sm:$0xff]
      %v3343 = vld [vmem:[%s7 + $0x38] sm:$0xf]
      %v3344 = vld [vmem:[%s7 + $0x3c] sm:$0xff]
      %v3345 = vld [vmem:[%s7 + $0x44] sm:$0xf]
      %v3346 = vld [vmem:[%s7 + $0x48] sm:$0xff]
      %v3347 = vld [vmem:[%s7 + $0x50] sm:$0xf]
      %v3348 = vld [vmem:[%s7 + $0x54] sm:$0xff]
      %v3349 = vld [vmem:[%s7 + $0x5c] sm:$0xf]
      %v3350 = vld [vmem:[%s7 + $0x60] sm:$0xff]
      %v3351 = vld [vmem:[%s7 + $0x68] sm:$0xf]
      %v3352 = vld [vmem:[%s7 + $0x6c] sm:$0xff]
      %v3353 = vld [vmem:[%s7 + $0x74] sm:$0xf]
      %v3354 = vld [vmem:[%s7 + $0x78] sm:$0xff]
      %v3355 = vld [vmem:[%s7 + $0x80] sm:$0xf]
      %v3356 = vld [vmem:[%s7 + $0x84] sm:$0xff]
      %v3357 = vld [vmem:[%s7 + $0x8c] sm:$0xf]
      %v3358 = vld [vmem:[%s7 + $0x90] sm:$0xff]
      %v3359 = vld [vmem:[%s7 + $0x98] sm:$0xf]
      %v3360 = vld [vmem:[%s7 + $0x9c] sm:$0xff]
      %v3361 = vld [vmem:[%s7 + $0xa4] sm:$0xf]
      %v3362 = vld [vmem:[%s7 + $0xa8] sm:$0xff]
      %v3363 = vld [vmem:[%s7 + $0xb0] sm:$0xf]
      %v3364 = vld [vmem:[%s7 + $0xb4] sm:$0xff]
      %v3365 = vld [vmem:[%s7 + $0xbc] sm:$0xf]
      %v3366 = vrot.slane %v1276, 7
      %v3367 = vrot.slane %v1280, 7
      %v3368 = vrot.slane %v1286, 7
      %v3369 = vrot.slane %v1290, 7
      %v3370 = vrot.slane %v1296, 7
      %v3371 = vrot.slane %v1300, 7
      %v3372 = vrot.slane %v1306, 7
      %v3373 = vrot.slane %v1310, 7
      %v3374 = vrot.slane %v1316, 7
      %v3375 = vrot.slane %v1320, 7
      %v3376 = vrot.slane %v1326, 7
      %v3377 = vrot.slane %v1330, 7
      %v3378 = vrot.slane %v1336, 7
      %v3379 = vrot.slane %v1340, 7
      %v3380 = vrot.slane %v1346, 7
      %v3381 = vrot.slane %v1350, 7
      %v3382 = vsel %vm1466, %v3380, %v3381
      %v3383 = vsel %vm1466, %v3379, %v3380
      %v3384 = vsel %vm1466, %v3378, %v3379
      %v3385 = vsel %vm1466, %v3377, %v3378
      %v3386 = vsel %vm1466, %v3376, %v3377
      %v3387 = vsel %vm1466, %v3375, %v3376
      %v3388 = vsel %vm1466, %v3374, %v3375
      %v3389 = vsel %vm1466, %v3373, %v3374
      %v3390 = vsel %vm1466, %v3372, %v3373
      %v3391 = vsel %vm1466, %v3371, %v3372
      %v3392 = vsel %vm1466, %v3370, %v3371
      %v3393 = vsel %vm1466, %v3369, %v3370
      %v3394 = vsel %vm1466, %v3368, %v3369
      %v3395 = vsel %vm1466, %v3367, %v3368
      %v3396 = vsel %vm1466, %v3366, %v3367
      %v3397 = vsel %vm1466, %v3381, %v3366
      %v3398 = vsel %vm1595, %v3397, 0.0
      %v3399 = vsel %vm1596, %v3396, 0.0
      %v3400 = vsel %vm1597, %v3395, 0.0
      %v3401 = vsel %vm1598, %v3394, 0.0
      %v3402 = vsel %vm1599, %v3393, 0.0
      %v3403 = vsel %vm1600, %v3392, 0.0
      %v3404 = vsel %vm1601, %v3391, 0.0
      %v3405 = vsel %vm1602, %v3390, 0.0
      %v3406 = vsel %vm1603, %v3389, 0.0
      %v3407 = vsel %vm1604, %v3388, 0.0
      %v3408 = vsel %vm1605, %v3387, 0.0
      %v3409 = vsel %vm1606, %v3386, 0.0
      %v3410 = vsel %vm1607, %v3385, 0.0
      %v3411 = vsel %vm1608, %v3384, 0.0
      %v3412 = vsel %vm1609, %v3383, 0.0
      %v3413 = vsel %vm1610, %v3382, 0.0
      %v3414 = vpack.c.bf16 %v3399, %v3398
      %v3415 = vpack.c.bf16 %v3401, %v3400
      %v3416 = vpack.c.bf16 %v3403, %v3402
      %v3417 = vpack.c.bf16 %v3405, %v3404
      %v3418 = vpack.c.bf16 %v3407, %v3406
      %v3419 = vpack.c.bf16 %v3409, %v3408
      %v3420 = vpack.c.bf16 %v3411, %v3410
      %v3421 = vpack.c.bf16 %v3413, %v3412
      %s3422 = scalar_lea.vmem %s7, 192
      %v3423 = vld [vmem:[%s3422] sm:$0xff]
      %v3424 = vld [vmem:[%s3422 + $0x8] sm:$0xf]
      %v3425 = vld [vmem:[%s3422 + $0xc] sm:$0xff]
      %v3426 = vld [vmem:[%s3422 + $0x14] sm:$0xf]
      %v3427 = vld [vmem:[%s3422 + $0x18] sm:$0xff]
      %v3428 = vld [vmem:[%s3422 + $0x20] sm:$0xf]
      %v3429 = vld [vmem:[%s3422 + $0x24] sm:$0xff]
      %v3430 = vld [vmem:[%s3422 + $0x2c] sm:$0xf]
      %v3431 = vld [vmem:[%s3422 + $0x30] sm:$0xff]
      %v3432 = vld [vmem:[%s3422 + $0x38] sm:$0xf]
      %v3433 = vld [vmem:[%s3422 + $0x3c] sm:$0xff]
      %v3434 = vld [vmem:[%s3422 + $0x44] sm:$0xf]
      %v3435 = vld [vmem:[%s3422 + $0x48] sm:$0xff]
      %v3436 = vld [vmem:[%s3422 + $0x50] sm:$0xf]
      %v3437 = vld [vmem:[%s3422 + $0x54] sm:$0xff]
      %v3438 = vld [vmem:[%s3422 + $0x5c] sm:$0xf]
      %v3439 = vld [vmem:[%s3422 + $0x60] sm:$0xff]
      %v3440 = vld [vmem:[%s3422 + $0x68] sm:$0xf]
      %v3441 = vld [vmem:[%s3422 + $0x6c] sm:$0xff]
      %v3442 = vld [vmem:[%s3422 + $0x74] sm:$0xf]
      %v3443 = vld [vmem:[%s3422 + $0x78] sm:$0xff]
      %v3444 = vld [vmem:[%s3422 + $0x80] sm:$0xf]
      %v3445 = vld [vmem:[%s3422 + $0x84] sm:$0xff]
      %v3446 = vld [vmem:[%s3422 + $0x8c] sm:$0xf]
      %v3447 = vld [vmem:[%s3422 + $0x90] sm:$0xff]
      %v3448 = vld [vmem:[%s3422 + $0x98] sm:$0xf]
      %v3449 = vld [vmem:[%s3422 + $0x9c] sm:$0xff]
      %v3450 = vld [vmem:[%s3422 + $0xa4] sm:$0xf]
      %v3451 = vld [vmem:[%s3422 + $0xa8] sm:$0xff]
      %v3452 = vld [vmem:[%s3422 + $0xb0] sm:$0xf]
      %v3453 = vld [vmem:[%s3422 + $0xb4] sm:$0xff]
      %v3454 = vld [vmem:[%s3422 + $0xbc] sm:$0xf]
      %v3487 = vunpack.c.l.b16 %v3423
      %v3488 = vunpack.c.h.b16 %v3423
      %v3489 = vunpack.c.l.b16 %v3424
      %v3490 = vunpack.c.l.b16 %v3425
      %v3491 = vunpack.c.h.b16 %v3425
      %v3492 = vunpack.c.l.b16 %v3426
      %v3493 = vunpack.c.l.b16 %v3427
      %v3494 = vunpack.c.h.b16 %v3427
      %v3495 = vunpack.c.l.b16 %v3428
      %v3496 = vunpack.c.l.b16 %v3429
      %v3497 = vunpack.c.h.b16 %v3429
      %v3498 = vunpack.c.l.b16 %v3430
      %v3499 = vunpack.c.l.b16 %v3431
      %v3500 = vunpack.c.h.b16 %v3431
      %v3501 = vunpack.c.l.b16 %v3432
      %v3502 = vunpack.c.l.b16 %v3433
      %v3503 = vunpack.c.h.b16 %v3433
      %v3504 = vunpack.c.l.b16 %v3434
      %v3505 = vunpack.c.l.b16 %v3435
      %v3506 = vunpack.c.h.b16 %v3435
      %v3507 = vunpack.c.l.b16 %v3436
      %v3508 = vunpack.c.l.b16 %v3437
      %v3509 = vunpack.c.h.b16 %v3437
      %v3510 = vunpack.c.l.b16 %v3438
      %v3511 = vunpack.c.l.b16 %v3439
      %v3512 = vunpack.c.h.b16 %v3439
      %v3513 = vunpack.c.l.b16 %v3440
      %v3514 = vunpack.c.l.b16 %v3441
      %v3515 = vunpack.c.h.b16 %v3441
      %v3516 = vunpack.c.l.b16 %v3442
      %v3517 = vunpack.c.l.b16 %v3443
      %v3518 = vunpack.c.h.b16 %v3443
      %v3519 = vunpack.c.l.b16 %v3444
      %v3520 = vunpack.c.l.b16 %v3445
      %v3521 = vunpack.c.h.b16 %v3445
      %v3522 = vunpack.c.l.b16 %v3446
      %v3523 = vunpack.c.l.b16 %v3447
      %v3524 = vunpack.c.h.b16 %v3447
      %v3525 = vunpack.c.l.b16 %v3448
      %v3526 = vunpack.c.l.b16 %v3449
      %v3527 = vunpack.c.h.b16 %v3449
      %v3528 = vunpack.c.l.b16 %v3450
      %v3529 = vunpack.c.l.b16 %v3451
      %v3530 = vunpack.c.h.b16 %v3451
      %v3531 = vunpack.c.l.b16 %v3452
      %v3532 = vunpack.c.l.b16 %v3453
      %v3533 = vunpack.c.h.b16 %v3453
      %v3534 = vunpack.c.l.b16 %v3454
      %v3535 = vpack.c.b16 %v3490, %v3487
      %v3536 = vpack.c.b16 %v3491, %v3488
      %v3537 = vpack.c.b16 %v3492, %v3489
      %v3538 = vpack.c.b16 %v3496, %v3493
      %v3539 = vpack.c.b16 %v3497, %v3494
      %v3540 = vpack.c.b16 %v3498, %v3495
      %v3541 = vpack.c.b16 %v3502, %v3499
      %v3542 = vpack.c.b16 %v3503, %v3500
      %v3543 = vpack.c.b16 %v3504, %v3501
      %v3544 = vpack.c.b16 %v3508, %v3505
      %v3545 = vpack.c.b16 %v3509, %v3506
      %v3546 = vpack.c.b16 %v3510, %v3507
      %v3547 = vpack.c.b16 %v3514, %v3511
      %v3548 = vpack.c.b16 %v3515, %v3512
      %v3549 = vpack.c.b16 %v3516, %v3513
      %v3550 = vpack.c.b16 %v3520, %v3517
      %v3551 = vpack.c.b16 %v3521, %v3518
      %v3552 = vpack.c.b16 %v3522, %v3519
      %v3553 = vpack.c.b16 %v3526, %v3523
      %v3554 = vpack.c.b16 %v3527, %v3524
      %v3555 = vpack.c.b16 %v3528, %v3525
      %v3556 = vpack.c.b16 %v3532, %v3529
      %v3557 = vpack.c.b16 %v3533, %v3530
      %v3558 = vpack.c.b16 %v3534, %v3531
      %3583 = vmatprep.subr.bf16.mxu0 %v3557
      %3584 = vmatpush1.bf16.msra.mxu0 %v3556
      %3585 = vmatprep.subr.bf16.mxu0 %v3554
      %3586 = vmatpush1.bf16.msra.mxu0 %v3553
      %3587 = vmatprep.subr.bf16.mxu0 %v3551
      %3588 = vmatpush1.bf16.msra.mxu0 %v3550
      %3589 = vmatprep.subr.bf16.mxu0 %v3548
      %3590 = vmatpush1.bf16.msra.mxu0 %v3547
      %3591 = vmatprep.subr.bf16.mxu0 %v3545
      %3592 = vmatpush1.bf16.msra.mxu0 %v3544
      %3593 = vmatprep.subr.bf16.mxu0 %v3542
      %3594 = vmatpush1.bf16.msra.mxu0 %v3541
      %3595 = vmatprep.subr.bf16.mxu0 %v3539
      %3596 = vmatpush1.bf16.msra.mxu0 %v3538
      %3597 = vmatprep.subr.bf16.mxu0 %v3536
      %3598 = vmatpush1.bf16.msra.mxu0 %v3535
      %3599 = vmatprep.subr.bf16.mxu0 0
      %3600 = vmatpush2.bf16.msra.mxu0 0
      %3601 = vmatprep.subr.bf16.mxu0 0
      %3602 = vmatpush2.bf16.msra.mxu0 0
      %3603 = vmatprep.subr.bf16.mxu0 0
      %3604 = vmatpush2.bf16.msra.mxu0 0
      %3605 = vmatprep.subr.bf16.mxu0 0
      %3606 = vmatpush2.bf16.msra.mxu0 0
      %3607 = vmatprep.subr.bf16.mxu0 0
      %3608 = vmatpush2.bf16.msra.mxu0 0
      %3609 = vmatprep.subr.bf16.mxu0 0
      %3610 = vmatpush2.bf16.msra.mxu0 0
      %3611 = vmatprep.subr.bf16.mxu0 0
      %3612 = vmatpush2.bf16.msra.mxu0 0
      %3613 = vmatprep.subr.bf16.mxu0 0
      %3614 = vmatpush2.bf16.msra.mxu0 0
      %3615 = vmatprep.mubr.bf16.mxu0 0
      %3616 = vmatmul.mubr.bf16.gmra.mxu0 %v3414
      %v3617 = vpop.f32.mrf.mxu0
      %v3618 = vadd.f32 0.0, %v3617
      %v3619 = vpop.f32.mrf.mxu0
      %v3620 = vadd.f32 0.0, %v3619
      %v3621 = vpop.f32.mrf.mxu0
      %v3622 = vadd.f32 0.0, %v3621
      %v3623 = vpop.f32.mrf.mxu0
      %v3624 = vadd.f32 0.0, %v3623
      %3625 = vmatprep.mubr.bf16.mxu0 0
      %3626 = vmatmul.mubr.bf16.gmra.mxu0 %v3415
      %v3627 = vpop.f32.mrf.mxu0
      %v3628 = vadd.f32 0.0, %v3627
      %v3629 = vpop.f32.mrf.mxu0
      %v3630 = vadd.f32 0.0, %v3629
      %v3631 = vpop.f32.mrf.mxu0
      %v3632 = vadd.f32 0.0, %v3631
      %v3633 = vpop.f32.mrf.mxu0
      %v3634 = vadd.f32 0.0, %v3633
      %3635 = vmatprep.mubr.bf16.mxu0 0
      %3636 = vmatmul.mubr.bf16.gmra.mxu0 %v3416
      %v3637 = vpop.f32.mrf.mxu0
      %v3638 = vadd.f32 0.0, %v3637
      %v3639 = vpop.f32.mrf.mxu0
      %v3640 = vadd.f32 0.0, %v3639
      %v3641 = vpop.f32.mrf.mxu0
      %v3642 = vadd.f32 0.0, %v3641
      %v3643 = vpop.f32.mrf.mxu0
      %v3644 = vadd.f32 0.0, %v3643
      %3645 = vmatprep.mubr.bf16.mxu0 0
      %3646 = vmatmul.mubr.bf16.gmra.mxu0 %v3417
      %v3647 = vpop.f32.mrf.mxu0
      %v3648 = vadd.f32 0.0, %v3647
      %v3649 = vpop.f32.mrf.mxu0
      %v3650 = vadd.f32 0.0, %v3649
      %v3651 = vpop.f32.mrf.mxu0
      %v3652 = vadd.f32 0.0, %v3651
      %v3653 = vpop.f32.mrf.mxu0
      %v3654 = vadd.f32 0.0, %v3653
      %3655 = vmatprep.mubr.bf16.mxu0 0
      %3656 = vmatmul.mubr.bf16.gmra.mxu0 %v3418
      %v3657 = vpop.f32.mrf.mxu0
      %v3658 = vadd.f32 0.0, %v3657
      %v3659 = vpop.f32.mrf.mxu0
      %v3660 = vadd.f32 0.0, %v3659
      %v3661 = vpop.f32.mrf.mxu0
      %v3662 = vadd.f32 0.0, %v3661
      %v3663 = vpop.f32.mrf.mxu0
      %v3664 = vadd.f32 0.0, %v3663
      %3665 = vmatprep.mubr.bf16.mxu0 0
      %3666 = vmatmul.mubr.bf16.gmra.mxu0 %v3419
      %v3667 = vpop.f32.mrf.mxu0
      %v3668 = vadd.f32 0.0, %v3667
      %v3669 = vpop.f32.mrf.mxu0
      %v3670 = vadd.f32 0.0, %v3669
      %v3671 = vpop.f32.mrf.mxu0
      %v3672 = vadd.f32 0.0, %v3671
      %v3673 = vpop.f32.mrf.mxu0
      %v3674 = vadd.f32 0.0, %v3673
      %3675 = vmatprep.mubr.bf16.mxu0 0
      %3676 = vmatmul.mubr.bf16.gmra.mxu0 %v3420
      %v3677 = vpop.f32.mrf.mxu0
      %v3678 = vadd.f32 0.0, %v3677
      %v3679 = vpop.f32.mrf.mxu0
      %v3680 = vadd.f32 0.0, %v3679
      %v3681 = vpop.f32.mrf.mxu0
      %v3682 = vadd.f32 0.0, %v3681
      %v3683 = vpop.f32.mrf.mxu0
      %v3684 = vadd.f32 0.0, %v3683
      %3685 = vmatprep.mubr.bf16.mxu0 0
      %3686 = vmatmul.mubr.bf16.gmra.mxu0 %v3421
      %v3687 = vpop.f32.mrf.mxu0
      %v3688 = vadd.f32 0.0, %v3687
      %v3689 = vpop.f32.mrf.mxu0
      %v3690 = vadd.f32 0.0, %v3689
      %v3691 = vpop.f32.mrf.mxu0
      %v3692 = vadd.f32 0.0, %v3691
      %v3693 = vpop.f32.mrf.mxu0
      %v3694 = vadd.f32 0.0, %v3693
      %3695 = vdwg.mxu0
      %3696 = vmatprep.subr.bf16.mxu0 0
      %3697 = vmatpush1.bf16.msra.mxu0 %v3558
      %3698 = vmatprep.subr.bf16.mxu0 0
      %3699 = vmatpush1.bf16.msra.mxu0 %v3555
      %3700 = vmatprep.subr.bf16.mxu0 0
      %3701 = vmatpush1.bf16.msra.mxu0 %v3552
      %3702 = vmatprep.subr.bf16.mxu0 0
      %3703 = vmatpush1.bf16.msra.mxu0 %v3549
      %3704 = vmatprep.subr.bf16.mxu0 0
      %3705 = vmatpush1.bf16.msra.mxu0 %v3546
      %3706 = vmatprep.subr.bf16.mxu0 0
      %3707 = vmatpush1.bf16.msra.mxu0 %v3543
      %3708 = vmatprep.subr.bf16.mxu0 0
      %3709 = vmatpush1.bf16.msra.mxu0 %v3540
      %3710 = vmatprep.subr.bf16.mxu0 0
      %3711 = vmatpush1.bf16.msra.mxu0 %v3537
      %3712 = vmatprep.subr.bf16.mxu0 0
      %3713 = vmatpush2.bf16.msra.mxu0 0
      %3714 = vmatprep.subr.bf16.mxu0 0
      %3715 = vmatpush2.bf16.msra.mxu0 0
      %3716 = vmatprep.subr.bf16.mxu0 0
      %3717 = vmatpush2.bf16.msra.mxu0 0
      %3718 = vmatprep.subr.bf16.mxu0 0
      %3719 = vmatpush2.bf16.msra.mxu0 0
      %3720 = vmatprep.subr.bf16.mxu0 0
      %3721 = vmatpush2.bf16.msra.mxu0 0
      %3722 = vmatprep.subr.bf16.mxu0 0
      %3723 = vmatpush2.bf16.msra.mxu0 0
      %3724 = vmatprep.subr.bf16.mxu0 0
      %3725 = vmatpush2.bf16.msra.mxu0 0
      %3726 = vmatprep.subr.bf16.mxu0 0
      %3727 = vmatpush2.bf16.msra.mxu0 0
      %3728 = vmatprep.mubr.bf16.mxu0 0
      %3729 = vmatmul.mubr.bf16.gmra.mxu0 %v3414
      %v3730 = vpop.f32.mrf.mxu0
      %v3731 = vadd.f32 0.0, %v3730
      %v3732 = vpop.f32.mrf.mxu0
      %v3733 = vpop.f32.mrf.mxu0
      %v3734 = vadd.f32 0.0, %v3733
      %v3735 = vpop.f32.mrf.mxu0
      %3736 = vmatprep.mubr.bf16.mxu0 0
      %3737 = vmatmul.mubr.bf16.gmra.mxu0 %v3415
      %v3738 = vpop.f32.mrf.mxu0
      %v3739 = vadd.f32 0.0, %v3738
      %v3740 = vpop.f32.mrf.mxu0
      %v3741 = vpop.f32.mrf.mxu0
      %v3742 = vadd.f32 0.0, %v3741
      %v3743 = vpop.f32.mrf.mxu0
      %3744 = vmatprep.mubr.bf16.mxu0 0
      %3745 = vmatmul.mubr.bf16.gmra.mxu0 %v3416
      %v3746 = vpop.f32.mrf.mxu0
      %v3747 = vadd.f32 0.0, %v3746
      %v3748 = vpop.f32.mrf.mxu0
      %v3749 = vpop.f32.mrf.mxu0
      %v3750 = vadd.f32 0.0, %v3749
      %v3751 = vpop.f32.mrf.mxu0
      %3752 = vmatprep.mubr.bf16.mxu0 0
      %3753 = vmatmul.mubr.bf16.gmra.mxu0 %v3417
      %v3754 = vpop.f32.mrf.mxu0
      %v3755 = vadd.f32 0.0, %v3754
      %v3756 = vpop.f32.mrf.mxu0
      %v3757 = vpop.f32.mrf.mxu0
      %v3758 = vadd.f32 0.0, %v3757
      %v3759 = vpop.f32.mrf.mxu0
      %3760 = vmatprep.mubr.bf16.mxu0 0
      %3761 = vmatmul.mubr.bf16.gmra.mxu0 %v3418
      %v3762 = vpop.f32.mrf.mxu0
      %v3763 = vadd.f32 0.0, %v3762
      %v3764 = vpop.f32.mrf.mxu0
      %v3765 = vpop.f32.mrf.mxu0
      %v3766 = vadd.f32 0.0, %v3765
      %v3767 = vpop.f32.mrf.mxu0
      %3768 = vmatprep.mubr.bf16.mxu0 0
      %3769 = vmatmul.mubr.bf16.gmra.mxu0 %v3419
      %v3770 = vpop.f32.mrf.mxu0
      %v3771 = vadd.f32 0.0, %v3770
      %v3772 = vpop.f32.mrf.mxu0
      %v3773 = vpop.f32.mrf.mxu0
      %v3774 = vadd.f32 0.0, %v3773
      %v3775 = vpop.f32.mrf.mxu0
      %3776 = vmatprep.mubr.bf16.mxu0 0
      %3777 = vmatmul.mubr.bf16.gmra.mxu0 %v3420
      %v3778 = vpop.f32.mrf.mxu0
      %v3779 = vadd.f32 0.0, %v3778
      %v3780 = vpop.f32.mrf.mxu0
      %v3781 = vpop.f32.mrf.mxu0
      %v3782 = vadd.f32 0.0, %v3781
      %v3783 = vpop.f32.mrf.mxu0
      %3784 = vmatprep.mubr.bf16.mxu0 0
      %3785 = vmatmul.mubr.bf16.gmra.mxu0 %v3421
      %v3786 = vpop.f32.mrf.mxu0
      %v3787 = vadd.f32 0.0, %v3786
      %v3788 = vpop.f32.mrf.mxu0
      %v3789 = vpop.f32.mrf.mxu0
      %v3790 = vadd.f32 0.0, %v3789
      %v3791 = vpop.f32.mrf.mxu0
      %3792 = vdwg.mxu0
      %v3825 = vunpack.c.l.b16 %v3334
      %v3826 = vunpack.c.h.b16 %v3334
      %v3827 = vunpack.c.l.b16 %v3335
      %v3828 = vunpack.c.l.b16 %v3336
      %v3829 = vunpack.c.h.b16 %v3336
      %v3830 = vunpack.c.l.b16 %v3337
      %v3831 = vunpack.c.l.b16 %v3338
      %v3832 = vunpack.c.h.b16 %v3338
      %v3833 = vunpack.c.l.b16 %v3339
      %v3834 = vunpack.c.l.b16 %v3340
      %v3835 = vunpack.c.h.b16 %v3340
      %v3836 = vunpack.c.l.b16 %v3341
      %v3837 = vunpack.c.l.b16 %v3342
      %v3838 = vunpack.c.h.b16 %v3342
      %v3839 = vunpack.c.l.b16 %v3343
      %v3840 = vunpack.c.l.b16 %v3344
      %v3841 = vunpack.c.h.b16 %v3344
      %v3842 = vunpack.c.l.b16 %v3345
      %v3843 = vunpack.c.l.b16 %v3346
      %v3844 = vunpack.c.h.b16 %v3346
      %v3845 = vunpack.c.l.b16 %v3347
      %v3846 = vunpack.c.l.b16 %v3348
      %v3847 = vunpack.c.h.b16 %v3348
      %v3848 = vunpack.c.l.b16 %v3349
      %v3849 = vunpack.c.l.b16 %v3350
      %v3850 = vunpack.c.h.b16 %v3350
      %v3851 = vunpack.c.l.b16 %v3351
      %v3852 = vunpack.c.l.b16 %v3352
      %v3853 = vunpack.c.h.b16 %v3352
      %v3854 = vunpack.c.l.b16 %v3353
      %v3855 = vunpack.c.l.b16 %v3354
      %v3856 = vunpack.c.h.b16 %v3354
      %v3857 = vunpack.c.l.b16 %v3355
      %v3858 = vunpack.c.l.b16 %v3356
      %v3859 = vunpack.c.h.b16 %v3356
      %v3860 = vunpack.c.l.b16 %v3357
      %v3861 = vunpack.c.l.b16 %v3358
      %v3862 = vunpack.c.h.b16 %v3358
      %v3863 = vunpack.c.l.b16 %v3359
      %v3864 = vunpack.c.l.b16 %v3360
      %v3865 = vunpack.c.h.b16 %v3360
      %v3866 = vunpack.c.l.b16 %v3361
      %v3867 = vunpack.c.l.b16 %v3362
      %v3868 = vunpack.c.h.b16 %v3362
      %v3869 = vunpack.c.l.b16 %v3363
      %v3870 = vunpack.c.l.b16 %v3364
      %v3871 = vunpack.c.h.b16 %v3364
      %v3872 = vunpack.c.l.b16 %v3365
      %v3873 = vpack.c.b16 %v3828, %v3825
      %v3874 = vpack.c.b16 %v3829, %v3826
      %v3875 = vpack.c.b16 %v3830, %v3827
      %v3876 = vpack.c.b16 %v3834, %v3831
      %v3877 = vpack.c.b16 %v3835, %v3832
      %v3878 = vpack.c.b16 %v3836, %v3833
      %v3879 = vpack.c.b16 %v3840, %v3837
      %v3880 = vpack.c.b16 %v3841, %v3838
      %v3881 = vpack.c.b16 %v3842, %v3839
      %v3882 = vpack.c.b16 %v3846, %v3843
      %v3883 = vpack.c.b16 %v3847, %v3844
      %v3884 = vpack.c.b16 %v3848, %v3845
      %v3885 = vpack.c.b16 %v3852, %v3849
      %v3886 = vpack.c.b16 %v3853, %v3850
      %v3887 = vpack.c.b16 %v3854, %v3851
      %v3888 = vpack.c.b16 %v3858, %v3855
      %v3889 = vpack.c.b16 %v3859, %v3856
      %v3890 = vpack.c.b16 %v3860, %v3857
      %v3891 = vpack.c.b16 %v3864, %v3861
      %v3892 = vpack.c.b16 %v3865, %v3862
      %v3893 = vpack.c.b16 %v3866, %v3863
      %v3894 = vpack.c.b16 %v3870, %v3867
      %v3895 = vpack.c.b16 %v3871, %v3868
      %v3896 = vpack.c.b16 %v3872, %v3869
      %3921 = vmatprep.subr.bf16.mxu0 %v3895
      %3922 = vmatpush1.bf16.msra.mxu0 %v3894
      %3923 = vmatprep.subr.bf16.mxu0 %v3892
      %3924 = vmatpush1.bf16.msra.mxu0 %v3891
      %3925 = vmatprep.subr.bf16.mxu0 %v3889
      %3926 = vmatpush1.bf16.msra.mxu0 %v3888
      %3927 = vmatprep.subr.bf16.mxu0 %v3886
      %3928 = vmatpush1.bf16.msra.mxu0 %v3885
      %3929 = vmatprep.subr.bf16.mxu0 %v3883
      %3930 = vmatpush1.bf16.msra.mxu0 %v3882
      %3931 = vmatprep.subr.bf16.mxu0 %v3880
      %3932 = vmatpush1.bf16.msra.mxu0 %v3879
      %3933 = vmatprep.subr.bf16.mxu0 %v3877
      %3934 = vmatpush1.bf16.msra.mxu0 %v3876
      %3935 = vmatprep.subr.bf16.mxu0 %v3874
      %3936 = vmatpush1.bf16.msra.mxu0 %v3873
      %3937 = vmatprep.subr.bf16.mxu0 0
      %3938 = vmatpush2.bf16.msra.mxu0 0
      %3939 = vmatprep.subr.bf16.mxu0 0
      %3940 = vmatpush2.bf16.msra.mxu0 0
      %3941 = vmatprep.subr.bf16.mxu0 0
      %3942 = vmatpush2.bf16.msra.mxu0 0
      %3943 = vmatprep.subr.bf16.mxu0 0
      %3944 = vmatpush2.bf16.msra.mxu0 0
      %3945 = vmatprep.subr.bf16.mxu0 0
      %3946 = vmatpush2.bf16.msra.mxu0 0
      %3947 = vmatprep.subr.bf16.mxu0 0
      %3948 = vmatpush2.bf16.msra.mxu0 0
      %3949 = vmatprep.subr.bf16.mxu0 0
      %3950 = vmatpush2.bf16.msra.mxu0 0
      %3951 = vmatprep.subr.bf16.mxu0 0
      %3952 = vmatpush2.bf16.msra.mxu0 0
      %3953 = vmatprep.mubr.bf16.mxu0 0
      %3954 = vmatmul.mubr.bf16.gmra.mxu0 %v3326
      %v3955 = vpop.f32.mrf.mxu0
      %v3956 = vadd.f32 %v3618, %v3955
      %v3957 = vpop.f32.mrf.mxu0
      %v3958 = vadd.f32 %v3620, %v3957
      %v3959 = vpop.f32.mrf.mxu0
      %v3960 = vadd.f32 %v3622, %v3959
      %v3961 = vpop.f32.mrf.mxu0
      %v3962 = vadd.f32 %v3624, %v3961
      %3963 = vmatprep.mubr.bf16.mxu0 0
      %3964 = vmatmul.mubr.bf16.gmra.mxu0 %v3327
      %v3965 = vpop.f32.mrf.mxu0
      %v3966 = vadd.f32 %v3628, %v3965
      %v3967 = vpop.f32.mrf.mxu0
      %v3968 = vadd.f32 %v3630, %v3967
      %v3969 = vpop.f32.mrf.mxu0
      %v3970 = vadd.f32 %v3632, %v3969
      %v3971 = vpop.f32.mrf.mxu0
      %v3972 = vadd.f32 %v3634, %v3971
      %3973 = vmatprep.mubr.bf16.mxu0 0
      %3974 = vmatmul.mubr.bf16.gmra.mxu0 %v3328
      %v3975 = vpop.f32.mrf.mxu0
      %v3976 = vadd.f32 %v3638, %v3975
      %v3977 = vpop.f32.mrf.mxu0
      %v3978 = vadd.f32 %v3640, %v3977
      %v3979 = vpop.f32.mrf.mxu0
      %v3980 = vadd.f32 %v3642, %v3979
      %v3981 = vpop.f32.mrf.mxu0
      %v3982 = vadd.f32 %v3644, %v3981
      %3983 = vmatprep.mubr.bf16.mxu0 0
      %3984 = vmatmul.mubr.bf16.gmra.mxu0 %v3329
      %v3985 = vpop.f32.mrf.mxu0
      %v3986 = vadd.f32 %v3648, %v3985
      %v3987 = vpop.f32.mrf.mxu0
      %v3988 = vadd.f32 %v3650, %v3987
      %v3989 = vpop.f32.mrf.mxu0
      %v3990 = vadd.f32 %v3652, %v3989
      %v3991 = vpop.f32.mrf.mxu0
      %v3992 = vadd.f32 %v3654, %v3991
      %3993 = vmatprep.mubr.bf16.mxu0 0
      %3994 = vmatmul.mubr.bf16.gmra.mxu0 %v3330
      %v3995 = vpop.f32.mrf.mxu0
      %v3996 = vadd.f32 %v3658, %v3995
      %v3997 = vpop.f32.mrf.mxu0
      %v3998 = vadd.f32 %v3660, %v3997
      %v3999 = vpop.f32.mrf.mxu0
      %v4000 = vadd.f32 %v3662, %v3999
      %v4001 = vpop.f32.mrf.mxu0
      %v4002 = vadd.f32 %v3664, %v4001
      %4003 = vmatprep.mubr.bf16.mxu0 0
      %4004 = vmatmul.mubr.bf16.gmra.mxu0 %v3331
      %v4005 = vpop.f32.mrf.mxu0
      %v4006 = vadd.f32 %v3668, %v4005
      %v4007 = vpop.f32.mrf.mxu0
      %v4008 = vadd.f32 %v3670, %v4007
      %v4009 = vpop.f32.mrf.mxu0
      %v4010 = vadd.f32 %v3672, %v4009
      %v4011 = vpop.f32.mrf.mxu0
      %v4012 = vadd.f32 %v3674, %v4011
      %4013 = vmatprep.mubr.bf16.mxu0 0
      %4014 = vmatmul.mubr.bf16.gmra.mxu0 %v3332
      %v4015 = vpop.f32.mrf.mxu0
      %v4016 = vadd.f32 %v3678, %v4015
      %v4017 = vpop.f32.mrf.mxu0
      %v4018 = vadd.f32 %v3680, %v4017
      %v4019 = vpop.f32.mrf.mxu0
      %v4020 = vadd.f32 %v3682, %v4019
      %v4021 = vpop.f32.mrf.mxu0
      %v4022 = vadd.f32 %v3684, %v4021
      %4023 = vmatprep.mubr.bf16.mxu0 0
      %4024 = vmatmul.mubr.bf16.gmra.mxu0 %v3333
      %v4025 = vpop.f32.mrf.mxu0
      %v4026 = vadd.f32 %v3688, %v4025
      %v4027 = vpop.f32.mrf.mxu0
      %v4028 = vadd.f32 %v3690, %v4027
      %v4029 = vpop.f32.mrf.mxu0
      %v4030 = vadd.f32 %v3692, %v4029
      %v4031 = vpop.f32.mrf.mxu0
      %v4032 = vadd.f32 %v3694, %v4031
      %4033 = vdwg.mxu0
      %4034 = vmatprep.subr.bf16.mxu0 0
      %4035 = vmatpush1.bf16.msra.mxu0 %v3896
      %4036 = vmatprep.subr.bf16.mxu0 0
      %4037 = vmatpush1.bf16.msra.mxu0 %v3893
      %4038 = vmatprep.subr.bf16.mxu0 0
      %4039 = vmatpush1.bf16.msra.mxu0 %v3890
      %4040 = vmatprep.subr.bf16.mxu0 0
      %4041 = vmatpush1.bf16.msra.mxu0 %v3887
      %4042 = vmatprep.subr.bf16.mxu0 0
      %4043 = vmatpush1.bf16.msra.mxu0 %v3884
      %4044 = vmatprep.subr.bf16.mxu0 0
      %4045 = vmatpush1.bf16.msra.mxu0 %v3881
      %4046 = vmatprep.subr.bf16.mxu0 0
      %4047 = vmatpush1.bf16.msra.mxu0 %v3878
      %4048 = vmatprep.subr.bf16.mxu0 0
      %4049 = vmatpush1.bf16.msra.mxu0 %v3875
      %4050 = vmatprep.subr.bf16.mxu0 0
      %4051 = vmatpush2.bf16.msra.mxu0 0
      %4052 = vmatprep.subr.bf16.mxu0 0
      %4053 = vmatpush2.bf16.msra.mxu0 0
      %4054 = vmatprep.subr.bf16.mxu0 0
      %4055 = vmatpush2.bf16.msra.mxu0 0
      %4056 = vmatprep.subr.bf16.mxu0 0
      %4057 = vmatpush2.bf16.msra.mxu0 0
      %4058 = vmatprep.subr.bf16.mxu0 0
      %4059 = vmatpush2.bf16.msra.mxu0 0
      %4060 = vmatprep.subr.bf16.mxu0 0
      %4061 = vmatpush2.bf16.msra.mxu0 0
      %4062 = vmatprep.subr.bf16.mxu0 0
      %4063 = vmatpush2.bf16.msra.mxu0 0
      %4064 = vmatprep.subr.bf16.mxu0 0
      %4065 = vmatpush2.bf16.msra.mxu0 0
      %4066 = vmatprep.mubr.bf16.mxu0 0
      %4067 = vmatmul.mubr.bf16.gmra.mxu0 %v3326
      %v4068 = vpop.f32.mrf.mxu0
      %v4069 = vadd.f32 %v3731, %v4068
      %v4070 = vpop.f32.mrf.mxu0
      %v4071 = vpop.f32.mrf.mxu0
      %v4072 = vadd.f32 %v3734, %v4071
      %v4073 = vpop.f32.mrf.mxu0
      %4074 = vmatprep.mubr.bf16.mxu0 0
      %4075 = vmatmul.mubr.bf16.gmra.mxu0 %v3327
      %v4076 = vpop.f32.mrf.mxu0
      %v4077 = vadd.f32 %v3739, %v4076
      %v4078 = vpop.f32.mrf.mxu0
      %v4079 = vpop.f32.mrf.mxu0
      %v4080 = vadd.f32 %v3742, %v4079
      %v4081 = vpop.f32.mrf.mxu0
      %4082 = vmatprep.mubr.bf16.mxu0 0
      %4083 = vmatmul.mubr.bf16.gmra.mxu0 %v3328
      %v4084 = vpop.f32.mrf.mxu0
      %v4085 = vadd.f32 %v3747, %v4084
      %v4086 = vpop.f32.mrf.mxu0
      %v4087 = vpop.f32.mrf.mxu0
      %v4088 = vadd.f32 %v3750, %v4087
      %v4089 = vpop.f32.mrf.mxu0
      %4090 = vmatprep.mubr.bf16.mxu0 0
      %4091 = vmatmul.mubr.bf16.gmra.mxu0 %v3329
      %v4092 = vpop.f32.mrf.mxu0
      %v4093 = vadd.f32 %v3755, %v4092
      %v4094 = vpop.f32.mrf.mxu0
      %v4095 = vpop.f32.mrf.mxu0
      %v4096 = vadd.f32 %v3758, %v4095
      %v4097 = vpop.f32.mrf.mxu0
      %4098 = vmatprep.mubr.bf16.mxu0 0
      %4099 = vmatmul.mubr.bf16.gmra.mxu0 %v3330
      %v4100 = vpop.f32.mrf.mxu0
      %v4101 = vadd.f32 %v3763, %v4100
      %v4102 = vpop.f32.mrf.mxu0
      %v4103 = vpop.f32.mrf.mxu0
      %v4104 = vadd.f32 %v3766, %v4103
      %v4105 = vpop.f32.mrf.mxu0
      %4106 = vmatprep.mubr.bf16.mxu0 0
      %4107 = vmatmul.mubr.bf16.gmra.mxu0 %v3331
      %v4108 = vpop.f32.mrf.mxu0
      %v4109 = vadd.f32 %v3771, %v4108
      %v4110 = vpop.f32.mrf.mxu0
      %v4111 = vpop.f32.mrf.mxu0
      %v4112 = vadd.f32 %v3774, %v4111
      %v4113 = vpop.f32.mrf.mxu0
      %4114 = vmatprep.mubr.bf16.mxu0 0
      %4115 = vmatmul.mubr.bf16.gmra.mxu0 %v3332
      %v4116 = vpop.f32.mrf.mxu0
      %v4117 = vadd.f32 %v3779, %v4116
      %v4118 = vpop.f32.mrf.mxu0
      %v4119 = vpop.f32.mrf.mxu0
      %v4120 = vadd.f32 %v3782, %v4119
      %v4121 = vpop.f32.mrf.mxu0
      %4122 = vmatprep.mubr.bf16.mxu0 0
      %4123 = vmatmul.mubr.bf16.gmra.mxu0 %v3333
      %v4124 = vpop.f32.mrf.mxu0
      %v4125 = vadd.f32 %v3787, %v4124
      %v4126 = vpop.f32.mrf.mxu0
      %v4127 = vpop.f32.mrf.mxu0
      %v4128 = vadd.f32 %v3790, %v4127
      %v4129 = vpop.f32.mrf.mxu0
      %4130 = vdwg.mxu0
      %v4131 = vpack.c.bf16 %v1280, %v1276
      %v4132 = vpack.c.bf16 %v1290, %v1286
      %v4133 = vpack.c.bf16 %v1300, %v1296
      %v4134 = vpack.c.bf16 %v1310, %v1306
      %v4135 = vpack.c.bf16 %v1320, %v1316
      %v4136 = vpack.c.bf16 %v1330, %v1326
      %v4137 = vpack.c.bf16 %v1340, %v1336
      %v4138 = vpack.c.bf16 %v1350, %v1346
      %s4139 = scalar_lea.vmem %s7, 384
      %v4140 = vld [vmem:[%s4139] sm:$0xff]
      %v4141 = vld [vmem:[%s4139 + $0x8] sm:$0xf]
      %v4142 = vld [vmem:[%s4139 + $0xc] sm:$0xff]
      %v4143 = vld [vmem:[%s4139 + $0x14] sm:$0xf]
      %v4144 = vld [vmem:[%s4139 + $0x18] sm:$0xff]
      %v4145 = vld [vmem:[%s4139 + $0x20] sm:$0xf]
      %v4146 = vld [vmem:[%s4139 + $0x24] sm:$0xff]
      %v4147 = vld [vmem:[%s4139 + $0x2c] sm:$0xf]
      %v4148 = vld [vmem:[%s4139 + $0x30] sm:$0xff]
      %v4149 = vld [vmem:[%s4139 + $0x38] sm:$0xf]
      %v4150 = vld [vmem:[%s4139 + $0x3c] sm:$0xff]
      %v4151 = vld [vmem:[%s4139 + $0x44] sm:$0xf]
      %v4152 = vld [vmem:[%s4139 + $0x48] sm:$0xff]
      %v4153 = vld [vmem:[%s4139 + $0x50] sm:$0xf]
      %v4154 = vld [vmem:[%s4139 + $0x54] sm:$0xff]
      %v4155 = vld [vmem:[%s4139 + $0x5c] sm:$0xf]
      %v4156 = vld [vmem:[%s4139 + $0x60] sm:$0xff]
      %v4157 = vld [vmem:[%s4139 + $0x68] sm:$0xf]
      %v4158 = vld [vmem:[%s4139 + $0x6c] sm:$0xff]
      %v4159 = vld [vmem:[%s4139 + $0x74] sm:$0xf]
      %v4160 = vld [vmem:[%s4139 + $0x78] sm:$0xff]
      %v4161 = vld [vmem:[%s4139 + $0x80] sm:$0xf]
      %v4162 = vld [vmem:[%s4139 + $0x84] sm:$0xff]
      %v4163 = vld [vmem:[%s4139 + $0x8c] sm:$0xf]
      %v4164 = vld [vmem:[%s4139 + $0x90] sm:$0xff]
      %v4165 = vld [vmem:[%s4139 + $0x98] sm:$0xf]
      %v4166 = vld [vmem:[%s4139 + $0x9c] sm:$0xff]
      %v4167 = vld [vmem:[%s4139 + $0xa4] sm:$0xf]
      %v4168 = vld [vmem:[%s4139 + $0xa8] sm:$0xff]
      %v4169 = vld [vmem:[%s4139 + $0xb0] sm:$0xf]
      %v4170 = vld [vmem:[%s4139 + $0xb4] sm:$0xff]
      %v4171 = vld [vmem:[%s4139 + $0xbc] sm:$0xf]
      %v4204 = vunpack.c.l.b16 %v4140
      %v4205 = vunpack.c.h.b16 %v4140
      %v4206 = vunpack.c.l.b16 %v4141
      %v4207 = vunpack.c.l.b16 %v4142
      %v4208 = vunpack.c.h.b16 %v4142
      %v4209 = vunpack.c.l.b16 %v4143
      %v4210 = vunpack.c.l.b16 %v4144
      %v4211 = vunpack.c.h.b16 %v4144
      %v4212 = vunpack.c.l.b16 %v4145
      %v4213 = vunpack.c.l.b16 %v4146
      %v4214 = vunpack.c.h.b16 %v4146
      %v4215 = vunpack.c.l.b16 %v4147
      %v4216 = vunpack.c.l.b16 %v4148
      %v4217 = vunpack.c.h.b16 %v4148
      %v4218 = vunpack.c.l.b16 %v4149
      %v4219 = vunpack.c.l.b16 %v4150
      %v4220 = vunpack.c.h.b16 %v4150
      %v4221 = vunpack.c.l.b16 %v4151
      %v4222 = vunpack.c.l.b16 %v4152
      %v4223 = vunpack.c.h.b16 %v4152
      %v4224 = vunpack.c.l.b16 %v4153
      %v4225 = vunpack.c.l.b16 %v4154
      %v4226 = vunpack.c.h.b16 %v4154
      %v4227 = vunpack.c.l.b16 %v4155
      %v4228 = vunpack.c.l.b16 %v4156
      %v4229 = vunpack.c.h.b16 %v4156
      %v4230 = vunpack.c.l.b16 %v4157
      %v4231 = vunpack.c.l.b16 %v4158
      %v4232 = vunpack.c.h.b16 %v4158
      %v4233 = vunpack.c.l.b16 %v4159
      %v4234 = vunpack.c.l.b16 %v4160
      %v4235 = vunpack.c.h.b16 %v4160
      %v4236 = vunpack.c.l.b16 %v4161
      %v4237 = vunpack.c.l.b16 %v4162
      %v4238 = vunpack.c.h.b16 %v4162
      %v4239 = vunpack.c.l.b16 %v4163
      %v4240 = vunpack.c.l.b16 %v4164
      %v4241 = vunpack.c.h.b16 %v4164
      %v4242 = vunpack.c.l.b16 %v4165
      %v4243 = vunpack.c.l.b16 %v4166
      %v4244 = vunpack.c.h.b16 %v4166
      %v4245 = vunpack.c.l.b16 %v4167
      %v4246 = vunpack.c.l.b16 %v4168
      %v4247 = vunpack.c.h.b16 %v4168
      %v4248 = vunpack.c.l.b16 %v4169
      %v4249 = vunpack.c.l.b16 %v4170
      %v4250 = vunpack.c.h.b16 %v4170
      %v4251 = vunpack.c.l.b16 %v4171
      %v4252 = vpack.c.b16 %v4207, %v4204
      %v4253 = vpack.c.b16 %v4208, %v4205
      %v4254 = vpack.c.b16 %v4209, %v4206
      %v4255 = vpack.c.b16 %v4213, %v4210
      %v4256 = vpack.c.b16 %v4214, %v4211
      %v4257 = vpack.c.b16 %v4215, %v4212
      %v4258 = vpack.c.b16 %v4219, %v4216
      %v4259 = vpack.c.b16 %v4220, %v4217
      %v4260 = vpack.c.b16 %v4221, %v4218
      %v4261 = vpack.c.b16 %v4225, %v4222
      %v4262 = vpack.c.b16 %v4226, %v4223
      %v4263 = vpack.c.b16 %v4227, %v4224
      %v4264 = vpack.c.b16 %v4231, %v4228
      %v4265 = vpack.c.b16 %v4232, %v4229
      %v4266 = vpack.c.b16 %v4233, %v4230
      %v4267 = vpack.c.b16 %v4237, %v4234
      %v4268 = vpack.c.b16 %v4238, %v4235
      %v4269 = vpack.c.b16 %v4239, %v4236
      %v4270 = vpack.c.b16 %v4243, %v4240
      %v4271 = vpack.c.b16 %v4244, %v4241
      %v4272 = vpack.c.b16 %v4245, %v4242
      %v4273 = vpack.c.b16 %v4249, %v4246
      %v4274 = vpack.c.b16 %v4250, %v4247
      %v4275 = vpack.c.b16 %v4251, %v4248
      %4300 = vmatprep.subr.bf16.mxu0 %v4274
      %4301 = vmatpush1.bf16.msra.mxu0 %v4273
      %4302 = vmatprep.subr.bf16.mxu0 %v4271
      %4303 = vmatpush1.bf16.msra.mxu0 %v4270
      %4304 = vmatprep.subr.bf16.mxu0 %v4268
      %4305 = vmatpush1.bf16.msra.mxu0 %v4267
      %4306 = vmatprep.subr.bf16.mxu0 %v4265
      %4307 = vmatpush1.bf16.msra.mxu0 %v4264
      %4308 = vmatprep.subr.bf16.mxu0 %v4262
      %4309 = vmatpush1.bf16.msra.mxu0 %v4261
      %4310 = vmatprep.subr.bf16.mxu0 %v4259
      %4311 = vmatpush1.bf16.msra.mxu0 %v4258
      %4312 = vmatprep.subr.bf16.mxu0 %v4256
      %4313 = vmatpush1.bf16.msra.mxu0 %v4255
      %4314 = vmatprep.subr.bf16.mxu0 %v4253
      %4315 = vmatpush1.bf16.msra.mxu0 %v4252
      %4316 = vmatprep.subr.bf16.mxu0 0
      %4317 = vmatpush2.bf16.msra.mxu0 0
      %4318 = vmatprep.subr.bf16.mxu0 0
      %4319 = vmatpush2.bf16.msra.mxu0 0
      %4320 = vmatprep.subr.bf16.mxu0 0
      %4321 = vmatpush2.bf16.msra.mxu0 0
      %4322 = vmatprep.subr.bf16.mxu0 0
      %4323 = vmatpush2.bf16.msra.mxu0 0
      %4324 = vmatprep.subr.bf16.mxu0 0
      %4325 = vmatpush2.bf16.msra.mxu0 0
      %4326 = vmatprep.subr.bf16.mxu0 0
      %4327 = vmatpush2.bf16.msra.mxu0 0
      %4328 = vmatprep.subr.bf16.mxu0 0
      %4329 = vmatpush2.bf16.msra.mxu0 0
      %4330 = vmatprep.subr.bf16.mxu0 0
      %4331 = vmatpush2.bf16.msra.mxu0 0
      %4332 = vmatprep.mubr.bf16.mxu0 0
      %4333 = vmatmul.mubr.bf16.gmra.mxu0 %v4131
      %v4334 = vpop.f32.mrf.mxu0
      %v4335 = vadd.f32 0.0, %v4334
      %v4336 = vpop.f32.mrf.mxu0
      %v4337 = vadd.f32 0.0, %v4336
      %v4338 = vpop.f32.mrf.mxu0
      %v4339 = vadd.f32 0.0, %v4338
      %v4340 = vpop.f32.mrf.mxu0
      %v4341 = vadd.f32 0.0, %v4340
      %4342 = vmatprep.mubr.bf16.mxu0 0
      %4343 = vmatmul.mubr.bf16.gmra.mxu0 %v4132
      %v4344 = vpop.f32.mrf.mxu0
      %v4345 = vadd.f32 0.0, %v4344
      %v4346 = vpop.f32.mrf.mxu0
      %v4347 = vadd.f32 0.0, %v4346
      %v4348 = vpop.f32.mrf.mxu0
      %v4349 = vadd.f32 0.0, %v4348
      %v4350 = vpop.f32.mrf.mxu0
      %v4351 = vadd.f32 0.0, %v4350
      %4352 = vmatprep.mubr.bf16.mxu0 0
      %4353 = vmatmul.mubr.bf16.gmra.mxu0 %v4133
      %v4354 = vpop.f32.mrf.mxu0
      %v4355 = vadd.f32 0.0, %v4354
      %v4356 = vpop.f32.mrf.mxu0
      %v4357 = vadd.f32 0.0, %v4356
      %v4358 = vpop.f32.mrf.mxu0
      %v4359 = vadd.f32 0.0, %v4358
      %v4360 = vpop.f32.mrf.mxu0
      %v4361 = vadd.f32 0.0, %v4360
      %4362 = vmatprep.mubr.bf16.mxu0 0
      %4363 = vmatmul.mubr.bf16.gmra.mxu0 %v4134
      %v4364 = vpop.f32.mrf.mxu0
      %v4365 = vadd.f32 0.0, %v4364
      %v4366 = vpop.f32.mrf.mxu0
      %v4367 = vadd.f32 0.0, %v4366
      %v4368 = vpop.f32.mrf.mxu0
      %v4369 = vadd.f32 0.0, %v4368
      %v4370 = vpop.f32.mrf.mxu0
      %v4371 = vadd.f32 0.0, %v4370
      %4372 = vmatprep.mubr.bf16.mxu0 0
      %4373 = vmatmul.mubr.bf16.gmra.mxu0 %v4135
      %v4374 = vpop.f32.mrf.mxu0
      %v4375 = vadd.f32 0.0, %v4374
      %v4376 = vpop.f32.mrf.mxu0
      %v4377 = vadd.f32 0.0, %v4376
      %v4378 = vpop.f32.mrf.mxu0
      %v4379 = vadd.f32 0.0, %v4378
      %v4380 = vpop.f32.mrf.mxu0
      %v4381 = vadd.f32 0.0, %v4380
      %4382 = vmatprep.mubr.bf16.mxu0 0
      %4383 = vmatmul.mubr.bf16.gmra.mxu0 %v4136
      %v4384 = vpop.f32.mrf.mxu0
      %v4385 = vadd.f32 0.0, %v4384
      %v4386 = vpop.f32.mrf.mxu0
      %v4387 = vadd.f32 0.0, %v4386
      %v4388 = vpop.f32.mrf.mxu0
      %v4389 = vadd.f32 0.0, %v4388
      %v4390 = vpop.f32.mrf.mxu0
      %v4391 = vadd.f32 0.0, %v4390
      %4392 = vmatprep.mubr.bf16.mxu0 0
      %4393 = vmatmul.mubr.bf16.gmra.mxu0 %v4137
      %v4394 = vpop.f32.mrf.mxu0
      %v4395 = vadd.f32 0.0, %v4394
      %v4396 = vpop.f32.mrf.mxu0
      %v4397 = vadd.f32 0.0, %v4396
      %v4398 = vpop.f32.mrf.mxu0
      %v4399 = vadd.f32 0.0, %v4398
      %v4400 = vpop.f32.mrf.mxu0
      %v4401 = vadd.f32 0.0, %v4400
      %4402 = vmatprep.mubr.bf16.mxu0 0
      %4403 = vmatmul.mubr.bf16.gmra.mxu0 %v4138
      %v4404 = vpop.f32.mrf.mxu0
      %v4405 = vadd.f32 0.0, %v4404
      %v4406 = vpop.f32.mrf.mxu0
      %v4407 = vadd.f32 0.0, %v4406
      %v4408 = vpop.f32.mrf.mxu0
      %v4409 = vadd.f32 0.0, %v4408
      %v4410 = vpop.f32.mrf.mxu0
      %v4411 = vadd.f32 0.0, %v4410
      %4412 = vdwg.mxu0
      %4413 = vmatprep.subr.bf16.mxu0 0
      %4414 = vmatpush1.bf16.msra.mxu0 %v4275
      %4415 = vmatprep.subr.bf16.mxu0 0
      %4416 = vmatpush1.bf16.msra.mxu0 %v4272
      %4417 = vmatprep.subr.bf16.mxu0 0
      %4418 = vmatpush1.bf16.msra.mxu0 %v4269
      %4419 = vmatprep.subr.bf16.mxu0 0
      %4420 = vmatpush1.bf16.msra.mxu0 %v4266
      %4421 = vmatprep.subr.bf16.mxu0 0
      %4422 = vmatpush1.bf16.msra.mxu0 %v4263
      %4423 = vmatprep.subr.bf16.mxu0 0
      %4424 = vmatpush1.bf16.msra.mxu0 %v4260
      %4425 = vmatprep.subr.bf16.mxu0 0
      %4426 = vmatpush1.bf16.msra.mxu0 %v4257
      %4427 = vmatprep.subr.bf16.mxu0 0
      %4428 = vmatpush1.bf16.msra.mxu0 %v4254
      %4429 = vmatprep.subr.bf16.mxu0 0
      %4430 = vmatpush2.bf16.msra.mxu0 0
      %4431 = vmatprep.subr.bf16.mxu0 0
      %4432 = vmatpush2.bf16.msra.mxu0 0
      %4433 = vmatprep.subr.bf16.mxu0 0
      %4434 = vmatpush2.bf16.msra.mxu0 0
      %4435 = vmatprep.subr.bf16.mxu0 0
      %4436 = vmatpush2.bf16.msra.mxu0 0
      %4437 = vmatprep.subr.bf16.mxu0 0
      %4438 = vmatpush2.bf16.msra.mxu0 0
      %4439 = vmatprep.subr.bf16.mxu0 0
      %4440 = vmatpush2.bf16.msra.mxu0 0
      %4441 = vmatprep.subr.bf16.mxu0 0
      %4442 = vmatpush2.bf16.msra.mxu0 0
      %4443 = vmatprep.subr.bf16.mxu0 0
      %4444 = vmatpush2.bf16.msra.mxu0 0
      %4445 = vmatprep.mubr.bf16.mxu0 0
      %4446 = vmatmul.mubr.bf16.gmra.mxu0 %v4131
      %v4447 = vpop.f32.mrf.mxu0
      %v4448 = vadd.f32 0.0, %v4447
      %v4449 = vpop.f32.mrf.mxu0
      %v4450 = vpop.f32.mrf.mxu0
      %v4451 = vadd.f32 0.0, %v4450
      %v4452 = vpop.f32.mrf.mxu0
      %4453 = vmatprep.mubr.bf16.mxu0 0
      %4454 = vmatmul.mubr.bf16.gmra.mxu0 %v4132
      %v4455 = vpop.f32.mrf.mxu0
      %v4456 = vadd.f32 0.0, %v4455
      %v4457 = vpop.f32.mrf.mxu0
      %v4458 = vpop.f32.mrf.mxu0
      %v4459 = vadd.f32 0.0, %v4458
      %v4460 = vpop.f32.mrf.mxu0
      %4461 = vmatprep.mubr.bf16.mxu0 0
      %4462 = vmatmul.mubr.bf16.gmra.mxu0 %v4133
      %v4463 = vpop.f32.mrf.mxu0
      %v4464 = vadd.f32 0.0, %v4463
      %v4465 = vpop.f32.mrf.mxu0
      %v4466 = vpop.f32.mrf.mxu0
      %v4467 = vadd.f32 0.0, %v4466
      %v4468 = vpop.f32.mrf.mxu0
      %4469 = vmatprep.mubr.bf16.mxu0 0
      %4470 = vmatmul.mubr.bf16.gmra.mxu0 %v4134
      %v4471 = vpop.f32.mrf.mxu0
      %v4472 = vadd.f32 0.0, %v4471
      %v4473 = vpop.f32.mrf.mxu0
      %v4474 = vpop.f32.mrf.mxu0
      %v4475 = vadd.f32 0.0, %v4474
      %v4476 = vpop.f32.mrf.mxu0
      %4477 = vmatprep.mubr.bf16.mxu0 0
      %4478 = vmatmul.mubr.bf16.gmra.mxu0 %v4135
      %v4479 = vpop.f32.mrf.mxu0
      %v4480 = vadd.f32 0.0, %v4479
      %v4481 = vpop.f32.mrf.mxu0
      %v4482 = vpop.f32.mrf.mxu0
      %v4483 = vadd.f32 0.0, %v4482
      %v4484 = vpop.f32.mrf.mxu0
      %4485 = vmatprep.mubr.bf16.mxu0 0
      %4486 = vmatmul.mubr.bf16.gmra.mxu0 %v4136
      %v4487 = vpop.f32.mrf.mxu0
      %v4488 = vadd.f32 0.0, %v4487
      %v4489 = vpop.f32.mrf.mxu0
      %v4490 = vpop.f32.mrf.mxu0
      %v4491 = vadd.f32 0.0, %v4490
      %v4492 = vpop.f32.mrf.mxu0
      %4493 = vmatprep.mubr.bf16.mxu0 0
      %4494 = vmatmul.mubr.bf16.gmra.mxu0 %v4137
      %v4495 = vpop.f32.mrf.mxu0
      %v4496 = vadd.f32 0.0, %v4495
      %v4497 = vpop.f32.mrf.mxu0
      %v4498 = vpop.f32.mrf.mxu0
      %v4499 = vadd.f32 0.0, %v4498
      %v4500 = vpop.f32.mrf.mxu0
      %4501 = vmatprep.mubr.bf16.mxu0 0
      %4502 = vmatmul.mubr.bf16.gmra.mxu0 %v4138
      %v4503 = vpop.f32.mrf.mxu0
      %v4504 = vadd.f32 0.0, %v4503
      %v4505 = vpop.f32.mrf.mxu0
      %v4506 = vpop.f32.mrf.mxu0
      %v4507 = vadd.f32 0.0, %v4506
      %v4508 = vpop.f32.mrf.mxu0
      %4509 = vdwg.mxu0
      %v4510 = vadd.f32 %v3956, %v4335
      %v4511 = vadd.f32 %v3958, %v4337
      %v4512 = vadd.f32 %v4069, %v4448
      %v4513 = vadd.f32 %v3960, %v4339
      %v4514 = vadd.f32 %v3962, %v4341
      %v4515 = vadd.f32 %v4072, %v4451
      %v4516 = vadd.f32 %v3966, %v4345
      %v4517 = vadd.f32 %v3968, %v4347
      %v4518 = vadd.f32 %v4077, %v4456
      %v4519 = vadd.f32 %v3970, %v4349
      %v4520 = vadd.f32 %v3972, %v4351
      %v4521 = vadd.f32 %v4080, %v4459
      %v4522 = vadd.f32 %v3976, %v4355
      %v4523 = vadd.f32 %v3978, %v4357
      %v4524 = vadd.f32 %v4085, %v4464
      %v4525 = vadd.f32 %v3980, %v4359
      %v4526 = vadd.f32 %v3982, %v4361
      %v4527 = vadd.f32 %v4088, %v4467
      %v4528 = vadd.f32 %v3986, %v4365
      %v4529 = vadd.f32 %v3988, %v4367
      %v4530 = vadd.f32 %v4093, %v4472
      %v4531 = vadd.f32 %v3990, %v4369
      %v4532 = vadd.f32 %v3992, %v4371
      %v4533 = vadd.f32 %v4096, %v4475
      %v4534 = vadd.f32 %v3996, %v4375
      %v4535 = vadd.f32 %v3998, %v4377
      %v4536 = vadd.f32 %v4101, %v4480
      %v4537 = vadd.f32 %v4000, %v4379
      %v4538 = vadd.f32 %v4002, %v4381
      %v4539 = vadd.f32 %v4104, %v4483
      %v4540 = vadd.f32 %v4006, %v4385
      %v4541 = vadd.f32 %v4008, %v4387
      %v4542 = vadd.f32 %v4109, %v4488
      %v4543 = vadd.f32 %v4010, %v4389
      %v4544 = vadd.f32 %v4012, %v4391
      %v4545 = vadd.f32 %v4112, %v4491
      %v4546 = vadd.f32 %v4016, %v4395
      %v4547 = vadd.f32 %v4018, %v4397
      %v4548 = vadd.f32 %v4117, %v4496
      %v4549 = vadd.f32 %v4020, %v4399
      %v4550 = vadd.f32 %v4022, %v4401
      %v4551 = vadd.f32 %v4120, %v4499
      %v4552 = vadd.f32 %v4026, %v4405
      %v4553 = vadd.f32 %v4028, %v4407
      %v4554 = vadd.f32 %v4125, %v4504
      %v4555 = vadd.f32 %v4030, %v4409
      %v4556 = vadd.f32 %v4032, %v4411
      %v4557 = vadd.f32 %v4128, %v4507
      %v4558 = vrot.slane %v1276, 1
      %v4559 = vrot.slane %v1280, 1
      %v4560 = vrot.slane %v1286, 1
      %v4561 = vrot.slane %v1290, 1
      %v4562 = vrot.slane %v1296, 1
      %v4563 = vrot.slane %v1300, 1
      %v4564 = vrot.slane %v1306, 1
      %v4565 = vrot.slane %v1310, 1
      %v4566 = vrot.slane %v1316, 1
      %v4567 = vrot.slane %v1320, 1
      %v4568 = vrot.slane %v1326, 1
      %v4569 = vrot.slane %v1330, 1
      %v4570 = vrot.slane %v1336, 1
      %v4571 = vrot.slane %v1340, 1
      %v4572 = vrot.slane %v1346, 1
      %v4573 = vrot.slane %v1350, 1
      %v4574 = vsel %vm2400, %v4572, %v4573
      %v4575 = vsel %vm2400, %v4571, %v4572
      %v4576 = vsel %vm2400, %v4570, %v4571
      %v4577 = vsel %vm2400, %v4569, %v4570
      %v4578 = vsel %vm2400, %v4568, %v4569
      %v4579 = vsel %vm2400, %v4567, %v4568
      %v4580 = vsel %vm2400, %v4566, %v4567
      %v4581 = vsel %vm2400, %v4565, %v4566
      %v4582 = vsel %vm2400, %v4564, %v4565
      %v4583 = vsel %vm2400, %v4563, %v4564
      %v4584 = vsel %vm2400, %v4562, %v4563
      %v4585 = vsel %vm2400, %v4561, %v4562
      %v4586 = vsel %vm2400, %v4560, %v4561
      %v4587 = vsel %vm2400, %v4559, %v4560
      %v4588 = vsel %vm2400, %v4558, %v4559
      %v4589 = vsel %vm2400, %v4573, %v4558
      %v4590 = vsel %vm2529, %v4588, 0.0
      %v4591 = vsel %vm2530, %v4587, 0.0
      %v4592 = vsel %vm2531, %v4586, 0.0
      %v4593 = vsel %vm2532, %v4585, 0.0
      %v4594 = vsel %vm2533, %v4584, 0.0
      %v4595 = vsel %vm2534, %v4583, 0.0
      %v4596 = vsel %vm2535, %v4582, 0.0
      %v4597 = vsel %vm2536, %v4581, 0.0
      %v4598 = vsel %vm2537, %v4580, 0.0
      %v4599 = vsel %vm2538, %v4579, 0.0
      %v4600 = vsel %vm2539, %v4578, 0.0
      %v4601 = vsel %vm2540, %v4577, 0.0
      %v4602 = vsel %vm2541, %v4576, 0.0
      %v4603 = vsel %vm2542, %v4575, 0.0
      %v4604 = vsel %vm2543, %v4574, 0.0
      %v4605 = vsel %vm2544, %v4589, 0.0
      %v4606 = vpack.c.bf16 %v4591, %v4590
      %v4607 = vpack.c.bf16 %v4593, %v4592
      %v4608 = vpack.c.bf16 %v4595, %v4594
      %v4609 = vpack.c.bf16 %v4597, %v4596
      %v4610 = vpack.c.bf16 %v4599, %v4598
      %v4611 = vpack.c.bf16 %v4601, %v4600
      %v4612 = vpack.c.bf16 %v4603, %v4602
      %v4613 = vpack.c.bf16 %v4605, %v4604
      %s4614 = scalar_lea.vmem %s7, 576
      %v4615 = vld [vmem:[%s4614] sm:$0xff]
      %v4616 = vld [vmem:[%s4614 + $0x8] sm:$0xf]
      %v4617 = vld [vmem:[%s4614 + $0xc] sm:$0xff]
      %v4618 = vld [vmem:[%s4614 + $0x14] sm:$0xf]
      %v4619 = vld [vmem:[%s4614 + $0x18] sm:$0xff]
      %v4620 = vld [vmem:[%s4614 + $0x20] sm:$0xf]
      %v4621 = vld [vmem:[%s4614 + $0x24] sm:$0xff]
      %v4622 = vld [vmem:[%s4614 + $0x2c] sm:$0xf]
      %v4623 = vld [vmem:[%s4614 + $0x30] sm:$0xff]
      %v4624 = vld [vmem:[%s4614 + $0x38] sm:$0xf]
      %v4625 = vld [vmem:[%s4614 + $0x3c] sm:$0xff]
      %v4626 = vld [vmem:[%s4614 + $0x44] sm:$0xf]
      %v4627 = vld [vmem:[%s4614 + $0x48] sm:$0xff]
      %v4628 = vld [vmem:[%s4614 + $0x50] sm:$0xf]
      %v4629 = vld [vmem:[%s4614 + $0x54] sm:$0xff]
      %v4630 = vld [vmem:[%s4614 + $0x5c] sm:$0xf]
      %v4631 = vld [vmem:[%s4614 + $0x60] sm:$0xff]
      %v4632 = vld [vmem:[%s4614 + $0x68] sm:$0xf]
      %v4633 = vld [vmem:[%s4614 + $0x6c] sm:$0xff]
      %v4634 = vld [vmem:[%s4614 + $0x74] sm:$0xf]
      %v4635 = vld [vmem:[%s4614 + $0x78] sm:$0xff]
      %v4636 = vld [vmem:[%s4614 + $0x80] sm:$0xf]
      %v4637 = vld [vmem:[%s4614 + $0x84] sm:$0xff]
      %v4638 = vld [vmem:[%s4614 + $0x8c] sm:$0xf]
      %v4639 = vld [vmem:[%s4614 + $0x90] sm:$0xff]
      %v4640 = vld [vmem:[%s4614 + $0x98] sm:$0xf]
      %v4641 = vld [vmem:[%s4614 + $0x9c] sm:$0xff]
      %v4642 = vld [vmem:[%s4614 + $0xa4] sm:$0xf]
      %v4643 = vld [vmem:[%s4614 + $0xa8] sm:$0xff]
      %v4644 = vld [vmem:[%s4614 + $0xb0] sm:$0xf]
      %v4645 = vld [vmem:[%s4614 + $0xb4] sm:$0xff]
      %v4646 = vld [vmem:[%s4614 + $0xbc] sm:$0xf]
      %v4679 = vunpack.c.l.b16 %v4615
      %v4680 = vunpack.c.h.b16 %v4615
      %v4681 = vunpack.c.l.b16 %v4616
      %v4682 = vunpack.c.l.b16 %v4617
      %v4683 = vunpack.c.h.b16 %v4617
      %v4684 = vunpack.c.l.b16 %v4618
      %v4685 = vunpack.c.l.b16 %v4619
      %v4686 = vunpack.c.h.b16 %v4619
      %v4687 = vunpack.c.l.b16 %v4620
      %v4688 = vunpack.c.l.b16 %v4621
      %v4689 = vunpack.c.h.b16 %v4621
      %v4690 = vunpack.c.l.b16 %v4622
      %v4691 = vunpack.c.l.b16 %v4623
      %v4692 = vunpack.c.h.b16 %v4623
      %v4693 = vunpack.c.l.b16 %v4624
      %v4694 = vunpack.c.l.b16 %v4625
      %v4695 = vunpack.c.h.b16 %v4625
      %v4696 = vunpack.c.l.b16 %v4626
      %v4697 = vunpack.c.l.b16 %v4627
      %v4698 = vunpack.c.h.b16 %v4627
      %v4699 = vunpack.c.l.b16 %v4628
      %v4700 = vunpack.c.l.b16 %v4629
      %v4701 = vunpack.c.h.b16 %v4629
      %v4702 = vunpack.c.l.b16 %v4630
      %v4703 = vunpack.c.l.b16 %v4631
      %v4704 = vunpack.c.h.b16 %v4631
      %v4705 = vunpack.c.l.b16 %v4632
      %v4706 = vunpack.c.l.b16 %v4633
      %v4707 = vunpack.c.h.b16 %v4633
      %v4708 = vunpack.c.l.b16 %v4634
      %v4709 = vunpack.c.l.b16 %v4635
      %v4710 = vunpack.c.h.b16 %v4635
      %v4711 = vunpack.c.l.b16 %v4636
      %v4712 = vunpack.c.l.b16 %v4637
      %v4713 = vunpack.c.h.b16 %v4637
      %v4714 = vunpack.c.l.b16 %v4638
      %v4715 = vunpack.c.l.b16 %v4639
      %v4716 = vunpack.c.h.b16 %v4639
      %v4717 = vunpack.c.l.b16 %v4640
      %v4718 = vunpack.c.l.b16 %v4641
      %v4719 = vunpack.c.h.b16 %v4641
      %v4720 = vunpack.c.l.b16 %v4642
      %v4721 = vunpack.c.l.b16 %v4643
      %v4722 = vunpack.c.h.b16 %v4643
      %v4723 = vunpack.c.l.b16 %v4644
      %v4724 = vunpack.c.l.b16 %v4645
      %v4725 = vunpack.c.h.b16 %v4645
      %v4726 = vunpack.c.l.b16 %v4646
      %v4727 = vpack.c.b16 %v4682, %v4679
      %v4728 = vpack.c.b16 %v4683, %v4680
      %v4729 = vpack.c.b16 %v4684, %v4681
      %v4730 = vpack.c.b16 %v4688, %v4685
      %v4731 = vpack.c.b16 %v4689, %v4686
      %v4732 = vpack.c.b16 %v4690, %v4687
      %v4733 = vpack.c.b16 %v4694, %v4691
      %v4734 = vpack.c.b16 %v4695, %v4692
      %v4735 = vpack.c.b16 %v4696, %v4693
      %v4736 = vpack.c.b16 %v4700, %v4697
      %v4737 = vpack.c.b16 %v4701, %v4698
      %v4738 = vpack.c.b16 %v4702, %v4699
      %v4739 = vpack.c.b16 %v4706, %v4703
      %v4740 = vpack.c.b16 %v4707, %v4704
      %v4741 = vpack.c.b16 %v4708, %v4705
      %v4742 = vpack.c.b16 %v4712, %v4709
      %v4743 = vpack.c.b16 %v4713, %v4710
      %v4744 = vpack.c.b16 %v4714, %v4711
      %v4745 = vpack.c.b16 %v4718, %v4715
      %v4746 = vpack.c.b16 %v4719, %v4716
      %v4747 = vpack.c.b16 %v4720, %v4717
      %v4748 = vpack.c.b16 %v4724, %v4721
      %v4749 = vpack.c.b16 %v4725, %v4722
      %v4750 = vpack.c.b16 %v4726, %v4723
      %4775 = vmatprep.subr.bf16.mxu0 %v4749
      %4776 = vmatpush1.bf16.msra.mxu0 %v4748
      %4777 = vmatprep.subr.bf16.mxu0 %v4746
      %4778 = vmatpush1.bf16.msra.mxu0 %v4745
      %4779 = vmatprep.subr.bf16.mxu0 %v4743
      %4780 = vmatpush1.bf16.msra.mxu0 %v4742
      %4781 = vmatprep.subr.bf16.mxu0 %v4740
      %4782 = vmatpush1.bf16.msra.mxu0 %v4739
      %4783 = vmatprep.subr.bf16.mxu0 %v4737
      %4784 = vmatpush1.bf16.msra.mxu0 %v4736
      %4785 = vmatprep.subr.bf16.mxu0 %v4734
      %4786 = vmatpush1.bf16.msra.mxu0 %v4733
      %4787 = vmatprep.subr.bf16.mxu0 %v4731
      %4788 = vmatpush1.bf16.msra.mxu0 %v4730
      %4789 = vmatprep.subr.bf16.mxu0 %v4728
      %4790 = vmatpush1.bf16.msra.mxu0 %v4727
      %4791 = vmatprep.subr.bf16.mxu0 0
      %4792 = vmatpush2.bf16.msra.mxu0 0
      %4793 = vmatprep.subr.bf16.mxu0 0
      %4794 = vmatpush2.bf16.msra.mxu0 0
      %4795 = vmatprep.subr.bf16.mxu0 0
      %4796 = vmatpush2.bf16.msra.mxu0 0
      %4797 = vmatprep.subr.bf16.mxu0 0
      %4798 = vmatpush2.bf16.msra.mxu0 0
      %4799 = vmatprep.subr.bf16.mxu0 0
      %4800 = vmatpush2.bf16.msra.mxu0 0
      %4801 = vmatprep.subr.bf16.mxu0 0
      %4802 = vmatpush2.bf16.msra.mxu0 0
      %4803 = vmatprep.subr.bf16.mxu0 0
      %4804 = vmatpush2.bf16.msra.mxu0 0
      %4805 = vmatprep.subr.bf16.mxu0 0
      %4806 = vmatpush2.bf16.msra.mxu0 0
      %4807 = vmatprep.mubr.bf16.mxu0 0
      %4808 = vmatmul.mubr.bf16.gmra.mxu0 %v4606
      %v4809 = vpop.f32.mrf.mxu0
      %v4810 = vadd.f32 0.0, %v4809
      %v4811 = vpop.f32.mrf.mxu0
      %v4812 = vadd.f32 0.0, %v4811
      %v4813 = vpop.f32.mrf.mxu0
      %v4814 = vadd.f32 0.0, %v4813
      %v4815 = vpop.f32.mrf.mxu0
      %v4816 = vadd.f32 0.0, %v4815
      %4817 = vmatprep.mubr.bf16.mxu0 0
      %4818 = vmatmul.mubr.bf16.gmra.mxu0 %v4607
      %v4819 = vpop.f32.mrf.mxu0
      %v4820 = vadd.f32 0.0, %v4819
      %v4821 = vpop.f32.mrf.mxu0
      %v4822 = vadd.f32 0.0, %v4821
      %v4823 = vpop.f32.mrf.mxu0
      %v4824 = vadd.f32 0.0, %v4823
      %v4825 = vpop.f32.mrf.mxu0
      %v4826 = vadd.f32 0.0, %v4825
      %4827 = vmatprep.mubr.bf16.mxu0 0
      %4828 = vmatmul.mubr.bf16.gmra.mxu0 %v4608
      %v4829 = vpop.f32.mrf.mxu0
      %v4830 = vadd.f32 0.0, %v4829
      %v4831 = vpop.f32.mrf.mxu0
      %v4832 = vadd.f32 0.0, %v4831
      %v4833 = vpop.f32.mrf.mxu0
      %v4834 = vadd.f32 0.0, %v4833
      %v4835 = vpop.f32.mrf.mxu0
      %v4836 = vadd.f32 0.0, %v4835
      %4837 = vmatprep.mubr.bf16.mxu0 0
      %4838 = vmatmul.mubr.bf16.gmra.mxu0 %v4609
      %v4839 = vpop.f32.mrf.mxu0
      %v4840 = vadd.f32 0.0, %v4839
      %v4841 = vpop.f32.mrf.mxu0
      %v4842 = vadd.f32 0.0, %v4841
      %v4843 = vpop.f32.mrf.mxu0
      %v4844 = vadd.f32 0.0, %v4843
      %v4845 = vpop.f32.mrf.mxu0
      %v4846 = vadd.f32 0.0, %v4845
      %4847 = vmatprep.mubr.bf16.mxu0 0
      %4848 = vmatmul.mubr.bf16.gmra.mxu0 %v4610
      %v4849 = vpop.f32.mrf.mxu0
      %v4850 = vadd.f32 0.0, %v4849
      %v4851 = vpop.f32.mrf.mxu0
      %v4852 = vadd.f32 0.0, %v4851
      %v4853 = vpop.f32.mrf.mxu0
      %v4854 = vadd.f32 0.0, %v4853
      %v4855 = vpop.f32.mrf.mxu0
      %v4856 = vadd.f32 0.0, %v4855
      %4857 = vmatprep.mubr.bf16.mxu0 0
      %4858 = vmatmul.mubr.bf16.gmra.mxu0 %v4611
      %v4859 = vpop.f32.mrf.mxu0
      %v4860 = vadd.f32 0.0, %v4859
      %v4861 = vpop.f32.mrf.mxu0
      %v4862 = vadd.f32 0.0, %v4861
      %v4863 = vpop.f32.mrf.mxu0
      %v4864 = vadd.f32 0.0, %v4863
      %v4865 = vpop.f32.mrf.mxu0
      %v4866 = vadd.f32 0.0, %v4865
      %4867 = vmatprep.mubr.bf16.mxu0 0
      %4868 = vmatmul.mubr.bf16.gmra.mxu0 %v4612
      %v4869 = vpop.f32.mrf.mxu0
      %v4870 = vadd.f32 0.0, %v4869
      %v4871 = vpop.f32.mrf.mxu0
      %v4872 = vadd.f32 0.0, %v4871
      %v4873 = vpop.f32.mrf.mxu0
      %v4874 = vadd.f32 0.0, %v4873
      %v4875 = vpop.f32.mrf.mxu0
      %v4876 = vadd.f32 0.0, %v4875
      %4877 = vmatprep.mubr.bf16.mxu0 0
      %4878 = vmatmul.mubr.bf16.gmra.mxu0 %v4613
      %v4879 = vpop.f32.mrf.mxu0
      %v4880 = vadd.f32 0.0, %v4879
      %v4881 = vpop.f32.mrf.mxu0
      %v4882 = vadd.f32 0.0, %v4881
      %v4883 = vpop.f32.mrf.mxu0
      %v4884 = vadd.f32 0.0, %v4883
      %v4885 = vpop.f32.mrf.mxu0
      %v4886 = vadd.f32 0.0, %v4885
      %4887 = vdwg.mxu0
      %4888 = vmatprep.subr.bf16.mxu0 0
      %4889 = vmatpush1.bf16.msra.mxu0 %v4750
      %4890 = vmatprep.subr.bf16.mxu0 0
      %4891 = vmatpush1.bf16.msra.mxu0 %v4747
      %4892 = vmatprep.subr.bf16.mxu0 0
      %4893 = vmatpush1.bf16.msra.mxu0 %v4744
      %4894 = vmatprep.subr.bf16.mxu0 0
      %4895 = vmatpush1.bf16.msra.mxu0 %v4741
      %4896 = vmatprep.subr.bf16.mxu0 0
      %4897 = vmatpush1.bf16.msra.mxu0 %v4738
      %4898 = vmatprep.subr.bf16.mxu0 0
      %4899 = vmatpush1.bf16.msra.mxu0 %v4735
      %4900 = vmatprep.subr.bf16.mxu0 0
      %4901 = vmatpush1.bf16.msra.mxu0 %v4732
      %4902 = vmatprep.subr.bf16.mxu0 0
      %4903 = vmatpush1.bf16.msra.mxu0 %v4729
      %4904 = vmatprep.subr.bf16.mxu0 0
      %4905 = vmatpush2.bf16.msra.mxu0 0
      %4906 = vmatprep.subr.bf16.mxu0 0
      %4907 = vmatpush2.bf16.msra.mxu0 0
      %4908 = vmatprep.subr.bf16.mxu0 0
      %4909 = vmatpush2.bf16.msra.mxu0 0
      %4910 = vmatprep.subr.bf16.mxu0 0
      %4911 = vmatpush2.bf16.msra.mxu0 0
      %4912 = vmatprep.subr.bf16.mxu0 0
      %4913 = vmatpush2.bf16.msra.mxu0 0
      %4914 = vmatprep.subr.bf16.mxu0 0
      %4915 = vmatpush2.bf16.msra.mxu0 0
      %4916 = vmatprep.subr.bf16.mxu0 0
      %4917 = vmatpush2.bf16.msra.mxu0 0
      %4918 = vmatprep.subr.bf16.mxu0 0
      %4919 = vmatpush2.bf16.msra.mxu0 0
      %4920 = vmatprep.mubr.bf16.mxu0 0
      %4921 = vmatmul.mubr.bf16.gmra.mxu0 %v4606
      %v4922 = vpop.f32.mrf.mxu0
      %v4923 = vadd.f32 0.0, %v4922
      %v4924 = vpop.f32.mrf.mxu0
      %v4925 = vpop.f32.mrf.mxu0
      %v4926 = vadd.f32 0.0, %v4925
      %v4927 = vpop.f32.mrf.mxu0
      %4928 = vmatprep.mubr.bf16.mxu0 0
      %4929 = vmatmul.mubr.bf16.gmra.mxu0 %v4607
      %v4930 = vpop.f32.mrf.mxu0
      %v4931 = vadd.f32 0.0, %v4930
      %v4932 = vpop.f32.mrf.mxu0
      %v4933 = vpop.f32.mrf.mxu0
      %v4934 = vadd.f32 0.0, %v4933
      %v4935 = vpop.f32.mrf.mxu0
      %4936 = vmatprep.mubr.bf16.mxu0 0
      %4937 = vmatmul.mubr.bf16.gmra.mxu0 %v4608
      %v4938 = vpop.f32.mrf.mxu0
      %v4939 = vadd.f32 0.0, %v4938
      %v4940 = vpop.f32.mrf.mxu0
      %v4941 = vpop.f32.mrf.mxu0
      %v4942 = vadd.f32 0.0, %v4941
      %v4943 = vpop.f32.mrf.mxu0
      %4944 = vmatprep.mubr.bf16.mxu0 0
      %4945 = vmatmul.mubr.bf16.gmra.mxu0 %v4609
      %v4946 = vpop.f32.mrf.mxu0
      %v4947 = vadd.f32 0.0, %v4946
      %v4948 = vpop.f32.mrf.mxu0
      %v4949 = vpop.f32.mrf.mxu0
      %v4950 = vadd.f32 0.0, %v4949
      %v4951 = vpop.f32.mrf.mxu0
      %4952 = vmatprep.mubr.bf16.mxu0 0
      %4953 = vmatmul.mubr.bf16.gmra.mxu0 %v4610
      %v4954 = vpop.f32.mrf.mxu0
      %v4955 = vadd.f32 0.0, %v4954
      %v4956 = vpop.f32.mrf.mxu0
      %v4957 = vpop.f32.mrf.mxu0
      %v4958 = vadd.f32 0.0, %v4957
      %v4959 = vpop.f32.mrf.mxu0
      %4960 = vmatprep.mubr.bf16.mxu0 0
      %4961 = vmatmul.mubr.bf16.gmra.mxu0 %v4611
      %v4962 = vpop.f32.mrf.mxu0
      %v4963 = vadd.f32 0.0, %v4962
      %v4964 = vpop.f32.mrf.mxu0
      %v4965 = vpop.f32.mrf.mxu0
      %v4966 = vadd.f32 0.0, %v4965
      %v4967 = vpop.f32.mrf.mxu0
      %4968 = vmatprep.mubr.bf16.mxu0 0
      %4969 = vmatmul.mubr.bf16.gmra.mxu0 %v4612
      %v4970 = vpop.f32.mrf.mxu0
      %v4971 = vadd.f32 0.0, %v4970
      %v4972 = vpop.f32.mrf.mxu0
      %v4973 = vpop.f32.mrf.mxu0
      %v4974 = vadd.f32 0.0, %v4973
      %v4975 = vpop.f32.mrf.mxu0
      %4976 = vmatprep.mubr.bf16.mxu0 0
      %4977 = vmatmul.mubr.bf16.gmra.mxu0 %v4613
      %v4978 = vpop.f32.mrf.mxu0
      %v4979 = vadd.f32 0.0, %v4978
      %v4980 = vpop.f32.mrf.mxu0
      %v4981 = vpop.f32.mrf.mxu0
      %v4982 = vadd.f32 0.0, %v4981
      %v4983 = vpop.f32.mrf.mxu0
      %4984 = vdwg.mxu0
      %v4985 = vadd.f32 %v4510, %v4810
      %v4986 = vadd.f32 %v4511, %v4812
      %v4987 = vadd.f32 %v4512, %v4923
      %v4988 = vadd.f32 %v4513, %v4814
      %v4989 = vadd.f32 %v4514, %v4816
      %v4990 = vadd.f32 %v4515, %v4926
      %v4991 = vadd.f32 %v4516, %v4820
      %v4992 = vadd.f32 %v4517, %v4822
      %v4993 = vadd.f32 %v4518, %v4931
      %v4994 = vadd.f32 %v4519, %v4824
      %v4995 = vadd.f32 %v4520, %v4826
      %v4996 = vadd.f32 %v4521, %v4934
      %v4997 = vadd.f32 %v4522, %v4830
      %v4998 = vadd.f32 %v4523, %v4832
      %v4999 = vadd.f32 %v4524, %v4939
      %v5000 = vadd.f32 %v4525, %v4834
      %v5001 = vadd.f32 %v4526, %v4836
      %v5002 = vadd.f32 %v4527, %v4942
      %v5003 = vadd.f32 %v4528, %v4840
      %v5004 = vadd.f32 %v4529, %v4842
      %v5005 = vadd.f32 %v4530, %v4947
      %v5006 = vadd.f32 %v4531, %v4844
      %v5007 = vadd.f32 %v4532, %v4846
      %v5008 = vadd.f32 %v4533, %v4950
      %v5009 = vadd.f32 %v4534, %v4850
      %v5010 = vadd.f32 %v4535, %v4852
      %v5011 = vadd.f32 %v4536, %v4955
      %v5012 = vadd.f32 %v4537, %v4854
      %v5013 = vadd.f32 %v4538, %v4856
      %v5014 = vadd.f32 %v4539, %v4958
      %v5015 = vadd.f32 %v4540, %v4860
      %v5016 = vadd.f32 %v4541, %v4862
      %v5017 = vadd.f32 %v4542, %v4963
      %v5018 = vadd.f32 %v4543, %v4864
      %v5019 = vadd.f32 %v4544, %v4866
      %v5020 = vadd.f32 %v4545, %v4966
      %v5021 = vadd.f32 %v4546, %v4870
      %v5022 = vadd.f32 %v4547, %v4872
      %v5023 = vadd.f32 %v4548, %v4971
      %v5024 = vadd.f32 %v4549, %v4874
      %v5025 = vadd.f32 %v4550, %v4876
      %v5026 = vadd.f32 %v4551, %v4974
      %v5027 = vadd.f32 %v4552, %v4880
      %v5028 = vadd.f32 %v4553, %v4882
      %v5029 = vadd.f32 %v4554, %v4979
      %v5030 = vadd.f32 %v4555, %v4884
      %v5031 = vadd.f32 %v4556, %v4886
      %v5032 = vadd.f32 %v4557, %v4982
      %v5033 = vrot.slane %v1276, 2
      %v5034 = vrot.slane %v1280, 2
      %v5035 = vrot.slane %v1286, 2
      %v5036 = vrot.slane %v1290, 2
      %v5037 = vrot.slane %v1296, 2
      %v5038 = vrot.slane %v1300, 2
      %v5039 = vrot.slane %v1306, 2
      %v5040 = vrot.slane %v1310, 2
      %v5041 = vrot.slane %v1316, 2
      %v5042 = vrot.slane %v1320, 2
      %v5043 = vrot.slane %v1326, 2
      %v5044 = vrot.slane %v1330, 2
      %v5045 = vrot.slane %v1336, 2
      %v5046 = vrot.slane %v1340, 2
      %v5047 = vrot.slane %v1346, 2
      %v5048 = vrot.slane %v1350, 2
      %vm5049 = vcmp.lt.s32.totalorder %v1465, 6
      %v5050 = vsel %vm5049, %v5047, %v5048
      %v5051 = vsel %vm5049, %v5046, %v5047
      %v5052 = vsel %vm5049, %v5045, %v5046
      %v5053 = vsel %vm5049, %v5044, %v5045
      %v5054 = vsel %vm5049, %v5043, %v5044
      %v5055 = vsel %vm5049, %v5042, %v5043
      %v5056 = vsel %vm5049, %v5041, %v5042
      %v5057 = vsel %vm5049, %v5040, %v5041
      %v5058 = vsel %vm5049, %v5039, %v5040
      %v5059 = vsel %vm5049, %v5038, %v5039
      %v5060 = vsel %vm5049, %v5037, %v5038
      %v5061 = vsel %vm5049, %v5036, %v5037
      %v5062 = vsel %vm5049, %v5035, %v5036
      %v5063 = vsel %vm5049, %v5034, %v5035
      %v5064 = vsel %vm5049, %v5033, %v5034
      %v5065 = vsel %vm5049, %v5048, %v5033
      %vm5066 = vcmp.ge.s32.totalorder %v409, 4294967294
      %vm5067 = vcmp.ge.s32.totalorder %v410, 4294967294
      %vm5068 = vcmp.ge.s32.totalorder %v411, 4294967294
      %vm5069 = vcmp.ge.s32.totalorder %v412, 4294967294
      %vm5070 = vcmp.ge.s32.totalorder %v413, 4294967294
      %vm5071 = vcmp.ge.s32.totalorder %v414, 4294967294
      %vm5072 = vcmp.ge.s32.totalorder %v415, 4294967294
      %vm5073 = vcmp.ge.s32.totalorder %v416, 4294967294
      %vm5074 = vcmp.ge.s32.totalorder %v417, 4294967294
      %vm5075 = vcmp.ge.s32.totalorder %v418, 4294967294
      %vm5076 = vcmp.ge.s32.totalorder %v419, 4294967294
      %vm5077 = vcmp.ge.s32.totalorder %v420, 4294967294
      %vm5078 = vcmp.ge.s32.totalorder %v421, 4294967294
      %vm5079 = vcmp.ge.s32.totalorder %v422, 4294967294
      %vm5080 = vcmp.ge.s32.totalorder %v423, 4294967294
      %vm5081 = vcmp.ge.s32.totalorder %v424, 4294967294
      %vm5082 = vcmp.lt.s32.totalorder %v409, 14
      %vm5083 = vcmp.lt.s32.totalorder %v410, 14
      %vm5084 = vcmp.lt.s32.totalorder %v411, 14
      %vm5085 = vcmp.lt.s32.totalorder %v412, 14
      %vm5086 = vcmp.lt.s32.totalorder %v413, 14
      %vm5087 = vcmp.lt.s32.totalorder %v414, 14
      %vm5088 = vcmp.lt.s32.totalorder %v415, 14
      %vm5089 = vcmp.lt.s32.totalorder %v416, 14
      %vm5090 = vcmp.lt.s32.totalorder %v417, 14
      %vm5091 = vcmp.lt.s32.totalorder %v418, 14
      %vm5092 = vcmp.lt.s32.totalorder %v419, 14
      %vm5093 = vcmp.lt.s32.totalorder %v420, 14
      %vm5094 = vcmp.lt.s32.totalorder %v421, 14
      %vm5095 = vcmp.lt.s32.totalorder %v422, 14
      %vm5096 = vcmp.lt.s32.totalorder %v423, 14
      %vm5097 = vcmp.lt.s32.totalorder %v424, 14
      %vm5098 = vmand %vm5066, %vm5082
      %vm5099 = vmand %vm5067, %vm5083
      %vm5100 = vmand %vm5068, %vm5084
      %vm5101 = vmand %vm5069, %vm5085
      %vm5102 = vmand %vm5070, %vm5086
      %vm5103 = vmand %vm5071, %vm5087
      %vm5104 = vmand %vm5072, %vm5088
      %vm5105 = vmand %vm5073, %vm5089
      %vm5106 = vmand %vm5074, %vm5090
      %vm5107 = vmand %vm5075, %vm5091
      %vm5108 = vmand %vm5076, %vm5092
      %vm5109 = vmand %vm5077, %vm5093
      %vm5110 = vmand %vm5078, %vm5094
      %vm5111 = vmand %vm5079, %vm5095
      %vm5112 = vmand %vm5080, %vm5096
      %vm5113 = vmand %vm5081, %vm5097
      %v5114 = vsel %vm5098, 1, 0
      %v5115 = vsel %vm5099, 1, 0
      %v5116 = vsel %vm5100, 1, 0
      %v5117 = vsel %vm5101, 1, 0
      %v5118 = vsel %vm5102, 1, 0
      %v5119 = vsel %vm5103, 1, 0
      %v5120 = vsel %vm5104, 1, 0
      %v5121 = vsel %vm5105, 1, 0
      %v5122 = vsel %vm5106, 1, 0
      %v5123 = vsel %vm5107, 1, 0
      %v5124 = vsel %vm5108, 1, 0
      %v5125 = vsel %vm5109, 1, 0
      %v5126 = vsel %vm5110, 1, 0
      %v5127 = vsel %vm5111, 1, 0
      %v5128 = vsel %vm5112, 1, 0
      %v5129 = vsel %vm5113, 1, 0
      %5130 = vset.pattern.permute.xlu0 0
      %5131 = vperm.xlu0 %5130, %v5114
      %v5132 = vpop.permute.xlu0 %5131
      %5133 = vset.pattern.permute.xlu0 0
      %5134 = vperm.xlu0 %5133, %v5115
      %v5135 = vpop.permute.xlu0 %5134
      %5136 = vset.pattern.permute.xlu0 0
      %5137 = vperm.xlu0 %5136, %v5116
      %v5138 = vpop.permute.xlu0 %5137
      %5139 = vset.pattern.permute.xlu0 0
      %5140 = vperm.xlu0 %5139, %v5117
      %v5141 = vpop.permute.xlu0 %5140
      %5142 = vset.pattern.permute.xlu0 0
      %5143 = vperm.xlu0 %5142, %v5118
      %v5144 = vpop.permute.xlu0 %5143
      %5145 = vset.pattern.permute.xlu0 0
      %5146 = vperm.xlu0 %5145, %v5119
      %v5147 = vpop.permute.xlu0 %5146
      %5148 = vset.pattern.permute.xlu0 0
      %5149 = vperm.xlu0 %5148, %v5120
      %v5150 = vpop.permute.xlu0 %5149
      %5151 = vset.pattern.permute.xlu0 0
      %5152 = vperm.xlu0 %5151, %v5121
      %v5153 = vpop.permute.xlu0 %5152
      %5154 = vset.pattern.permute.xlu0 0
      %5155 = vperm.xlu0 %5154, %v5122
      %v5156 = vpop.permute.xlu0 %5155
      %5157 = vset.pattern.permute.xlu0 0
      %5158 = vperm.xlu0 %5157, %v5123
      %v5159 = vpop.permute.xlu0 %5158
      %5160 = vset.pattern.permute.xlu0 0
      %5161 = vperm.xlu0 %5160, %v5124
      %v5162 = vpop.permute.xlu0 %5161
      %5163 = vset.pattern.permute.xlu0 0
      %5164 = vperm.xlu0 %5163, %v5125
      %v5165 = vpop.permute.xlu0 %5164
      %5166 = vset.pattern.permute.xlu0 0
      %5167 = vperm.xlu0 %5166, %v5126
      %v5168 = vpop.permute.xlu0 %5167
      %5169 = vset.pattern.permute.xlu0 0
      %5170 = vperm.xlu0 %5169, %v5127
      %v5171 = vpop.permute.xlu0 %5170
      %5172 = vset.pattern.permute.xlu0 0
      %5173 = vperm.xlu0 %5172, %v5128
      %v5174 = vpop.permute.xlu0 %5173
      %5175 = vset.pattern.permute.xlu0 0
      %5176 = vperm.xlu0 %5175, %v5129
      %v5177 = vpop.permute.xlu0 %5176
      %vm5178 = vcmp.eq.s32.totalorder %v5132, 1
      %vm5179 = vcmp.eq.s32.totalorder %v5135, 1
      %vm5180 = vcmp.eq.s32.totalorder %v5138, 1
      %vm5181 = vcmp.eq.s32.totalorder %v5141, 1
      %vm5182 = vcmp.eq.s32.totalorder %v5144, 1
      %vm5183 = vcmp.eq.s32.totalorder %v5147, 1
      %vm5184 = vcmp.eq.s32.totalorder %v5150, 1
      %vm5185 = vcmp.eq.s32.totalorder %v5153, 1
      %vm5186 = vcmp.eq.s32.totalorder %v5156, 1
      %vm5187 = vcmp.eq.s32.totalorder %v5159, 1
      %vm5188 = vcmp.eq.s32.totalorder %v5162, 1
      %vm5189 = vcmp.eq.s32.totalorder %v5165, 1
      %vm5190 = vcmp.eq.s32.totalorder %v5168, 1
      %vm5191 = vcmp.eq.s32.totalorder %v5171, 1
      %vm5192 = vcmp.eq.s32.totalorder %v5174, 1
      %vm5193 = vcmp.eq.s32.totalorder %v5177, 1
      %v5194 = vsel %vm5178, %v5064, 0.0
      %v5195 = vsel %vm5179, %v5063, 0.0
      %v5196 = vsel %vm5180, %v5062, 0.0
      %v5197 = vsel %vm5181, %v5061, 0.0
      %v5198 = vsel %vm5182, %v5060, 0.0
      %v5199 = vsel %vm5183, %v5059, 0.0
      %v5200 = vsel %vm5184, %v5058, 0.0
      %v5201 = vsel %vm5185, %v5057, 0.0
      %v5202 = vsel %vm5186, %v5056, 0.0
      %v5203 = vsel %vm5187, %v5055, 0.0
      %v5204 = vsel %vm5188, %v5054, 0.0
      %v5205 = vsel %vm5189, %v5053, 0.0
      %v5206 = vsel %vm5190, %v5052, 0.0
      %v5207 = vsel %vm5191, %v5051, 0.0
      %v5208 = vsel %vm5192, %v5050, 0.0
      %v5209 = vsel %vm5193, %v5065, 0.0
      %v5210 = vpack.c.bf16 %v5195, %v5194
      %v5211 = vpack.c.bf16 %v5197, %v5196
      %v5212 = vpack.c.bf16 %v5199, %v5198
      %v5213 = vpack.c.bf16 %v5201, %v5200
      %v5214 = vpack.c.bf16 %v5203, %v5202
      %v5215 = vpack.c.bf16 %v5205, %v5204
      %v5216 = vpack.c.bf16 %v5207, %v5206
      %v5217 = vpack.c.bf16 %v5209, %v5208
      %s5218 = scalar_lea.vmem %s7, 768
      %v5219 = vld [vmem:[%s5218] sm:$0xff]
      %v5220 = vld [vmem:[%s5218 + $0x8] sm:$0xf]
      %v5221 = vld [vmem:[%s5218 + $0xc] sm:$0xff]
      %v5222 = vld [vmem:[%s5218 + $0x14] sm:$0xf]
      %v5223 = vld [vmem:[%s5218 + $0x18] sm:$0xff]
      %v5224 = vld [vmem:[%s5218 + $0x20] sm:$0xf]
      %v5225 = vld [vmem:[%s5218 + $0x24] sm:$0xff]
      %v5226 = vld [vmem:[%s5218 + $0x2c] sm:$0xf]
      %v5227 = vld [vmem:[%s5218 + $0x30] sm:$0xff]
      %v5228 = vld [vmem:[%s5218 + $0x38] sm:$0xf]
      %v5229 = vld [vmem:[%s5218 + $0x3c] sm:$0xff]
      %v5230 = vld [vmem:[%s5218 + $0x44] sm:$0xf]
      %v5231 = vld [vmem:[%s5218 + $0x48] sm:$0xff]
      %v5232 = vld [vmem:[%s5218 + $0x50] sm:$0xf]
      %v5233 = vld [vmem:[%s5218 + $0x54] sm:$0xff]
      %v5234 = vld [vmem:[%s5218 + $0x5c] sm:$0xf]
      %v5235 = vld [vmem:[%s5218 + $0x60] sm:$0xff]
      %v5236 = vld [vmem:[%s5218 + $0x68] sm:$0xf]
      %v5237 = vld [vmem:[%s5218 + $0x6c] sm:$0xff]
      %v5238 = vld [vmem:[%s5218 + $0x74] sm:$0xf]
      %v5239 = vld [vmem:[%s5218 + $0x78] sm:$0xff]
      %v5240 = vld [vmem:[%s5218 + $0x80] sm:$0xf]
      %v5241 = vld [vmem:[%s5218 + $0x84] sm:$0xff]
      %v5242 = vld [vmem:[%s5218 + $0x8c] sm:$0xf]
      %v5243 = vld [vmem:[%s5218 + $0x90] sm:$0xff]
      %v5244 = vld [vmem:[%s5218 + $0x98] sm:$0xf]
      %v5245 = vld [vmem:[%s5218 + $0x9c] sm:$0xff]
      %v5246 = vld [vmem:[%s5218 + $0xa4] sm:$0xf]
      %v5247 = vld [vmem:[%s5218 + $0xa8] sm:$0xff]
      %v5248 = vld [vmem:[%s5218 + $0xb0] sm:$0xf]
      %v5249 = vld [vmem:[%s5218 + $0xb4] sm:$0xff]
      %v5250 = vld [vmem:[%s5218 + $0xbc] sm:$0xf]
      %v5283 = vunpack.c.l.b16 %v5219
      %v5284 = vunpack.c.h.b16 %v5219
      %v5285 = vunpack.c.l.b16 %v5220
      %v5286 = vunpack.c.l.b16 %v5221
      %v5287 = vunpack.c.h.b16 %v5221
      %v5288 = vunpack.c.l.b16 %v5222
      %v5289 = vunpack.c.l.b16 %v5223
      %v5290 = vunpack.c.h.b16 %v5223
      %v5291 = vunpack.c.l.b16 %v5224
      %v5292 = vunpack.c.l.b16 %v5225
      %v5293 = vunpack.c.h.b16 %v5225
      %v5294 = vunpack.c.l.b16 %v5226
      %v5295 = vunpack.c.l.b16 %v5227
      %v5296 = vunpack.c.h.b16 %v5227
      %v5297 = vunpack.c.l.b16 %v5228
      %v5298 = vunpack.c.l.b16 %v5229
      %v5299 = vunpack.c.h.b16 %v5229
      %v5300 = vunpack.c.l.b16 %v5230
      %v5301 = vunpack.c.l.b16 %v5231
      %v5302 = vunpack.c.h.b16 %v5231
      %v5303 = vunpack.c.l.b16 %v5232
      %v5304 = vunpack.c.l.b16 %v5233
      %v5305 = vunpack.c.h.b16 %v5233
      %v5306 = vunpack.c.l.b16 %v5234
      %v5307 = vunpack.c.l.b16 %v5235
      %v5308 = vunpack.c.h.b16 %v5235
      %v5309 = vunpack.c.l.b16 %v5236
      %v5310 = vunpack.c.l.b16 %v5237
      %v5311 = vunpack.c.h.b16 %v5237
      %v5312 = vunpack.c.l.b16 %v5238
      %v5313 = vunpack.c.l.b16 %v5239
      %v5314 = vunpack.c.h.b16 %v5239
      %v5315 = vunpack.c.l.b16 %v5240
      %v5316 = vunpack.c.l.b16 %v5241
      %v5317 = vunpack.c.h.b16 %v5241
      %v5318 = vunpack.c.l.b16 %v5242
      %v5319 = vunpack.c.l.b16 %v5243
      %v5320 = vunpack.c.h.b16 %v5243
      %v5321 = vunpack.c.l.b16 %v5244
      %v5322 = vunpack.c.l.b16 %v5245
      %v5323 = vunpack.c.h.b16 %v5245
      %v5324 = vunpack.c.l.b16 %v5246
      %v5325 = vunpack.c.l.b16 %v5247
      %v5326 = vunpack.c.h.b16 %v5247
      %v5327 = vunpack.c.l.b16 %v5248
      %v5328 = vunpack.c.l.b16 %v5249
      %v5329 = vunpack.c.h.b16 %v5249
      %v5330 = vunpack.c.l.b16 %v5250
      %v5331 = vpack.c.b16 %v5286, %v5283
      %v5332 = vpack.c.b16 %v5287, %v5284
      %v5333 = vpack.c.b16 %v5288, %v5285
      %v5334 = vpack.c.b16 %v5292, %v5289
      %v5335 = vpack.c.b16 %v5293, %v5290
      %v5336 = vpack.c.b16 %v5294, %v5291
      %v5337 = vpack.c.b16 %v5298, %v5295
      %v5338 = vpack.c.b16 %v5299, %v5296
      %v5339 = vpack.c.b16 %v5300, %v5297
      %v5340 = vpack.c.b16 %v5304, %v5301
      %v5341 = vpack.c.b16 %v5305, %v5302
      %v5342 = vpack.c.b16 %v5306, %v5303
      %v5343 = vpack.c.b16 %v5310, %v5307
      %v5344 = vpack.c.b16 %v5311, %v5308
      %v5345 = vpack.c.b16 %v5312, %v5309
      %v5346 = vpack.c.b16 %v5316, %v5313
      %v5347 = vpack.c.b16 %v5317, %v5314
      %v5348 = vpack.c.b16 %v5318, %v5315
      %v5349 = vpack.c.b16 %v5322, %v5319
      %v5350 = vpack.c.b16 %v5323, %v5320
      %v5351 = vpack.c.b16 %v5324, %v5321
      %v5352 = vpack.c.b16 %v5328, %v5325
      %v5353 = vpack.c.b16 %v5329, %v5326
      %v5354 = vpack.c.b16 %v5330, %v5327
      %5379 = vmatprep.subr.bf16.mxu0 %v5353
      %5380 = vmatpush1.bf16.msra.mxu0 %v5352
      %5381 = vmatprep.subr.bf16.mxu0 %v5350
      %5382 = vmatpush1.bf16.msra.mxu0 %v5349
      %5383 = vmatprep.subr.bf16.mxu0 %v5347
      %5384 = vmatpush1.bf16.msra.mxu0 %v5346
      %5385 = vmatprep.subr.bf16.mxu0 %v5344
      %5386 = vmatpush1.bf16.msra.mxu0 %v5343
      %5387 = vmatprep.subr.bf16.mxu0 %v5341
      %5388 = vmatpush1.bf16.msra.mxu0 %v5340
      %5389 = vmatprep.subr.bf16.mxu0 %v5338
      %5390 = vmatpush1.bf16.msra.mxu0 %v5337
      %5391 = vmatprep.subr.bf16.mxu0 %v5335
      %5392 = vmatpush1.bf16.msra.mxu0 %v5334
      %5393 = vmatprep.subr.bf16.mxu0 %v5332
      %5394 = vmatpush1.bf16.msra.mxu0 %v5331
      %5395 = vmatprep.subr.bf16.mxu0 0
      %5396 = vmatpush2.bf16.msra.mxu0 0
      %5397 = vmatprep.subr.bf16.mxu0 0
      %5398 = vmatpush2.bf16.msra.mxu0 0
      %5399 = vmatprep.subr.bf16.mxu0 0
      %5400 = vmatpush2.bf16.msra.mxu0 0
      %5401 = vmatprep.subr.bf16.mxu0 0
      %5402 = vmatpush2.bf16.msra.mxu0 0
      %5403 = vmatprep.subr.bf16.mxu0 0
      %5404 = vmatpush2.bf16.msra.mxu0 0
      %5405 = vmatprep.subr.bf16.mxu0 0
      %5406 = vmatpush2.bf16.msra.mxu0 0
      %5407 = vmatprep.subr.bf16.mxu0 0
      %5408 = vmatpush2.bf16.msra.mxu0 0
      %5409 = vmatprep.subr.bf16.mxu0 0
      %5410 = vmatpush2.bf16.msra.mxu0 0
      %5411 = vmatprep.mubr.bf16.mxu0 0
      %5412 = vmatmul.mubr.bf16.gmra.mxu0 %v5210
      %v5413 = vpop.f32.mrf.mxu0
      %v5414 = vadd.f32 0.0, %v5413
      %v5415 = vpop.f32.mrf.mxu0
      %v5416 = vadd.f32 0.0, %v5415
      %v5417 = vpop.f32.mrf.mxu0
      %v5418 = vadd.f32 0.0, %v5417
      %v5419 = vpop.f32.mrf.mxu0
      %v5420 = vadd.f32 0.0, %v5419
      %5421 = vmatprep.mubr.bf16.mxu0 0
      %5422 = vmatmul.mubr.bf16.gmra.mxu0 %v5211
      %v5423 = vpop.f32.mrf.mxu0
      %v5424 = vadd.f32 0.0, %v5423
      %v5425 = vpop.f32.mrf.mxu0
      %v5426 = vadd.f32 0.0, %v5425
      %v5427 = vpop.f32.mrf.mxu0
      %v5428 = vadd.f32 0.0, %v5427
      %v5429 = vpop.f32.mrf.mxu0
      %v5430 = vadd.f32 0.0, %v5429
      %5431 = vmatprep.mubr.bf16.mxu0 0
      %5432 = vmatmul.mubr.bf16.gmra.mxu0 %v5212
      %v5433 = vpop.f32.mrf.mxu0
      %v5434 = vadd.f32 0.0, %v5433
      %v5435 = vpop.f32.mrf.mxu0
      %v5436 = vadd.f32 0.0, %v5435
      %v5437 = vpop.f32.mrf.mxu0
      %v5438 = vadd.f32 0.0, %v5437
      %v5439 = vpop.f32.mrf.mxu0
      %v5440 = vadd.f32 0.0, %v5439
      %5441 = vmatprep.mubr.bf16.mxu0 0
      %5442 = vmatmul.mubr.bf16.gmra.mxu0 %v5213
      %v5443 = vpop.f32.mrf.mxu0
      %v5444 = vadd.f32 0.0, %v5443
      %v5445 = vpop.f32.mrf.mxu0
      %v5446 = vadd.f32 0.0, %v5445
      %v5447 = vpop.f32.mrf.mxu0
      %v5448 = vadd.f32 0.0, %v5447
      %v5449 = vpop.f32.mrf.mxu0
      %v5450 = vadd.f32 0.0, %v5449
      %5451 = vmatprep.mubr.bf16.mxu0 0
      %5452 = vmatmul.mubr.bf16.gmra.mxu0 %v5214
      %v5453 = vpop.f32.mrf.mxu0
      %v5454 = vadd.f32 0.0, %v5453
      %v5455 = vpop.f32.mrf.mxu0
      %v5456 = vadd.f32 0.0, %v5455
      %v5457 = vpop.f32.mrf.mxu0
      %v5458 = vadd.f32 0.0, %v5457
      %v5459 = vpop.f32.mrf.mxu0
      %v5460 = vadd.f32 0.0, %v5459
      %5461 = vmatprep.mubr.bf16.mxu0 0
      %5462 = vmatmul.mubr.bf16.gmra.mxu0 %v5215
      %v5463 = vpop.f32.mrf.mxu0
      %v5464 = vadd.f32 0.0, %v5463
      %v5465 = vpop.f32.mrf.mxu0
      %v5466 = vadd.f32 0.0, %v5465
      %v5467 = vpop.f32.mrf.mxu0
      %v5468 = vadd.f32 0.0, %v5467
      %v5469 = vpop.f32.mrf.mxu0
      %v5470 = vadd.f32 0.0, %v5469
      %5471 = vmatprep.mubr.bf16.mxu0 0
      %5472 = vmatmul.mubr.bf16.gmra.mxu0 %v5216
      %v5473 = vpop.f32.mrf.mxu0
      %v5474 = vadd.f32 0.0, %v5473
      %v5475 = vpop.f32.mrf.mxu0
      %v5476 = vadd.f32 0.0, %v5475
      %v5477 = vpop.f32.mrf.mxu0
      %v5478 = vadd.f32 0.0, %v5477
      %v5479 = vpop.f32.mrf.mxu0
      %v5480 = vadd.f32 0.0, %v5479
      %5481 = vmatprep.mubr.bf16.mxu0 0
      %5482 = vmatmul.mubr.bf16.gmra.mxu0 %v5217
      %v5483 = vpop.f32.mrf.mxu0
      %v5484 = vadd.f32 0.0, %v5483
      %v5485 = vpop.f32.mrf.mxu0
      %v5486 = vadd.f32 0.0, %v5485
      %v5487 = vpop.f32.mrf.mxu0
      %v5488 = vadd.f32 0.0, %v5487
      %v5489 = vpop.f32.mrf.mxu0
      %v5490 = vadd.f32 0.0, %v5489
      %5491 = vdwg.mxu0
      %5492 = vmatprep.subr.bf16.mxu0 0
      %5493 = vmatpush1.bf16.msra.mxu0 %v5354
      %5494 = vmatprep.subr.bf16.mxu0 0
      %5495 = vmatpush1.bf16.msra.mxu0 %v5351
      %5496 = vmatprep.subr.bf16.mxu0 0
      %5497 = vmatpush1.bf16.msra.mxu0 %v5348
      %5498 = vmatprep.subr.bf16.mxu0 0
      %5499 = vmatpush1.bf16.msra.mxu0 %v5345
      %5500 = vmatprep.subr.bf16.mxu0 0
      %5501 = vmatpush1.bf16.msra.mxu0 %v5342
      %5502 = vmatprep.subr.bf16.mxu0 0
      %5503 = vmatpush1.bf16.msra.mxu0 %v5339
      %5504 = vmatprep.subr.bf16.mxu0 0
      %5505 = vmatpush1.bf16.msra.mxu0 %v5336
      %5506 = vmatprep.subr.bf16.mxu0 0
      %5507 = vmatpush1.bf16.msra.mxu0 %v5333
      %5508 = vmatprep.subr.bf16.mxu0 0
      %5509 = vmatpush2.bf16.msra.mxu0 0
      %5510 = vmatprep.subr.bf16.mxu0 0
      %5511 = vmatpush2.bf16.msra.mxu0 0
      %5512 = vmatprep.subr.bf16.mxu0 0
      %5513 = vmatpush2.bf16.msra.mxu0 0
      %5514 = vmatprep.subr.bf16.mxu0 0
      %5515 = vmatpush2.bf16.msra.mxu0 0
      %5516 = vmatprep.subr.bf16.mxu0 0
      %5517 = vmatpush2.bf16.msra.mxu0 0
      %5518 = vmatprep.subr.bf16.mxu0 0
      %5519 = vmatpush2.bf16.msra.mxu0 0
      %5520 = vmatprep.subr.bf16.mxu0 0
      %5521 = vmatpush2.bf16.msra.mxu0 0
      %5522 = vmatprep.subr.bf16.mxu0 0
      %5523 = vmatpush2.bf16.msra.mxu0 0
      %5524 = vmatprep.mubr.bf16.mxu0 0
      %5525 = vmatmul.mubr.bf16.gmra.mxu0 %v5210
      %v5526 = vpop.f32.mrf.mxu0
      %v5527 = vadd.f32 0.0, %v5526
      %v5528 = vpop.f32.mrf.mxu0
      %v5529 = vpop.f32.mrf.mxu0
      %v5530 = vadd.f32 0.0, %v5529
      %v5531 = vpop.f32.mrf.mxu0
      %5532 = vmatprep.mubr.bf16.mxu0 0
      %5533 = vmatmul.mubr.bf16.gmra.mxu0 %v5211
      %v5534 = vpop.f32.mrf.mxu0
      %v5535 = vadd.f32 0.0, %v5534
      %v5536 = vpop.f32.mrf.mxu0
      %v5537 = vpop.f32.mrf.mxu0
      %v5538 = vadd.f32 0.0, %v5537
      %v5539 = vpop.f32.mrf.mxu0
      %5540 = vmatprep.mubr.bf16.mxu0 0
      %5541 = vmatmul.mubr.bf16.gmra.mxu0 %v5212
      %v5542 = vpop.f32.mrf.mxu0
      %v5543 = vadd.f32 0.0, %v5542
      %v5544 = vpop.f32.mrf.mxu0
      %v5545 = vpop.f32.mrf.mxu0
      %v5546 = vadd.f32 0.0, %v5545
      %v5547 = vpop.f32.mrf.mxu0
      %5548 = vmatprep.mubr.bf16.mxu0 0
      %5549 = vmatmul.mubr.bf16.gmra.mxu0 %v5213
      %v5550 = vpop.f32.mrf.mxu0
      %v5551 = vadd.f32 0.0, %v5550
      %v5552 = vpop.f32.mrf.mxu0
      %v5553 = vpop.f32.mrf.mxu0
      %v5554 = vadd.f32 0.0, %v5553
      %v5555 = vpop.f32.mrf.mxu0
      %5556 = vmatprep.mubr.bf16.mxu0 0
      %5557 = vmatmul.mubr.bf16.gmra.mxu0 %v5214
      %v5558 = vpop.f32.mrf.mxu0
      %v5559 = vadd.f32 0.0, %v5558
      %v5560 = vpop.f32.mrf.mxu0
      %v5561 = vpop.f32.mrf.mxu0
      %v5562 = vadd.f32 0.0, %v5561
      %v5563 = vpop.f32.mrf.mxu0
      %5564 = vmatprep.mubr.bf16.mxu0 0
      %5565 = vmatmul.mubr.bf16.gmra.mxu0 %v5215
      %v5566 = vpop.f32.mrf.mxu0
      %v5567 = vadd.f32 0.0, %v5566
      %v5568 = vpop.f32.mrf.mxu0
      %v5569 = vpop.f32.mrf.mxu0
      %v5570 = vadd.f32 0.0, %v5569
      %v5571 = vpop.f32.mrf.mxu0
      %5572 = vmatprep.mubr.bf16.mxu0 0
      %5573 = vmatmul.mubr.bf16.gmra.mxu0 %v5216
      %v5574 = vpop.f32.mrf.mxu0
      %v5575 = vadd.f32 0.0, %v5574
      %v5576 = vpop.f32.mrf.mxu0
      %v5577 = vpop.f32.mrf.mxu0
      %v5578 = vadd.f32 0.0, %v5577
      %v5579 = vpop.f32.mrf.mxu0
      %5580 = vmatprep.mubr.bf16.mxu0 0
      %5581 = vmatmul.mubr.bf16.gmra.mxu0 %v5217
      %v5582 = vpop.f32.mrf.mxu0
      %v5583 = vadd.f32 0.0, %v5582
      %v5584 = vpop.f32.mrf.mxu0
      %v5585 = vpop.f32.mrf.mxu0
      %v5586 = vadd.f32 0.0, %v5585
      %v5587 = vpop.f32.mrf.mxu0
      %5588 = vdwg.mxu0
      %v5589 = vadd.f32 %v4985, %v5414
      %v5590 = vadd.f32 %v4986, %v5416
      %v5591 = vadd.f32 %v4987, %v5527
      %v5592 = vadd.f32 %v4988, %v5418
      %v5593 = vadd.f32 %v4989, %v5420
      %v5594 = vadd.f32 %v4990, %v5530
      %v5595 = vadd.f32 %v4991, %v5424
      %v5596 = vadd.f32 %v4992, %v5426
      %v5597 = vadd.f32 %v4993, %v5535
      %v5598 = vadd.f32 %v4994, %v5428
      %v5599 = vadd.f32 %v4995, %v5430
      %v5600 = vadd.f32 %v4996, %v5538
      %v5601 = vadd.f32 %v4997, %v5434
      %v5602 = vadd.f32 %v4998, %v5436
      %v5603 = vadd.f32 %v4999, %v5543
      %v5604 = vadd.f32 %v5000, %v5438
      %v5605 = vadd.f32 %v5001, %v5440
      %v5606 = vadd.f32 %v5002, %v5546
      %v5607 = vadd.f32 %v5003, %v5444
      %v5608 = vadd.f32 %v5004, %v5446
      %v5609 = vadd.f32 %v5005, %v5551
      %v5610 = vadd.f32 %v5006, %v5448
      %v5611 = vadd.f32 %v5007, %v5450
      %v5612 = vadd.f32 %v5008, %v5554
      %v5613 = vadd.f32 %v5009, %v5454
      %v5614 = vadd.f32 %v5010, %v5456
      %v5615 = vadd.f32 %v5011, %v5559
      %v5616 = vadd.f32 %v5012, %v5458
      %v5617 = vadd.f32 %v5013, %v5460
      %v5618 = vadd.f32 %v5014, %v5562
      %v5619 = vadd.f32 %v5015, %v5464
      %v5620 = vadd.f32 %v5016, %v5466
      %v5621 = vadd.f32 %v5017, %v5567
      %v5622 = vadd.f32 %v5018, %v5468
      %v5623 = vadd.f32 %v5019, %v5470
      %v5624 = vadd.f32 %v5020, %v5570
      %v5625 = vadd.f32 %v5021, %v5474
      %v5626 = vadd.f32 %v5022, %v5476
      %v5627 = vadd.f32 %v5023, %v5575
      %v5628 = vadd.f32 %v5024, %v5478
      %v5629 = vadd.f32 %v5025, %v5480
      %v5630 = vadd.f32 %v5026, %v5578
      %v5631 = vadd.f32 %v5027, %v5484
      %v5632 = vadd.f32 %v5028, %v5486
      %v5633 = vadd.f32 %v5029, %v5583
      %v5634 = vadd.f32 %v5030, %v5488
      %v5635 = vadd.f32 %v5031, %v5490
      %v5636 = vadd.f32 %v5032, %v5586
      %v5637 = vld [vmem:[%s8] sm:$0x7]
      %v5639 = vlaneseq
      %v5640 = vshrl.u32 %v5639, 7
      %v5641 = vsub.s32 0, %v5640
      %v5642 = vrot.slane %v5637, %v5641
      %v5643 = vlaneseq
      %v5644 = vshrl.u32 %v5643, 7
      %v5645 = vsub.s32 1, %v5644
      %v5646 = vrot.slane %v5637, %v5645
      %v5647 = vlaneseq
      %v5648 = vshrl.u32 %v5647, 7
      %v5649 = vsub.s32 2, %v5648
      %v5650 = vrot.slane %v5637, %v5649
      %v5654 = vadd.f32 %v5589, %v5642
      %v5655 = vadd.f32 %v5590, %v5646
      %v5656 = vadd.f32 %v5591, %v5650
      %v5657 = vadd.f32 %v5592, %v5642
      %v5658 = vadd.f32 %v5593, %v5646
      %v5659 = vadd.f32 %v5594, %v5650
      %v5660 = vadd.f32 %v5595, %v5642
      %v5661 = vadd.f32 %v5596, %v5646
      %v5662 = vadd.f32 %v5597, %v5650
      %v5663 = vadd.f32 %v5598, %v5642
      %v5664 = vadd.f32 %v5599, %v5646
      %v5665 = vadd.f32 %v5600, %v5650
      %v5666 = vadd.f32 %v5601, %v5642
      %v5667 = vadd.f32 %v5602, %v5646
      %v5668 = vadd.f32 %v5603, %v5650
      %v5669 = vadd.f32 %v5604, %v5642
      %v5670 = vadd.f32 %v5605, %v5646
      %v5671 = vadd.f32 %v5606, %v5650
      %v5672 = vadd.f32 %v5607, %v5642
      %v5673 = vadd.f32 %v5608, %v5646
      %v5674 = vadd.f32 %v5609, %v5650
      %v5675 = vadd.f32 %v5610, %v5642
      %v5676 = vadd.f32 %v5611, %v5646
      %v5677 = vadd.f32 %v5612, %v5650
      %v5678 = vadd.f32 %v5613, %v5642
      %v5679 = vadd.f32 %v5614, %v5646
      %v5680 = vadd.f32 %v5615, %v5650
      %v5681 = vadd.f32 %v5616, %v5642
      %v5682 = vadd.f32 %v5617, %v5646
      %v5683 = vadd.f32 %v5618, %v5650
      %v5684 = vadd.f32 %v5619, %v5642
      %v5685 = vadd.f32 %v5620, %v5646
      %v5686 = vadd.f32 %v5621, %v5650
      %v5687 = vadd.f32 %v5622, %v5642
      %v5688 = vadd.f32 %v5623, %v5646
      %v5689 = vadd.f32 %v5624, %v5650
      %v5690 = vadd.f32 %v5625, %v5642
      %v5691 = vadd.f32 %v5626, %v5646
      %v5692 = vadd.f32 %v5627, %v5650
      %v5693 = vadd.f32 %v5628, %v5642
      %v5694 = vadd.f32 %v5629, %v5646
      %v5695 = vadd.f32 %v5630, %v5650
      %v5696 = vadd.f32 %v5631, %v5642
      %v5697 = vadd.f32 %v5632, %v5646
      %v5698 = vadd.f32 %v5633, %v5650
      %v5699 = vadd.f32 %v5634, %v5642
      %v5700 = vadd.f32 %v5635, %v5646
      %v5701 = vadd.f32 %v5636, %v5650
      %v5702 = vmax.f32 %v5654, 0.0
      %v5703 = vmax.f32 %v5655, 0.0
      %v5704 = vmax.f32 %v5656, 0.0
      %v5705 = vmax.f32 %v5657, 0.0
      %v5706 = vmax.f32 %v5658, 0.0
      %v5707 = vmax.f32 %v5659, 0.0
      %v5708 = vmax.f32 %v5660, 0.0
      %v5709 = vmax.f32 %v5661, 0.0
      %v5710 = vmax.f32 %v5662, 0.0
      %v5711 = vmax.f32 %v5663, 0.0
      %v5712 = vmax.f32 %v5664, 0.0
      %v5713 = vmax.f32 %v5665, 0.0
      %v5714 = vmax.f32 %v5666, 0.0
      %v5715 = vmax.f32 %v5667, 0.0
      %v5716 = vmax.f32 %v5668, 0.0
      %v5717 = vmax.f32 %v5669, 0.0
      %v5718 = vmax.f32 %v5670, 0.0
      %v5719 = vmax.f32 %v5671, 0.0
      %v5720 = vmax.f32 %v5672, 0.0
      %v5721 = vmax.f32 %v5673, 0.0
      %v5722 = vmax.f32 %v5674, 0.0
      %v5723 = vmax.f32 %v5675, 0.0
      %v5724 = vmax.f32 %v5676, 0.0
      %v5725 = vmax.f32 %v5677, 0.0
      %v5726 = vmax.f32 %v5678, 0.0
      %v5727 = vmax.f32 %v5679, 0.0
      %v5728 = vmax.f32 %v5680, 0.0
      %v5729 = vmax.f32 %v5681, 0.0
      %v5730 = vmax.f32 %v5682, 0.0
      %v5731 = vmax.f32 %v5683, 0.0
      %v5732 = vmax.f32 %v5684, 0.0
      %v5733 = vmax.f32 %v5685, 0.0
      %v5734 = vmax.f32 %v5686, 0.0
      %v5735 = vmax.f32 %v5687, 0.0
      %v5736 = vmax.f32 %v5688, 0.0
      %v5737 = vmax.f32 %v5689, 0.0
      %v5738 = vmax.f32 %v5690, 0.0
      %v5739 = vmax.f32 %v5691, 0.0
      %v5740 = vmax.f32 %v5692, 0.0
      %v5741 = vmax.f32 %v5693, 0.0
      %v5742 = vmax.f32 %v5694, 0.0
      %v5743 = vmax.f32 %v5695, 0.0
      %v5744 = vmax.f32 %v5696, 0.0
      %v5745 = vmax.f32 %v5697, 0.0
      %v5746 = vmax.f32 %v5698, 0.0
      %v5747 = vmax.f32 %v5699, 0.0
      %v5748 = vmax.f32 %v5700, 0.0
      %v5749 = vmax.f32 %v5701, 0.0
      %v5750 = vadd.f32 %v3101, %v5702
      %v5751 = vadd.f32 %v3102, %v5703
      %v5752 = vadd.f32 %v3103, %v5704
      %v5753 = vadd.f32 %v3104, %v5705
      %v5754 = vadd.f32 %v3105, %v5706
      %v5755 = vadd.f32 %v3106, %v5707
      %v5756 = vadd.f32 %v3107, %v5708
      %v5757 = vadd.f32 %v3108, %v5709
      %v5758 = vadd.f32 %v3109, %v5710
      %v5759 = vadd.f32 %v3110, %v5711
      %v5760 = vadd.f32 %v3111, %v5712
      %v5761 = vadd.f32 %v3112, %v5713
      %v5762 = vadd.f32 %v3113, %v5714
      %v5763 = vadd.f32 %v3114, %v5715
      %v5764 = vadd.f32 %v3115, %v5716
      %v5765 = vadd.f32 %v3116, %v5717
      %v5766 = vadd.f32 %v3117, %v5718
      %v5767 = vadd.f32 %v3118, %v5719
      %v5768 = vadd.f32 %v3119, %v5720
      %v5769 = vadd.f32 %v3120, %v5721
      %v5770 = vadd.f32 %v3121, %v5722
      %v5771 = vadd.f32 %v3122, %v5723
      %v5772 = vadd.f32 %v3123, %v5724
      %v5773 = vadd.f32 %v3124, %v5725
      %v5774 = vadd.f32 %v3125, %v5726
      %v5775 = vadd.f32 %v3126, %v5727
      %v5776 = vadd.f32 %v3127, %v5728
      %v5777 = vadd.f32 %v3128, %v5729
      %v5778 = vadd.f32 %v3129, %v5730
      %v5779 = vadd.f32 %v3130, %v5731
      %v5780 = vadd.f32 %v3131, %v5732
      %v5781 = vadd.f32 %v3132, %v5733
      %v5782 = vadd.f32 %v3133, %v5734
      %v5783 = vadd.f32 %v3134, %v5735
      %v5784 = vadd.f32 %v3135, %v5736
      %v5785 = vadd.f32 %v3136, %v5737
      %v5786 = vadd.f32 %v3137, %v5738
      %v5787 = vadd.f32 %v3138, %v5739
      %v5788 = vadd.f32 %v3139, %v5740
      %v5789 = vadd.f32 %v3140, %v5741
      %v5790 = vadd.f32 %v3141, %v5742
      %v5791 = vadd.f32 %v3142, %v5743
      %v5792 = vadd.f32 %v3143, %v5744
      %v5793 = vadd.f32 %v3144, %v5745
      %v5794 = vadd.f32 %v3145, %v5746
      %v5795 = vadd.f32 %v3146, %v5747
      %v5796 = vadd.f32 %v3147, %v5748
      %v5797 = vadd.f32 %v3148, %v5749
      %v5798 = vunpack.c.l.bf16 %v393
      %v5799 = vunpack.c.l.bf16 %v394
      %v5800 = vunpack.c.l.bf16 %v395
      %v5801 = vunpack.c.l.bf16 %v396
      %v5802 = vunpack.c.l.bf16 %v397
      %v5803 = vunpack.c.l.bf16 %v398
      %v5804 = vunpack.c.l.bf16 %v399
      %v5805 = vunpack.c.l.bf16 %v400
      %v5806 = vunpack.c.l.bf16 %v401
      %v5807 = vunpack.c.l.bf16 %v402
      %v5808 = vunpack.c.l.bf16 %v403
      %v5809 = vunpack.c.l.bf16 %v404
      %v5810 = vunpack.c.l.bf16 %v405
      %v5811 = vunpack.c.l.bf16 %v406
      %v5812 = vunpack.c.l.bf16 %v407
      %v5813 = vunpack.c.l.bf16 %v408
      %vm5814 = vcmp.ge.s32.totalorder %v425, 8
      %5815 = vrot.lane.b32.xlu0 %v5798, 8
      %v5816 = vpop.permute.xlu0 %5815
      %5817 = vrot.lane.b32.xlu0 %v5799, 8
      %v5818 = vpop.permute.xlu0 %5817
      %5819 = vrot.lane.b32.xlu0 %v5800, 8
      %v5820 = vpop.permute.xlu0 %5819
      %5821 = vrot.lane.b32.xlu0 %v5801, 8
      %v5822 = vpop.permute.xlu0 %5821
      %5823 = vrot.lane.b32.xlu0 %v5802, 8
      %v5824 = vpop.permute.xlu0 %5823
      %5825 = vrot.lane.b32.xlu0 %v5803, 8
      %v5826 = vpop.permute.xlu0 %5825
      %5827 = vrot.lane.b32.xlu0 %v5804, 8
      %v5828 = vpop.permute.xlu0 %5827
      %5829 = vrot.lane.b32.xlu0 %v5805, 8
      %v5830 = vpop.permute.xlu0 %5829
      %5831 = vrot.lane.b32.xlu0 %v5806, 8
      %v5832 = vpop.permute.xlu0 %5831
      %5833 = vrot.lane.b32.xlu0 %v5807, 8
      %v5834 = vpop.permute.xlu0 %5833
      %5835 = vrot.lane.b32.xlu0 %v5808, 8
      %v5836 = vpop.permute.xlu0 %5835
      %5837 = vrot.lane.b32.xlu0 %v5809, 8
      %v5838 = vpop.permute.xlu0 %5837
      %5839 = vrot.lane.b32.xlu0 %v5810, 8
      %v5840 = vpop.permute.xlu0 %5839
      %5841 = vrot.lane.b32.xlu0 %v5811, 8
      %v5842 = vpop.permute.xlu0 %5841
      %5843 = vrot.lane.b32.xlu0 %v5812, 8
      %v5844 = vpop.permute.xlu0 %5843
      %5845 = vrot.lane.b32.xlu0 %v5813, 8
      %v5846 = vpop.permute.xlu0 %5845
      %v5847 = vsel %vm5814, 1, 0
      %v5848 = vlaneseq
      %v5849 = vshrl.u32 %v5848, 7
      %v5850 = vsub.s32 0, %v5849
      %v5851 = vrot.slane %v5847, %v5850
      %vm5852 = vcmp.eq.s32.totalorder %v5851, 1
      %v5853 = vsel %vm5852, %v5816, -3e+38
      %v5854 = vsel %vm5852, %v5818, -3e+38
      %v5855 = vsel %vm5852, %v5820, -3e+38
      %v5856 = vsel %vm5852, %v5822, -3e+38
      %v5857 = vsel %vm5852, %v5824, -3e+38
      %v5858 = vsel %vm5852, %v5826, -3e+38
      %v5859 = vsel %vm5852, %v5828, -3e+38
      %v5860 = vsel %vm5852, %v5830, -3e+38
      %v5861 = vsel %vm5852, %v5832, -3e+38
      %v5862 = vsel %vm5852, %v5834, -3e+38
      %v5863 = vsel %vm5852, %v5836, -3e+38
      %v5864 = vsel %vm5852, %v5838, -3e+38
      %v5865 = vsel %vm5852, %v5840, -3e+38
      %v5866 = vsel %vm5852, %v5842, -3e+38
      %v5867 = vsel %vm5852, %v5844, -3e+38
      %v5868 = vsel %vm5852, %v5846, -3e+38
      %vm5869 = vcmp.lt.s32.totalorder %v425, 120
      %5870 = vrot.lane.b32.xlu0 %v5798, 120
      %v5871 = vpop.permute.xlu0 %5870
      %5872 = vrot.lane.b32.xlu0 %v5799, 120
      %v5873 = vpop.permute.xlu0 %5872
      %5874 = vrot.lane.b32.xlu0 %v5800, 120
      %v5875 = vpop.permute.xlu0 %5874
      %5876 = vrot.lane.b32.xlu0 %v5801, 120
      %v5877 = vpop.permute.xlu0 %5876
      %5878 = vrot.lane.b32.xlu0 %v5802, 120
      %v5879 = vpop.permute.xlu0 %5878
      %5880 = vrot.lane.b32.xlu0 %v5803, 120
      %v5881 = vpop.permute.xlu0 %5880
      %5882 = vrot.lane.b32.xlu0 %v5804, 120
      %v5883 = vpop.permute.xlu0 %5882
      %5884 = vrot.lane.b32.xlu0 %v5805, 120
      %v5885 = vpop.permute.xlu0 %5884
      %5886 = vrot.lane.b32.xlu0 %v5806, 120
      %v5887 = vpop.permute.xlu0 %5886
      %5888 = vrot.lane.b32.xlu0 %v5807, 120
      %v5889 = vpop.permute.xlu0 %5888
      %5890 = vrot.lane.b32.xlu0 %v5808, 120
      %v5891 = vpop.permute.xlu0 %5890
      %5892 = vrot.lane.b32.xlu0 %v5809, 120
      %v5893 = vpop.permute.xlu0 %5892
      %5894 = vrot.lane.b32.xlu0 %v5810, 120
      %v5895 = vpop.permute.xlu0 %5894
      %5896 = vrot.lane.b32.xlu0 %v5811, 120
      %v5897 = vpop.permute.xlu0 %5896
      %5898 = vrot.lane.b32.xlu0 %v5812, 120
      %v5899 = vpop.permute.xlu0 %5898
      %5900 = vrot.lane.b32.xlu0 %v5813, 120
      %v5901 = vpop.permute.xlu0 %5900
      %v5902 = vsel %vm5869, 1, 0
      %v5903 = vlaneseq
      %v5904 = vshrl.u32 %v5903, 7
      %v5905 = vsub.s32 0, %v5904
      %v5906 = vrot.slane %v5902, %v5905
      %vm5907 = vcmp.eq.s32.totalorder %v5906, 1
      %v5908 = vsel %vm5907, %v5871, -3e+38
      %v5909 = vsel %vm5907, %v5873, -3e+38
      %v5910 = vsel %vm5907, %v5875, -3e+38
      %v5911 = vsel %vm5907, %v5877, -3e+38
      %v5912 = vsel %vm5907, %v5879, -3e+38
      %v5913 = vsel %vm5907, %v5881, -3e+38
      %v5914 = vsel %vm5907, %v5883, -3e+38
      %v5915 = vsel %vm5907, %v5885, -3e+38
      %v5916 = vsel %vm5907, %v5887, -3e+38
      %v5917 = vsel %vm5907, %v5889, -3e+38
      %v5918 = vsel %vm5907, %v5891, -3e+38
      %v5919 = vsel %vm5907, %v5893, -3e+38
      %v5920 = vsel %vm5907, %v5895, -3e+38
      %v5921 = vsel %vm5907, %v5897, -3e+38
      %v5922 = vsel %vm5907, %v5899, -3e+38
      %v5923 = vsel %vm5907, %v5901, -3e+38
      %v5924 = vmax.f32 %v5853, %v5908
      %v5925 = vmax.f32 %v5854, %v5909
      %v5926 = vmax.f32 %v5855, %v5910
      %v5927 = vmax.f32 %v5856, %v5911
      %v5928 = vmax.f32 %v5857, %v5912
      %v5929 = vmax.f32 %v5858, %v5913
      %v5930 = vmax.f32 %v5859, %v5914
      %v5931 = vmax.f32 %v5860, %v5915
      %v5932 = vmax.f32 %v5861, %v5916
      %v5933 = vmax.f32 %v5862, %v5917
      %v5934 = vmax.f32 %v5863, %v5918
      %v5935 = vmax.f32 %v5864, %v5919
      %v5936 = vmax.f32 %v5865, %v5920
      %v5937 = vmax.f32 %v5866, %v5921
      %v5938 = vmax.f32 %v5867, %v5922
      %v5939 = vmax.f32 %v5868, %v5923
      %v5940 = vmax.f32 %v5924, %v5798
      %v5941 = vmax.f32 %v5925, %v5799
      %v5942 = vmax.f32 %v5926, %v5800
      %v5943 = vmax.f32 %v5927, %v5801
      %v5944 = vmax.f32 %v5928, %v5802
      %v5945 = vmax.f32 %v5929, %v5803
      %v5946 = vmax.f32 %v5930, %v5804
      %v5947 = vmax.f32 %v5931, %v5805
      %v5948 = vmax.f32 %v5932, %v5806
      %v5949 = vmax.f32 %v5933, %v5807
      %v5950 = vmax.f32 %v5934, %v5808
      %v5951 = vmax.f32 %v5935, %v5809
      %v5952 = vmax.f32 %v5936, %v5810
      %v5953 = vmax.f32 %v5937, %v5811
      %v5954 = vmax.f32 %v5938, %v5812
      %v5955 = vmax.f32 %v5939, %v5813
      %v5956 = vrot.slane %v5940, 7
      %v5957 = vrot.slane %v5941, 7
      %v5958 = vrot.slane %v5942, 7
      %v5959 = vrot.slane %v5943, 7
      %v5960 = vrot.slane %v5944, 7
      %v5961 = vrot.slane %v5945, 7
      %v5962 = vrot.slane %v5946, 7
      %v5963 = vrot.slane %v5947, 7
      %v5964 = vrot.slane %v5948, 7
      %v5965 = vrot.slane %v5949, 7
      %v5966 = vrot.slane %v5950, 7
      %v5967 = vrot.slane %v5951, 7
      %v5968 = vrot.slane %v5952, 7
      %v5969 = vrot.slane %v5953, 7
      %v5970 = vrot.slane %v5954, 7
      %v5971 = vrot.slane %v5955, 7
      %v5972 = vsel %vm1466, %v5970, %v5971
      %v5973 = vsel %vm1466, %v5969, %v5970
      %v5974 = vsel %vm1466, %v5968, %v5969
      %v5975 = vsel %vm1466, %v5967, %v5968
      %v5976 = vsel %vm1466, %v5966, %v5967
      %v5977 = vsel %vm1466, %v5965, %v5966
      %v5978 = vsel %vm1466, %v5964, %v5965
      %v5979 = vsel %vm1466, %v5963, %v5964
      %v5980 = vsel %vm1466, %v5962, %v5963
      %v5981 = vsel %vm1466, %v5961, %v5962
      %v5982 = vsel %vm1466, %v5960, %v5961
      %v5983 = vsel %vm1466, %v5959, %v5960
      %v5984 = vsel %vm1466, %v5958, %v5959
      %v5985 = vsel %vm1466, %v5957, %v5958
      %v5986 = vsel %vm1466, %v5956, %v5957
      %v5987 = vsel %vm1466, %v5971, %v5956
      %v5988 = vsel %vm1483, 1, 0
      %v5989 = vsel %vm1484, 1, 0
      %v5990 = vsel %vm1485, 1, 0
      %v5991 = vsel %vm1486, 1, 0
      %v5992 = vsel %vm1487, 1, 0
      %v5993 = vsel %vm1488, 1, 0
      %v5994 = vsel %vm1489, 1, 0
      %v5995 = vsel %vm1490, 1, 0
      %v5996 = vsel %vm1491, 1, 0
      %v5997 = vsel %vm1492, 1, 0
      %v5998 = vsel %vm1493, 1, 0
      %v5999 = vsel %vm1494, 1, 0
      %v6000 = vsel %vm1495, 1, 0
      %v6001 = vsel %vm1496, 1, 0
      %v6002 = vsel %vm1497, 1, 0
      %v6003 = vsel %vm1498, 1, 0
      %6004 = vset.pattern.permute.xlu0 0
      %6005 = vperm.xlu0 %6004, %v5988
      %v6006 = vpop.permute.xlu0 %6005
      %6007 = vset.pattern.permute.xlu0 0
      %6008 = vperm.xlu0 %6007, %v5989
      %v6009 = vpop.permute.xlu0 %6008
      %6010 = vset.pattern.permute.xlu0 0
      %6011 = vperm.xlu0 %6010, %v5990
      %v6012 = vpop.permute.xlu0 %6011
      %6013 = vset.pattern.permute.xlu0 0
      %6014 = vperm.xlu0 %6013, %v5991
      %v6015 = vpop.permute.xlu0 %6014
      %6016 = vset.pattern.permute.xlu0 0
      %6017 = vperm.xlu0 %6016, %v5992
      %v6018 = vpop.permute.xlu0 %6017
      %6019 = vset.pattern.permute.xlu0 0
      %6020 = vperm.xlu0 %6019, %v5993
      %v6021 = vpop.permute.xlu0 %6020
      %6022 = vset.pattern.permute.xlu0 0
      %6023 = vperm.xlu0 %6022, %v5994
      %v6024 = vpop.permute.xlu0 %6023
      %6025 = vset.pattern.permute.xlu0 0
      %6026 = vperm.xlu0 %6025, %v5995
      %v6027 = vpop.permute.xlu0 %6026
      %6028 = vset.pattern.permute.xlu0 0
      %6029 = vperm.xlu0 %6028, %v5996
      %v6030 = vpop.permute.xlu0 %6029
      %6031 = vset.pattern.permute.xlu0 0
      %6032 = vperm.xlu0 %6031, %v5997
      %v6033 = vpop.permute.xlu0 %6032
      %6034 = vset.pattern.permute.xlu0 0
      %6035 = vperm.xlu0 %6034, %v5998
      %v6036 = vpop.permute.xlu0 %6035
      %6037 = vset.pattern.permute.xlu0 0
      %6038 = vperm.xlu0 %6037, %v5999
      %v6039 = vpop.permute.xlu0 %6038
      %6040 = vset.pattern.permute.xlu0 0
      %6041 = vperm.xlu0 %6040, %v6000
      %v6042 = vpop.permute.xlu0 %6041
      %6043 = vset.pattern.permute.xlu0 0
      %6044 = vperm.xlu0 %6043, %v6001
      %v6045 = vpop.permute.xlu0 %6044
      %6046 = vset.pattern.permute.xlu0 0
      %6047 = vperm.xlu0 %6046, %v6002
      %v6048 = vpop.permute.xlu0 %6047
      %6049 = vset.pattern.permute.xlu0 0
      %6050 = vperm.xlu0 %6049, %v6003
      %v6051 = vpop.permute.xlu0 %6050
      %vm6052 = vcmp.eq.s32.totalorder %v6006, 1
      %vm6053 = vcmp.eq.s32.totalorder %v6009, 1
      %vm6054 = vcmp.eq.s32.totalorder %v6012, 1
      %vm6055 = vcmp.eq.s32.totalorder %v6015, 1
      %vm6056 = vcmp.eq.s32.totalorder %v6018, 1
      %vm6057 = vcmp.eq.s32.totalorder %v6021, 1
      %vm6058 = vcmp.eq.s32.totalorder %v6024, 1
      %vm6059 = vcmp.eq.s32.totalorder %v6027, 1
      %vm6060 = vcmp.eq.s32.totalorder %v6030, 1
      %vm6061 = vcmp.eq.s32.totalorder %v6033, 1
      %vm6062 = vcmp.eq.s32.totalorder %v6036, 1
      %vm6063 = vcmp.eq.s32.totalorder %v6039, 1
      %vm6064 = vcmp.eq.s32.totalorder %v6042, 1
      %vm6065 = vcmp.eq.s32.totalorder %v6045, 1
      %vm6066 = vcmp.eq.s32.totalorder %v6048, 1
      %vm6067 = vcmp.eq.s32.totalorder %v6051, 1
      %v6068 = vsel %vm6052, %v5987, -3e+38
      %v6069 = vsel %vm6053, %v5986, -3e+38
      %v6070 = vsel %vm6054, %v5985, -3e+38
      %v6071 = vsel %vm6055, %v5984, -3e+38
      %v6072 = vsel %vm6056, %v5983, -3e+38
      %v6073 = vsel %vm6057, %v5982, -3e+38
      %v6074 = vsel %vm6058, %v5981, -3e+38
      %v6075 = vsel %vm6059, %v5980, -3e+38
      %v6076 = vsel %vm6060, %v5979, -3e+38
      %v6077 = vsel %vm6061, %v5978, -3e+38
      %v6078 = vsel %vm6062, %v5977, -3e+38
      %v6079 = vsel %vm6063, %v5976, -3e+38
      %v6080 = vsel %vm6064, %v5975, -3e+38
      %v6081 = vsel %vm6065, %v5974, -3e+38
      %v6082 = vsel %vm6066, %v5973, -3e+38
      %v6083 = vsel %vm6067, %v5972, -3e+38
      %v6084 = vrot.slane %v5940, 1
      %v6085 = vrot.slane %v5941, 1
      %v6086 = vrot.slane %v5942, 1
      %v6087 = vrot.slane %v5943, 1
      %v6088 = vrot.slane %v5944, 1
      %v6089 = vrot.slane %v5945, 1
      %v6090 = vrot.slane %v5946, 1
      %v6091 = vrot.slane %v5947, 1
      %v6092 = vrot.slane %v5948, 1
      %v6093 = vrot.slane %v5949, 1
      %v6094 = vrot.slane %v5950, 1
      %v6095 = vrot.slane %v5951, 1
      %v6096 = vrot.slane %v5952, 1
      %v6097 = vrot.slane %v5953, 1
      %v6098 = vrot.slane %v5954, 1
      %v6099 = vrot.slane %v5955, 1
      %v6100 = vsel %vm2400, %v6098, %v6099
      %v6101 = vsel %vm2400, %v6097, %v6098
      %v6102 = vsel %vm2400, %v6096, %v6097
      %v6103 = vsel %vm2400, %v6095, %v6096
      %v6104 = vsel %vm2400, %v6094, %v6095
      %v6105 = vsel %vm2400, %v6093, %v6094
      %v6106 = vsel %vm2400, %v6092, %v6093
      %v6107 = vsel %vm2400, %v6091, %v6092
      %v6108 = vsel %vm2400, %v6090, %v6091
      %v6109 = vsel %vm2400, %v6089, %v6090
      %v6110 = vsel %vm2400, %v6088, %v6089
      %v6111 = vsel %vm2400, %v6087, %v6088
      %v6112 = vsel %vm2400, %v6086, %v6087
      %v6113 = vsel %vm2400, %v6085, %v6086
      %v6114 = vsel %vm2400, %v6084, %v6085
      %v6115 = vsel %vm2400, %v6099, %v6084
      %v6116 = vsel %vm2433, 1, 0
      %v6117 = vsel %vm2434, 1, 0
      %v6118 = vsel %vm2435, 1, 0
      %v6119 = vsel %vm2436, 1, 0
      %v6120 = vsel %vm2437, 1, 0
      %v6121 = vsel %vm2438, 1, 0
      %v6122 = vsel %vm2439, 1, 0
      %v6123 = vsel %vm2440, 1, 0
      %v6124 = vsel %vm2441, 1, 0
      %v6125 = vsel %vm2442, 1, 0
      %v6126 = vsel %vm2443, 1, 0
      %v6127 = vsel %vm2444, 1, 0
      %v6128 = vsel %vm2445, 1, 0
      %v6129 = vsel %vm2446, 1, 0
      %v6130 = vsel %vm2447, 1, 0
      %v6131 = vsel %vm2448, 1, 0
      %6132 = vset.pattern.permute.xlu0 0
      %6133 = vperm.xlu0 %6132, %v6116
      %v6134 = vpop.permute.xlu0 %6133
      %6135 = vset.pattern.permute.xlu0 0
      %6136 = vperm.xlu0 %6135, %v6117
      %v6137 = vpop.permute.xlu0 %6136
      %6138 = vset.pattern.permute.xlu0 0
      %6139 = vperm.xlu0 %6138, %v6118
      %v6140 = vpop.permute.xlu0 %6139
      %6141 = vset.pattern.permute.xlu0 0
      %6142 = vperm.xlu0 %6141, %v6119
      %v6143 = vpop.permute.xlu0 %6142
      %6144 = vset.pattern.permute.xlu0 0
      %6145 = vperm.xlu0 %6144, %v6120
      %v6146 = vpop.permute.xlu0 %6145
      %6147 = vset.pattern.permute.xlu0 0
      %6148 = vperm.xlu0 %6147, %v6121
      %v6149 = vpop.permute.xlu0 %6148
      %6150 = vset.pattern.permute.xlu0 0
      %6151 = vperm.xlu0 %6150, %v6122
      %v6152 = vpop.permute.xlu0 %6151
      %6153 = vset.pattern.permute.xlu0 0
      %6154 = vperm.xlu0 %6153, %v6123
      %v6155 = vpop.permute.xlu0 %6154
      %6156 = vset.pattern.permute.xlu0 0
      %6157 = vperm.xlu0 %6156, %v6124
      %v6158 = vpop.permute.xlu0 %6157
      %6159 = vset.pattern.permute.xlu0 0
      %6160 = vperm.xlu0 %6159, %v6125
      %v6161 = vpop.permute.xlu0 %6160
      %6162 = vset.pattern.permute.xlu0 0
      %6163 = vperm.xlu0 %6162, %v6126
      %v6164 = vpop.permute.xlu0 %6163
      %6165 = vset.pattern.permute.xlu0 0
      %6166 = vperm.xlu0 %6165, %v6127
      %v6167 = vpop.permute.xlu0 %6166
      %6168 = vset.pattern.permute.xlu0 0
      %6169 = vperm.xlu0 %6168, %v6128
      %v6170 = vpop.permute.xlu0 %6169
      %6171 = vset.pattern.permute.xlu0 0
      %6172 = vperm.xlu0 %6171, %v6129
      %v6173 = vpop.permute.xlu0 %6172
      %6174 = vset.pattern.permute.xlu0 0
      %6175 = vperm.xlu0 %6174, %v6130
      %v6176 = vpop.permute.xlu0 %6175
      %6177 = vset.pattern.permute.xlu0 0
      %6178 = vperm.xlu0 %6177, %v6131
      %v6179 = vpop.permute.xlu0 %6178
      %vm6180 = vcmp.eq.s32.totalorder %v6134, 1
      %vm6181 = vcmp.eq.s32.totalorder %v6137, 1
      %vm6182 = vcmp.eq.s32.totalorder %v6140, 1
      %vm6183 = vcmp.eq.s32.totalorder %v6143, 1
      %vm6184 = vcmp.eq.s32.totalorder %v6146, 1
      %vm6185 = vcmp.eq.s32.totalorder %v6149, 1
      %vm6186 = vcmp.eq.s32.totalorder %v6152, 1
      %vm6187 = vcmp.eq.s32.totalorder %v6155, 1
      %vm6188 = vcmp.eq.s32.totalorder %v6158, 1
      %vm6189 = vcmp.eq.s32.totalorder %v6161, 1
      %vm6190 = vcmp.eq.s32.totalorder %v6164, 1
      %vm6191 = vcmp.eq.s32.totalorder %v6167, 1
      %vm6192 = vcmp.eq.s32.totalorder %v6170, 1
      %vm6193 = vcmp.eq.s32.totalorder %v6173, 1
      %vm6194 = vcmp.eq.s32.totalorder %v6176, 1
      %vm6195 = vcmp.eq.s32.totalorder %v6179, 1
      %v6196 = vsel %vm6180, %v6114, -3e+38
      %v6197 = vsel %vm6181, %v6113, -3e+38
      %v6198 = vsel %vm6182, %v6112, -3e+38
      %v6199 = vsel %vm6183, %v6111, -3e+38
      %v6200 = vsel %vm6184, %v6110, -3e+38
      %v6201 = vsel %vm6185, %v6109, -3e+38
      %v6202 = vsel %vm6186, %v6108, -3e+38
      %v6203 = vsel %vm6187, %v6107, -3e+38
      %v6204 = vsel %vm6188, %v6106, -3e+38
      %v6205 = vsel %vm6189, %v6105, -3e+38
      %v6206 = vsel %vm6190, %v6104, -3e+38
      %v6207 = vsel %vm6191, %v6103, -3e+38
      %v6208 = vsel %vm6192, %v6102, -3e+38
      %v6209 = vsel %vm6193, %v6101, -3e+38
      %v6210 = vsel %vm6194, %v6100, -3e+38
      %v6211 = vsel %vm6195, %v6115, -3e+38
      %v6212 = vmax.f32 %v6068, %v6196
      %v6213 = vmax.f32 %v6069, %v6197
      %v6214 = vmax.f32 %v6070, %v6198
      %v6215 = vmax.f32 %v6071, %v6199
      %v6216 = vmax.f32 %v6072, %v6200
      %v6217 = vmax.f32 %v6073, %v6201
      %v6218 = vmax.f32 %v6074, %v6202
      %v6219 = vmax.f32 %v6075, %v6203
      %v6220 = vmax.f32 %v6076, %v6204
      %v6221 = vmax.f32 %v6077, %v6205
      %v6222 = vmax.f32 %v6078, %v6206
      %v6223 = vmax.f32 %v6079, %v6207
      %v6224 = vmax.f32 %v6080, %v6208
      %v6225 = vmax.f32 %v6081, %v6209
      %v6226 = vmax.f32 %v6082, %v6210
      %v6227 = vmax.f32 %v6083, %v6211
      %v6228 = vmax.f32 %v6212, %v5940
      %v6229 = vmax.f32 %v6213, %v5941
      %v6230 = vmax.f32 %v6214, %v5942
      %v6231 = vmax.f32 %v6215, %v5943
      %v6232 = vmax.f32 %v6216, %v5944
      %v6233 = vmax.f32 %v6217, %v5945
      %v6234 = vmax.f32 %v6218, %v5946
      %v6235 = vmax.f32 %v6219, %v5947
      %v6236 = vmax.f32 %v6220, %v5948
      %v6237 = vmax.f32 %v6221, %v5949
      %v6238 = vmax.f32 %v6222, %v5950
      %v6239 = vmax.f32 %v6223, %v5951
      %v6240 = vmax.f32 %v6224, %v5952
      %v6241 = vmax.f32 %v6225, %v5953
      %v6242 = vmax.f32 %v6226, %v5954
      %v6243 = vmax.f32 %v6227, %v5955
      %v6244 = vpack.c.bf16 %v6229, %v6228
      %v6245 = vpack.c.bf16 %v6231, %v6230
      %v6246 = vpack.c.bf16 %v6233, %v6232
      %v6247 = vpack.c.bf16 %v6235, %v6234
      %v6248 = vpack.c.bf16 %v6237, %v6236
      %v6249 = vpack.c.bf16 %v6239, %v6238
      %v6250 = vpack.c.bf16 %v6241, %v6240
      %v6251 = vpack.c.bf16 %v6243, %v6242
      %v6252 = vld [vmem:[%s9] sm:$0xff]
      %v6253 = vld [vmem:[%s9 + $0x8] sm:$0xf]
      %v6254 = vld [vmem:[%s9 + $0xc] sm:$0xff]
      %v6255 = vld [vmem:[%s9 + $0x14] sm:$0xf]
      %v6256 = vld [vmem:[%s9 + $0x18] sm:$0xff]
      %v6257 = vld [vmem:[%s9 + $0x20] sm:$0xf]
      %v6258 = vld [vmem:[%s9 + $0x24] sm:$0xff]
      %v6259 = vld [vmem:[%s9 + $0x2c] sm:$0xf]
      %v6260 = vld [vmem:[%s9 + $0x30] sm:$0xff]
      %v6261 = vld [vmem:[%s9 + $0x38] sm:$0xf]
      %v6262 = vld [vmem:[%s9 + $0x3c] sm:$0xff]
      %v6263 = vld [vmem:[%s9 + $0x44] sm:$0xf]
      %v6264 = vld [vmem:[%s9 + $0x48] sm:$0xff]
      %v6265 = vld [vmem:[%s9 + $0x50] sm:$0xf]
      %v6266 = vld [vmem:[%s9 + $0x54] sm:$0xff]
      %v6267 = vld [vmem:[%s9 + $0x5c] sm:$0xf]
      %v6268 = vld [vmem:[%s9 + $0x60] sm:$0xff]
      %v6269 = vld [vmem:[%s9 + $0x68] sm:$0xf]
      %v6270 = vld [vmem:[%s9 + $0x6c] sm:$0xff]
      %v6271 = vld [vmem:[%s9 + $0x74] sm:$0xf]
      %v6272 = vld [vmem:[%s9 + $0x78] sm:$0xff]
      %v6273 = vld [vmem:[%s9 + $0x80] sm:$0xf]
      %v6274 = vld [vmem:[%s9 + $0x84] sm:$0xff]
      %v6275 = vld [vmem:[%s9 + $0x8c] sm:$0xf]
      %v6276 = vld [vmem:[%s9 + $0x90] sm:$0xff]
      %v6277 = vld [vmem:[%s9 + $0x98] sm:$0xf]
      %v6278 = vld [vmem:[%s9 + $0x9c] sm:$0xff]
      %v6279 = vld [vmem:[%s9 + $0xa4] sm:$0xf]
      %v6280 = vld [vmem:[%s9 + $0xa8] sm:$0xff]
      %v6281 = vld [vmem:[%s9 + $0xb0] sm:$0xf]
      %v6282 = vld [vmem:[%s9 + $0xb4] sm:$0xff]
      %v6283 = vld [vmem:[%s9 + $0xbc] sm:$0xf]
      %v6284 = vld [vmem:[%s10] sm:$0x7]
      %v6286 = vlaneseq
      %v6287 = vshrl.u32 %v6286, 7
      %v6288 = vsub.s32 0, %v6287
      %v6289 = vrot.slane %v6284, %v6288
      %v6290 = vlaneseq
      %v6291 = vshrl.u32 %v6290, 7
      %v6292 = vsub.s32 1, %v6291
      %v6293 = vrot.slane %v6284, %v6292
      %v6294 = vlaneseq
      %v6295 = vshrl.u32 %v6294, 7
      %v6296 = vsub.s32 2, %v6295
      %v6297 = vrot.slane %v6284, %v6296
      %v6333 = vunpack.c.l.b16 %v6252
      %v6334 = vunpack.c.h.b16 %v6252
      %v6335 = vunpack.c.l.b16 %v6253
      %v6336 = vunpack.c.l.b16 %v6254
      %v6337 = vunpack.c.h.b16 %v6254
      %v6338 = vunpack.c.l.b16 %v6255
      %v6339 = vunpack.c.l.b16 %v6256
      %v6340 = vunpack.c.h.b16 %v6256
      %v6341 = vunpack.c.l.b16 %v6257
      %v6342 = vunpack.c.l.b16 %v6258
      %v6343 = vunpack.c.h.b16 %v6258
      %v6344 = vunpack.c.l.b16 %v6259
      %v6345 = vunpack.c.l.b16 %v6260
      %v6346 = vunpack.c.h.b16 %v6260
      %v6347 = vunpack.c.l.b16 %v6261
      %v6348 = vunpack.c.l.b16 %v6262
      %v6349 = vunpack.c.h.b16 %v6262
      %v6350 = vunpack.c.l.b16 %v6263
      %v6351 = vunpack.c.l.b16 %v6264
      %v6352 = vunpack.c.h.b16 %v6264
      %v6353 = vunpack.c.l.b16 %v6265
      %v6354 = vunpack.c.l.b16 %v6266
      %v6355 = vunpack.c.h.b16 %v6266
      %v6356 = vunpack.c.l.b16 %v6267
      %v6357 = vunpack.c.l.b16 %v6268
      %v6358 = vunpack.c.h.b16 %v6268
      %v6359 = vunpack.c.l.b16 %v6269
      %v6360 = vunpack.c.l.b16 %v6270
      %v6361 = vunpack.c.h.b16 %v6270
      %v6362 = vunpack.c.l.b16 %v6271
      %v6363 = vunpack.c.l.b16 %v6272
      %v6364 = vunpack.c.h.b16 %v6272
      %v6365 = vunpack.c.l.b16 %v6273
      %v6366 = vunpack.c.l.b16 %v6274
      %v6367 = vunpack.c.h.b16 %v6274
      %v6368 = vunpack.c.l.b16 %v6275
      %v6369 = vunpack.c.l.b16 %v6276
      %v6370 = vunpack.c.h.b16 %v6276
      %v6371 = vunpack.c.l.b16 %v6277
      %v6372 = vunpack.c.l.b16 %v6278
      %v6373 = vunpack.c.h.b16 %v6278
      %v6374 = vunpack.c.l.b16 %v6279
      %v6375 = vunpack.c.l.b16 %v6280
      %v6376 = vunpack.c.h.b16 %v6280
      %v6377 = vunpack.c.l.b16 %v6281
      %v6378 = vunpack.c.l.b16 %v6282
      %v6379 = vunpack.c.h.b16 %v6282
      %v6380 = vunpack.c.l.b16 %v6283
      %v6381 = vpack.c.b16 %v6336, %v6333
      %v6382 = vpack.c.b16 %v6337, %v6334
      %v6383 = vpack.c.b16 %v6338, %v6335
      %v6384 = vpack.c.b16 %v6342, %v6339
      %v6385 = vpack.c.b16 %v6343, %v6340
      %v6386 = vpack.c.b16 %v6344, %v6341
      %v6387 = vpack.c.b16 %v6348, %v6345
      %v6388 = vpack.c.b16 %v6349, %v6346
      %v6389 = vpack.c.b16 %v6350, %v6347
      %v6390 = vpack.c.b16 %v6354, %v6351
      %v6391 = vpack.c.b16 %v6355, %v6352
      %v6392 = vpack.c.b16 %v6356, %v6353
      %v6393 = vpack.c.b16 %v6360, %v6357
      %v6394 = vpack.c.b16 %v6361, %v6358
      %v6395 = vpack.c.b16 %v6362, %v6359
      %v6396 = vpack.c.b16 %v6366, %v6363
      %v6397 = vpack.c.b16 %v6367, %v6364
      %v6398 = vpack.c.b16 %v6368, %v6365
      %v6399 = vpack.c.b16 %v6372, %v6369
      %v6400 = vpack.c.b16 %v6373, %v6370
      %v6401 = vpack.c.b16 %v6374, %v6371
      %v6402 = vpack.c.b16 %v6378, %v6375
      %v6403 = vpack.c.b16 %v6379, %v6376
      %v6404 = vpack.c.b16 %v6380, %v6377
      %6429 = vmatprep.subr.bf16.mxu0 %v6403
      %6430 = vmatpush1.bf16.msra.mxu0 %v6402
      %6431 = vmatprep.subr.bf16.mxu0 %v6400
      %6432 = vmatpush1.bf16.msra.mxu0 %v6399
      %6433 = vmatprep.subr.bf16.mxu0 %v6397
      %6434 = vmatpush1.bf16.msra.mxu0 %v6396
      %6435 = vmatprep.subr.bf16.mxu0 %v6394
      %6436 = vmatpush1.bf16.msra.mxu0 %v6393
      %6437 = vmatprep.subr.bf16.mxu0 %v6391
      %6438 = vmatpush1.bf16.msra.mxu0 %v6390
      %6439 = vmatprep.subr.bf16.mxu0 %v6388
      %6440 = vmatpush1.bf16.msra.mxu0 %v6387
      %6441 = vmatprep.subr.bf16.mxu0 %v6385
      %6442 = vmatpush1.bf16.msra.mxu0 %v6384
      %6443 = vmatprep.subr.bf16.mxu0 %v6382
      %6444 = vmatpush1.bf16.msra.mxu0 %v6381
      %6445 = vmatprep.subr.bf16.mxu0 0
      %6446 = vmatpush2.bf16.msra.mxu0 0
      %6447 = vmatprep.subr.bf16.mxu0 0
      %6448 = vmatpush2.bf16.msra.mxu0 0
      %6449 = vmatprep.subr.bf16.mxu0 0
      %6450 = vmatpush2.bf16.msra.mxu0 0
      %6451 = vmatprep.subr.bf16.mxu0 0
      %6452 = vmatpush2.bf16.msra.mxu0 0
      %6453 = vmatprep.subr.bf16.mxu0 0
      %6454 = vmatpush2.bf16.msra.mxu0 0
      %6455 = vmatprep.subr.bf16.mxu0 0
      %6456 = vmatpush2.bf16.msra.mxu0 0
      %6457 = vmatprep.subr.bf16.mxu0 0
      %6458 = vmatpush2.bf16.msra.mxu0 0
      %6459 = vmatprep.subr.bf16.mxu0 0
      %6460 = vmatpush2.bf16.msra.mxu0 0
      %6461 = vmatprep.mubr.bf16.mxu0 0
      %6462 = vmatmul.mubr.bf16.gmra.mxu0 %v6244
      %v6463 = vpop.f32.mrf.mxu0
      %v6464 = vadd.f32 %v6289, %v6463
      %v6465 = vpop.f32.mrf.mxu0
      %v6466 = vadd.f32 %v6293, %v6465
      %v6467 = vpop.f32.mrf.mxu0
      %v6468 = vadd.f32 %v6289, %v6467
      %v6469 = vpop.f32.mrf.mxu0
      %v6470 = vadd.f32 %v6293, %v6469
      %6471 = vmatprep.mubr.bf16.mxu0 0
      %6472 = vmatmul.mubr.bf16.gmra.mxu0 %v6245
      %v6473 = vpop.f32.mrf.mxu0
      %v6474 = vadd.f32 %v6289, %v6473
      %v6475 = vpop.f32.mrf.mxu0
      %v6476 = vadd.f32 %v6293, %v6475
      %v6477 = vpop.f32.mrf.mxu0
      %v6478 = vadd.f32 %v6289, %v6477
      %v6479 = vpop.f32.mrf.mxu0
      %v6480 = vadd.f32 %v6293, %v6479
      %6481 = vmatprep.mubr.bf16.mxu0 0
      %6482 = vmatmul.mubr.bf16.gmra.mxu0 %v6246
      %v6483 = vpop.f32.mrf.mxu0
      %v6484 = vadd.f32 %v6289, %v6483
      %v6485 = vpop.f32.mrf.mxu0
      %v6486 = vadd.f32 %v6293, %v6485
      %v6487 = vpop.f32.mrf.mxu0
      %v6488 = vadd.f32 %v6289, %v6487
      %v6489 = vpop.f32.mrf.mxu0
      %v6490 = vadd.f32 %v6293, %v6489
      %6491 = vmatprep.mubr.bf16.mxu0 0
      %6492 = vmatmul.mubr.bf16.gmra.mxu0 %v6247
      %v6493 = vpop.f32.mrf.mxu0
      %v6494 = vadd.f32 %v6289, %v6493
      %v6495 = vpop.f32.mrf.mxu0
      %v6496 = vadd.f32 %v6293, %v6495
      %v6497 = vpop.f32.mrf.mxu0
      %v6498 = vadd.f32 %v6289, %v6497
      %v6499 = vpop.f32.mrf.mxu0
      %v6500 = vadd.f32 %v6293, %v6499
      %6501 = vmatprep.mubr.bf16.mxu0 0
      %6502 = vmatmul.mubr.bf16.gmra.mxu0 %v6248
      %v6503 = vpop.f32.mrf.mxu0
      %v6504 = vadd.f32 %v6289, %v6503
      %v6505 = vpop.f32.mrf.mxu0
      %v6506 = vadd.f32 %v6293, %v6505
      %v6507 = vpop.f32.mrf.mxu0
      %v6508 = vadd.f32 %v6289, %v6507
      %v6509 = vpop.f32.mrf.mxu0
      %v6510 = vadd.f32 %v6293, %v6509
      %6511 = vmatprep.mubr.bf16.mxu0 0
      %6512 = vmatmul.mubr.bf16.gmra.mxu0 %v6249
      %v6513 = vpop.f32.mrf.mxu0
      %v6514 = vadd.f32 %v6289, %v6513
      %v6515 = vpop.f32.mrf.mxu0
      %v6516 = vadd.f32 %v6293, %v6515
      %v6517 = vpop.f32.mrf.mxu0
      %v6518 = vadd.f32 %v6289, %v6517
      %v6519 = vpop.f32.mrf.mxu0
      %v6520 = vadd.f32 %v6293, %v6519
      %6521 = vmatprep.mubr.bf16.mxu0 0
      %6522 = vmatmul.mubr.bf16.gmra.mxu0 %v6250
      %v6523 = vpop.f32.mrf.mxu0
      %v6524 = vadd.f32 %v6289, %v6523
      %v6525 = vpop.f32.mrf.mxu0
      %v6526 = vadd.f32 %v6293, %v6525
      %v6527 = vpop.f32.mrf.mxu0
      %v6528 = vadd.f32 %v6289, %v6527
      %v6529 = vpop.f32.mrf.mxu0
      %v6530 = vadd.f32 %v6293, %v6529
      %6531 = vmatprep.mubr.bf16.mxu0 0
      %6532 = vmatmul.mubr.bf16.gmra.mxu0 %v6251
      %v6533 = vpop.f32.mrf.mxu0
      %v6534 = vadd.f32 %v6289, %v6533
      %v6535 = vpop.f32.mrf.mxu0
      %v6536 = vadd.f32 %v6293, %v6535
      %v6537 = vpop.f32.mrf.mxu0
      %v6538 = vadd.f32 %v6289, %v6537
      %v6539 = vpop.f32.mrf.mxu0
      %v6540 = vadd.f32 %v6293, %v6539
      %6541 = vdwg.mxu0
      %6542 = vmatprep.subr.bf16.mxu0 0
      %6543 = vmatpush1.bf16.msra.mxu0 %v6404
      %6544 = vmatprep.subr.bf16.mxu0 0
      %6545 = vmatpush1.bf16.msra.mxu0 %v6401
      %6546 = vmatprep.subr.bf16.mxu0 0
      %6547 = vmatpush1.bf16.msra.mxu0 %v6398
      %6548 = vmatprep.subr.bf16.mxu0 0
      %6549 = vmatpush1.bf16.msra.mxu0 %v6395
      %6550 = vmatprep.subr.bf16.mxu0 0
      %6551 = vmatpush1.bf16.msra.mxu0 %v6392
      %6552 = vmatprep.subr.bf16.mxu0 0
      %6553 = vmatpush1.bf16.msra.mxu0 %v6389
      %6554 = vmatprep.subr.bf16.mxu0 0
      %6555 = vmatpush1.bf16.msra.mxu0 %v6386
      %6556 = vmatprep.subr.bf16.mxu0 0
      %6557 = vmatpush1.bf16.msra.mxu0 %v6383
      %6558 = vmatprep.subr.bf16.mxu0 0
      %6559 = vmatpush2.bf16.msra.mxu0 0
      %6560 = vmatprep.subr.bf16.mxu0 0
      %6561 = vmatpush2.bf16.msra.mxu0 0
      %6562 = vmatprep.subr.bf16.mxu0 0
      %6563 = vmatpush2.bf16.msra.mxu0 0
      %6564 = vmatprep.subr.bf16.mxu0 0
      %6565 = vmatpush2.bf16.msra.mxu0 0
      %6566 = vmatprep.subr.bf16.mxu0 0
      %6567 = vmatpush2.bf16.msra.mxu0 0
      %6568 = vmatprep.subr.bf16.mxu0 0
      %6569 = vmatpush2.bf16.msra.mxu0 0
      %6570 = vmatprep.subr.bf16.mxu0 0
      %6571 = vmatpush2.bf16.msra.mxu0 0
      %6572 = vmatprep.subr.bf16.mxu0 0
      %6573 = vmatpush2.bf16.msra.mxu0 0
      %6574 = vmatprep.mubr.bf16.mxu0 0
      %6575 = vmatmul.mubr.bf16.gmra.mxu0 %v6244
      %v6576 = vpop.f32.mrf.mxu0
      %v6577 = vadd.f32 %v6297, %v6576
      %v6578 = vpop.f32.mrf.mxu0
      %v6579 = vpop.f32.mrf.mxu0
      %v6580 = vadd.f32 %v6297, %v6579
      %v6581 = vpop.f32.mrf.mxu0
      %6582 = vmatprep.mubr.bf16.mxu0 0
      %6583 = vmatmul.mubr.bf16.gmra.mxu0 %v6245
      %v6584 = vpop.f32.mrf.mxu0
      %v6585 = vadd.f32 %v6297, %v6584
      %v6586 = vpop.f32.mrf.mxu0
      %v6587 = vpop.f32.mrf.mxu0
      %v6588 = vadd.f32 %v6297, %v6587
      %v6589 = vpop.f32.mrf.mxu0
      %6590 = vmatprep.mubr.bf16.mxu0 0
      %6591 = vmatmul.mubr.bf16.gmra.mxu0 %v6246
      %v6592 = vpop.f32.mrf.mxu0
      %v6593 = vadd.f32 %v6297, %v6592
      %v6594 = vpop.f32.mrf.mxu0
      %v6595 = vpop.f32.mrf.mxu0
      %v6596 = vadd.f32 %v6297, %v6595
      %v6597 = vpop.f32.mrf.mxu0
      %6598 = vmatprep.mubr.bf16.mxu0 0
      %6599 = vmatmul.mubr.bf16.gmra.mxu0 %v6247
      %v6600 = vpop.f32.mrf.mxu0
      %v6601 = vadd.f32 %v6297, %v6600
      %v6602 = vpop.f32.mrf.mxu0
      %v6603 = vpop.f32.mrf.mxu0
      %v6604 = vadd.f32 %v6297, %v6603
      %v6605 = vpop.f32.mrf.mxu0
      %6606 = vmatprep.mubr.bf16.mxu0 0
      %6607 = vmatmul.mubr.bf16.gmra.mxu0 %v6248
      %v6608 = vpop.f32.mrf.mxu0
      %v6609 = vadd.f32 %v6297, %v6608
      %v6610 = vpop.f32.mrf.mxu0
      %v6611 = vpop.f32.mrf.mxu0
      %v6612 = vadd.f32 %v6297, %v6611
      %v6613 = vpop.f32.mrf.mxu0
      %6614 = vmatprep.mubr.bf16.mxu0 0
      %6615 = vmatmul.mubr.bf16.gmra.mxu0 %v6249
      %v6616 = vpop.f32.mrf.mxu0
      %v6617 = vadd.f32 %v6297, %v6616
      %v6618 = vpop.f32.mrf.mxu0
      %v6619 = vpop.f32.mrf.mxu0
      %v6620 = vadd.f32 %v6297, %v6619
      %v6621 = vpop.f32.mrf.mxu0
      %6622 = vmatprep.mubr.bf16.mxu0 0
      %6623 = vmatmul.mubr.bf16.gmra.mxu0 %v6250
      %v6624 = vpop.f32.mrf.mxu0
      %v6625 = vadd.f32 %v6297, %v6624
      %v6626 = vpop.f32.mrf.mxu0
      %v6627 = vpop.f32.mrf.mxu0
      %v6628 = vadd.f32 %v6297, %v6627
      %v6629 = vpop.f32.mrf.mxu0
      %6630 = vmatprep.mubr.bf16.mxu0 0
      %6631 = vmatmul.mubr.bf16.gmra.mxu0 %v6251
      %v6632 = vpop.f32.mrf.mxu0
      %v6633 = vadd.f32 %v6297, %v6632
      %v6634 = vpop.f32.mrf.mxu0
      %v6635 = vpop.f32.mrf.mxu0
      %v6636 = vadd.f32 %v6297, %v6635
      %v6637 = vpop.f32.mrf.mxu0
      %6638 = vdwg.mxu0
      %v6639 = vmax.f32 %v6464, 0.0
      %v6640 = vmax.f32 %v6466, 0.0
      %v6641 = vmax.f32 %v6577, 0.0
      %v6642 = vmax.f32 %v6468, 0.0
      %v6643 = vmax.f32 %v6470, 0.0
      %v6644 = vmax.f32 %v6580, 0.0
      %v6645 = vmax.f32 %v6474, 0.0
      %v6646 = vmax.f32 %v6476, 0.0
      %v6647 = vmax.f32 %v6585, 0.0
      %v6648 = vmax.f32 %v6478, 0.0
      %v6649 = vmax.f32 %v6480, 0.0
      %v6650 = vmax.f32 %v6588, 0.0
      %v6651 = vmax.f32 %v6484, 0.0
      %v6652 = vmax.f32 %v6486, 0.0
      %v6653 = vmax.f32 %v6593, 0.0
      %v6654 = vmax.f32 %v6488, 0.0
      %v6655 = vmax.f32 %v6490, 0.0
      %v6656 = vmax.f32 %v6596, 0.0
      %v6657 = vmax.f32 %v6494, 0.0
      %v6658 = vmax.f32 %v6496, 0.0
      %v6659 = vmax.f32 %v6601, 0.0
      %v6660 = vmax.f32 %v6498, 0.0
      %v6661 = vmax.f32 %v6500, 0.0
      %v6662 = vmax.f32 %v6604, 0.0
      %v6663 = vmax.f32 %v6504, 0.0
      %v6664 = vmax.f32 %v6506, 0.0
      %v6665 = vmax.f32 %v6609, 0.0
      %v6666 = vmax.f32 %v6508, 0.0
      %v6667 = vmax.f32 %v6510, 0.0
      %v6668 = vmax.f32 %v6612, 0.0
      %v6669 = vmax.f32 %v6514, 0.0
      %v6670 = vmax.f32 %v6516, 0.0
      %v6671 = vmax.f32 %v6617, 0.0
      %v6672 = vmax.f32 %v6518, 0.0
      %v6673 = vmax.f32 %v6520, 0.0
      %v6674 = vmax.f32 %v6620, 0.0
      %v6675 = vmax.f32 %v6524, 0.0
      %v6676 = vmax.f32 %v6526, 0.0
      %v6677 = vmax.f32 %v6625, 0.0
      %v6678 = vmax.f32 %v6528, 0.0
      %v6679 = vmax.f32 %v6530, 0.0
      %v6680 = vmax.f32 %v6628, 0.0
      %v6681 = vmax.f32 %v6534, 0.0
      %v6682 = vmax.f32 %v6536, 0.0
      %v6683 = vmax.f32 %v6633, 0.0
      %v6684 = vmax.f32 %v6538, 0.0
      %v6685 = vmax.f32 %v6540, 0.0
      %v6686 = vmax.f32 %v6636, 0.0
      %v6687 = vadd.f32 %v5750, %v6639
      %v6688 = vadd.f32 %v5751, %v6640
      %v6689 = vadd.f32 %v5752, %v6641
      %v6690 = vadd.f32 %v5753, %v6642
      %v6691 = vadd.f32 %v5754, %v6643
      %v6692 = vadd.f32 %v5755, %v6644
      %v6693 = vadd.f32 %v5756, %v6645
      %v6694 = vadd.f32 %v5757, %v6646
      %v6695 = vadd.f32 %v5758, %v6647
      %v6696 = vadd.f32 %v5759, %v6648
      %v6697 = vadd.f32 %v5760, %v6649
      %v6698 = vadd.f32 %v5761, %v6650
      %v6699 = vadd.f32 %v5762, %v6651
      %v6700 = vadd.f32 %v5763, %v6652
      %v6701 = vadd.f32 %v5764, %v6653
      %v6702 = vadd.f32 %v5765, %v6654
      %v6703 = vadd.f32 %v5766, %v6655
      %v6704 = vadd.f32 %v5767, %v6656
      %v6705 = vadd.f32 %v5768, %v6657
      %v6706 = vadd.f32 %v5769, %v6658
      %v6707 = vadd.f32 %v5770, %v6659
      %v6708 = vadd.f32 %v5771, %v6660
      %v6709 = vadd.f32 %v5772, %v6661
      %v6710 = vadd.f32 %v5773, %v6662
      %v6711 = vadd.f32 %v5774, %v6663
      %v6712 = vadd.f32 %v5775, %v6664
      %v6713 = vadd.f32 %v5776, %v6665
      %v6714 = vadd.f32 %v5777, %v6666
      %v6715 = vadd.f32 %v5778, %v6667
      %v6716 = vadd.f32 %v5779, %v6668
      %v6717 = vadd.f32 %v5780, %v6669
      %v6718 = vadd.f32 %v5781, %v6670
      %v6719 = vadd.f32 %v5782, %v6671
      %v6720 = vadd.f32 %v5783, %v6672
      %v6721 = vadd.f32 %v5784, %v6673
      %v6722 = vadd.f32 %v5785, %v6674
      %v6723 = vadd.f32 %v5786, %v6675
      %v6724 = vadd.f32 %v5787, %v6676
      %v6725 = vadd.f32 %v5788, %v6677
      %v6726 = vadd.f32 %v5789, %v6678
      %v6727 = vadd.f32 %v5790, %v6679
      %v6728 = vadd.f32 %v5791, %v6680
      %v6729 = vadd.f32 %v5792, %v6681
      %v6730 = vadd.f32 %v5793, %v6682
      %v6731 = vadd.f32 %v5794, %v6683
      %v6732 = vadd.f32 %v5795, %v6684
      %v6733 = vadd.f32 %v5796, %v6685
      %v6734 = vadd.f32 %v5797, %v6686
      %6735 = vst [vmem:[%s390] sm:$0xff] %v6687
      %6736 = vst [vmem:[%s390 + $0x8] sm:$0xff] %v6688
      %6737 = vst [vmem:[%s390 + $0x10] sm:$0xff] %v6689
      %6738 = vst [vmem:[%s390 + $0x18] sm:$0xff] %v6690
      %6739 = vst [vmem:[%s390 + $0x20] sm:$0xff] %v6691
      %6740 = vst [vmem:[%s390 + $0x28] sm:$0xff] %v6692
      %6741 = vst [vmem:[%s390 + $0x30] sm:$0xff] %v6693
      %6742 = vst [vmem:[%s390 + $0x38] sm:$0xff] %v6694
      %6743 = vst [vmem:[%s390 + $0x40] sm:$0xff] %v6695
      %6744 = vst [vmem:[%s390 + $0x48] sm:$0xff] %v6696
      %6745 = vst [vmem:[%s390 + $0x50] sm:$0xff] %v6697
      %6746 = vst [vmem:[%s390 + $0x58] sm:$0xff] %v6698
      %6747 = vst [vmem:[%s390 + $0x60] sm:$0xff] %v6699
      %6748 = vst [vmem:[%s390 + $0x68] sm:$0xff] %v6700
      %6749 = vst [vmem:[%s390 + $0x70] sm:$0xff] %v6701
      %6750 = vst [vmem:[%s390 + $0x78] sm:$0xff] %v6702
      %6751 = vst [vmem:[%s390 + $0x80] sm:$0xff] %v6703
      %6752 = vst [vmem:[%s390 + $0x88] sm:$0xff] %v6704
      %6753 = vst [vmem:[%s390 + $0x90] sm:$0xff] %v6705
      %6754 = vst [vmem:[%s390 + $0x98] sm:$0xff] %v6706
      %6755 = vst [vmem:[%s390 + $0xa0] sm:$0xff] %v6707
      %6756 = vst [vmem:[%s390 + $0xa8] sm:$0xff] %v6708
      %6757 = vst [vmem:[%s390 + $0xb0] sm:$0xff] %v6709
      %6758 = vst [vmem:[%s390 + $0xb8] sm:$0xff] %v6710
      %6759 = vst [vmem:[%s390 + $0xc0] sm:$0xff] %v6711
      %6760 = vst [vmem:[%s390 + $0xc8] sm:$0xff] %v6712
      %6761 = vst [vmem:[%s390 + $0xd0] sm:$0xff] %v6713
      %6762 = vst [vmem:[%s390 + $0xd8] sm:$0xff] %v6714
      %6763 = vst [vmem:[%s390 + $0xe0] sm:$0xff] %v6715
      %6764 = vst [vmem:[%s390 + $0xe8] sm:$0xff] %v6716
      %6765 = vst [vmem:[%s390 + $0xf0] sm:$0xff] %v6717
      %6766 = vst [vmem:[%s390 + $0xf8] sm:$0xff] %v6718
      %6767 = vst [vmem:[%s390 + $0x100] sm:$0xff] %v6719
      %6768 = vst [vmem:[%s390 + $0x108] sm:$0xff] %v6720
      %6769 = vst [vmem:[%s390 + $0x110] sm:$0xff] %v6721
      %6770 = vst [vmem:[%s390 + $0x118] sm:$0xff] %v6722
      %6771 = vst [vmem:[%s390 + $0x120] sm:$0xff] %v6723
      %6772 = vst [vmem:[%s390 + $0x128] sm:$0xff] %v6724
      %6773 = vst [vmem:[%s390 + $0x130] sm:$0xff] %v6725
      %6774 = vst [vmem:[%s390 + $0x138] sm:$0xff] %v6726
      %6775 = vst [vmem:[%s390 + $0x140] sm:$0xff] %v6727
      %6776 = vst [vmem:[%s390 + $0x148] sm:$0xff] %v6728
      %6777 = vst [vmem:[%s390 + $0x150] sm:$0xff] %v6729
      %6778 = vst [vmem:[%s390 + $0x158] sm:$0xff] %v6730
      %6779 = vst [vmem:[%s390 + $0x160] sm:$0xff] %v6731
      %6780 = vst [vmem:[%s390 + $0x168] sm:$0xff] %v6732
      %6781 = vst [vmem:[%s390 + $0x170] sm:$0xff] %v6733
      %6782 = vst [vmem:[%s390 + $0x178] sm:$0xff] %v6734
      %s6783 = smul.u32 16, %s22
      %p6784 = scmp.lt.s32.totalorder %s6783, 31
      %s6785 = scalar_select %p6784, %s6783, 31
      %s6786 = smul.addr %s6785, 3
      %s6787 = smul.addr %s6786, 8
      %s6788 = scalar_lea.vmem %s11, %s6787
      // Predicated region
      $region65: #{forward.1} parent=63 // pred_check
        %p6789 = pneg %p276
      $region66: #{forward.1} parent=63 // pred_check_branch
        %6791 = sbr.rel (%p6789) target = $region68
      $region67: #{forward.1} parent=63 // pred_region
        %s6792 = smul.u32 16, %s22
      $region68: #{forward.1} parent=63 // pred_fallthru
        _
    $region64: #{forward.1} parent=5 // pred_fallthru
      _
    %p6793 = scmp.le.s32.totalorder 2, %s17
    // Predicated region
    $region69: #{forward.1} parent=5 // pred_check
      %p6794 = pneg %p6793
    $region70: #{forward.1} parent=5 // pred_check_branch
      %6796 = sbr.rel (%p6794) target = $region72
    $region71: #{forward.1} parent=5 // pred_region
      %s6797 = ssub.s32 %s17, 2
      // Predicated region
      $region73: #{forward.1} parent=71 // pred_check
        %p6798 = pneg %p282
      $region74: #{forward.1} parent=71 // pred_check_branch
        %6800 = sbr.rel (%p6798) target = $region76
      $region75: #{forward.1} parent=71 // pred_region
        %s6801 = smul.u32 16, %s23
        %p6802 = scmp.lt.s32.totalorder %s6801, 31
        %s6803 = scalar_select %p6802, %s6801, 31
        %s6804 = smul.addr %s6803, 3
        %s6805 = smul.addr %s6804, 8
        %s6806 = scalar_lea.vmem %s11, %s6805
      $region76: #{forward.1} parent=71 // pred_fallthru
        _
    $region72: #{forward.1} parent=5 // pred_fallthru
      _
  $region6: #{forward.1} parent=0 // loop_footer
    %s21 = sadd.s32 1, %s17
  $region7: #{forward.1} parent=0 // loop_footer_branch
    %16 = sbr.rel target = $region3
  $region8: #{forward.1} parent=0 // loop_exit
    _

</llo_original>
